<compile_context>
chip_gen: v5e
topology: v5e:2x2
jax: 0.10.0
libtpu: 0.0.40
codegen_flags: <defaults>
</compile_context>

<pallas_src>
import numpy as np
import jax
import jax.numpy as jnp
from jax.experimental import pallas as pl
from jax.experimental.pallas import tpu as pltpu

# ----------------------------- model hyper-params ---------------------------
N_FEATURES = 16          # self.N_features
N_HEADS = 8              # self.N_heads
AT_CHANNELS = 4          # at_channels (small synthetic choice)
HC = AT_CHANNELS * N_HEADS          # heads * out_channels = 32
FIN_PAD = 32             # padded input feature dim (layer 0: 16 -> 32, zero rows)
PROJ_W = 4 * HC          # padded fused projection width = 128 (lane-dense)
SPEC_VEC_LEN = 16        # TODO(synk): `spec_vec_len` is an undefined global in the
                         # reference file; fixed to 16 for this synthetic kernel.
NUM_LAYERS = 10
NUM_NODES = 16
NUM_GRAPHS = 2
NEG_SLOPE = 0.2          # GATv2Conv default negative_slope
PAIR_W = NUM_NODES * HC          # 512  (pairwise tensor lane width)
EH_W = NUM_NODES * N_HEADS       # 128  (logit / alpha lane width)


# ------------------------------- Pallas kernel -------------------------------
def fused_gcn_kernel(x_ref, w_ref, b_ref, arow_ref,
                     txr_ref, txl_ref, selmask_ref, collapse_ref, sumexp_ref,
                     repj_ref, headmask_ref, maskadd_ref, maskmul_ref,
                     pool_ref, wlin_ref, blin_ref, out_ref):
    """Whole forward pass: 10x (GATv2Conv + Linear skip -> ELU), pool, Linear."""
    f32 = jnp.float32
    ones_row = jnp.full((1, NUM_NODES), 1.0, dtype=f32)

    # small per-kernel constants (hoisted out of the layer loop)
    selmask = selmask_ref[...]       # [16, 512]  SelMask[r, j*HC+k] = (r == j)
    mask_add = maskadd_ref[...]      # [16, 128]  0 / -1e9  additive adjacency mask
    mask_mul = maskmul_ref[...]      # [16, 128]  1 / 0     multiplicative mask
    headmask = headmask_ref[...]     # [128, 32]  HeadMask[j*H+h, k] = (head(k)==h)

    h = x_ref[...]                   # [16, 32]  (layer-0 features zero-padded)

    for layer in range(NUM_LAYERS):
        w = w_ref[layer]             # [32, 128] = [W_l | W_r | W_skip | 0]
        b = b_ref[layer]             # [1, 128]  = [b_l | b_r | b_skip + gat_bias | 0]
        arow = arow_ref[layer]       # [1, 512]  att weights tiled per source node

        # fused projection (single MXU push, lane-dense 128-wide result)
        proj = jnp.dot(h, w, preferred_element_type=f32) + b            # [16, 128]

        # dense pairwise tensor P[i, j*HC+k] = x_r[i,k] + x_l[j,k]  -> [16, 512]
        xr_tile = jnp.dot(proj, txr_ref[...], preferred_element_type=f32)   # [16, 512]
        xl_rows = jnp.dot(proj, txl_ref[...], preferred_element_type=f32)   # [16, 512]
        xl_flat = jnp.dot(ones_row, xl_rows * selmask,
                          preferred_element_type=f32)                       # [1, 512]
        p = xr_tile + xl_flat
        p = jnp.where(p > 0, p, NEG_SLOPE * p)                              # LeakyReLU
        p = p * arow                                                        # fold `att`

        # per-head logits e[i, j*H+h] via block-structured MXU reduction (K=512)
        e = jnp.dot(p, collapse_ref[...], preferred_element_type=f32) + mask_add  # [16,128]

        # exact per-(target, head) max over sources: 4 lane rotations (stride H)
        m = e
        m = jnp.maximum(m, pltpu.roll(m, N_HEADS, 1))
        m = jnp.maximum(m, pltpu.roll(m, 2 * N_HEADS, 1))
        m = jnp.maximum(m, pltpu.roll(m, 4 * N_HEADS, 1))
        m = jnp.maximum(m, pltpu.roll(m, 8 * N_HEADS, 1))

        wgt = jnp.exp(e - m) * mask_mul                                     # [16, 128]
        den = jnp.dot(wgt, sumexp_ref[...], preferred_element_type=f32)     # [16, 128]
        alpha = wgt / jnp.maximum(den, 1e-30)                               # exact divide

        # aggregation on the MXU: agg[i,k] = sum_j alpha[i,j,head(k)] * x_l[j,k]
        xl = proj[:, 0:HC]                                                  # [16, 32]
        xlexp = jnp.dot(repj_ref[...], xl,
                        preferred_element_type=f32) * headmask              # [128, 32]
        agg = jnp.dot(alpha, xlexp, preferred_element_type=f32)             # [16, 32]

        y = agg + proj[:, 2 * HC:3 * HC]          # skip Linear (+ GAT output bias)
        h = jnp.where(y > 0, y, jnp.exp(jnp.minimum(y, 0.0)) - 1.0)         # ELU

    # global_mean_pool (pooling matmul) + final Linear
    pooled = jnp.dot(pool_ref[...], h, preferred_element_type=f32)          # [2, 32]
    out_ref[...] = (jnp.dot(pooled, wlin_ref[...],
                            preferred_element_type=f32) + blin_ref[...])    # [2, 16]


# ------------------------------- wrapper --------------------------------------
def gcn_forward_fused(x_pad, w_all, b_all, arow_all, txr, txl, selmask,
                      collapse, sumexp, repj, headmask, mask_add, mask_mul,
                      pool, w_lin, b_lin):
    vmem = pl.BlockSpec(memory_space=pltpu.MemorySpace.VMEM)
    return pl.pallas_call(
        fused_gcn_kernel,
        out_shape=jax.ShapeDtypeStruct((NUM_GRAPHS, SPEC_VEC_LEN), jnp.float32),
        in_specs=[vmem] * 16,
        out_specs=vmem,
    )(x_pad, w_all, b_all, arow_all, txr, txl, selmask, collapse, sumexp,
      repj, headmask, mask_add, mask_mul, pool, w_lin, b_lin)


gcn_forward = jax.jit(gcn_forward_fused)


# ------------------------------- constants ------------------------------------
def build_structure_constants(adj):
    """Precomputed 0/1 matrices that move the GATv2 structure onto the MXU."""
    f32 = np.float32
    head_ind = np.kron(np.eye(N_HEADS, dtype=f32),
                       np.ones((AT_CHANNELS, 1), f32))               # [32, 8]
    collapse = np.kron(np.eye(NUM_NODES, dtype=f32), head_ind)       # [512, 128]
    sumexp = np.tile(np.eye(N_HEADS, dtype=f32),
                     (NUM_NODES, NUM_NODES))                         # [128, 128]
    repj = np.kron(np.eye(NUM_NODES, dtype=f32),
                   np.ones((N_HEADS, 1), f32))                       # [128, 16]
    headmask = np.tile(head_ind.T, (NUM_NODES, 1))                   # [128, 32]
    selmask = np.kron(np.eye(NUM_NODES, dtype=f32),
                      np.ones((1, HC), f32))                         # [16, 512]

    txr = np.zeros((PROJ_W, HC), f32)
    txr[HC:2 * HC, :] = np.eye(HC, dtype=f32)
    txr = np.tile(txr, (1, NUM_NODES))                               # [128, 512]
    txl = np.zeros((PROJ_W, HC), f32)
    txl[0:HC, :] = np.eye(HC, dtype=f32)
    txl = np.tile(txl, (1, NUM_NODES))                               # [128, 512]

    adj_rep = np.repeat(adj.astype(f32), N_HEADS, axis=1)            # [16, 128]
    mask_add = np.where(adj_rep > 0, 0.0, -1e9).astype(f32)
    mask_mul = (adj_rep > 0).astype(f32)
    return (txr, txl, selmask, collapse, sumexp, repj, headmask, mask_add, mask_mul)


# ------------------------------- glue / init ----------------------------------
def glorot(key, shape):
    fan_in, fan_out = shape[0], shape[1]
    lim = (6.0 / (fan_in + fan_out)) ** 0.5
    return jax.random.uniform(key, shape, jnp.float32, -lim, lim)


def init_layer(key, fin):
    ks = jax.random.split(key, 5)
    wl = glorot(ks[0], (fin, HC))
    bl = jnp.zeros((1, HC), jnp.float32)
    wr = glorot(ks[1], (fin, HC))
    br = jnp.zeros((1, HC), jnp.float32)
    att = glorot(ks[2], (1, HC))                   # att[0, h*C+c] (PyG [1,H,C] flat)
    gbias = jnp.zeros((1, HC), jnp.float32)
    ws = glorot(ks[3], (fin, HC))                  # skip Linear weight (x @ W)
    bs = jax.random.uniform(ks[4], (1, HC), jnp.float32, -0.1, 0.1)
    return (wl, bl, wr, br, att, gbias, ws, bs)


def stack_layer_params(layer_params):
    """Stack per-layer weights: W [L,32,128], B [L,1,128], att_row [L,1,512]."""
    w_rows, b_rows, arow_rows = [], [], []
    for (wl, bl, wr, br, att, gbias, ws, bs) in layer_params:
        pad = FIN_PAD - wl.shape[0]
        if pad > 0:                                # zero-pad layer-0 Fin 16 -> 32
            z = jnp.zeros((pad, HC), jnp.float32)
            wl = jnp.concatenate([wl, z], axis=0)
            wr = jnp.concatenate([wr, z], axis=0)
            ws = jnp.concatenate([ws, z], axis=0)
        wz = jnp.zeros((FIN_PAD, HC), jnp.float32)
        bz = jnp.zeros((1, HC), jnp.float32)
        w_rows.append(jnp.concatenate([wl, wr, ws, wz], axis=1))             # [32, 128]
        b_rows.append(jnp.concatenate([bl, br, bs + gbias, bz], axis=1))     # [1, 128]
        arow_rows.append(jnp.tile(att.reshape(-1),
                                  (NUM_NODES,)).reshape(1, PAIR_W))          # [1, 512]
    return jnp.stack(w_rows), jnp.stack(b_rows), jnp.stack(arow_rows)


def edge_index_to_adj(edge_index, num_nodes):
    adj = np.zeros((num_nodes, num_nodes), np.float32)
    adj[edge_index[1], edge_index[0]] = 1.0                    # edge j -> i
    adj = np.minimum(adj + np.eye(num_nodes, dtype=np.float32), 1.0)   # + self loops
    return adj


# ------------------------------- pure-JAX reference ---------------------------
def reference_forward(x, adj, layer_params, w_lin, b_lin, pool):
    hi = jax.lax.Precision.HIGHEST
    h = x
    for (wl, bl, wr, br, att, gbias, ws, bs) in layer_params:
        xl = jnp.dot(h, wl, precision=hi) + bl
        xr = jnp.dot(h, wr, precision=hi) + br
        p = xr[:, None, :] + xl[None, :, :]
        p = jnp.where(p > 0, p, NEG_SLOPE * p)
        p4 = p.reshape(NUM_NODES, NUM_NODES, N_HEADS, AT_CHANNELS)
        att4 = att.reshape(1, 1, N_HEADS, AT_CHANNELS)
        e = jnp.sum(p4 * att4, axis=-1)
        e = jnp.where(adj[:, :, None] > 0, e, -jnp.inf)
        a = jax.nn.softmax(e, axis=1)
        xl4 = xl.reshape(NUM_NODES, N_HEADS, AT_CHANNELS)
        agg = jnp.einsum('ijh,jhc->ihc', a, xl4, precision=hi).reshape(NUM_NODES, HC)
        y = agg + gbias + (jnp.dot(h, ws, precision=hi) + bs)
        h = jax.nn.elu(y)
    pooled = jnp.dot(pool, h, precision=hi)
    return jnp.dot(pooled, w_lin, precision=hi) + b_lin


# ------------------------------------ main -------------------------------------
if __name__ == "__main__":
    key = jax.random.PRNGKey(0)
    keys = jax.random.split(key, NUM_LAYERS + 2)

    # node features (zero-padded feature dim so layer 0 uses the same [32,*] weights)
    x = jax.random.normal(keys[0], (NUM_NODES, N_FEATURES), jnp.float32)
    x_pad = jnp.pad(x, ((0, 0), (0, FIN_PAD - N_FEATURES)))

    # edge_index: two ring graphs of 8 nodes each, bidirectional edges
    edges = []
    per = NUM_NODES // NUM_GRAPHS
    for g in range(NUM_GRAPHS):
        base = g * per
        for i in range(per):
            a, b = base + i, base + (i + 1) % per
            edges.append((a, b))
            edges.append((b, a))
    edge_index = np.array(edges, np.int32).T                   # [2, E]
    adj = edge_index_to_adj(edge_index, NUM_NODES)             # [16, 16]

    # batch vector -> mean-pool matrix [num_graphs, num_nodes]
    batch = np.repeat(np.arange(NUM_GRAPHS), per)
    onehot = (batch[None, :] == np.arange(NUM_GRAPHS)[:, None]).astype(np.float32)
    pool = onehot / onehot.sum(axis=1, keepdims=True)

    # parameters for the 10 GATv2 + skip-Linear blocks, stacked for the fused kernel
    layer_params = []
    fin = N_FEATURES
    for i in range(NUM_LAYERS):
        layer_params.append(init_layer(keys[1 + i], fin))
        fin = HC
    w_all, b_all, arow_all = stack_layer_params(layer_params)

    # final Linear
    w_lin = glorot(keys[NUM_LAYERS + 1], (HC, SPEC_VEC_LEN))
    b_lin = jnp.zeros((1, SPEC_VEC_LEN), jnp.float32)

    # structural 0/1 constants (MXU-side graph / head bookkeeping) + masks
    consts = tuple(jnp.asarray(c) for c in build_structure_constants(adj))

    out = gcn_forward(x_pad, w_all, b_all, arow_all, *consts,
                      jnp.asarray(pool), w_lin, b_lin)
    out = jax.block_until_ready(out)

    assert out.shape == (NUM_GRAPHS, SPEC_VEC_LEN)
    assert bool(jnp.all(jnp.isfinite(out)))

    # numerical cross-check vs. a plain-JAX GATv2 reference of the same module
    ref = reference_forward(x, jnp.asarray(adj), layer_params, w_lin, b_lin,
                            jnp.asarray(pool))
    np.testing.assert_allclose(np.asarray(out), np.asarray(ref),
                               rtol=1e-2, atol=1e-2)

    print("KERNEL_OK")
</pallas_src>

<mosaic_0001>
module attributes {stable_mosaic.version = 11 : i64} {
  func.func @fused_gcn_kernel(%arg0: memref<16x32xf32, #tpu.memory_space<vmem>>, %arg1: memref<10x32x128xf32, #tpu.memory_space<vmem>>, %arg2: memref<10x1x128xf32, #tpu.memory_space<vmem>>, %arg3: memref<10x1x512xf32, #tpu.memory_space<vmem>>, %arg4: memref<128x512xf32, #tpu.memory_space<vmem>>, %arg5: memref<128x512xf32, #tpu.memory_space<vmem>>, %arg6: memref<16x512xf32, #tpu.memory_space<vmem>>, %arg7: memref<512x128xf32, #tpu.memory_space<vmem>>, %arg8: memref<128x128xf32, #tpu.memory_space<vmem>>, %arg9: memref<128x16xf32, #tpu.memory_space<vmem>>, %arg10: memref<128x32xf32, #tpu.memory_space<vmem>>, %arg11: memref<16x128xf32, #tpu.memory_space<vmem>>, %arg12: memref<16x128xf32, #tpu.memory_space<vmem>>, %arg13: memref<2x16xf32, #tpu.memory_space<vmem>>, %arg14: memref<32x16xf32, #tpu.memory_space<vmem>>, %arg15: memref<1x16xf32, #tpu.memory_space<vmem>>, %arg16: memref<2x16xf32, #tpu.memory_space<vmem>>) attributes {dimension_semantics = [], scalar_prefetch = 0 : i64, scratch_operands = 0 : i64, tpu.core_type = #tpu.core_type<tc>} {
    %cst = arith.constant 1.000000e+00 : f32
    %0 = vector.broadcast %cst : f32 to vector<1x16xf32>
    %c0 = arith.constant 0 : index
    %c0_0 = arith.constant 0 : index
    %1 = vector.load %arg6[%c0, %c0_0] : memref<16x512xf32, #tpu.memory_space<vmem>>, vector<16x512xf32>
    %c0_1 = arith.constant 0 : index
    %c0_2 = arith.constant 0 : index
    %2 = vector.load %arg11[%c0_1, %c0_2] : memref<16x128xf32, #tpu.memory_space<vmem>>, vector<16x128xf32>
    %c0_3 = arith.constant 0 : index
    %c0_4 = arith.constant 0 : index
    %3 = vector.load %arg12[%c0_3, %c0_4] : memref<16x128xf32, #tpu.memory_space<vmem>>, vector<16x128xf32>
    %c0_5 = arith.constant 0 : index
    %c0_6 = arith.constant 0 : index
    %4 = vector.load %arg10[%c0_5, %c0_6] : memref<128x32xf32, #tpu.memory_space<vmem>>, vector<128x32xf32>
    %c0_7 = arith.constant 0 : index
    %c0_8 = arith.constant 0 : index
    %5 = vector.load %arg0[%c0_7, %c0_8] : memref<16x32xf32, #tpu.memory_space<vmem>>, vector<16x32xf32>
    %c0_9 = arith.constant 0 : index
    %c0_10 = arith.constant 0 : index
    %c0_11 = arith.constant 0 : index
    %6 = vector.load %arg1[%c0_9, %c0_10, %c0_11] : memref<10x32x128xf32, #tpu.memory_space<vmem>>, vector<1x32x128xf32>
    %7 = vector.shape_cast %6 : vector<1x32x128xf32> to vector<32x128xf32>
    %c0_12 = arith.constant 0 : index
    %c0_13 = arith.constant 0 : index
    %c0_14 = arith.constant 0 : index
    %8 = vector.load %arg2[%c0_12, %c0_13, %c0_14] : memref<10x1x128xf32, #tpu.memory_space<vmem>>, vector<1x1x128xf32>
    %9 = vector.shape_cast %8 : vector<1x1x128xf32> to vector<1x128xf32>
    %c0_15 = arith.constant 0 : index
    %c0_16 = arith.constant 0 : index
    %c0_17 = arith.constant 0 : index
    %10 = vector.load %arg3[%c0_15, %c0_16, %c0_17] : memref<10x1x512xf32, #tpu.memory_space<vmem>>, vector<1x1x512xf32>
    %11 = vector.shape_cast %10 : vector<1x1x512xf32> to vector<1x512xf32>
    %cst_18 = arith.constant dense<0.000000e+00> : vector<16x128xf32>
    %12 = tpu.matmul %5, %7, %cst_18 {dimension_numbers = #tpu.dot_dimension_numbers<[1], [0], [0], [1], [0, 0, 1, 1], [], []>} : vector<16x32xf32>, vector<32x128xf32>, vector<16x128xf32> -> vector<16x128xf32>
    %13 = vector.broadcast %9 : vector<1x128xf32> to vector<16x128xf32>
    %14 = arith.addf %12, %13 : vector<16x128xf32>
    %c0_19 = arith.constant 0 : index
    %c0_20 = arith.constant 0 : index
    %15 = vector.load %arg4[%c0_19, %c0_20] : memref<128x512xf32, #tpu.memory_space<vmem>>, vector<128x512xf32>
    %cst_21 = arith.constant dense<0.000000e+00> : vector<16x512xf32>
    %16 = tpu.matmul %14, %15, %cst_21 {dimension_numbers = #tpu.dot_dimension_numbers<[1], [0], [0], [1], [0, 0, 1, 1], [], []>} : vector<16x128xf32>, vector<128x512xf32>, vector<16x512xf32> -> vector<16x512xf32>
    %c0_22 = arith.constant 0 : index
    %c0_23 = arith.constant 0 : index
    %17 = vector.load %arg5[%c0_22, %c0_23] : memref<128x512xf32, #tpu.memory_space<vmem>>, vector<128x512xf32>
    %cst_24 = arith.constant dense<0.000000e+00> : vector<16x512xf32>
    %18 = tpu.matmul %14, %17, %cst_24 {dimension_numbers = #tpu.dot_dimension_numbers<[1], [0], [0], [1], [0, 0, 1, 1], [], []>} : vector<16x128xf32>, vector<128x512xf32>, vector<16x512xf32> -> vector<16x512xf32>
    %19 = arith.mulf %18, %1 : vector<16x512xf32>
    %cst_25 = arith.constant dense<0.000000e+00> : vector<1x512xf32>
    %20 = tpu.matmul %0, %19, %cst_25 {dimension_numbers = #tpu.dot_dimension_numbers<[1], [0], [0], [1], [0, 0, 1, 1], [], []>} : vector<1x16xf32>, vector<16x512xf32>, vector<1x512xf32> -> vector<1x512xf32>
    %21 = vector.broadcast %20 : vector<1x512xf32> to vector<16x512xf32>
    %22 = arith.addf %16, %21 : vector<16x512xf32>
    %cst_26 = arith.constant 0.000000e+00 : f32
    %23 = vector.broadcast %cst_26 : f32 to vector<16x512xf32>
    %24 = arith.cmpf ogt, %22, %23 : vector<16x512xf32>
    %cst_27 = arith.constant 2.000000e-01 : f32
    %25 = vector.broadcast %cst_27 : f32 to vector<16x512xf32>
    %26 = arith.mulf %25, %22 : vector<16x512xf32>
    %27 = arith.select %24, %22, %26 : vector<16x512xi1>, vector<16x512xf32>
    %28 = vector.broadcast %11 : vector<1x512xf32> to vector<16x512xf32>
    %29 = arith.mulf %27, %28 : vector<16x512xf32>
    %c0_28 = arith.constant 0 : index
    %c0_29 = arith.constant 0 : index
    %30 = vector.load %arg7[%c0_28, %c0_29] : memref<512x128xf32, #tpu.memory_space<vmem>>, vector<512x128xf32>
    %cst_30 = arith.constant dense<0.000000e+00> : vector<16x128xf32>
    %31 = tpu.matmul %29, %30, %cst_30 {dimension_numbers = #tpu.dot_dimension_numbers<[1], [0], [0], [1], [0, 0, 1, 1], [], []>} : vector<16x512xf32>, vector<512x128xf32>, vector<16x128xf32> -> vector<16x128xf32>
    %32 = arith.addf %31, %2 : vector<16x128xf32>
    %c8_i32 = arith.constant 8 : i32
    %33 = tpu.dynamic_rotate %32 by %c8_i32 dim 1 : vector<16x128xf32>, i32 -> vector<16x128xf32>
    %34 = arith.maximumf %32, %33 : vector<16x128xf32>
    %c16_i32 = arith.constant 16 : i32
    %35 = tpu.dynamic_rotate %34 by %c16_i32 dim 1 : vector<16x128xf32>, i32 -> vector<16x128xf32>
    %36 = arith.maximumf %34, %35 : vector<16x128xf32>
    %c32_i32 = arith.constant 32 : i32
    %37 = tpu.dynamic_rotate %36 by %c32_i32 dim 1 : vector<16x128xf32>, i32 -> vector<16x128xf32>
    %38 = arith.maximumf %36, %37 : vector<16x128xf32>
    %c64_i32 = arith.constant 64 : i32
    %39 = tpu.dynamic_rotate %38 by %c64_i32 dim 1 : vector<16x128xf32>, i32 -> vector<16x128xf32>
    %40 = arith.maximumf %38, %39 : vector<16x128xf32>
    %41 = arith.subf %32, %40 : vector<16x128xf32>
    %42 = math.exp %41 : vector<16x128xf32>
    %43 = arith.mulf %42, %3 : vector<16x128xf32>
    %c0_31 = arith.constant 0 : index
    %c0_32 = arith.constant 0 : index
    %44 = vector.load %arg8[%c0_31, %c0_32] : memref<128x128xf32, #tpu.memory_space<vmem>>, vector<128x128xf32>
    %cst_33 = arith.constant dense<0.000000e+00> : vector<16x128xf32>
    %45 = tpu.matmul %43, %44, %cst_33 {dimension_numbers = #tpu.dot_dimension_numbers<[1], [0], [0], [1], [0, 0, 1, 1], [], []>} : vector<16x128xf32>, vector<128x128xf32>, vector<16x128xf32> -> vector<16x128xf32>
    %cst_34 = arith.constant 1.000000e-30 : f32
    %46 = vector.broadcast %cst_34 : f32 to vector<16x128xf32>
    %47 = arith.maximumf %45, %46 : vector<16x128xf32>
    %48 = arith.divf %43, %47 : vector<16x128xf32>
    %49 = vector.extract_strided_slice %14 {offsets = [0, 0], sizes = [16, 32], strides = [1, 1]} : vector<16x128xf32> to vector<16x32xf32>
    %c0_35 = arith.constant 0 : index
    %c0_36 = arith.constant 0 : index
    %50 = vector.load %arg9[%c0_35, %c0_36] : memref<128x16xf32, #tpu.memory_space<vmem>>, vector<128x16xf32>
    %cst_37 = arith.constant dense<0.000000e+00> : vector<128x32xf32>
    %51 = tpu.matmul %50, %49, %cst_37 {dimension_numbers = #tpu.dot_dimension_numbers<[1], [0], [0], [1], [0, 0, 1, 1], [], []>} : vector<128x16xf32>, vector<16x32xf32>, vector<128x32xf32> -> vector<128x32xf32>
    %52 = arith.mulf %51, %4 : vector<128x32xf32>
    %cst_38 = arith.constant dense<0.000000e+00> : vector<16x32xf32>
    %53 = tpu.matmul %48, %52, %cst_38 {dimension_numbers = #tpu.dot_dimension_numbers<[1], [0], [0], [1], [0, 0, 1, 1], [], []>} : vector<16x128xf32>, vector<128x32xf32>, vector<16x32xf32> -> vector<16x32xf32>
    %54 = vector.extract_strided_slice %14 {offsets = [0, 64], sizes = [16, 32], strides = [1, 1]} : vector<16x128xf32> to vector<16x32xf32>
    %55 = arith.addf %53, %54 : vector<16x32xf32>
    %cst_39 = arith.constant 0.000000e+00 : f32
    %56 = vector.broadcast %cst_39 : f32 to vector<16x32xf32>
    %57 = arith.cmpf ogt, %55, %56 : vector<16x32xf32>
    %cst_40 = arith.constant 0.000000e+00 : f32
    %58 = vector.broadcast %cst_40 : f32 to vector<16x32xf32>
    %59 = arith.minimumf %55, %58 : vector<16x32xf32>
    %60 = math.exp %59 : vector<16x32xf32>
    %cst_41 = arith.constant 1.000000e+00 : f32
    %61 = vector.broadcast %cst_41 : f32 to vector<16x32xf32>
    %62 = arith.subf %60, %61 : vector<16x32xf32>
    %63 = arith.select %57, %55, %62 : vector<16x32xi1>, vector<16x32xf32>
    %c1 = arith.constant 1 : index
    %c0_42 = arith.constant 0 : index
    %c0_43 = arith.constant 0 : index
    %64 = vector.load %arg1[%c1, %c0_42, %c0_43] : memref<10x32x128xf32, #tpu.memory_space<vmem>>, vector<1x32x128xf32>
    %65 = vector.shape_cast %64 : vector<1x32x128xf32> to vector<32x128xf32>
    %c1_44 = arith.constant 1 : index
    %c0_45 = arith.constant 0 : index
    %c0_46 = arith.constant 0 : index
    %66 = vector.load %arg2[%c1_44, %c0_45, %c0_46] : memref<10x1x128xf32, #tpu.memory_space<vmem>>, vector<1x1x128xf32>
    %67 = vector.shape_cast %66 : vector<1x1x128xf32> to vector<1x128xf32>
    %c1_47 = arith.constant 1 : index
    %c0_48 = arith.constant 0 : index
    %c0_49 = arith.constant 0 : index
    %68 = vector.load %arg3[%c1_47, %c0_48, %c0_49] : memref<10x1x512xf32, #tpu.memory_space<vmem>>, vector<1x1x512xf32>
    %69 = vector.shape_cast %68 : vector<1x1x512xf32> to vector<1x512xf32>
    %cst_50 = arith.constant dense<0.000000e+00> : vector<16x128xf32>
    %70 = tpu.matmul %63, %65, %cst_50 {dimension_numbers = #tpu.dot_dimension_numbers<[1], [0], [0], [1], [0, 0, 1, 1], [], []>} : vector<16x32xf32>, vector<32x128xf32>, vector<16x128xf32> -> vector<16x128xf32>
    %71 = vector.broadcast %67 : vector<1x128xf32> to vector<16x128xf32>
    %72 = arith.addf %70, %71 : vector<16x128xf32>
    %c0_51 = arith.constant 0 : index
    %c0_52 = arith.constant 0 : index
    %73 = vector.load %arg4[%c0_51, %c0_52] : memref<128x512xf32, #tpu.memory_space<vmem>>, vector<128x512xf32>
    %cst_53 = arith.constant dense<0.000000e+00> : vector<16x512xf32>
    %74 = tpu.matmul %72, %73, %cst_53 {dimension_numbers = #tpu.dot_dimension_numbers<[1], [0], [0], [1], [0, 0, 1, 1], [], []>} : vector<16x128xf32>, vector<128x512xf32>, vector<16x512xf32> -> vector<16x512xf32>
    %c0_54 = arith.constant 0 : index
    %c0_55 = arith.constant 0 : index
    %75 = vector.load %arg5[%c0_54, %c0_55] : memref<128x512xf32, #tpu.memory_space<vmem>>, vector<128x512xf32>
    %cst_56 = arith.constant dense<0.000000e+00> : vector<16x512xf32>
    %76 = tpu.matmul %72, %75, %cst_56 {dimension_numbers = #tpu.dot_dimension_numbers<[1], [0], [0], [1], [0, 0, 1, 1], [], []>} : vector<16x128xf32>, vector<128x512xf32>, vector<16x512xf32> -> vector<16x512xf32>
    %77 = arith.mulf %76, %1 : vector<16x512xf32>
    %cst_57 = arith.constant dense<0.000000e+00> : vector<1x512xf32>
    %78 = tpu.matmul %0, %77, %cst_57 {dimension_numbers = #tpu.dot_dimension_numbers<[1], [0], [0], [1], [0, 0, 1, 1], [], []>} : vector<1x16xf32>, vector<16x512xf32>, vector<1x512xf32> -> vector<1x512xf32>
    %79 = vector.broadcast %78 : vector<1x512xf32> to vector<16x512xf32>
    %80 = arith.addf %74, %79 : vector<16x512xf32>
    %cst_58 = arith.constant 0.000000e+00 : f32
    %81 = vector.broadcast %cst_58 : f32 to vector<16x512xf32>
    %82 = arith.cmpf ogt, %80, %81 : vector<16x512xf32>
    %cst_59 = arith.constant 2.000000e-01 : f32
    %83 = vector.broadcast %cst_59 : f32 to vector<16x512xf32>
    %84 = arith.mulf %83, %80 : vector<16x512xf32>
    %85 = arith.select %82, %80, %84 : vector<16x512xi1>, vector<16x512xf32>
    %86 = vector.broadcast %69 : vector<1x512xf32> to vector<16x512xf32>
    %87 = arith.mulf %85, %86 : vector<16x512xf32>
    %c0_60 = arith.constant 0 : index
    %c0_61 = arith.constant 0 : index
    %88 = vector.load %arg7[%c0_60, %c0_61] : memref<512x128xf32, #tpu.memory_space<vmem>>, vector<512x128xf32>
    %cst_62 = arith.constant dense<0.000000e+00> : vector<16x128xf32>
    %89 = tpu.matmul %87, %88, %cst_62 {dimension_numbers = #tpu.dot_dimension_numbers<[1], [0], [0], [1], [0, 0, 1, 1], [], []>} : vector<16x512xf32>, vector<512x128xf32>, vector<16x128xf32> -> vector<16x128xf32>
    %90 = arith.addf %89, %2 : vector<16x128xf32>
    %c8_i32_63 = arith.constant 8 : i32
    %91 = tpu.dynamic_rotate %90 by %c8_i32_63 dim 1 : vector<16x128xf32>, i32 -> vector<16x128xf32>
    %92 = arith.maximumf %90, %91 : vector<16x128xf32>
    %c16_i32_64 = arith.constant 16 : i32
    %93 = tpu.dynamic_rotate %92 by %c16_i32_64 dim 1 : vector<16x128xf32>, i32 -> vector<16x128xf32>
    %94 = arith.maximumf %92, %93 : vector<16x128xf32>
    %c32_i32_65 = arith.constant 32 : i32
    %95 = tpu.dynamic_rotate %94 by %c32_i32_65 dim 1 : vector<16x128xf32>, i32 -> vector<16x128xf32>
    %96 = arith.maximumf %94, %95 : vector<16x128xf32>
    %c64_i32_66 = arith.constant 64 : i32
    %97 = tpu.dynamic_rotate %96 by %c64_i32_66 dim 1 : vector<16x128xf32>, i32 -> vector<16x128xf32>
    %98 = arith.maximumf %96, %97 : vector<16x128xf32>
    %99 = arith.subf %90, %98 : vector<16x128xf32>
    %100 = math.exp %99 : vector<16x128xf32>
    %101 = arith.mulf %100, %3 : vector<16x128xf32>
    %c0_67 = arith.constant 0 : index
    %c0_68 = arith.constant 0 : index
    %102 = vector.load %arg8[%c0_67, %c0_68] : memref<128x128xf32, #tpu.memory_space<vmem>>, vector<128x128xf32>
    %cst_69 = arith.constant dense<0.000000e+00> : vector<16x128xf32>
    %103 = tpu.matmul %101, %102, %cst_69 {dimension_numbers = #tpu.dot_dimension_numbers<[1], [0], [0], [1], [0, 0, 1, 1], [], []>} : vector<16x128xf32>, vector<128x128xf32>, vector<16x128xf32> -> vector<16x128xf32>
    %cst_70 = arith.constant 1.000000e-30 : f32
    %104 = vector.broadcast %cst_70 : f32 to vector<16x128xf32>
    %105 = arith.maximumf %103, %104 : vector<16x128xf32>
    %106 = arith.divf %101, %105 : vector<16x128xf32>
    %107 = vector.extract_strided_slice %72 {offsets = [0, 0], sizes = [16, 32], strides = [1, 1]} : vector<16x128xf32> to vector<16x32xf32>
    %c0_71 = arith.constant 0 : index
    %c0_72 = arith.constant 0 : index
    %108 = vector.load %arg9[%c0_71, %c0_72] : memref<128x16xf32, #tpu.memory_space<vmem>>, vector<128x16xf32>
    %cst_73 = arith.constant dense<0.000000e+00> : vector<128x32xf32>
    %109 = tpu.matmul %108, %107, %cst_73 {dimension_numbers = #tpu.dot_dimension_numbers<[1], [0], [0], [1], [0, 0, 1, 1], [], []>} : vector<128x16xf32>, vector<16x32xf32>, vector<128x32xf32> -> vector<128x32xf32>
    %110 = arith.mulf %109, %4 : vector<128x32xf32>
    %cst_74 = arith.constant dense<0.000000e+00> : vector<16x32xf32>
    %111 = tpu.matmul %106, %110, %cst_74 {dimension_numbers = #tpu.dot_dimension_numbers<[1], [0], [0], [1], [0, 0, 1, 1], [], []>} : vector<16x128xf32>, vector<128x32xf32>, vector<16x32xf32> -> vector<16x32xf32>
    %112 = vector.extract_strided_slice %72 {offsets = [0, 64], sizes = [16, 32], strides = [1, 1]} : vector<16x128xf32> to vector<16x32xf32>
    %113 = arith.addf %111, %112 : vector<16x32xf32>
    %cst_75 = arith.constant 0.000000e+00 : f32
    %114 = vector.broadcast %cst_75 : f32 to vector<16x32xf32>
    %115 = arith.cmpf ogt, %113, %114 : vector<16x32xf32>
    %cst_76 = arith.constant 0.000000e+00 : f32
    %116 = vector.broadcast %cst_76 : f32 to vector<16x32xf32>
    %117 = arith.minimumf %113, %116 : vector<16x32xf32>
    %118 = math.exp %117 : vector<16x32xf32>
    %cst_77 = arith.constant 1.000000e+00 : f32
    %119 = vector.broadcast %cst_77 : f32 to vector<16x32xf32>
    %120 = arith.subf %118, %119 : vector<16x32xf32>
    %121 = arith.select %115, %113, %120 : vector<16x32xi1>, vector<16x32xf32>
    %c2 = arith.constant 2 : index
    %c0_78 = arith.constant 0 : index
    %c0_79 = arith.constant 0 : index
    %122 = vector.load %arg1[%c2, %c0_78, %c0_79] : memref<10x32x128xf32, #tpu.memory_space<vmem>>, vector<1x32x128xf32>
    %123 = vector.shape_cast %122 : vector<1x32x128xf32> to vector<32x128xf32>
    %c2_80 = arith.constant 2 : index
    %c0_81 = arith.constant 0 : index
    %c0_82 = arith.constant 0 : index
    %124 = vector.load %arg2[%c2_80, %c0_81, %c0_82] : memref<10x1x128xf32, #tpu.memory_space<vmem>>, vector<1x1x128xf32>
    %125 = vector.shape_cast %124 : vector<1x1x128xf32> to vector<1x128xf32>
    %c2_83 = arith.constant 2 : index
    %c0_84 = arith.constant 0 : index
    %c0_85 = arith.constant 0 : index
    %126 = vector.load %arg3[%c2_83, %c0_84, %c0_85] : memref<10x1x512xf32, #tpu.memory_space<vmem>>, vector<1x1x512xf32>
    %127 = vector.shape_cast %126 : vector<1x1x512xf32> to vector<1x512xf32>
    %cst_86 = arith.constant dense<0.000000e+00> : vector<16x128xf32>
    %128 = tpu.matmul %121, %123, %cst_86 {dimension_numbers = #tpu.dot_dimension_numbers<[1], [0], [0], [1], [0, 0, 1, 1], [], []>} : vector<16x32xf32>, vector<32x128xf32>, vector<16x128xf32> -> vector<16x128xf32>
    %129 = vector.broadcast %125 : vector<1x128xf32> to vector<16x128xf32>
    %130 = arith.addf %128, %129 : vector<16x128xf32>
    %c0_87 = arith.constant 0 : index
    %c0_88 = arith.constant 0 : index
    %131 = vector.load %arg4[%c0_87, %c0_88] : memref<128x512xf32, #tpu.memory_space<vmem>>, vector<128x512xf32>
    %cst_89 = arith.constant dense<0.000000e+00> : vector<16x512xf32>
    %132 = tpu.matmul %130, %131, %cst_89 {dimension_numbers = #tpu.dot_dimension_numbers<[1], [0], [0], [1], [0, 0, 1, 1], [], []>} : vector<16x128xf32>, vector<128x512xf32>, vector<16x512xf32> -> vector<16x512xf32>
    %c0_90 = arith.constant 0 : index
    %c0_91 = arith.constant 0 : index
    %133 = vector.load %arg5[%c0_90, %c0_91] : memref<128x512xf32, #tpu.memory_space<vmem>>, vector<128x512xf32>
    %cst_92 = arith.constant dense<0.000000e+00> : vector<16x512xf32>
    %134 = tpu.matmul %130, %133, %cst_92 {dimension_numbers = #tpu.dot_dimension_numbers<[1], [0], [0], [1], [0, 0, 1, 1], [], []>} : vector<16x128xf32>, vector<128x512xf32>, vector<16x512xf32> -> vector<16x512xf32>
    %135 = arith.mulf %134, %1 : vector<16x512xf32>
    %cst_93 = arith.constant dense<0.000000e+00> : vector<1x512xf32>
    %136 = tpu.matmul %0, %135, %cst_93 {dimension_numbers = #tpu.dot_dimension_numbers<[1], [0], [0], [1], [0, 0, 1, 1], [], []>} : vector<1x16xf32>, vector<16x512xf32>, vector<1x512xf32> -> vector<1x512xf32>
    %137 = vector.broadcast %136 : vector<1x512xf32> to vector<16x512xf32>
    %138 = arith.addf %132, %137 : vector<16x512xf32>
    %cst_94 = arith.constant 0.000000e+00 : f32
    %139 = vector.broadcast %cst_94 : f32 to vector<16x512xf32>
    %140 = arith.cmpf ogt, %138, %139 : vector<16x512xf32>
    %cst_95 = arith.constant 2.000000e-01 : f32
    %141 = vector.broadcast %cst_95 : f32 to vector<16x512xf32>
    %142 = arith.mulf %141, %138 : vector<16x512xf32>
    %143 = arith.select %140, %138, %142 : vector<16x512xi1>, vector<16x512xf32>
    %144 = vector.broadcast %127 : vector<1x512xf32> to vector<16x512xf32>
    %145 = arith.mulf %143, %144 : vector<16x512xf32>
    %c0_96 = arith.constant 0 : index
    %c0_97 = arith.constant 0 : index
    %146 = vector.load %arg7[%c0_96, %c0_97] : memref<512x128xf32, #tpu.memory_space<vmem>>, vector<512x128xf32>
    %cst_98 = arith.constant dense<0.000000e+00> : vector<16x128xf32>
    %147 = tpu.matmul %145, %146, %cst_98 {dimension_numbers = #tpu.dot_dimension_numbers<[1], [0], [0], [1], [0, 0, 1, 1], [], []>} : vector<16x512xf32>, vector<512x128xf32>, vector<16x128xf32> -> vector<16x128xf32>
    %148 = arith.addf %147, %2 : vector<16x128xf32>
    %c8_i32_99 = arith.constant 8 : i32
    %149 = tpu.dynamic_rotate %148 by %c8_i32_99 dim 1 : vector<16x128xf32>, i32 -> vector<16x128xf32>
    %150 = arith.maximumf %148, %149 : vector<16x128xf32>
    %c16_i32_100 = arith.constant 16 : i32
    %151 = tpu.dynamic_rotate %150 by %c16_i32_100 dim 1 : vector<16x128xf32>, i32 -> vector<16x128xf32>
    %152 = arith.maximumf %150, %151 : vector<16x128xf32>
    %c32_i32_101 = arith.constant 32 : i32
    %153 = tpu.dynamic_rotate %152 by %c32_i32_101 dim 1 : vector<16x128xf32>, i32 -> vector<16x128xf32>
    %154 = arith.maximumf %152, %153 : vector<16x128xf32>
    %c64_i32_102 = arith.constant 64 : i32
    %155 = tpu.dynamic_rotate %154 by %c64_i32_102 dim 1 : vector<16x128xf32>, i32 -> vector<16x128xf32>
    %156 = arith.maximumf %154, %155 : vector<16x128xf32>
    %157 = arith.subf %148, %156 : vector<16x128xf32>
    %158 = math.exp %157 : vector<16x128xf32>
    %159 = arith.mulf %158, %3 : vector<16x128xf32>
    %c0_103 = arith.constant 0 : index
    %c0_104 = arith.constant 0 : index
    %160 = vector.load %arg8[%c0_103, %c0_104] : memref<128x128xf32, #tpu.memory_space<vmem>>, vector<128x128xf32>
    %cst_105 = arith.constant dense<0.000000e+00> : vector<16x128xf32>
    %161 = tpu.matmul %159, %160, %cst_105 {dimension_numbers = #tpu.dot_dimension_numbers<[1], [0], [0], [1], [0, 0, 1, 1], [], []>} : vector<16x128xf32>, vector<128x128xf32>, vector<16x128xf32> -> vector<16x128xf32>
    %cst_106 = arith.constant 1.000000e-30 : f32
    %162 = vector.broadcast %cst_106 : f32 to vector<16x128xf32>
    %163 = arith.maximumf %161, %162 : vector<16x128xf32>
    %164 = arith.divf %159, %163 : vector<16x128xf32>
    %165 = vector.extract_strided_slice %130 {offsets = [0, 0], sizes = [16, 32], strides = [1, 1]} : vector<16x128xf32> to vector<16x32xf32>
    %c0_107 = arith.constant 0 : index
    %c0_108 = arith.constant 0 : index
    %166 = vector.load %arg9[%c0_107, %c0_108] : memref<128x16xf32, #tpu.memory_space<vmem>>, vector<128x16xf32>
    %cst_109 = arith.constant dense<0.000000e+00> : vector<128x32xf32>
    %167 = tpu.matmul %166, %165, %cst_109 {dimension_numbers = #tpu.dot_dimension_numbers<[1], [0], [0], [1], [0, 0, 1, 1], [], []>} : vector<128x16xf32>, vector<16x32xf32>, vector<128x32xf32> -> vector<128x32xf32>
    %168 = arith.mulf %167, %4 : vector<128x32xf32>
    %cst_110 = arith.constant dense<0.000000e+00> : vector<16x32xf32>
    %169 = tpu.matmul %164, %168, %cst_110 {dimension_numbers = #tpu.dot_dimension_numbers<[1], [0], [0], [1], [0, 0, 1, 1], [], []>} : vector<16x128xf32>, vector<128x32xf32>, vector<16x32xf32> -> vector<16x32xf32>
    %170 = vector.extract_strided_slice %130 {offsets = [0, 64], sizes = [16, 32], strides = [1, 1]} : vector<16x128xf32> to vector<16x32xf32>
    %171 = arith.addf %169, %170 : vector<16x32xf32>
    %cst_111 = arith.constant 0.000000e+00 : f32
    %172 = vector.broadcast %cst_111 : f32 to vector<16x32xf32>
    %173 = arith.cmpf ogt, %171, %172 : vector<16x32xf32>
    %cst_112 = arith.constant 0.000000e+00 : f32
    %174 = vector.broadcast %cst_112 : f32 to vector<16x32xf32>
    %175 = arith.minimumf %171, %174 : vector<16x32xf32>
    %176 = math.exp %175 : vector<16x32xf32>
    %cst_113 = arith.constant 1.000000e+00 : f32
    %177 = vector.broadcast %cst_113 : f32 to vector<16x32xf32>
    %178 = arith.subf %176, %177 : vector<16x32xf32>
    %179 = arith.select %173, %171, %178 : vector<16x32xi1>, vector<16x32xf32>
    %c3 = arith.constant 3 : index
    %c0_114 = arith.constant 0 : index
    %c0_115 = arith.constant 0 : index
    %180 = vector.load %arg1[%c3, %c0_114, %c0_115] : memref<10x32x128xf32, #tpu.memory_space<vmem>>, vector<1x32x128xf32>
    %181 = vector.shape_cast %180 : vector<1x32x128xf32> to vector<32x128xf32>
    %c3_116 = arith.constant 3 : index
    %c0_117 = arith.constant 0 : index
    %c0_118 = arith.constant 0 : index
    %182 = vector.load %arg2[%c3_116, %c0_117, %c0_118] : memref<10x1x128xf32, #tpu.memory_space<vmem>>, vector<1x1x128xf32>
    %183 = vector.shape_cast %182 : vector<1x1x128xf32> to vector<1x128xf32>
    %c3_119 = arith.constant 3 : index
    %c0_120 = arith.constant 0 : index
    %c0_121 = arith.constant 0 : index
    %184 = vector.load %arg3[%c3_119, %c0_120, %c0_121] : memref<10x1x512xf32, #tpu.memory_space<vmem>>, vector<1x1x512xf32>
    %185 = vector.shape_cast %184 : vector<1x1x512xf32> to vector<1x512xf32>
    %cst_122 = arith.constant dense<0.000000e+00> : vector<16x128xf32>
    %186 = tpu.matmul %179, %181, %cst_122 {dimension_numbers = #tpu.dot_dimension_numbers<[1], [0], [0], [1], [0, 0, 1, 1], [], []>} : vector<16x32xf32>, vector<32x128xf32>, vector<16x128xf32> -> vector<16x128xf32>
    %187 = vector.broadcast %183 : vector<1x128xf32> to vector<16x128xf32>
    %188 = arith.addf %186, %187 : vector<16x128xf32>
    %c0_123 = arith.constant 0 : index
    %c0_124 = arith.constant 0 : index
    %189 = vector.load %arg4[%c0_123, %c0_124] : memref<128x512xf32, #tpu.memory_space<vmem>>, vector<128x512xf32>
    %cst_125 = arith.constant dense<0.000000e+00> : vector<16x512xf32>
    %190 = tpu.matmul %188, %189, %cst_125 {dimension_numbers = #tpu.dot_dimension_numbers<[1], [0], [0], [1], [0, 0, 1, 1], [], []>} : vector<16x128xf32>, vector<128x512xf32>, vector<16x512xf32> -> vector<16x512xf32>
    %c0_126 = arith.constant 0 : index
    %c0_127 = arith.constant 0 : index
    %191 = vector.load %arg5[%c0_126, %c0_127] : memref<128x512xf32, #tpu.memory_space<vmem>>, vector<128x512xf32>
    %cst_128 = arith.constant dense<0.000000e+00> : vector<16x512xf32>
    %192 = tpu.matmul %188, %191, %cst_128 {dimension_numbers = #tpu.dot_dimension_numbers<[1], [0], [0], [1], [0, 0, 1, 1], [], []>} : vector<16x128xf32>, vector<128x512xf32>, vector<16x512xf32> -> vector<16x512xf32>
    %193 = arith.mulf %192, %1 : vector<16x512xf32>
    %cst_129 = arith.constant dense<0.000000e+00> : vector<1x512xf32>
    %194 = tpu.matmul %0, %193, %cst_129 {dimension_numbers = #tpu.dot_dimension_numbers<[1], [0], [0], [1], [0, 0, 1, 1], [], []>} : vector<1x16xf32>, vector<16x512xf32>, vector<1x512xf32> -> vector<1x512xf32>
    %195 = vector.broadcast %194 : vector<1x512xf32> to vector<16x512xf32>
    %196 = arith.addf %190, %195 : vector<16x512xf32>
    %cst_130 = arith.constant 0.000000e+00 : f32
    %197 = vector.broadcast %cst_130 : f32 to vector<16x512xf32>
    %198 = arith.cmpf ogt, %196, %197 : vector<16x512xf32>
    %cst_131 = arith.constant 2.000000e-01 : f32
    %199 = vector.broadcast %cst_131 : f32 to vector<16x512xf32>
    %200 = arith.mulf %199, %196 : vector<16x512xf32>
    %201 = arith.select %198, %196, %200 : vector<16x512xi1>, vector<16x512xf32>
    %202 = vector.broadcast %185 : vector<1x512xf32> to vector<16x512xf32>
    %203 = arith.mulf %201, %202 : vector<16x512xf32>
    %c0_132 = arith.constant 0 : index
    %c0_133 = arith.constant 0 : index
    %204 = vector.load %arg7[%c0_132, %c0_133] : memref<512x128xf32, #tpu.memory_space<vmem>>, vector<512x128xf32>
    %cst_134 = arith.constant dense<0.000000e+00> : vector<16x128xf32>
    %205 = tpu.matmul %203, %204, %cst_134 {dimension_numbers = #tpu.dot_dimension_numbers<[1], [0], [0], [1], [0, 0, 1, 1], [], []>} : vector<16x512xf32>, vector<512x128xf32>, vector<16x128xf32> -> vector<16x128xf32>
    %206 = arith.addf %205, %2 : vector<16x128xf32>
    %c8_i32_135 = arith.constant 8 : i32
    %207 = tpu.dynamic_rotate %206 by %c8_i32_135 dim 1 : vector<16x128xf32>, i32 -> vector<16x128xf32>
    %208 = arith.maximumf %206, %207 : vector<16x128xf32>
    %c16_i32_136 = arith.constant 16 : i32
    %209 = tpu.dynamic_rotate %208 by %c16_i32_136 dim 1 : vector<16x128xf32>, i32 -> vector<16x128xf32>
    %210 = arith.maximumf %208, %209 : vector<16x128xf32>
    %c32_i32_137 = arith.constant 32 : i32
    %211 = tpu.dynamic_rotate %210 by %c32_i32_137 dim 1 : vector<16x128xf32>, i32 -> vector<16x128xf32>
    %212 = arith.maximumf %210, %211 : vector<16x128xf32>
    %c64_i32_138 = arith.constant 64 : i32
    %213 = tpu.dynamic_rotate %212 by %c64_i32_138 dim 1 : vector<16x128xf32>, i32 -> vector<16x128xf32>
    %214 = arith.maximumf %212, %213 : vector<16x128xf32>
    %215 = arith.subf %206, %214 : vector<16x128xf32>
    %216 = math.exp %215 : vector<16x128xf32>
    %217 = arith.mulf %216, %3 : vector<16x128xf32>
    %c0_139 = arith.constant 0 : index
    %c0_140 = arith.constant 0 : index
    %218 = vector.load %arg8[%c0_139, %c0_140] : memref<128x128xf32, #tpu.memory_space<vmem>>, vector<128x128xf32>
    %cst_141 = arith.constant dense<0.000000e+00> : vector<16x128xf32>
    %219 = tpu.matmul %217, %218, %cst_141 {dimension_numbers = #tpu.dot_dimension_numbers<[1], [0], [0], [1], [0, 0, 1, 1], [], []>} : vector<16x128xf32>, vector<128x128xf32>, vector<16x128xf32> -> vector<16x128xf32>
    %cst_142 = arith.constant 1.000000e-30 : f32
    %220 = vector.broadcast %cst_142 : f32 to vector<16x128xf32>
    %221 = arith.maximumf %219, %220 : vector<16x128xf32>
    %222 = arith.divf %217, %221 : vector<16x128xf32>
    %223 = vector.extract_strided_slice %188 {offsets = [0, 0], sizes = [16, 32], strides = [1, 1]} : vector<16x128xf32> to vector<16x32xf32>
    %c0_143 = arith.constant 0 : index
    %c0_144 = arith.constant 0 : index
    %224 = vector.load %arg9[%c0_143, %c0_144] : memref<128x16xf32, #tpu.memory_space<vmem>>, vector<128x16xf32>
    %cst_145 = arith.constant dense<0.000000e+00> : vector<128x32xf32>
    %225 = tpu.matmul %224, %223, %cst_145 {dimension_numbers = #tpu.dot_dimension_numbers<[1], [0], [0], [1], [0, 0, 1, 1], [], []>} : vector<128x16xf32>, vector<16x32xf32>, vector<128x32xf32> -> vector<128x32xf32>
    %226 = arith.mulf %225, %4 : vector<128x32xf32>
    %cst_146 = arith.constant dense<0.000000e+00> : vector<16x32xf32>
    %227 = tpu.matmul %222, %226, %cst_146 {dimension_numbers = #tpu.dot_dimension_numbers<[1], [0], [0], [1], [0, 0, 1, 1], [], []>} : vector<16x128xf32>, vector<128x32xf32>, vector<16x32xf32> -> vector<16x32xf32>
    %228 = vector.extract_strided_slice %188 {offsets = [0, 64], sizes = [16, 32], strides = [1, 1]} : vector<16x128xf32> to vector<16x32xf32>
    %229 = arith.addf %227, %228 : vector<16x32xf32>
    %cst_147 = arith.constant 0.000000e+00 : f32
    %230 = vector.broadcast %cst_147 : f32 to vector<16x32xf32>
    %231 = arith.cmpf ogt, %229, %230 : vector<16x32xf32>
    %cst_148 = arith.constant 0.000000e+00 : f32
    %232 = vector.broadcast %cst_148 : f32 to vector<16x32xf32>
    %233 = arith.minimumf %229, %232 : vector<16x32xf32>
    %234 = math.exp %233 : vector<16x32xf32>
    %cst_149 = arith.constant 1.000000e+00 : f32
    %235 = vector.broadcast %cst_149 : f32 to vector<16x32xf32>
    %236 = arith.subf %234, %235 : vector<16x32xf32>
    %237 = arith.select %231, %229, %236 : vector<16x32xi1>, vector<16x32xf32>
    %c4 = arith.constant 4 : index
    %c0_150 = arith.constant 0 : index
    %c0_151 = arith.constant 0 : index
    %238 = vector.load %arg1[%c4, %c0_150, %c0_151] : memref<10x32x128xf32, #tpu.memory_space<vmem>>, vector<1x32x128xf32>
    %239 = vector.shape_cast %238 : vector<1x32x128xf32> to vector<32x128xf32>
    %c4_152 = arith.constant 4 : index
    %c0_153 = arith.constant 0 : index
    %c0_154 = arith.constant 0 : index
    %240 = vector.load %arg2[%c4_152, %c0_153, %c0_154] : memref<10x1x128xf32, #tpu.memory_space<vmem>>, vector<1x1x128xf32>
    %241 = vector.shape_cast %240 : vector<1x1x128xf32> to vector<1x128xf32>
    %c4_155 = arith.constant 4 : index
    %c0_156 = arith.constant 0 : index
    %c0_157 = arith.constant 0 : index
    %242 = vector.load %arg3[%c4_155, %c0_156, %c0_157] : memref<10x1x512xf32, #tpu.memory_space<vmem>>, vector<1x1x512xf32>
    %243 = vector.shape_cast %242 : vector<1x1x512xf32> to vector<1x512xf32>
    %cst_158 = arith.constant dense<0.000000e+00> : vector<16x128xf32>
    %244 = tpu.matmul %237, %239, %cst_158 {dimension_numbers = #tpu.dot_dimension_numbers<[1], [0], [0], [1], [0, 0, 1, 1], [], []>} : vector<16x32xf32>, vector<32x128xf32>, vector<16x128xf32> -> vector<16x128xf32>
    %245 = vector.broadcast %241 : vector<1x128xf32> to vector<16x128xf32>
    %246 = arith.addf %244, %245 : vector<16x128xf32>
    %c0_159 = arith.constant 0 : index
    %c0_160 = arith.constant 0 : index
    %247 = vector.load %arg4[%c0_159, %c0_160] : memref<128x512xf32, #tpu.memory_space<vmem>>, vector<128x512xf32>
    %cst_161 = arith.constant dense<0.000000e+00> : vector<16x512xf32>
    %248 = tpu.matmul %246, %247, %cst_161 {dimension_numbers = #tpu.dot_dimension_numbers<[1], [0], [0], [1], [0, 0, 1, 1], [], []>} : vector<16x128xf32>, vector<128x512xf32>, vector<16x512xf32> -> vector<16x512xf32>
    %c0_162 = arith.constant 0 : index
    %c0_163 = arith.constant 0 : index
    %249 = vector.load %arg5[%c0_162, %c0_163] : memref<128x512xf32, #tpu.memory_space<vmem>>, vector<128x512xf32>
    %cst_164 = arith.constant dense<0.000000e+00> : vector<16x512xf32>
    %250 = tpu.matmul %246, %249, %cst_164 {dimension_numbers = #tpu.dot_dimension_numbers<[1], [0], [0], [1], [0, 0, 1, 1], [], []>} : vector<16x128xf32>, vector<128x512xf32>, vector<16x512xf32> -> vector<16x512xf32>
    %251 = arith.mulf %250, %1 : vector<16x512xf32>
    %cst_165 = arith.constant dense<0.000000e+00> : vector<1x512xf32>
    %252 = tpu.matmul %0, %251, %cst_165 {dimension_numbers = #tpu.dot_dimension_numbers<[1], [0], [0], [1], [0, 0, 1, 1], [], []>} : vector<1x16xf32>, vector<16x512xf32>, vector<1x512xf32> -> vector<1x512xf32>
    %253 = vector.broadcast %252 : vector<1x512xf32> to vector<16x512xf32>
    %254 = arith.addf %248, %253 : vector<16x512xf32>
    %cst_166 = arith.constant 0.000000e+00 : f32
    %255 = vector.broadcast %cst_166 : f32 to vector<16x512xf32>
    %256 = arith.cmpf ogt, %254, %255 : vector<16x512xf32>
    %cst_167 = arith.constant 2.000000e-01 : f32
    %257 = vector.broadcast %cst_167 : f32 to vector<16x512xf32>
    %258 = arith.mulf %257, %254 : vector<16x512xf32>
    %259 = arith.select %256, %254, %258 : vector<16x512xi1>, vector<16x512xf32>
    %260 = vector.broadcast %243 : vector<1x512xf32> to vector<16x512xf32>
    %261 = arith.mulf %259, %260 : vector<16x512xf32>
    %c0_168 = arith.constant 0 : index
    %c0_169 = arith.constant 0 : index
    %262 = vector.load %arg7[%c0_168, %c0_169] : memref<512x128xf32, #tpu.memory_space<vmem>>, vector<512x128xf32>
    %cst_170 = arith.constant dense<0.000000e+00> : vector<16x128xf32>
    %263 = tpu.matmul %261, %262, %cst_170 {dimension_numbers = #tpu.dot_dimension_numbers<[1], [0], [0], [1], [0, 0, 1, 1], [], []>} : vector<16x512xf32>, vector<512x128xf32>, vector<16x128xf32> -> vector<16x128xf32>
    %264 = arith.addf %263, %2 : vector<16x128xf32>
    %c8_i32_171 = arith.constant 8 : i32
    %265 = tpu.dynamic_rotate %264 by %c8_i32_171 dim 1 : vector<16x128xf32>, i32 -> vector<16x128xf32>
    %266 = arith.maximumf %264, %265 : vector<16x128xf32>
    %c16_i32_172 = arith.constant 16 : i32
    %267 = tpu.dynamic_rotate %266 by %c16_i32_172 dim 1 : vector<16x128xf32>, i32 -> vector<16x128xf32>
    %268 = arith.maximumf %266, %267 : vector<16x128xf32>
    %c32_i32_173 = arith.constant 32 : i32
    %269 = tpu.dynamic_rotate %268 by %c32_i32_173 dim 1 : vector<16x128xf32>, i32 -> vector<16x128xf32>
    %270 = arith.maximumf %268, %269 : vector<16x128xf32>
    %c64_i32_174 = arith.constant 64 : i32
    %271 = tpu.dynamic_rotate %270 by %c64_i32_174 dim 1 : vector<16x128xf32>, i32 -> vector<16x128xf32>
    %272 = arith.maximumf %270, %271 : vector<16x128xf32>
    %273 = arith.subf %264, %272 : vector<16x128xf32>
    %274 = math.exp %273 : vector<16x128xf32>
    %275 = arith.mulf %274, %3 : vector<16x128xf32>
    %c0_175 = arith.constant 0 : index
    %c0_176 = arith.constant 0 : index
    %276 = vector.load %arg8[%c0_175, %c0_176] : memref<128x128xf32, #tpu.memory_space<vmem>>, vector<128x128xf32>
    %cst_177 = arith.constant dense<0.000000e+00> : vector<16x128xf32>
    %277 = tpu.matmul %275, %276, %cst_177 {dimension_numbers = #tpu.dot_dimension_numbers<[1], [0], [0], [1], [0, 0, 1, 1], [], []>} : vector<16x128xf32>, vector<128x128xf32>, vector<16x128xf32> -> vector<16x128xf32>
    %cst_178 = arith.constant 1.000000e-30 : f32
    %278 = vector.broadcast %cst_178 : f32 to vector<16x128xf32>
    %279 = arith.maximumf %277, %278 : vector<16x128xf32>
    %280 = arith.divf %275, %279 : vector<16x128xf32>
    %281 = vector.extract_strided_slice %246 {offsets = [0, 0], sizes = [16, 32], strides = [1, 1]} : vector<16x128xf32> to vector<16x32xf32>
    %c0_179 = arith.constant 0 : index
    %c0_180 = arith.constant 0 : index
    %282 = vector.load %arg9[%c0_179, %c0_180] : memref<128x16xf32, #tpu.memory_space<vmem>>, vector<128x16xf32>
    %cst_181 = arith.constant dense<0.000000e+00> : vector<128x32xf32>
    %283 = tpu.matmul %282, %281, %cst_181 {dimension_numbers = #tpu.dot_dimension_numbers<[1], [0], [0], [1], [0, 0, 1, 1], [], []>} : vector<128x16xf32>, vector<16x32xf32>, vector<128x32xf32> -> vector<128x32xf32>
    %284 = arith.mulf %283, %4 : vector<128x32xf32>
    %cst_182 = arith.constant dense<0.000000e+00> : vector<16x32xf32>
    %285 = tpu.matmul %280, %284, %cst_182 {dimension_numbers = #tpu.dot_dimension_numbers<[1], [0], [0], [1], [0, 0, 1, 1], [], []>} : vector<16x128xf32>, vector<128x32xf32>, vector<16x32xf32> -> vector<16x32xf32>
    %286 = vector.extract_strided_slice %246 {offsets = [0, 64], sizes = [16, 32], strides = [1, 1]} : vector<16x128xf32> to vector<16x32xf32>
    %287 = arith.addf %285, %286 : vector<16x32xf32>
    %cst_183 = arith.constant 0.000000e+00 : f32
    %288 = vector.broadcast %cst_183 : f32 to vector<16x32xf32>
    %289 = arith.cmpf ogt, %287, %288 : vector<16x32xf32>
    %cst_184 = arith.constant 0.000000e+00 : f32
    %290 = vector.broadcast %cst_184 : f32 to vector<16x32xf32>
    %291 = arith.minimumf %287, %290 : vector<16x32xf32>
    %292 = math.exp %291 : vector<16x32xf32>
    %cst_185 = arith.constant 1.000000e+00 : f32
    %293 = vector.broadcast %cst_185 : f32 to vector<16x32xf32>
    %294 = arith.subf %292, %293 : vector<16x32xf32>
    %295 = arith.select %289, %287, %294 : vector<16x32xi1>, vector<16x32xf32>
    %c5 = arith.constant 5 : index
    %c0_186 = arith.constant 0 : index
    %c0_187 = arith.constant 0 : index
    %296 = vector.load %arg1[%c5, %c0_186, %c0_187] : memref<10x32x128xf32, #tpu.memory_space<vmem>>, vector<1x32x128xf32>
    %297 = vector.shape_cast %296 : vector<1x32x128xf32> to vector<32x128xf32>
    %c5_188 = arith.constant 5 : index
    %c0_189 = arith.constant 0 : index
    %c0_190 = arith.constant 0 : index
    %298 = vector.load %arg2[%c5_188, %c0_189, %c0_190] : memref<10x1x128xf32, #tpu.memory_space<vmem>>, vector<1x1x128xf32>
    %299 = vector.shape_cast %298 : vector<1x1x128xf32> to vector<1x128xf32>
    %c5_191 = arith.constant 5 : index
    %c0_192 = arith.constant 0 : index
    %c0_193 = arith.constant 0 : index
    %300 = vector.load %arg3[%c5_191, %c0_192, %c0_193] : memref<10x1x512xf32, #tpu.memory_space<vmem>>, vector<1x1x512xf32>
    %301 = vector.shape_cast %300 : vector<1x1x512xf32> to vector<1x512xf32>
    %cst_194 = arith.constant dense<0.000000e+00> : vector<16x128xf32>
    %302 = tpu.matmul %295, %297, %cst_194 {dimension_numbers = #tpu.dot_dimension_numbers<[1], [0], [0], [1], [0, 0, 1, 1], [], []>} : vector<16x32xf32>, vector<32x128xf32>, vector<16x128xf32> -> vector<16x128xf32>
    %303 = vector.broadcast %299 : vector<1x128xf32> to vector<16x128xf32>
    %304 = arith.addf %302, %303 : vector<16x128xf32>
    %c0_195 = arith.constant 0 : index
    %c0_196 = arith.constant 0 : index
    %305 = vector.load %arg4[%c0_195, %c0_196] : memref<128x512xf32, #tpu.memory_space<vmem>>, vector<128x512xf32>
    %cst_197 = arith.constant dense<0.000000e+00> : vector<16x512xf32>
    %306 = tpu.matmul %304, %305, %cst_197 {dimension_numbers = #tpu.dot_dimension_numbers<[1], [0], [0], [1], [0, 0, 1, 1], [], []>} : vector<16x128xf32>, vector<128x512xf32>, vector<16x512xf32> -> vector<16x512xf32>
    %c0_198 = arith.constant 0 : index
    %c0_199 = arith.constant 0 : index
    %307 = vector.load %arg5[%c0_198, %c0_199] : memref<128x512xf32, #tpu.memory_space<vmem>>, vector<128x512xf32>
    %cst_200 = arith.constant dense<0.000000e+00> : vector<16x512xf32>
    %308 = tpu.matmul %304, %307, %cst_200 {dimension_numbers = #tpu.dot_dimension_numbers<[1], [0], [0], [1], [0, 0, 1, 1], [], []>} : vector<16x128xf32>, vector<128x512xf32>, vector<16x512xf32> -> vector<16x512xf32>
    %309 = arith.mulf %308, %1 : vector<16x512xf32>
    %cst_201 = arith.constant dense<0.000000e+00> : vector<1x512xf32>
    %310 = tpu.matmul %0, %309, %cst_201 {dimension_numbers = #tpu.dot_dimension_numbers<[1], [0], [0], [1], [0, 0, 1, 1], [], []>} : vector<1x16xf32>, vector<16x512xf32>, vector<1x512xf32> -> vector<1x512xf32>
    %311 = vector.broadcast %310 : vector<1x512xf32> to vector<16x512xf32>
    %312 = arith.addf %306, %311 : vector<16x512xf32>
    %cst_202 = arith.constant 0.000000e+00 : f32
    %313 = vector.broadcast %cst_202 : f32 to vector<16x512xf32>
    %314 = arith.cmpf ogt, %312, %313 : vector<16x512xf32>
    %cst_203 = arith.constant 2.000000e-01 : f32
    %315 = vector.broadcast %cst_203 : f32 to vector<16x512xf32>
    %316 = arith.mulf %315, %312 : vector<16x512xf32>
    %317 = arith.select %314, %312, %316 : vector<16x512xi1>, vector<16x512xf32>
    %318 = vector.broadcast %301 : vector<1x512xf32> to vector<16x512xf32>
    %319 = arith.mulf %317, %318 : vector<16x512xf32>
    %c0_204 = arith.constant 0 : index
    %c0_205 = arith.constant 0 : index
    %320 = vector.load %arg7[%c0_204, %c0_205] : memref<512x128xf32, #tpu.memory_space<vmem>>, vector<512x128xf32>
    %cst_206 = arith.constant dense<0.000000e+00> : vector<16x128xf32>
    %321 = tpu.matmul %319, %320, %cst_206 {dimension_numbers = #tpu.dot_dimension_numbers<[1], [0], [0], [1], [0, 0, 1, 1], [], []>} : vector<16x512xf32>, vector<512x128xf32>, vector<16x128xf32> -> vector<16x128xf32>
    %322 = arith.addf %321, %2 : vector<16x128xf32>
    %c8_i32_207 = arith.constant 8 : i32
    %323 = tpu.dynamic_rotate %322 by %c8_i32_207 dim 1 : vector<16x128xf32>, i32 -> vector<16x128xf32>
    %324 = arith.maximumf %322, %323 : vector<16x128xf32>
    %c16_i32_208 = arith.constant 16 : i32
    %325 = tpu.dynamic_rotate %324 by %c16_i32_208 dim 1 : vector<16x128xf32>, i32 -> vector<16x128xf32>
    %326 = arith.maximumf %324, %325 : vector<16x128xf32>
    %c32_i32_209 = arith.constant 32 : i32
    %327 = tpu.dynamic_rotate %326 by %c32_i32_209 dim 1 : vector<16x128xf32>, i32 -> vector<16x128xf32>
    %328 = arith.maximumf %326, %327 : vector<16x128xf32>
    %c64_i32_210 = arith.constant 64 : i32
    %329 = tpu.dynamic_rotate %328 by %c64_i32_210 dim 1 : vector<16x128xf32>, i32 -> vector<16x128xf32>
    %330 = arith.maximumf %328, %329 : vector<16x128xf32>
    %331 = arith.subf %322, %330 : vector<16x128xf32>
    %332 = math.exp %331 : vector<16x128xf32>
    %333 = arith.mulf %332, %3 : vector<16x128xf32>
    %c0_211 = arith.constant 0 : index
    %c0_212 = arith.constant 0 : index
    %334 = vector.load %arg8[%c0_211, %c0_212] : memref<128x128xf32, #tpu.memory_space<vmem>>, vector<128x128xf32>
    %cst_213 = arith.constant dense<0.000000e+00> : vector<16x128xf32>
    %335 = tpu.matmul %333, %334, %cst_213 {dimension_numbers = #tpu.dot_dimension_numbers<[1], [0], [0], [1], [0, 0, 1, 1], [], []>} : vector<16x128xf32>, vector<128x128xf32>, vector<16x128xf32> -> vector<16x128xf32>
    %cst_214 = arith.constant 1.000000e-30 : f32
    %336 = vector.broadcast %cst_214 : f32 to vector<16x128xf32>
    %337 = arith.maximumf %335, %336 : vector<16x128xf32>
    %338 = arith.divf %333, %337 : vector<16x128xf32>
    %339 = vector.extract_strided_slice %304 {offsets = [0, 0], sizes = [16, 32], strides = [1, 1]} : vector<16x128xf32> to vector<16x32xf32>
    %c0_215 = arith.constant 0 : index
    %c0_216 = arith.constant 0 : index
    %340 = vector.load %arg9[%c0_215, %c0_216] : memref<128x16xf32, #tpu.memory_space<vmem>>, vector<128x16xf32>
    %cst_217 = arith.constant dense<0.000000e+00> : vector<128x32xf32>
    %341 = tpu.matmul %340, %339, %cst_217 {dimension_numbers = #tpu.dot_dimension_numbers<[1], [0], [0], [1], [0, 0, 1, 1], [], []>} : vector<128x16xf32>, vector<16x32xf32>, vector<128x32xf32> -> vector<128x32xf32>
    %342 = arith.mulf %341, %4 : vector<128x32xf32>
    %cst_218 = arith.constant dense<0.000000e+00> : vector<16x32xf32>
    %343 = tpu.matmul %338, %342, %cst_218 {dimension_numbers = #tpu.dot_dimension_numbers<[1], [0], [0], [1], [0, 0, 1, 1], [], []>} : vector<16x128xf32>, vector<128x32xf32>, vector<16x32xf32> -> vector<16x32xf32>
    %344 = vector.extract_strided_slice %304 {offsets = [0, 64], sizes = [16, 32], strides = [1, 1]} : vector<16x128xf32> to vector<16x32xf32>
    %345 = arith.addf %343, %344 : vector<16x32xf32>
    %cst_219 = arith.constant 0.000000e+00 : f32
    %346 = vector.broadcast %cst_219 : f32 to vector<16x32xf32>
    %347 = arith.cmpf ogt, %345, %346 : vector<16x32xf32>
    %cst_220 = arith.constant 0.000000e+00 : f32
    %348 = vector.broadcast %cst_220 : f32 to vector<16x32xf32>
    %349 = arith.minimumf %345, %348 : vector<16x32xf32>
    %350 = math.exp %349 : vector<16x32xf32>
    %cst_221 = arith.constant 1.000000e+00 : f32
    %351 = vector.broadcast %cst_221 : f32 to vector<16x32xf32>
    %352 = arith.subf %350, %351 : vector<16x32xf32>
    %353 = arith.select %347, %345, %352 : vector<16x32xi1>, vector<16x32xf32>
    %c6 = arith.constant 6 : index
    %c0_222 = arith.constant 0 : index
    %c0_223 = arith.constant 0 : index
    %354 = vector.load %arg1[%c6, %c0_222, %c0_223] : memref<10x32x128xf32, #tpu.memory_space<vmem>>, vector<1x32x128xf32>
    %355 = vector.shape_cast %354 : vector<1x32x128xf32> to vector<32x128xf32>
    %c6_224 = arith.constant 6 : index
    %c0_225 = arith.constant 0 : index
    %c0_226 = arith.constant 0 : index
    %356 = vector.load %arg2[%c6_224, %c0_225, %c0_226] : memref<10x1x128xf32, #tpu.memory_space<vmem>>, vector<1x1x128xf32>
    %357 = vector.shape_cast %356 : vector<1x1x128xf32> to vector<1x128xf32>
    %c6_227 = arith.constant 6 : index
    %c0_228 = arith.constant 0 : index
    %c0_229 = arith.constant 0 : index
    %358 = vector.load %arg3[%c6_227, %c0_228, %c0_229] : memref<10x1x512xf32, #tpu.memory_space<vmem>>, vector<1x1x512xf32>
    %359 = vector.shape_cast %358 : vector<1x1x512xf32> to vector<1x512xf32>
    %cst_230 = arith.constant dense<0.000000e+00> : vector<16x128xf32>
    %360 = tpu.matmul %353, %355, %cst_230 {dimension_numbers = #tpu.dot_dimension_numbers<[1], [0], [0], [1], [0, 0, 1, 1], [], []>} : vector<16x32xf32>, vector<32x128xf32>, vector<16x128xf32> -> vector<16x128xf32>
    %361 = vector.broadcast %357 : vector<1x128xf32> to vector<16x128xf32>
    %362 = arith.addf %360, %361 : vector<16x128xf32>
    %c0_231 = arith.constant 0 : index
    %c0_232 = arith.constant 0 : index
    %363 = vector.load %arg4[%c0_231, %c0_232] : memref<128x512xf32, #tpu.memory_space<vmem>>, vector<128x512xf32>
    %cst_233 = arith.constant dense<0.000000e+00> : vector<16x512xf32>
    %364 = tpu.matmul %362, %363, %cst_233 {dimension_numbers = #tpu.dot_dimension_numbers<[1], [0], [0], [1], [0, 0, 1, 1], [], []>} : vector<16x128xf32>, vector<128x512xf32>, vector<16x512xf32> -> vector<16x512xf32>
    %c0_234 = arith.constant 0 : index
    %c0_235 = arith.constant 0 : index
    %365 = vector.load %arg5[%c0_234, %c0_235] : memref<128x512xf32, #tpu.memory_space<vmem>>, vector<128x512xf32>
    %cst_236 = arith.constant dense<0.000000e+00> : vector<16x512xf32>
    %366 = tpu.matmul %362, %365, %cst_236 {dimension_numbers = #tpu.dot_dimension_numbers<[1], [0], [0], [1], [0, 0, 1, 1], [], []>} : vector<16x128xf32>, vector<128x512xf32>, vector<16x512xf32> -> vector<16x512xf32>
    %367 = arith.mulf %366, %1 : vector<16x512xf32>
    %cst_237 = arith.constant dense<0.000000e+00> : vector<1x512xf32>
    %368 = tpu.matmul %0, %367, %cst_237 {dimension_numbers = #tpu.dot_dimension_numbers<[1], [0], [0], [1], [0, 0, 1, 1], [], []>} : vector<1x16xf32>, vector<16x512xf32>, vector<1x512xf32> -> vector<1x512xf32>
    %369 = vector.broadcast %368 : vector<1x512xf32> to vector<16x512xf32>
    %370 = arith.addf %364, %369 : vector<16x512xf32>
    %cst_238 = arith.constant 0.000000e+00 : f32
    %371 = vector.broadcast %cst_238 : f32 to vector<16x512xf32>
    %372 = arith.cmpf ogt, %370, %371 : vector<16x512xf32>
    %cst_239 = arith.constant 2.000000e-01 : f32
    %373 = vector.broadcast %cst_239 : f32 to vector<16x512xf32>
    %374 = arith.mulf %373, %370 : vector<16x512xf32>
    %375 = arith.select %372, %370, %374 : vector<16x512xi1>, vector<16x512xf32>
    %376 = vector.broadcast %359 : vector<1x512xf32> to vector<16x512xf32>
    %377 = arith.mulf %375, %376 : vector<16x512xf32>
    %c0_240 = arith.constant 0 : index
    %c0_241 = arith.constant 0 : index
    %378 = vector.load %arg7[%c0_240, %c0_241] : memref<512x128xf32, #tpu.memory_space<vmem>>, vector<512x128xf32>
    %cst_242 = arith.constant dense<0.000000e+00> : vector<16x128xf32>
    %379 = tpu.matmul %377, %378, %cst_242 {dimension_numbers = #tpu.dot_dimension_numbers<[1], [0], [0], [1], [0, 0, 1, 1], [], []>} : vector<16x512xf32>, vector<512x128xf32>, vector<16x128xf32> -> vector<16x128xf32>
    %380 = arith.addf %379, %2 : vector<16x128xf32>
    %c8_i32_243 = arith.constant 8 : i32
    %381 = tpu.dynamic_rotate %380 by %c8_i32_243 dim 1 : vector<16x128xf32>, i32 -> vector<16x128xf32>
    %382 = arith.maximumf %380, %381 : vector<16x128xf32>
    %c16_i32_244 = arith.constant 16 : i32
    %383 = tpu.dynamic_rotate %382 by %c16_i32_244 dim 1 : vector<16x128xf32>, i32 -> vector<16x128xf32>
    %384 = arith.maximumf %382, %383 : vector<16x128xf32>
    %c32_i32_245 = arith.constant 32 : i32
    %385 = tpu.dynamic_rotate %384 by %c32_i32_245 dim 1 : vector<16x128xf32>, i32 -> vector<16x128xf32>
    %386 = arith.maximumf %384, %385 : vector<16x128xf32>
    %c64_i32_246 = arith.constant 64 : i32
    %387 = tpu.dynamic_rotate %386 by %c64_i32_246 dim 1 : vector<16x128xf32>, i32 -> vector<16x128xf32>
    %388 = arith.maximumf %386, %387 : vector<16x128xf32>
    %389 = arith.subf %380, %388 : vector<16x128xf32>
    %390 = math.exp %389 : vector<16x128xf32>
    %391 = arith.mulf %390, %3 : vector<16x128xf32>
    %c0_247 = arith.constant 0 : index
    %c0_248 = arith.constant 0 : index
    %392 = vector.load %arg8[%c0_247, %c0_248] : memref<128x128xf32, #tpu.memory_space<vmem>>, vector<128x128xf32>
    %cst_249 = arith.constant dense<0.000000e+00> : vector<16x128xf32>
    %393 = tpu.matmul %391, %392, %cst_249 {dimension_numbers = #tpu.dot_dimension_numbers<[1], [0], [0], [1], [0, 0, 1, 1], [], []>} : vector<16x128xf32>, vector<128x128xf32>, vector<16x128xf32> -> vector<16x128xf32>
    %cst_250 = arith.constant 1.000000e-30 : f32
    %394 = vector.broadcast %cst_250 : f32 to vector<16x128xf32>
    %395 = arith.maximumf %393, %394 : vector<16x128xf32>
    %396 = arith.divf %391, %395 : vector<16x128xf32>
    %397 = vector.extract_strided_slice %362 {offsets = [0, 0], sizes = [16, 32], strides = [1, 1]} : vector<16x128xf32> to vector<16x32xf32>
    %c0_251 = arith.constant 0 : index
    %c0_252 = arith.constant 0 : index
    %398 = vector.load %arg9[%c0_251, %c0_252] : memref<128x16xf32, #tpu.memory_space<vmem>>, vector<128x16xf32>
    %cst_253 = arith.constant dense<0.000000e+00> : vector<128x32xf32>
    %399 = tpu.matmul %398, %397, %cst_253 {dimension_numbers = #tpu.dot_dimension_numbers<[1], [0], [0], [1], [0, 0, 1, 1], [], []>} : vector<128x16xf32>, vector<16x32xf32>, vector<128x32xf32> -> vector<128x32xf32>
    %400 = arith.mulf %399, %4 : vector<128x32xf32>
    %cst_254 = arith.constant dense<0.000000e+00> : vector<16x32xf32>
    %401 = tpu.matmul %396, %400, %cst_254 {dimension_numbers = #tpu.dot_dimension_numbers<[1], [0], [0], [1], [0, 0, 1, 1], [], []>} : vector<16x128xf32>, vector<128x32xf32>, vector<16x32xf32> -> vector<16x32xf32>
    %402 = vector.extract_strided_slice %362 {offsets = [0, 64], sizes = [16, 32], strides = [1, 1]} : vector<16x128xf32> to vector<16x32xf32>
    %403 = arith.addf %401, %402 : vector<16x32xf32>
    %cst_255 = arith.constant 0.000000e+00 : f32
    %404 = vector.broadcast %cst_255 : f32 to vector<16x32xf32>
    %405 = arith.cmpf ogt, %403, %404 : vector<16x32xf32>
    %cst_256 = arith.constant 0.000000e+00 : f32
    %406 = vector.broadcast %cst_256 : f32 to vector<16x32xf32>
    %407 = arith.minimumf %403, %406 : vector<16x32xf32>
    %408 = math.exp %407 : vector<16x32xf32>
    %cst_257 = arith.constant 1.000000e+00 : f32
    %409 = vector.broadcast %cst_257 : f32 to vector<16x32xf32>
    %410 = arith.subf %408, %409 : vector<16x32xf32>
    %411 = arith.select %405, %403, %410 : vector<16x32xi1>, vector<16x32xf32>
    %c7 = arith.constant 7 : index
    %c0_258 = arith.constant 0 : index
    %c0_259 = arith.constant 0 : index
    %412 = vector.load %arg1[%c7, %c0_258, %c0_259] : memref<10x32x128xf32, #tpu.memory_space<vmem>>, vector<1x32x128xf32>
    %413 = vector.shape_cast %412 : vector<1x32x128xf32> to vector<32x128xf32>
    %c7_260 = arith.constant 7 : index
    %c0_261 = arith.constant 0 : index
    %c0_262 = arith.constant 0 : index
    %414 = vector.load %arg2[%c7_260, %c0_261, %c0_262] : memref<10x1x128xf32, #tpu.memory_space<vmem>>, vector<1x1x128xf32>
    %415 = vector.shape_cast %414 : vector<1x1x128xf32> to vector<1x128xf32>
    %c7_263 = arith.constant 7 : index
    %c0_264 = arith.constant 0 : index
    %c0_265 = arith.constant 0 : index
    %416 = vector.load %arg3[%c7_263, %c0_264, %c0_265] : memref<10x1x512xf32, #tpu.memory_space<vmem>>, vector<1x1x512xf32>
    %417 = vector.shape_cast %416 : vector<1x1x512xf32> to vector<1x512xf32>
    %cst_266 = arith.constant dense<0.000000e+00> : vector<16x128xf32>
    %418 = tpu.matmul %411, %413, %cst_266 {dimension_numbers = #tpu.dot_dimension_numbers<[1], [0], [0], [1], [0, 0, 1, 1], [], []>} : vector<16x32xf32>, vector<32x128xf32>, vector<16x128xf32> -> vector<16x128xf32>
    %419 = vector.broadcast %415 : vector<1x128xf32> to vector<16x128xf32>
    %420 = arith.addf %418, %419 : vector<16x128xf32>
    %c0_267 = arith.constant 0 : index
    %c0_268 = arith.constant 0 : index
    %421 = vector.load %arg4[%c0_267, %c0_268] : memref<128x512xf32, #tpu.memory_space<vmem>>, vector<128x512xf32>
    %cst_269 = arith.constant dense<0.000000e+00> : vector<16x512xf32>
    %422 = tpu.matmul %420, %421, %cst_269 {dimension_numbers = #tpu.dot_dimension_numbers<[1], [0], [0], [1], [0, 0, 1, 1], [], []>} : vector<16x128xf32>, vector<128x512xf32>, vector<16x512xf32> -> vector<16x512xf32>
    %c0_270 = arith.constant 0 : index
    %c0_271 = arith.constant 0 : index
    %423 = vector.load %arg5[%c0_270, %c0_271] : memref<128x512xf32, #tpu.memory_space<vmem>>, vector<128x512xf32>
    %cst_272 = arith.constant dense<0.000000e+00> : vector<16x512xf32>
    %424 = tpu.matmul %420, %423, %cst_272 {dimension_numbers = #tpu.dot_dimension_numbers<[1], [0], [0], [1], [0, 0, 1, 1], [], []>} : vector<16x128xf32>, vector<128x512xf32>, vector<16x512xf32> -> vector<16x512xf32>
    %425 = arith.mulf %424, %1 : vector<16x512xf32>
    %cst_273 = arith.constant dense<0.000000e+00> : vector<1x512xf32>
    %426 = tpu.matmul %0, %425, %cst_273 {dimension_numbers = #tpu.dot_dimension_numbers<[1], [0], [0], [1], [0, 0, 1, 1], [], []>} : vector<1x16xf32>, vector<16x512xf32>, vector<1x512xf32> -> vector<1x512xf32>
    %427 = vector.broadcast %426 : vector<1x512xf32> to vector<16x512xf32>
    %428 = arith.addf %422, %427 : vector<16x512xf32>
    %cst_274 = arith.constant 0.000000e+00 : f32
    %429 = vector.broadcast %cst_274 : f32 to vector<16x512xf32>
    %430 = arith.cmpf ogt, %428, %429 : vector<16x512xf32>
    %cst_275 = arith.constant 2.000000e-01 : f32
    %431 = vector.broadcast %cst_275 : f32 to vector<16x512xf32>
    %432 = arith.mulf %431, %428 : vector<16x512xf32>
    %433 = arith.select %430, %428, %432 : vector<16x512xi1>, vector<16x512xf32>
    %434 = vector.broadcast %417 : vector<1x512xf32> to vector<16x512xf32>
    %435 = arith.mulf %433, %434 : vector<16x512xf32>
    %c0_276 = arith.constant 0 : index
    %c0_277 = arith.constant 0 : index
    %436 = vector.load %arg7[%c0_276, %c0_277] : memref<512x128xf32, #tpu.memory_space<vmem>>, vector<512x128xf32>
    %cst_278 = arith.constant dense<0.000000e+00> : vector<16x128xf32>
    %437 = tpu.matmul %435, %436, %cst_278 {dimension_numbers = #tpu.dot_dimension_numbers<[1], [0], [0], [1], [0, 0, 1, 1], [], []>} : vector<16x512xf32>, vector<512x128xf32>, vector<16x128xf32> -> vector<16x128xf32>
    %438 = arith.addf %437, %2 : vector<16x128xf32>
    %c8_i32_279 = arith.constant 8 : i32
    %439 = tpu.dynamic_rotate %438 by %c8_i32_279 dim 1 : vector<16x128xf32>, i32 -> vector<16x128xf32>
    %440 = arith.maximumf %438, %439 : vector<16x128xf32>
    %c16_i32_280 = arith.constant 16 : i32
    %441 = tpu.dynamic_rotate %440 by %c16_i32_280 dim 1 : vector<16x128xf32>, i32 -> vector<16x128xf32>
    %442 = arith.maximumf %440, %441 : vector<16x128xf32>
    %c32_i32_281 = arith.constant 32 : i32
    %443 = tpu.dynamic_rotate %442 by %c32_i32_281 dim 1 : vector<16x128xf32>, i32 -> vector<16x128xf32>
    %444 = arith.maximumf %442, %443 : vector<16x128xf32>
    %c64_i32_282 = arith.constant 64 : i32
    %445 = tpu.dynamic_rotate %444 by %c64_i32_282 dim 1 : vector<16x128xf32>, i32 -> vector<16x128xf32>
    %446 = arith.maximumf %444, %445 : vector<16x128xf32>
    %447 = arith.subf %438, %446 : vector<16x128xf32>
    %448 = math.exp %447 : vector<16x128xf32>
    %449 = arith.mulf %448, %3 : vector<16x128xf32>
    %c0_283 = arith.constant 0 : index
    %c0_284 = arith.constant 0 : index
    %450 = vector.load %arg8[%c0_283, %c0_284] : memref<128x128xf32, #tpu.memory_space<vmem>>, vector<128x128xf32>
    %cst_285 = arith.constant dense<0.000000e+00> : vector<16x128xf32>
    %451 = tpu.matmul %449, %450, %cst_285 {dimension_numbers = #tpu.dot_dimension_numbers<[1], [0], [0], [1], [0, 0, 1, 1], [], []>} : vector<16x128xf32>, vector<128x128xf32>, vector<16x128xf32> -> vector<16x128xf32>
    %cst_286 = arith.constant 1.000000e-30 : f32
    %452 = vector.broadcast %cst_286 : f32 to vector<16x128xf32>
    %453 = arith.maximumf %451, %452 : vector<16x128xf32>
    %454 = arith.divf %449, %453 : vector<16x128xf32>
    %455 = vector.extract_strided_slice %420 {offsets = [0, 0], sizes = [16, 32], strides = [1, 1]} : vector<16x128xf32> to vector<16x32xf32>
    %c0_287 = arith.constant 0 : index
    %c0_288 = arith.constant 0 : index
    %456 = vector.load %arg9[%c0_287, %c0_288] : memref<128x16xf32, #tpu.memory_space<vmem>>, vector<128x16xf32>
    %cst_289 = arith.constant dense<0.000000e+00> : vector<128x32xf32>
    %457 = tpu.matmul %456, %455, %cst_289 {dimension_numbers = #tpu.dot_dimension_numbers<[1], [0], [0], [1], [0, 0, 1, 1], [], []>} : vector<128x16xf32>, vector<16x32xf32>, vector<128x32xf32> -> vector<128x32xf32>
    %458 = arith.mulf %457, %4 : vector<128x32xf32>
    %cst_290 = arith.constant dense<0.000000e+00> : vector<16x32xf32>
    %459 = tpu.matmul %454, %458, %cst_290 {dimension_numbers = #tpu.dot_dimension_numbers<[1], [0], [0], [1], [0, 0, 1, 1], [], []>} : vector<16x128xf32>, vector<128x32xf32>, vector<16x32xf32> -> vector<16x32xf32>
    %460 = vector.extract_strided_slice %420 {offsets = [0, 64], sizes = [16, 32], strides = [1, 1]} : vector<16x128xf32> to vector<16x32xf32>
    %461 = arith.addf %459, %460 : vector<16x32xf32>
    %cst_291 = arith.constant 0.000000e+00 : f32
    %462 = vector.broadcast %cst_291 : f32 to vector<16x32xf32>
    %463 = arith.cmpf ogt, %461, %462 : vector<16x32xf32>
    %cst_292 = arith.constant 0.000000e+00 : f32
    %464 = vector.broadcast %cst_292 : f32 to vector<16x32xf32>
    %465 = arith.minimumf %461, %464 : vector<16x32xf32>
    %466 = math.exp %465 : vector<16x32xf32>
    %cst_293 = arith.constant 1.000000e+00 : f32
    %467 = vector.broadcast %cst_293 : f32 to vector<16x32xf32>
    %468 = arith.subf %466, %467 : vector<16x32xf32>
    %469 = arith.select %463, %461, %468 : vector<16x32xi1>, vector<16x32xf32>
    %c8 = arith.constant 8 : index
    %c0_294 = arith.constant 0 : index
    %c0_295 = arith.constant 0 : index
    %470 = vector.load %arg1[%c8, %c0_294, %c0_295] : memref<10x32x128xf32, #tpu.memory_space<vmem>>, vector<1x32x128xf32>
    %471 = vector.shape_cast %470 : vector<1x32x128xf32> to vector<32x128xf32>
    %c8_296 = arith.constant 8 : index
    %c0_297 = arith.constant 0 : index
    %c0_298 = arith.constant 0 : index
    %472 = vector.load %arg2[%c8_296, %c0_297, %c0_298] : memref<10x1x128xf32, #tpu.memory_space<vmem>>, vector<1x1x128xf32>
    %473 = vector.shape_cast %472 : vector<1x1x128xf32> to vector<1x128xf32>
    %c8_299 = arith.constant 8 : index
    %c0_300 = arith.constant 0 : index
    %c0_301 = arith.constant 0 : index
    %474 = vector.load %arg3[%c8_299, %c0_300, %c0_301] : memref<10x1x512xf32, #tpu.memory_space<vmem>>, vector<1x1x512xf32>
    %475 = vector.shape_cast %474 : vector<1x1x512xf32> to vector<1x512xf32>
    %cst_302 = arith.constant dense<0.000000e+00> : vector<16x128xf32>
    %476 = tpu.matmul %469, %471, %cst_302 {dimension_numbers = #tpu.dot_dimension_numbers<[1], [0], [0], [1], [0, 0, 1, 1], [], []>} : vector<16x32xf32>, vector<32x128xf32>, vector<16x128xf32> -> vector<16x128xf32>
    %477 = vector.broadcast %473 : vector<1x128xf32> to vector<16x128xf32>
    %478 = arith.addf %476, %477 : vector<16x128xf32>
    %c0_303 = arith.constant 0 : index
    %c0_304 = arith.constant 0 : index
    %479 = vector.load %arg4[%c0_303, %c0_304] : memref<128x512xf32, #tpu.memory_space<vmem>>, vector<128x512xf32>
    %cst_305 = arith.constant dense<0.000000e+00> : vector<16x512xf32>
    %480 = tpu.matmul %478, %479, %cst_305 {dimension_numbers = #tpu.dot_dimension_numbers<[1], [0], [0], [1], [0, 0, 1, 1], [], []>} : vector<16x128xf32>, vector<128x512xf32>, vector<16x512xf32> -> vector<16x512xf32>
    %c0_306 = arith.constant 0 : index
    %c0_307 = arith.constant 0 : index
    %481 = vector.load %arg5[%c0_306, %c0_307] : memref<128x512xf32, #tpu.memory_space<vmem>>, vector<128x512xf32>
    %cst_308 = arith.constant dense<0.000000e+00> : vector<16x512xf32>
    %482 = tpu.matmul %478, %481, %cst_308 {dimension_numbers = #tpu.dot_dimension_numbers<[1], [0], [0], [1], [0, 0, 1, 1], [], []>} : vector<16x128xf32>, vector<128x512xf32>, vector<16x512xf32> -> vector<16x512xf32>
    %483 = arith.mulf %482, %1 : vector<16x512xf32>
    %cst_309 = arith.constant dense<0.000000e+00> : vector<1x512xf32>
    %484 = tpu.matmul %0, %483, %cst_309 {dimension_numbers = #tpu.dot_dimension_numbers<[1], [0], [0], [1], [0, 0, 1, 1], [], []>} : vector<1x16xf32>, vector<16x512xf32>, vector<1x512xf32> -> vector<1x512xf32>
    %485 = vector.broadcast %484 : vector<1x512xf32> to vector<16x512xf32>
    %486 = arith.addf %480, %485 : vector<16x512xf32>
    %cst_310 = arith.constant 0.000000e+00 : f32
    %487 = vector.broadcast %cst_310 : f32 to vector<16x512xf32>
    %488 = arith.cmpf ogt, %486, %487 : vector<16x512xf32>
    %cst_311 = arith.constant 2.000000e-01 : f32
    %489 = vector.broadcast %cst_311 : f32 to vector<16x512xf32>
    %490 = arith.mulf %489, %486 : vector<16x512xf32>
    %491 = arith.select %488, %486, %490 : vector<16x512xi1>, vector<16x512xf32>
    %492 = vector.broadcast %475 : vector<1x512xf32> to vector<16x512xf32>
    %493 = arith.mulf %491, %492 : vector<16x512xf32>
    %c0_312 = arith.constant 0 : index
    %c0_313 = arith.constant 0 : index
    %494 = vector.load %arg7[%c0_312, %c0_313] : memref<512x128xf32, #tpu.memory_space<vmem>>, vector<512x128xf32>
    %cst_314 = arith.constant dense<0.000000e+00> : vector<16x128xf32>
    %495 = tpu.matmul %493, %494, %cst_314 {dimension_numbers = #tpu.dot_dimension_numbers<[1], [0], [0], [1], [0, 0, 1, 1], [], []>} : vector<16x512xf32>, vector<512x128xf32>, vector<16x128xf32> -> vector<16x128xf32>
    %496 = arith.addf %495, %2 : vector<16x128xf32>
    %c8_i32_315 = arith.constant 8 : i32
    %497 = tpu.dynamic_rotate %496 by %c8_i32_315 dim 1 : vector<16x128xf32>, i32 -> vector<16x128xf32>
    %498 = arith.maximumf %496, %497 : vector<16x128xf32>
    %c16_i32_316 = arith.constant 16 : i32
    %499 = tpu.dynamic_rotate %498 by %c16_i32_316 dim 1 : vector<16x128xf32>, i32 -> vector<16x128xf32>
    %500 = arith.maximumf %498, %499 : vector<16x128xf32>
    %c32_i32_317 = arith.constant 32 : i32
    %501 = tpu.dynamic_rotate %500 by %c32_i32_317 dim 1 : vector<16x128xf32>, i32 -> vector<16x128xf32>
    %502 = arith.maximumf %500, %501 : vector<16x128xf32>
    %c64_i32_318 = arith.constant 64 : i32
    %503 = tpu.dynamic_rotate %502 by %c64_i32_318 dim 1 : vector<16x128xf32>, i32 -> vector<16x128xf32>
    %504 = arith.maximumf %502, %503 : vector<16x128xf32>
    %505 = arith.subf %496, %504 : vector<16x128xf32>
    %506 = math.exp %505 : vector<16x128xf32>
    %507 = arith.mulf %506, %3 : vector<16x128xf32>
    %c0_319 = arith.constant 0 : index
    %c0_320 = arith.constant 0 : index
    %508 = vector.load %arg8[%c0_319, %c0_320] : memref<128x128xf32, #tpu.memory_space<vmem>>, vector<128x128xf32>
    %cst_321 = arith.constant dense<0.000000e+00> : vector<16x128xf32>
    %509 = tpu.matmul %507, %508, %cst_321 {dimension_numbers = #tpu.dot_dimension_numbers<[1], [0], [0], [1], [0, 0, 1, 1], [], []>} : vector<16x128xf32>, vector<128x128xf32>, vector<16x128xf32> -> vector<16x128xf32>
    %cst_322 = arith.constant 1.000000e-30 : f32
    %510 = vector.broadcast %cst_322 : f32 to vector<16x128xf32>
    %511 = arith.maximumf %509, %510 : vector<16x128xf32>
    %512 = arith.divf %507, %511 : vector<16x128xf32>
    %513 = vector.extract_strided_slice %478 {offsets = [0, 0], sizes = [16, 32], strides = [1, 1]} : vector<16x128xf32> to vector<16x32xf32>
    %c0_323 = arith.constant 0 : index
    %c0_324 = arith.constant 0 : index
    %514 = vector.load %arg9[%c0_323, %c0_324] : memref<128x16xf32, #tpu.memory_space<vmem>>, vector<128x16xf32>
    %cst_325 = arith.constant dense<0.000000e+00> : vector<128x32xf32>
    %515 = tpu.matmul %514, %513, %cst_325 {dimension_numbers = #tpu.dot_dimension_numbers<[1], [0], [0], [1], [0, 0, 1, 1], [], []>} : vector<128x16xf32>, vector<16x32xf32>, vector<128x32xf32> -> vector<128x32xf32>
    %516 = arith.mulf %515, %4 : vector<128x32xf32>
    %cst_326 = arith.constant dense<0.000000e+00> : vector<16x32xf32>
    %517 = tpu.matmul %512, %516, %cst_326 {dimension_numbers = #tpu.dot_dimension_numbers<[1], [0], [0], [1], [0, 0, 1, 1], [], []>} : vector<16x128xf32>, vector<128x32xf32>, vector<16x32xf32> -> vector<16x32xf32>
    %518 = vector.extract_strided_slice %478 {offsets = [0, 64], sizes = [16, 32], strides = [1, 1]} : vector<16x128xf32> to vector<16x32xf32>
    %519 = arith.addf %517, %518 : vector<16x32xf32>
    %cst_327 = arith.constant 0.000000e+00 : f32
    %520 = vector.broadcast %cst_327 : f32 to vector<16x32xf32>
    %521 = arith.cmpf ogt, %519, %520 : vector<16x32xf32>
    %cst_328 = arith.constant 0.000000e+00 : f32
    %522 = vector.broadcast %cst_328 : f32 to vector<16x32xf32>
    %523 = arith.minimumf %519, %522 : vector<16x32xf32>
    %524 = math.exp %523 : vector<16x32xf32>
    %cst_329 = arith.constant 1.000000e+00 : f32
    %525 = vector.broadcast %cst_329 : f32 to vector<16x32xf32>
    %526 = arith.subf %524, %525 : vector<16x32xf32>
    %527 = arith.select %521, %519, %526 : vector<16x32xi1>, vector<16x32xf32>
    %c9 = arith.constant 9 : index
    %c0_330 = arith.constant 0 : index
    %c0_331 = arith.constant 0 : index
    %528 = vector.load %arg1[%c9, %c0_330, %c0_331] : memref<10x32x128xf32, #tpu.memory_space<vmem>>, vector<1x32x128xf32>
    %529 = vector.shape_cast %528 : vector<1x32x128xf32> to vector<32x128xf32>
    %c9_332 = arith.constant 9 : index
    %c0_333 = arith.constant 0 : index
    %c0_334 = arith.constant 0 : index
    %530 = vector.load %arg2[%c9_332, %c0_333, %c0_334] : memref<10x1x128xf32, #tpu.memory_space<vmem>>, vector<1x1x128xf32>
    %531 = vector.shape_cast %530 : vector<1x1x128xf32> to vector<1x128xf32>
    %c9_335 = arith.constant 9 : index
    %c0_336 = arith.constant 0 : index
    %c0_337 = arith.constant 0 : index
    %532 = vector.load %arg3[%c9_335, %c0_336, %c0_337] : memref<10x1x512xf32, #tpu.memory_space<vmem>>, vector<1x1x512xf32>
    %533 = vector.shape_cast %532 : vector<1x1x512xf32> to vector<1x512xf32>
    %cst_338 = arith.constant dense<0.000000e+00> : vector<16x128xf32>
    %534 = tpu.matmul %527, %529, %cst_338 {dimension_numbers = #tpu.dot_dimension_numbers<[1], [0], [0], [1], [0, 0, 1, 1], [], []>} : vector<16x32xf32>, vector<32x128xf32>, vector<16x128xf32> -> vector<16x128xf32>
    %535 = vector.broadcast %531 : vector<1x128xf32> to vector<16x128xf32>
    %536 = arith.addf %534, %535 : vector<16x128xf32>
    %c0_339 = arith.constant 0 : index
    %c0_340 = arith.constant 0 : index
    %537 = vector.load %arg4[%c0_339, %c0_340] : memref<128x512xf32, #tpu.memory_space<vmem>>, vector<128x512xf32>
    %cst_341 = arith.constant dense<0.000000e+00> : vector<16x512xf32>
    %538 = tpu.matmul %536, %537, %cst_341 {dimension_numbers = #tpu.dot_dimension_numbers<[1], [0], [0], [1], [0, 0, 1, 1], [], []>} : vector<16x128xf32>, vector<128x512xf32>, vector<16x512xf32> -> vector<16x512xf32>
    %c0_342 = arith.constant 0 : index
    %c0_343 = arith.constant 0 : index
    %539 = vector.load %arg5[%c0_342, %c0_343] : memref<128x512xf32, #tpu.memory_space<vmem>>, vector<128x512xf32>
    %cst_344 = arith.constant dense<0.000000e+00> : vector<16x512xf32>
    %540 = tpu.matmul %536, %539, %cst_344 {dimension_numbers = #tpu.dot_dimension_numbers<[1], [0], [0], [1], [0, 0, 1, 1], [], []>} : vector<16x128xf32>, vector<128x512xf32>, vector<16x512xf32> -> vector<16x512xf32>
    %541 = arith.mulf %540, %1 : vector<16x512xf32>
    %cst_345 = arith.constant dense<0.000000e+00> : vector<1x512xf32>
    %542 = tpu.matmul %0, %541, %cst_345 {dimension_numbers = #tpu.dot_dimension_numbers<[1], [0], [0], [1], [0, 0, 1, 1], [], []>} : vector<1x16xf32>, vector<16x512xf32>, vector<1x512xf32> -> vector<1x512xf32>
    %543 = vector.broadcast %542 : vector<1x512xf32> to vector<16x512xf32>
    %544 = arith.addf %538, %543 : vector<16x512xf32>
    %cst_346 = arith.constant 0.000000e+00 : f32
    %545 = vector.broadcast %cst_346 : f32 to vector<16x512xf32>
    %546 = arith.cmpf ogt, %544, %545 : vector<16x512xf32>
    %cst_347 = arith.constant 2.000000e-01 : f32
    %547 = vector.broadcast %cst_347 : f32 to vector<16x512xf32>
    %548 = arith.mulf %547, %544 : vector<16x512xf32>
    %549 = arith.select %546, %544, %548 : vector<16x512xi1>, vector<16x512xf32>
    %550 = vector.broadcast %533 : vector<1x512xf32> to vector<16x512xf32>
    %551 = arith.mulf %549, %550 : vector<16x512xf32>
    %c0_348 = arith.constant 0 : index
    %c0_349 = arith.constant 0 : index
    %552 = vector.load %arg7[%c0_348, %c0_349] : memref<512x128xf32, #tpu.memory_space<vmem>>, vector<512x128xf32>
    %cst_350 = arith.constant dense<0.000000e+00> : vector<16x128xf32>
    %553 = tpu.matmul %551, %552, %cst_350 {dimension_numbers = #tpu.dot_dimension_numbers<[1], [0], [0], [1], [0, 0, 1, 1], [], []>} : vector<16x512xf32>, vector<512x128xf32>, vector<16x128xf32> -> vector<16x128xf32>
    %554 = arith.addf %553, %2 : vector<16x128xf32>
    %c8_i32_351 = arith.constant 8 : i32
    %555 = tpu.dynamic_rotate %554 by %c8_i32_351 dim 1 : vector<16x128xf32>, i32 -> vector<16x128xf32>
    %556 = arith.maximumf %554, %555 : vector<16x128xf32>
    %c16_i32_352 = arith.constant 16 : i32
    %557 = tpu.dynamic_rotate %556 by %c16_i32_352 dim 1 : vector<16x128xf32>, i32 -> vector<16x128xf32>
    %558 = arith.maximumf %556, %557 : vector<16x128xf32>
    %c32_i32_353 = arith.constant 32 : i32
    %559 = tpu.dynamic_rotate %558 by %c32_i32_353 dim 1 : vector<16x128xf32>, i32 -> vector<16x128xf32>
    %560 = arith.maximumf %558, %559 : vector<16x128xf32>
    %c64_i32_354 = arith.constant 64 : i32
    %561 = tpu.dynamic_rotate %560 by %c64_i32_354 dim 1 : vector<16x128xf32>, i32 -> vector<16x128xf32>
    %562 = arith.maximumf %560, %561 : vector<16x128xf32>
    %563 = arith.subf %554, %562 : vector<16x128xf32>
    %564 = math.exp %563 : vector<16x128xf32>
    %565 = arith.mulf %564, %3 : vector<16x128xf32>
    %c0_355 = arith.constant 0 : index
    %c0_356 = arith.constant 0 : index
    %566 = vector.load %arg8[%c0_355, %c0_356] : memref<128x128xf32, #tpu.memory_space<vmem>>, vector<128x128xf32>
    %cst_357 = arith.constant dense<0.000000e+00> : vector<16x128xf32>
    %567 = tpu.matmul %565, %566, %cst_357 {dimension_numbers = #tpu.dot_dimension_numbers<[1], [0], [0], [1], [0, 0, 1, 1], [], []>} : vector<16x128xf32>, vector<128x128xf32>, vector<16x128xf32> -> vector<16x128xf32>
    %cst_358 = arith.constant 1.000000e-30 : f32
    %568 = vector.broadcast %cst_358 : f32 to vector<16x128xf32>
    %569 = arith.maximumf %567, %568 : vector<16x128xf32>
    %570 = arith.divf %565, %569 : vector<16x128xf32>
    %571 = vector.extract_strided_slice %536 {offsets = [0, 0], sizes = [16, 32], strides = [1, 1]} : vector<16x128xf32> to vector<16x32xf32>
    %c0_359 = arith.constant 0 : index
    %c0_360 = arith.constant 0 : index
    %572 = vector.load %arg9[%c0_359, %c0_360] : memref<128x16xf32, #tpu.memory_space<vmem>>, vector<128x16xf32>
    %cst_361 = arith.constant dense<0.000000e+00> : vector<128x32xf32>
    %573 = tpu.matmul %572, %571, %cst_361 {dimension_numbers = #tpu.dot_dimension_numbers<[1], [0], [0], [1], [0, 0, 1, 1], [], []>} : vector<128x16xf32>, vector<16x32xf32>, vector<128x32xf32> -> vector<128x32xf32>
    %574 = arith.mulf %573, %4 : vector<128x32xf32>
    %cst_362 = arith.constant dense<0.000000e+00> : vector<16x32xf32>
    %575 = tpu.matmul %570, %574, %cst_362 {dimension_numbers = #tpu.dot_dimension_numbers<[1], [0], [0], [1], [0, 0, 1, 1], [], []>} : vector<16x128xf32>, vector<128x32xf32>, vector<16x32xf32> -> vector<16x32xf32>
    %576 = vector.extract_strided_slice %536 {offsets = [0, 64], sizes = [16, 32], strides = [1, 1]} : vector<16x128xf32> to vector<16x32xf32>
    %577 = arith.addf %575, %576 : vector<16x32xf32>
    %cst_363 = arith.constant 0.000000e+00 : f32
    %578 = vector.broadcast %cst_363 : f32 to vector<16x32xf32>
    %579 = arith.cmpf ogt, %577, %578 : vector<16x32xf32>
    %cst_364 = arith.constant 0.000000e+00 : f32
    %580 = vector.broadcast %cst_364 : f32 to vector<16x32xf32>
    %581 = arith.minimumf %577, %580 : vector<16x32xf32>
    %582 = math.exp %581 : vector<16x32xf32>
    %cst_365 = arith.constant 1.000000e+00 : f32
    %583 = vector.broadcast %cst_365 : f32 to vector<16x32xf32>
    %584 = arith.subf %582, %583 : vector<16x32xf32>
    %585 = arith.select %579, %577, %584 : vector<16x32xi1>, vector<16x32xf32>
    %c0_366 = arith.constant 0 : index
    %c0_367 = arith.constant 0 : index
    %586 = vector.load %arg13[%c0_366, %c0_367] : memref<2x16xf32, #tpu.memory_space<vmem>>, vector<2x16xf32>
    %cst_368 = arith.constant dense<0.000000e+00> : vector<2x32xf32>
    %587 = tpu.matmul %586, %585, %cst_368 {dimension_numbers = #tpu.dot_dimension_numbers<[1], [0], [0], [1], [0, 0, 1, 1], [], []>} : vector<2x16xf32>, vector<16x32xf32>, vector<2x32xf32> -> vector<2x32xf32>
    %c0_369 = arith.constant 0 : index
    %c0_370 = arith.constant 0 : index
    %588 = vector.load %arg14[%c0_369, %c0_370] : memref<32x16xf32, #tpu.memory_space<vmem>>, vector<32x16xf32>
    %cst_371 = arith.constant dense<0.000000e+00> : vector<2x16xf32>
    %589 = tpu.matmul %587, %588, %cst_371 {dimension_numbers = #tpu.dot_dimension_numbers<[1], [0], [0], [1], [0, 0, 1, 1], [], []>} : vector<2x32xf32>, vector<32x16xf32>, vector<2x16xf32> -> vector<2x16xf32>
    %c0_372 = arith.constant 0 : index
    %c0_373 = arith.constant 0 : index
    %590 = vector.load %arg15[%c0_372, %c0_373] : memref<1x16xf32, #tpu.memory_space<vmem>>, vector<1x16xf32>
    %591 = vector.broadcast %590 : vector<1x16xf32> to vector<2x16xf32>
    %592 = arith.addf %589, %591 : vector<2x16xf32>
    %c0_374 = arith.constant 0 : index
    %c0_375 = arith.constant 0 : index
    %593 = vector.load %arg16[%c0_374, %c0_375] : memref<2x16xf32, #tpu.memory_space<vmem>>, vector<2x16xf32>
    tpu.vector_store %arg16[%c0_374, %c0_375], %592 {strides = array<i32>} : memref<2x16xf32, #tpu.memory_space<vmem>>, vector<2x16xf32>,
    return
  }
}

</mosaic_0001>

<llo_original>
// kernel: gcn_forward_fused.1
$region0: #{gcn_forward_fused.1}
  #allocation0 [shape = 'u32[]', space=smem, size = 0x4, offset = 0x4, fixed_abs, tag = 'smem constant byte address 0x4 - core index']
  #allocation1 [shape = 'u32[72,128]{1,0:T(1,128)}', space=vmem, size = 0x9000, scoped, tag = 'internal scratch']
  %s0 = inlined_call_operand.vmem [shape: f32[16,32], index: 0, kind: input, shape index: {}]
  %s1 = inlined_call_operand.hbm [shape: f32[10,32,128], index: 1, kind: input, shape index: {}]
  %s2 = inlined_call_operand.vmem [shape: f32[10,1,128], index: 2, kind: input, shape index: {}]
  %s3 = inlined_call_operand.vmem [shape: f32[10,1,512], index: 3, kind: input, shape index: {}]
  %s4 = inlined_call_operand.hbm [shape: f32[128,512], index: 4, kind: input, shape index: {}]
  %s5 = inlined_call_operand.hbm [shape: f32[128,512], index: 5, kind: input, shape index: {}]
  %s6 = inlined_call_operand.vmem [shape: f32[16,512], index: 6, kind: input, shape index: {}]
  %s7 = inlined_call_operand.hbm [shape: f32[512,128], index: 7, kind: input, shape index: {}]
  %s8 = inlined_call_operand.vmem [shape: f32[128,128], index: 8, kind: input, shape index: {}]
  %s9 = inlined_call_operand.vmem [shape: f32[128,16], index: 9, kind: input, shape index: {}]
  %s10 = inlined_call_operand.vmem [shape: f32[128,32], index: 10, kind: input, shape index: {}]
  %s11 = inlined_call_operand.vmem [shape: f32[16,128], index: 11, kind: input, shape index: {}]
  %s12 = inlined_call_operand.vmem [shape: f32[16,128], index: 12, kind: input, shape index: {}]
  %s13 = inlined_call_operand.vmem [shape: f32[2,16], index: 13, kind: input, shape index: {}]
  %s14 = inlined_call_operand.vmem [shape: f32[32,16], index: 14, kind: input, shape index: {}]
  %s15 = inlined_call_operand.vmem [shape: f32[1,16], index: 15, kind: input, shape index: {}]
  %s16 = inlined_call_operand.hbm [shape: f32[2,16], index: 16, kind: output, shape index: {}]
  %s17 = sld [smem:[#allocation0]]
  $region90: #{gcn_forward_fused.1} parent=0
    _
  %s19 = ssub.s32 1, %s17
  %s20 = scalar_select 0, %s19, %s17
  $region1: #{gcn_forward_fused.1} parent=0
    #allocation2 [shape = 'u8[163840]{0}', space=vmem, size = 0x28000, scoped, tag = 'input window, operand 1, single buffered']
    #allocation3 [shape = 's32[1]{0}', space=sflag, size = 0x4, scoped, tag = 'scoped memory for gcn_forward_fused.1']
    #allocation4 [shape = 's32[1]{0}', space=sflag, size = 0x4, scoped, tag = 'scoped memory for gcn_forward_fused.1']
    #allocation5 [shape = 'u8[262144]{0}', space=vmem, size = 0x40000, scoped, tag = 'input window, operand 4, single buffered']
    #allocation6 [shape = 's32[1]{0}', space=sflag, size = 0x4, scoped, tag = 'scoped memory for gcn_forward_fused.1']
    #allocation7 [shape = 'u8[262144]{0}', space=vmem, size = 0x40000, scoped, tag = 'input window, operand 5, single buffered']
    #allocation8 [shape = 'u8[262144]{0}', space=vmem, size = 0x40000, scoped, tag = 'input window, operand 7, single buffered']
    #allocation9 [shape = 's32[1]{0}', space=sflag, size = 0x4, scoped, tag = 'scoped memory for gcn_forward_fused.1']
    #allocation10 [shape = 'u8[1024]{0}', space=vmem, size = 0x400, scoped, tag = 'output window, operand 0, single buffered']
    %21 = vsyncpa [#allocation3], 0
    %22 = vsyncpa [#allocation6], 0
    %23 = vsyncpa [#allocation9], 0
    %24 = vsyncpa [#allocation4], 0
    // Predicated region
    $region2: #{gcn_forward_fused.1} parent=1 // pred_check
      _
    $region3: #{gcn_forward_fused.1} parent=1 // pred_check_branch
      %26 = sbr.rel (0) target = $region5
    $region4: #{gcn_forward_fused.1} parent=1 // pred_region
      _
    $region5: #{gcn_forward_fused.1} parent=1 // pred_fallthru
      _
    // Predicated region
    $region6: #{gcn_forward_fused.1} parent=1 // pred_check
      _
    $region7: #{gcn_forward_fused.1} parent=1 // pred_check_branch
      %28 = sbr.rel (0) target = $region9
    $region8: #{gcn_forward_fused.1} parent=1 // pred_region
      %30 = vsyncadd [#allocation3], 0
      %s31 = sshll.u32 %s1, 4
      %s32 = int_to_ptr.hbm [resolvable:$true] %s31
      %s33 = sshll.u32 [#allocation2], 4
      %s34 = int_to_ptr.vmem [resolvable:$true] %s33
      %39 = dma.hbm_to_vmem [thread:$0]  %s32, 5120, %s34, [#allocation3], 128, 128, 8
    $region9: #{gcn_forward_fused.1} parent=1 // pred_fallthru
      _
    // Predicated region
    $region10: #{gcn_forward_fused.1} parent=1 // pred_check
      _
    $region11: #{gcn_forward_fused.1} parent=1 // pred_check_branch
      %41 = sbr.rel (0) target = $region13
    $region12: #{gcn_forward_fused.1} parent=1 // pred_region
      _
    $region13: #{gcn_forward_fused.1} parent=1 // pred_fallthru
      _
    // Predicated region
    $region14: #{gcn_forward_fused.1} parent=1 // pred_check
      _
    $region15: #{gcn_forward_fused.1} parent=1 // pred_check_branch
      %43 = sbr.rel (0) target = $region17
    $region16: #{gcn_forward_fused.1} parent=1 // pred_region
      _
    $region17: #{gcn_forward_fused.1} parent=1 // pred_fallthru
      _
    // Predicated region
    $region18: #{gcn_forward_fused.1} parent=1 // pred_check
      _
    $region19: #{gcn_forward_fused.1} parent=1 // pred_check_branch
      %45 = sbr.rel (0) target = $region21
    $region20: #{gcn_forward_fused.1} parent=1 // pred_region
      %47 = vsyncadd [#allocation6], 0
      %s48 = sshll.u32 %s4, 4
      %s49 = int_to_ptr.hbm [resolvable:$true] %s48
      %s50 = sshll.u32 [#allocation5], 4
      %s51 = int_to_ptr.vmem [resolvable:$true] %s50
      %56 = dma.hbm_to_vmem [thread:$0]  %s49, 8192, %s51, [#allocation6], 512, 512, 32
    $region21: #{gcn_forward_fused.1} parent=1 // pred_fallthru
      _
    // Predicated region
    $region22: #{gcn_forward_fused.1} parent=1 // pred_check
      _
    $region23: #{gcn_forward_fused.1} parent=1 // pred_check_branch
      %58 = sbr.rel (0) target = $region25
    $region24: #{gcn_forward_fused.1} parent=1 // pred_region
      %60 = vsyncadd [#allocation6], 0
      %s61 = sshll.u32 %s5, 4
      %s62 = int_to_ptr.hbm [resolvable:$true] %s61
      %s63 = sshll.u32 [#allocation7], 4
      %s64 = int_to_ptr.vmem [resolvable:$true] %s63
      %69 = dma.hbm_to_vmem [thread:$0]  %s62, 8192, %s64, [#allocation6], 512, 512, 32
    $region25: #{gcn_forward_fused.1} parent=1 // pred_fallthru
      _
    // Predicated region
    $region26: #{gcn_forward_fused.1} parent=1 // pred_check
      _
    $region27: #{gcn_forward_fused.1} parent=1 // pred_check_branch
      %71 = sbr.rel (0) target = $region29
    $region28: #{gcn_forward_fused.1} parent=1 // pred_region
      _
    $region29: #{gcn_forward_fused.1} parent=1 // pred_fallthru
      _
    // Predicated region
    $region30: #{gcn_forward_fused.1} parent=1 // pred_check
      _
    $region31: #{gcn_forward_fused.1} parent=1 // pred_check_branch
      %73 = sbr.rel (0) target = $region33
    $region32: #{gcn_forward_fused.1} parent=1 // pred_region
      %75 = vsyncadd [#allocation9], 0
      %s76 = sshll.u32 %s7, 4
      %s77 = int_to_ptr.hbm [resolvable:$true] %s76
      %s78 = sshll.u32 [#allocation8], 4
      %s79 = int_to_ptr.vmem [resolvable:$true] %s78
      %84 = dma.hbm_to_vmem [thread:$0]  %s77, 8192, %s79, [#allocation9], 128, 128, 8
    $region33: #{gcn_forward_fused.1} parent=1 // pred_fallthru
      _
    // Predicated region
    $region34: #{gcn_forward_fused.1} parent=1 // pred_check
      _
    $region35: #{gcn_forward_fused.1} parent=1 // pred_check_branch
      %86 = sbr.rel (0) target = $region37
    $region36: #{gcn_forward_fused.1} parent=1 // pred_region
      _
    $region37: #{gcn_forward_fused.1} parent=1 // pred_fallthru
      _
    // Predicated region
    $region38: #{gcn_forward_fused.1} parent=1 // pred_check
      _
    $region39: #{gcn_forward_fused.1} parent=1 // pred_check_branch
      %88 = sbr.rel (0) target = $region41
    $region40: #{gcn_forward_fused.1} parent=1 // pred_region
      _
    $region41: #{gcn_forward_fused.1} parent=1 // pred_fallthru
      _
    // Predicated region
    $region42: #{gcn_forward_fused.1} parent=1 // pred_check
      _
    $region43: #{gcn_forward_fused.1} parent=1 // pred_check_branch
      %90 = sbr.rel (0) target = $region45
    $region44: #{gcn_forward_fused.1} parent=1 // pred_region
      _
    $region45: #{gcn_forward_fused.1} parent=1 // pred_fallthru
      _
    // Predicated region
    $region46: #{gcn_forward_fused.1} parent=1 // pred_check
      _
    $region47: #{gcn_forward_fused.1} parent=1 // pred_check_branch
      %92 = sbr.rel (0) target = $region49
    $region48: #{gcn_forward_fused.1} parent=1 // pred_region
      _
    $region49: #{gcn_forward_fused.1} parent=1 // pred_fallthru
      _
    // Predicated region
    $region50: #{gcn_forward_fused.1} parent=1 // pred_check
      _
    $region51: #{gcn_forward_fused.1} parent=1 // pred_check_branch
      %94 = sbr.rel (0) target = $region53
    $region52: #{gcn_forward_fused.1} parent=1 // pred_region
      _
    $region53: #{gcn_forward_fused.1} parent=1 // pred_fallthru
      _
    // Predicated region
    $region54: #{gcn_forward_fused.1} parent=1 // pred_check
      _
    $region55: #{gcn_forward_fused.1} parent=1 // pred_check_branch
      %96 = sbr.rel (0) target = $region57
    $region56: #{gcn_forward_fused.1} parent=1 // pred_region
      _
    $region57: #{gcn_forward_fused.1} parent=1 // pred_fallthru
      _
    // Predicated region
    $region58: #{gcn_forward_fused.1} parent=1 // pred_check
      _
    $region59: #{gcn_forward_fused.1} parent=1 // pred_check_branch
      %98 = sbr.rel (0) target = $region61
    $region60: #{gcn_forward_fused.1} parent=1 // pred_region
      _
    $region61: #{gcn_forward_fused.1} parent=1 // pred_fallthru
      _
    // Predicated region
    $region62: #{gcn_forward_fused.1} parent=1 // pred_check
      _
    $region63: #{gcn_forward_fused.1} parent=1 // pred_check_branch
      %100 = sbr.rel (0) target = $region65
    $region64: #{gcn_forward_fused.1} parent=1 // pred_region
      _
    $region65: #{gcn_forward_fused.1} parent=1 // pred_fallthru
      _
    // Predicated region
    $region66: #{gcn_forward_fused.1} parent=1 // pred_check
      _
    $region67: #{gcn_forward_fused.1} parent=1 // pred_check_branch
      %102 = sbr.rel (0) target = $region69
    $region68: #{gcn_forward_fused.1} parent=1 // pred_region
      %104 = dma.done [#allocation3], 5120
    $region69: #{gcn_forward_fused.1} parent=1 // pred_fallthru
      _
    // Predicated region
    $region70: #{gcn_forward_fused.1} parent=1 // pred_check
      _
    $region71: #{gcn_forward_fused.1} parent=1 // pred_check_branch
      %106 = sbr.rel (0) target = $region73
    $region72: #{gcn_forward_fused.1} parent=1 // pred_region
      %108 = dma.done [#allocation6], 8192
    $region73: #{gcn_forward_fused.1} parent=1 // pred_fallthru
      _
    // Predicated region
    $region74: #{gcn_forward_fused.1} parent=1 // pred_check
      _
    $region75: #{gcn_forward_fused.1} parent=1 // pred_check_branch
      %110 = sbr.rel (0) target = $region77
    $region76: #{gcn_forward_fused.1} parent=1 // pred_region
      %112 = dma.done [#allocation6], 8192
    $region77: #{gcn_forward_fused.1} parent=1 // pred_fallthru
      _
    // Predicated region
    $region78: #{gcn_forward_fused.1} parent=1 // pred_check
      _
    $region79: #{gcn_forward_fused.1} parent=1 // pred_check_branch
      %114 = sbr.rel (0) target = $region81
    $region80: #{gcn_forward_fused.1} parent=1 // pred_region
      %116 = dma.done [#allocation9], 8192
    $region81: #{gcn_forward_fused.1} parent=1 // pred_fallthru
      _
    %v117 = vld [vmem:[%s6] sm:$0xff]
    %v118 = vld [vmem:[%s6 + $0x8] sm:$0xff]
    %v119 = vld [vmem:[%s6 + $0x10] sm:$0xff]
    %v120 = vld [vmem:[%s6 + $0x18] sm:$0xff]
    %v121 = vld [vmem:[%s6 + $0x20] sm:$0xff]
    %v122 = vld [vmem:[%s6 + $0x28] sm:$0xff]
    %v123 = vld [vmem:[%s6 + $0x30] sm:$0xff]
    %v124 = vld [vmem:[%s6 + $0x38] sm:$0xff]
    %v125 = vld [vmem:[%s11] sm:$0xff]
    %v126 = vld [vmem:[%s11 + $0x8] sm:$0xff]
    %v127 = vld [vmem:[%s12] sm:$0xff]
    %v128 = vld [vmem:[%s12 + $0x8] sm:$0xff]
    %v129 = vld [vmem:[%s10] sm:$0xff]
    %v130 = vld [vmem:[%s10 + $0x8] sm:$0xff]
    %v131 = vld [vmem:[%s10 + $0x10] sm:$0xff]
    %v132 = vld [vmem:[%s10 + $0x18] sm:$0xff]
    %v133 = vld [vmem:[%s10 + $0x20] sm:$0xff]
    %v134 = vld [vmem:[%s10 + $0x28] sm:$0xff]
    %v135 = vld [vmem:[%s10 + $0x30] sm:$0xff]
    %v136 = vld [vmem:[%s10 + $0x38] sm:$0xff]
    %v137 = vld [vmem:[%s10 + $0x40] sm:$0xff]
    %v138 = vld [vmem:[%s10 + $0x48] sm:$0xff]
    %v139 = vld [vmem:[%s10 + $0x50] sm:$0xff]
    %v140 = vld [vmem:[%s10 + $0x58] sm:$0xff]
    %v141 = vld [vmem:[%s10 + $0x60] sm:$0xff]
    %v142 = vld [vmem:[%s10 + $0x68] sm:$0xff]
    %v143 = vld [vmem:[%s10 + $0x70] sm:$0xff]
    %v144 = vld [vmem:[%s10 + $0x78] sm:$0xff]
    %v145 = vld [vmem:[%s0] sm:$0xff]
    %v146 = vld [vmem:[%s0 + $0x8] sm:$0xff]
    %v147 = vld [vmem:[#allocation2] sm:$0xff]
    %v148 = vld [vmem:[#allocation2 + $0x8] sm:$0xff]
    %v149 = vld [vmem:[#allocation2 + $0x10] sm:$0xff]
    %v150 = vld [vmem:[#allocation2 + $0x18] sm:$0xff]
    %v151 = vld [vmem:[%s2] sm:$0x1]
    %v152 = vld [vmem:[%s3] sm:$0xf]
    %v154 = vperm.slane %v151, 0
    %vm156 = vcmask 261120
    %v158 = vsel %vm156, %v145, 0
    %v161 = vsel %vm156, %v146, 0
    %163 = vmatpush.msra.mxu0 0.0
    %164 = vmatpush.msra.mxu0 0.0
    %165 = vmatpush.msra.mxu0 0.0
    %166 = vmatpush.msra.mxu0 0.0
    %167 = vmatpush.msra.mxu0 0.0
    %168 = vmatpush.msra.mxu0 0.0
    %169 = vmatpush.msra.mxu0 0.0
    %170 = vmatpush.msra.mxu0 0.0
    %171 = vmatpush.msra.mxu0 0.0
    %172 = vmatpush.msra.mxu0 0.0
    %173 = vmatpush.msra.mxu0 0.0
    %174 = vmatpush.msra.mxu0 0.0
    %175 = vmatpush.msra.mxu0 %v150
    %176 = vmatpush.msra.mxu0 %v149
    %177 = vmatpush.msra.mxu0 %v148
    %178 = vmatpush.msra.mxu0 %v147
    %179 = vmatmul.f32.gmra.mxu0 %v158
    %v180 = vpop.f32.mrf.mxu0
    %v181 = vadd.f32 %v154, %v180
    %182 = vmatmul.f32.gmra.mxu0 %v161
    %v183 = vpop.f32.mrf.mxu0
    %v184 = vadd.f32 %v154, %v183
    %185 = vdwg.mxu0
    %v186 = vld [vmem:[#allocation5] sm:$0xff]
    %v187 = vld [vmem:[#allocation5 + $0x8] sm:$0xff]
    %v188 = vld [vmem:[#allocation5 + $0x10] sm:$0xff]
    %v189 = vld [vmem:[#allocation5 + $0x18] sm:$0xff]
    %v190 = vld [vmem:[#allocation5 + $0x20] sm:$0xff]
    %v191 = vld [vmem:[#allocation5 + $0x28] sm:$0xff]
    %v192 = vld [vmem:[#allocation5 + $0x30] sm:$0xff]
    %v193 = vld [vmem:[#allocation5 + $0x38] sm:$0xff]
    %v194 = vld [vmem:[#allocation5 + $0x40] sm:$0xff]
    %v195 = vld [vmem:[#allocation5 + $0x48] sm:$0xff]
    %v196 = vld [vmem:[#allocation5 + $0x50] sm:$0xff]
    %v197 = vld [vmem:[#allocation5 + $0x58] sm:$0xff]
    %v198 = vld [vmem:[#allocation5 + $0x60] sm:$0xff]
    %v199 = vld [vmem:[#allocation5 + $0x68] sm:$0xff]
    %v200 = vld [vmem:[#allocation5 + $0x70] sm:$0xff]
    %v201 = vld [vmem:[#allocation5 + $0x78] sm:$0xff]
    %v202 = vld [vmem:[#allocation5 + $0x80] sm:$0xff]
    %v203 = vld [vmem:[#allocation5 + $0x88] sm:$0xff]
    %v204 = vld [vmem:[#allocation5 + $0x90] sm:$0xff]
    %v205 = vld [vmem:[#allocation5 + $0x98] sm:$0xff]
    %v206 = vld [vmem:[#allocation5 + $0xa0] sm:$0xff]
    %v207 = vld [vmem:[#allocation5 + $0xa8] sm:$0xff]
    %v208 = vld [vmem:[#allocation5 + $0xb0] sm:$0xff]
    %v209 = vld [vmem:[#allocation5 + $0xb8] sm:$0xff]
    %v210 = vld [vmem:[#allocation5 + $0xc0] sm:$0xff]
    %v211 = vld [vmem:[#allocation5 + $0xc8] sm:$0xff]
    %v212 = vld [vmem:[#allocation5 + $0xd0] sm:$0xff]
    %v213 = vld [vmem:[#allocation5 + $0xd8] sm:$0xff]
    %v214 = vld [vmem:[#allocation5 + $0xe0] sm:$0xff]
    %v215 = vld [vmem:[#allocation5 + $0xe8] sm:$0xff]
    %v216 = vld [vmem:[#allocation5 + $0xf0] sm:$0xff]
    %v217 = vld [vmem:[#allocation5 + $0xf8] sm:$0xff]
    %v218 = vld [vmem:[#allocation5 + $0x100] sm:$0xff]
    %v219 = vld [vmem:[#allocation5 + $0x108] sm:$0xff]
    %v220 = vld [vmem:[#allocation5 + $0x110] sm:$0xff]
    %v221 = vld [vmem:[#allocation5 + $0x118] sm:$0xff]
    %v222 = vld [vmem:[#allocation5 + $0x120] sm:$0xff]
    %v223 = vld [vmem:[#allocation5 + $0x128] sm:$0xff]
    %v224 = vld [vmem:[#allocation5 + $0x130] sm:$0xff]
    %v225 = vld [vmem:[#allocation5 + $0x138] sm:$0xff]
    %v226 = vld [vmem:[#allocation5 + $0x140] sm:$0xff]
    %v227 = vld [vmem:[#allocation5 + $0x148] sm:$0xff]
    %v228 = vld [vmem:[#allocation5 + $0x150] sm:$0xff]
    %v229 = vld [vmem:[#allocation5 + $0x158] sm:$0xff]
    %v230 = vld [vmem:[#allocation5 + $0x160] sm:$0xff]
    %v231 = vld [vmem:[#allocation5 + $0x168] sm:$0xff]
    %v232 = vld [vmem:[#allocation5 + $0x170] sm:$0xff]
    %v233 = vld [vmem:[#allocation5 + $0x178] sm:$0xff]
    %v234 = vld [vmem:[#allocation5 + $0x180] sm:$0xff]
    %v235 = vld [vmem:[#allocation5 + $0x188] sm:$0xff]
    %v236 = vld [vmem:[#allocation5 + $0x190] sm:$0xff]
    %v237 = vld [vmem:[#allocation5 + $0x198] sm:$0xff]
    %v238 = vld [vmem:[#allocation5 + $0x1a0] sm:$0xff]
    %v239 = vld [vmem:[#allocation5 + $0x1a8] sm:$0xff]
    %v240 = vld [vmem:[#allocation5 + $0x1b0] sm:$0xff]
    %v241 = vld [vmem:[#allocation5 + $0x1b8] sm:$0xff]
    %v242 = vld [vmem:[#allocation5 + $0x1c0] sm:$0xff]
    %v243 = vld [vmem:[#allocation5 + $0x1c8] sm:$0xff]
    %v244 = vld [vmem:[#allocation5 + $0x1d0] sm:$0xff]
    %v245 = vld [vmem:[#allocation5 + $0x1d8] sm:$0xff]
    %v246 = vld [vmem:[#allocation5 + $0x1e0] sm:$0xff]
    %v247 = vld [vmem:[#allocation5 + $0x1e8] sm:$0xff]
    %v248 = vld [vmem:[#allocation5 + $0x1f0] sm:$0xff]
    %v249 = vld [vmem:[#allocation5 + $0x1f8] sm:$0xff]
    %v250 = vld [vmem:[#allocation7] sm:$0xff]
    %v251 = vld [vmem:[#allocation7 + $0x8] sm:$0xff]
    %v252 = vld [vmem:[#allocation7 + $0x10] sm:$0xff]
    %v253 = vld [vmem:[#allocation7 + $0x18] sm:$0xff]
    %v254 = vld [vmem:[#allocation7 + $0x20] sm:$0xff]
    %v255 = vld [vmem:[#allocation7 + $0x28] sm:$0xff]
    %v256 = vld [vmem:[#allocation7 + $0x30] sm:$0xff]
    %v257 = vld [vmem:[#allocation7 + $0x38] sm:$0xff]
    %v258 = vld [vmem:[#allocation7 + $0x40] sm:$0xff]
    %v259 = vld [vmem:[#allocation7 + $0x48] sm:$0xff]
    %v260 = vld [vmem:[#allocation7 + $0x50] sm:$0xff]
    %v261 = vld [vmem:[#allocation7 + $0x58] sm:$0xff]
    %v262 = vld [vmem:[#allocation7 + $0x60] sm:$0xff]
    %v263 = vld [vmem:[#allocation7 + $0x68] sm:$0xff]
    %v264 = vld [vmem:[#allocation7 + $0x70] sm:$0xff]
    %v265 = vld [vmem:[#allocation7 + $0x78] sm:$0xff]
    %v266 = vld [vmem:[#allocation7 + $0x80] sm:$0xff]
    %v267 = vld [vmem:[#allocation7 + $0x88] sm:$0xff]
    %v268 = vld [vmem:[#allocation7 + $0x90] sm:$0xff]
    %v269 = vld [vmem:[#allocation7 + $0x98] sm:$0xff]
    %v270 = vld [vmem:[#allocation7 + $0xa0] sm:$0xff]
    %v271 = vld [vmem:[#allocation7 + $0xa8] sm:$0xff]
    %v272 = vld [vmem:[#allocation7 + $0xb0] sm:$0xff]
    %v273 = vld [vmem:[#allocation7 + $0xb8] sm:$0xff]
    %v274 = vld [vmem:[#allocation7 + $0xc0] sm:$0xff]
    %v275 = vld [vmem:[#allocation7 + $0xc8] sm:$0xff]
    %v276 = vld [vmem:[#allocation7 + $0xd0] sm:$0xff]
    %v277 = vld [vmem:[#allocation7 + $0xd8] sm:$0xff]
    %v278 = vld [vmem:[#allocation7 + $0xe0] sm:$0xff]
    %v279 = vld [vmem:[#allocation7 + $0xe8] sm:$0xff]
    %v280 = vld [vmem:[#allocation7 + $0xf0] sm:$0xff]
    %v281 = vld [vmem:[#allocation7 + $0xf8] sm:$0xff]
    %v282 = vld [vmem:[#allocation7 + $0x100] sm:$0xff]
    %v283 = vld [vmem:[#allocation7 + $0x108] sm:$0xff]
    %v284 = vld [vmem:[#allocation7 + $0x110] sm:$0xff]
    %v285 = vld [vmem:[#allocation7 + $0x118] sm:$0xff]
    %v286 = vld [vmem:[#allocation7 + $0x120] sm:$0xff]
    %v287 = vld [vmem:[#allocation7 + $0x128] sm:$0xff]
    %v288 = vld [vmem:[#allocation7 + $0x130] sm:$0xff]
    %v289 = vld [vmem:[#allocation7 + $0x138] sm:$0xff]
    %v290 = vld [vmem:[#allocation7 + $0x140] sm:$0xff]
    %v291 = vld [vmem:[#allocation7 + $0x148] sm:$0xff]
    %v292 = vld [vmem:[#allocation7 + $0x150] sm:$0xff]
    %v293 = vld [vmem:[#allocation7 + $0x158] sm:$0xff]
    %v294 = vld [vmem:[#allocation7 + $0x160] sm:$0xff]
    %v295 = vld [vmem:[#allocation7 + $0x168] sm:$0xff]
    %v296 = vld [vmem:[#allocation7 + $0x170] sm:$0xff]
    %v297 = vld [vmem:[#allocation7 + $0x178] sm:$0xff]
    %v298 = vld [vmem:[#allocation7 + $0x180] sm:$0xff]
    %v299 = vld [vmem:[#allocation7 + $0x188] sm:$0xff]
    %v300 = vld [vmem:[#allocation7 + $0x190] sm:$0xff]
    %v301 = vld [vmem:[#allocation7 + $0x198] sm:$0xff]
    %v302 = vld [vmem:[#allocation7 + $0x1a0] sm:$0xff]
    %v303 = vld [vmem:[#allocation7 + $0x1a8] sm:$0xff]
    %v304 = vld [vmem:[#allocation7 + $0x1b0] sm:$0xff]
    %v305 = vld [vmem:[#allocation7 + $0x1b8] sm:$0xff]
    %v306 = vld [vmem:[#allocation7 + $0x1c0] sm:$0xff]
    %v307 = vld [vmem:[#allocation7 + $0x1c8] sm:$0xff]
    %v308 = vld [vmem:[#allocation7 + $0x1d0] sm:$0xff]
    %v309 = vld [vmem:[#allocation7 + $0x1d8] sm:$0xff]
    %v310 = vld [vmem:[#allocation7 + $0x1e0] sm:$0xff]
    %v311 = vld [vmem:[#allocation7 + $0x1e8] sm:$0xff]
    %v312 = vld [vmem:[#allocation7 + $0x1f0] sm:$0xff]
    %v313 = vld [vmem:[#allocation7 + $0x1f8] sm:$0xff]
    %314 = vmatpush.msra.mxu0 %v310
    %315 = vmatpush.msra.mxu0 %v306
    %316 = vmatpush.msra.mxu0 %v302
    %317 = vmatpush.msra.mxu0 %v298
    %318 = vmatpush.msra.mxu0 %v294
    %319 = vmatpush.msra.mxu0 %v290
    %320 = vmatpush.msra.mxu0 %v286
    %321 = vmatpush.msra.mxu0 %v282
    %322 = vmatpush.msra.mxu0 %v278
    %323 = vmatpush.msra.mxu0 %v274
    %324 = vmatpush.msra.mxu0 %v270
    %325 = vmatpush.msra.mxu0 %v266
    %326 = vmatpush.msra.mxu0 %v262
    %327 = vmatpush.msra.mxu0 %v258
    %328 = vmatpush.msra.mxu0 %v254
    %329 = vmatpush.msra.mxu0 %v250
    %330 = vmatmul.f32.gmra.mxu0 %v181
    %v331 = vpop.f32.mrf.mxu0
    %v332 = vadd.f32 0.0, %v331
    %333 = vmatmul.f32.gmra.mxu0 %v184
    %v334 = vpop.f32.mrf.mxu0
    %v335 = vadd.f32 0.0, %v334
    %336 = vdwg.mxu0
    %337 = vmatpush.msra.mxu0 %v311
    %338 = vmatpush.msra.mxu0 %v307
    %339 = vmatpush.msra.mxu0 %v303
    %340 = vmatpush.msra.mxu0 %v299
    %341 = vmatpush.msra.mxu0 %v295
    %342 = vmatpush.msra.mxu0 %v291
    %343 = vmatpush.msra.mxu0 %v287
    %344 = vmatpush.msra.mxu0 %v283
    %345 = vmatpush.msra.mxu0 %v279
    %346 = vmatpush.msra.mxu0 %v275
    %347 = vmatpush.msra.mxu0 %v271
    %348 = vmatpush.msra.mxu0 %v267
    %349 = vmatpush.msra.mxu0 %v263
    %350 = vmatpush.msra.mxu0 %v259
    %351 = vmatpush.msra.mxu0 %v255
    %352 = vmatpush.msra.mxu0 %v251
    %353 = vmatmul.f32.gmra.mxu0 %v181
    %v354 = vpop.f32.mrf.mxu0
    %v355 = vadd.f32 0.0, %v354
    %356 = vmatmul.f32.gmra.mxu0 %v184
    %v357 = vpop.f32.mrf.mxu0
    %v358 = vadd.f32 0.0, %v357
    %359 = vdwg.mxu0
    %360 = vmatpush.msra.mxu0 %v312
    %361 = vmatpush.msra.mxu0 %v308
    %362 = vmatpush.msra.mxu0 %v304
    %363 = vmatpush.msra.mxu0 %v300
    %364 = vmatpush.msra.mxu0 %v296
    %365 = vmatpush.msra.mxu0 %v292
    %366 = vmatpush.msra.mxu0 %v288
    %367 = vmatpush.msra.mxu0 %v284
    %368 = vmatpush.msra.mxu0 %v280
    %369 = vmatpush.msra.mxu0 %v276
    %370 = vmatpush.msra.mxu0 %v272
    %371 = vmatpush.msra.mxu0 %v268
    %372 = vmatpush.msra.mxu0 %v264
    %373 = vmatpush.msra.mxu0 %v260
    %374 = vmatpush.msra.mxu0 %v256
    %375 = vmatpush.msra.mxu0 %v252
    %376 = vmatmul.f32.gmra.mxu0 %v181
    %v377 = vpop.f32.mrf.mxu0
    %v378 = vadd.f32 0.0, %v377
    %379 = vmatmul.f32.gmra.mxu0 %v184
    %v380 = vpop.f32.mrf.mxu0
    %v381 = vadd.f32 0.0, %v380
    %382 = vdwg.mxu0
    %383 = vmatpush.msra.mxu0 %v313
    %384 = vmatpush.msra.mxu0 %v309
    %385 = vmatpush.msra.mxu0 %v305
    %386 = vmatpush.msra.mxu0 %v301
    %387 = vmatpush.msra.mxu0 %v297
    %388 = vmatpush.msra.mxu0 %v293
    %389 = vmatpush.msra.mxu0 %v289
    %390 = vmatpush.msra.mxu0 %v285
    %391 = vmatpush.msra.mxu0 %v281
    %392 = vmatpush.msra.mxu0 %v277
    %393 = vmatpush.msra.mxu0 %v273
    %394 = vmatpush.msra.mxu0 %v269
    %395 = vmatpush.msra.mxu0 %v265
    %396 = vmatpush.msra.mxu0 %v261
    %397 = vmatpush.msra.mxu0 %v257
    %398 = vmatpush.msra.mxu0 %v253
    %399 = vmatmul.f32.gmra.mxu0 %v181
    %v400 = vpop.f32.mrf.mxu0
    %v401 = vadd.f32 0.0, %v400
    %402 = vmatmul.f32.gmra.mxu0 %v184
    %v403 = vpop.f32.mrf.mxu0
    %v404 = vadd.f32 0.0, %v403
    %405 = vdwg.mxu0
    %v406 = vmul.f32 %v332, %v117
    %v407 = vmul.f32 %v355, %v118
    %v408 = vmul.f32 %v378, %v119
    %v409 = vmul.f32 %v401, %v120
    %v410 = vmul.f32 %v335, %v121
    %v411 = vmul.f32 %v358, %v122
    %v412 = vmul.f32 %v381, %v123
    %v413 = vmul.f32 %v404, %v124
    %vm414 = vcmask 130048
    %v416 = vsel %vm414, 1.0, 0
    %418 = vmatpush.msra.mxu0 0.0
    %419 = vmatpush.msra.mxu0 0.0
    %420 = vmatpush.msra.mxu0 0.0
    %421 = vmatpush.msra.mxu0 0.0
    %422 = vmatpush.msra.mxu0 0.0
    %423 = vmatpush.msra.mxu0 0.0
    %424 = vmatpush.msra.mxu0 0.0
    %425 = vmatpush.msra.mxu0 0.0
    %426 = vmatpush.msra.mxu0 0.0
    %427 = vmatpush.msra.mxu0 0.0
    %428 = vmatpush.msra.mxu0 0.0
    %429 = vmatpush.msra.mxu0 0.0
    %430 = vmatpush.msra.mxu0 0.0
    %431 = vmatpush.msra.mxu0 0.0
    %432 = vmatpush.msra.mxu0 %v410
    %433 = vmatpush.msra.mxu0 %v406
    %434 = vmatmul.f32.gmra.mxu0 %v416
    %v435 = vpop.f32.mrf.mxu0
    %v436 = vadd.f32 0.0, %v435
    %437 = vdwg.mxu0
    %438 = vmatpush.msra.mxu0 0.0
    %439 = vmatpush.msra.mxu0 0.0
    %440 = vmatpush.msra.mxu0 0.0
    %441 = vmatpush.msra.mxu0 0.0
    %442 = vmatpush.msra.mxu0 0.0
    %443 = vmatpush.msra.mxu0 0.0
    %444 = vmatpush.msra.mxu0 0.0
    %445 = vmatpush.msra.mxu0 0.0
    %446 = vmatpush.msra.mxu0 0.0
    %447 = vmatpush.msra.mxu0 0.0
    %448 = vmatpush.msra.mxu0 0.0
    %449 = vmatpush.msra.mxu0 0.0
    %450 = vmatpush.msra.mxu0 0.0
    %451 = vmatpush.msra.mxu0 0.0
    %452 = vmatpush.msra.mxu0 %v411
    %453 = vmatpush.msra.mxu0 %v407
    %454 = vmatmul.f32.gmra.mxu0 %v416
    %v455 = vpop.f32.mrf.mxu0
    %v456 = vadd.f32 0.0, %v455
    %457 = vdwg.mxu0
    %458 = vmatpush.msra.mxu0 0.0
    %459 = vmatpush.msra.mxu0 0.0
    %460 = vmatpush.msra.mxu0 0.0
    %461 = vmatpush.msra.mxu0 0.0
    %462 = vmatpush.msra.mxu0 0.0
    %463 = vmatpush.msra.mxu0 0.0
    %464 = vmatpush.msra.mxu0 0.0
    %465 = vmatpush.msra.mxu0 0.0
    %466 = vmatpush.msra.mxu0 0.0
    %467 = vmatpush.msra.mxu0 0.0
    %468 = vmatpush.msra.mxu0 0.0
    %469 = vmatpush.msra.mxu0 0.0
    %470 = vmatpush.msra.mxu0 0.0
    %471 = vmatpush.msra.mxu0 0.0
    %472 = vmatpush.msra.mxu0 %v412
    %473 = vmatpush.msra.mxu0 %v408
    %474 = vmatmul.f32.gmra.mxu0 %v416
    %v475 = vpop.f32.mrf.mxu0
    %v476 = vadd.f32 0.0, %v475
    %477 = vdwg.mxu0
    %478 = vmatpush.msra.mxu0 0.0
    %479 = vmatpush.msra.mxu0 0.0
    %480 = vmatpush.msra.mxu0 0.0
    %481 = vmatpush.msra.mxu0 0.0
    %482 = vmatpush.msra.mxu0 0.0
    %483 = vmatpush.msra.mxu0 0.0
    %484 = vmatpush.msra.mxu0 0.0
    %485 = vmatpush.msra.mxu0 0.0
    %486 = vmatpush.msra.mxu0 0.0
    %487 = vmatpush.msra.mxu0 0.0
    %488 = vmatpush.msra.mxu0 0.0
    %489 = vmatpush.msra.mxu0 0.0
    %490 = vmatpush.msra.mxu0 0.0
    %491 = vmatpush.msra.mxu0 0.0
    %492 = vmatpush.msra.mxu0 %v413
    %493 = vmatpush.msra.mxu0 %v409
    %494 = vmatmul.f32.gmra.mxu0 %v416
    %v495 = vpop.f32.mrf.mxu0
    %v496 = vadd.f32 0.0, %v495
    %497 = vdwg.mxu0
    %v498 = vperm.slane %v436, 0
    %v499 = vperm.slane %v456, 0
    %v500 = vperm.slane %v476, 0
    %v501 = vperm.slane %v496, 0
    %502 = vmatpush.msra.mxu0 %v246
    %503 = vmatpush.msra.mxu0 %v242
    %504 = vmatpush.msra.mxu0 %v238
    %505 = vmatpush.msra.mxu0 %v234
    %506 = vmatpush.msra.mxu0 %v230
    %507 = vmatpush.msra.mxu0 %v226
    %508 = vmatpush.msra.mxu0 %v222
    %509 = vmatpush.msra.mxu0 %v218
    %510 = vmatpush.msra.mxu0 %v214
    %511 = vmatpush.msra.mxu0 %v210
    %512 = vmatpush.msra.mxu0 %v206
    %513 = vmatpush.msra.mxu0 %v202
    %514 = vmatpush.msra.mxu0 %v198
    %515 = vmatpush.msra.mxu0 %v194
    %516 = vmatpush.msra.mxu0 %v190
    %517 = vmatpush.msra.mxu0 %v186
    %518 = vmatmul.f32.gmra.mxu0 %v181
    %v519 = vpop.f32.mrf.mxu0
    %v520 = vadd.f32 %v498, %v519
    %521 = vmatmul.f32.gmra.mxu0 %v184
    %v522 = vpop.f32.mrf.mxu0
    %v523 = vadd.f32 %v498, %v522
    %524 = vdwg.mxu0
    %525 = vmatpush.msra.mxu0 %v247
    %526 = vmatpush.msra.mxu0 %v243
    %527 = vmatpush.msra.mxu0 %v239
    %528 = vmatpush.msra.mxu0 %v235
    %529 = vmatpush.msra.mxu0 %v231
    %530 = vmatpush.msra.mxu0 %v227
    %531 = vmatpush.msra.mxu0 %v223
    %532 = vmatpush.msra.mxu0 %v219
    %533 = vmatpush.msra.mxu0 %v215
    %534 = vmatpush.msra.mxu0 %v211
    %535 = vmatpush.msra.mxu0 %v207
    %536 = vmatpush.msra.mxu0 %v203
    %537 = vmatpush.msra.mxu0 %v199
    %538 = vmatpush.msra.mxu0 %v195
    %539 = vmatpush.msra.mxu0 %v191
    %540 = vmatpush.msra.mxu0 %v187
    %541 = vmatmul.f32.gmra.mxu0 %v181
    %v542 = vpop.f32.mrf.mxu0
    %v543 = vadd.f32 %v499, %v542
    %544 = vmatmul.f32.gmra.mxu0 %v184
    %v545 = vpop.f32.mrf.mxu0
    %v546 = vadd.f32 %v499, %v545
    %547 = vdwg.mxu0
    %548 = vmatpush.msra.mxu0 %v248
    %549 = vmatpush.msra.mxu0 %v244
    %550 = vmatpush.msra.mxu0 %v240
    %551 = vmatpush.msra.mxu0 %v236
    %552 = vmatpush.msra.mxu0 %v232
    %553 = vmatpush.msra.mxu0 %v228
    %554 = vmatpush.msra.mxu0 %v224
    %555 = vmatpush.msra.mxu0 %v220
    %556 = vmatpush.msra.mxu0 %v216
    %557 = vmatpush.msra.mxu0 %v212
    %558 = vmatpush.msra.mxu0 %v208
    %559 = vmatpush.msra.mxu0 %v204
    %560 = vmatpush.msra.mxu0 %v200
    %561 = vmatpush.msra.mxu0 %v196
    %562 = vmatpush.msra.mxu0 %v192
    %563 = vmatpush.msra.mxu0 %v188
    %564 = vmatmul.f32.gmra.mxu0 %v181
    %v565 = vpop.f32.mrf.mxu0
    %v566 = vadd.f32 %v500, %v565
    %567 = vmatmul.f32.gmra.mxu0 %v184
    %v568 = vpop.f32.mrf.mxu0
    %v569 = vadd.f32 %v500, %v568
    %570 = vdwg.mxu0
    %571 = vmatpush.msra.mxu0 %v249
    %572 = vmatpush.msra.mxu0 %v245
    %573 = vmatpush.msra.mxu0 %v241
    %574 = vmatpush.msra.mxu0 %v237
    %575 = vmatpush.msra.mxu0 %v233
    %576 = vmatpush.msra.mxu0 %v229
    %577 = vmatpush.msra.mxu0 %v225
    %578 = vmatpush.msra.mxu0 %v221
    %579 = vmatpush.msra.mxu0 %v217
    %580 = vmatpush.msra.mxu0 %v213
    %581 = vmatpush.msra.mxu0 %v209
    %582 = vmatpush.msra.mxu0 %v205
    %583 = vmatpush.msra.mxu0 %v201
    %584 = vmatpush.msra.mxu0 %v197
    %585 = vmatpush.msra.mxu0 %v193
    %586 = vmatpush.msra.mxu0 %v189
    %587 = vmatmul.f32.gmra.mxu0 %v181
    %v588 = vpop.f32.mrf.mxu0
    %v589 = vadd.f32 %v501, %v588
    %590 = vmatmul.f32.gmra.mxu0 %v184
    %v591 = vpop.f32.mrf.mxu0
    %v592 = vadd.f32 %v501, %v591
    %593 = vdwg.mxu0
    %vm594 = vcmp.gt.f32.partialorder %v520, 0.0
    %vm595 = vcmp.gt.f32.partialorder %v543, 0.0
    %vm596 = vcmp.gt.f32.partialorder %v566, 0.0
    %vm597 = vcmp.gt.f32.partialorder %v589, 0.0
    %vm598 = vcmp.gt.f32.partialorder %v523, 0.0
    %vm599 = vcmp.gt.f32.partialorder %v546, 0.0
    %vm600 = vcmp.gt.f32.partialorder %v569, 0.0
    %vm601 = vcmp.gt.f32.partialorder %v592, 0.0
    %v602 = vmul.f32 %v520, 0.2
    %v603 = vmul.f32 %v543, 0.2
    %v604 = vmul.f32 %v566, 0.2
    %v605 = vmul.f32 %v589, 0.2
    %v606 = vmul.f32 %v523, 0.2
    %v607 = vmul.f32 %v546, 0.2
    %v608 = vmul.f32 %v569, 0.2
    %v609 = vmul.f32 %v592, 0.2
    %v610 = vsel %vm594, %v520, %v602
    %v611 = vsel %vm595, %v543, %v603
    %v612 = vsel %vm596, %v566, %v604
    %v613 = vsel %vm597, %v589, %v605
    %v614 = vsel %vm598, %v523, %v606
    %v615 = vsel %vm599, %v546, %v607
    %v616 = vsel %vm600, %v569, %v608
    %v617 = vsel %vm601, %v592, %v609
    %v619 = vperm.slane %v152, 0
    %v620 = vperm.slane %v152, 1
    %v621 = vperm.slane %v152, 2
    %v622 = vperm.slane %v152, 3
    %v627 = vmul.f32 %v610, %v619
    %v628 = vmul.f32 %v611, %v620
    %v629 = vmul.f32 %v612, %v621
    %v630 = vmul.f32 %v613, %v622
    %v631 = vmul.f32 %v614, %v619
    %v632 = vmul.f32 %v615, %v620
    %v633 = vmul.f32 %v616, %v621
    %v634 = vmul.f32 %v617, %v622
    %v635 = vld [vmem:[#allocation8] sm:$0xff]
    %v636 = vld [vmem:[#allocation8 + $0x8] sm:$0xff]
    %v637 = vld [vmem:[#allocation8 + $0x10] sm:$0xff]
    %v638 = vld [vmem:[#allocation8 + $0x18] sm:$0xff]
    %v639 = vld [vmem:[#allocation8 + $0x20] sm:$0xff]
    %v640 = vld [vmem:[#allocation8 + $0x28] sm:$0xff]
    %v641 = vld [vmem:[#allocation8 + $0x30] sm:$0xff]
    %v642 = vld [vmem:[#allocation8 + $0x38] sm:$0xff]
    %v643 = vld [vmem:[#allocation8 + $0x40] sm:$0xff]
    %v644 = vld [vmem:[#allocation8 + $0x48] sm:$0xff]
    %v645 = vld [vmem:[#allocation8 + $0x50] sm:$0xff]
    %v646 = vld [vmem:[#allocation8 + $0x58] sm:$0xff]
    %v647 = vld [vmem:[#allocation8 + $0x60] sm:$0xff]
    %v648 = vld [vmem:[#allocation8 + $0x68] sm:$0xff]
    %v649 = vld [vmem:[#allocation8 + $0x70] sm:$0xff]
    %v650 = vld [vmem:[#allocation8 + $0x78] sm:$0xff]
    %v651 = vld [vmem:[#allocation8 + $0x80] sm:$0xff]
    %v652 = vld [vmem:[#allocation8 + $0x88] sm:$0xff]
    %v653 = vld [vmem:[#allocation8 + $0x90] sm:$0xff]
    %v654 = vld [vmem:[#allocation8 + $0x98] sm:$0xff]
    %v655 = vld [vmem:[#allocation8 + $0xa0] sm:$0xff]
    %v656 = vld [vmem:[#allocation8 + $0xa8] sm:$0xff]
    %v657 = vld [vmem:[#allocation8 + $0xb0] sm:$0xff]
    %v658 = vld [vmem:[#allocation8 + $0xb8] sm:$0xff]
    %v659 = vld [vmem:[#allocation8 + $0xc0] sm:$0xff]
    %v660 = vld [vmem:[#allocation8 + $0xc8] sm:$0xff]
    %v661 = vld [vmem:[#allocation8 + $0xd0] sm:$0xff]
    %v662 = vld [vmem:[#allocation8 + $0xd8] sm:$0xff]
    %v663 = vld [vmem:[#allocation8 + $0xe0] sm:$0xff]
    %v664 = vld [vmem:[#allocation8 + $0xe8] sm:$0xff]
    %v665 = vld [vmem:[#allocation8 + $0xf0] sm:$0xff]
    %v666 = vld [vmem:[#allocation8 + $0xf8] sm:$0xff]
    %v667 = vld [vmem:[#allocation8 + $0x100] sm:$0xff]
    %v668 = vld [vmem:[#allocation8 + $0x108] sm:$0xff]
    %v669 = vld [vmem:[#allocation8 + $0x110] sm:$0xff]
    %v670 = vld [vmem:[#allocation8 + $0x118] sm:$0xff]
    %v671 = vld [vmem:[#allocation8 + $0x120] sm:$0xff]
    %v672 = vld [vmem:[#allocation8 + $0x128] sm:$0xff]
    %v673 = vld [vmem:[#allocation8 + $0x130] sm:$0xff]
    %v674 = vld [vmem:[#allocation8 + $0x138] sm:$0xff]
    %v675 = vld [vmem:[#allocation8 + $0x140] sm:$0xff]
    %v676 = vld [vmem:[#allocation8 + $0x148] sm:$0xff]
    %v677 = vld [vmem:[#allocation8 + $0x150] sm:$0xff]
    %v678 = vld [vmem:[#allocation8 + $0x158] sm:$0xff]
    %v679 = vld [vmem:[#allocation8 + $0x160] sm:$0xff]
    %v680 = vld [vmem:[#allocation8 + $0x168] sm:$0xff]
    %v681 = vld [vmem:[#allocation8 + $0x170] sm:$0xff]
    %v682 = vld [vmem:[#allocation8 + $0x178] sm:$0xff]
    %v683 = vld [vmem:[#allocation8 + $0x180] sm:$0xff]
    %v684 = vld [vmem:[#allocation8 + $0x188] sm:$0xff]
    %v685 = vld [vmem:[#allocation8 + $0x190] sm:$0xff]
    %v686 = vld [vmem:[#allocation8 + $0x198] sm:$0xff]
    %v687 = vld [vmem:[#allocation8 + $0x1a0] sm:$0xff]
    %v688 = vld [vmem:[#allocation8 + $0x1a8] sm:$0xff]
    %v689 = vld [vmem:[#allocation8 + $0x1b0] sm:$0xff]
    %v690 = vld [vmem:[#allocation8 + $0x1b8] sm:$0xff]
    %v691 = vld [vmem:[#allocation8 + $0x1c0] sm:$0xff]
    %v692 = vld [vmem:[#allocation8 + $0x1c8] sm:$0xff]
    %v693 = vld [vmem:[#allocation8 + $0x1d0] sm:$0xff]
    %v694 = vld [vmem:[#allocation8 + $0x1d8] sm:$0xff]
    %v695 = vld [vmem:[#allocation8 + $0x1e0] sm:$0xff]
    %v696 = vld [vmem:[#allocation8 + $0x1e8] sm:$0xff]
    %v697 = vld [vmem:[#allocation8 + $0x1f0] sm:$0xff]
    %v698 = vld [vmem:[#allocation8 + $0x1f8] sm:$0xff]
    %699 = vmatpush.msra.mxu0 %v650
    %700 = vmatpush.msra.mxu0 %v649
    %701 = vmatpush.msra.mxu0 %v648
    %702 = vmatpush.msra.mxu0 %v647
    %703 = vmatpush.msra.mxu0 %v646
    %704 = vmatpush.msra.mxu0 %v645
    %705 = vmatpush.msra.mxu0 %v644
    %706 = vmatpush.msra.mxu0 %v643
    %707 = vmatpush.msra.mxu0 %v642
    %708 = vmatpush.msra.mxu0 %v641
    %709 = vmatpush.msra.mxu0 %v640
    %710 = vmatpush.msra.mxu0 %v639
    %711 = vmatpush.msra.mxu0 %v638
    %712 = vmatpush.msra.mxu0 %v637
    %713 = vmatpush.msra.mxu0 %v636
    %714 = vmatpush.msra.mxu0 %v635
    %715 = vmatmul.f32.gmra.mxu0 %v627
    %v716 = vpop.f32.mrf.mxu0
    %v717 = vadd.f32 %v125, %v716
    %718 = vmatmul.f32.gmra.mxu0 %v631
    %v719 = vpop.f32.mrf.mxu0
    %v720 = vadd.f32 %v126, %v719
    %721 = vdwg.mxu0
    %722 = vmatpush.msra.mxu0 %v666
    %723 = vmatpush.msra.mxu0 %v665
    %724 = vmatpush.msra.mxu0 %v664
    %725 = vmatpush.msra.mxu0 %v663
    %726 = vmatpush.msra.mxu0 %v662
    %727 = vmatpush.msra.mxu0 %v661
    %728 = vmatpush.msra.mxu0 %v660
    %729 = vmatpush.msra.mxu0 %v659
    %730 = vmatpush.msra.mxu0 %v658
    %731 = vmatpush.msra.mxu0 %v657
    %732 = vmatpush.msra.mxu0 %v656
    %733 = vmatpush.msra.mxu0 %v655
    %734 = vmatpush.msra.mxu0 %v654
    %735 = vmatpush.msra.mxu0 %v653
    %736 = vmatpush.msra.mxu0 %v652
    %737 = vmatpush.msra.mxu0 %v651
    %738 = vmatmul.f32.gmra.mxu0 %v628
    %v739 = vpop.f32.mrf.mxu0
    %v740 = vadd.f32 %v717, %v739
    %741 = vmatmul.f32.gmra.mxu0 %v632
    %v742 = vpop.f32.mrf.mxu0
    %v743 = vadd.f32 %v720, %v742
    %744 = vdwg.mxu0
    %745 = vmatpush.msra.mxu0 %v682
    %746 = vmatpush.msra.mxu0 %v681
    %747 = vmatpush.msra.mxu0 %v680
    %748 = vmatpush.msra.mxu0 %v679
    %749 = vmatpush.msra.mxu0 %v678
    %750 = vmatpush.msra.mxu0 %v677
    %751 = vmatpush.msra.mxu0 %v676
    %752 = vmatpush.msra.mxu0 %v675
    %753 = vmatpush.msra.mxu0 %v674
    %754 = vmatpush.msra.mxu0 %v673
    %755 = vmatpush.msra.mxu0 %v672
    %756 = vmatpush.msra.mxu0 %v671
    %757 = vmatpush.msra.mxu0 %v670
    %758 = vmatpush.msra.mxu0 %v669
    %759 = vmatpush.msra.mxu0 %v668
    %760 = vmatpush.msra.mxu0 %v667
    %761 = vmatmul.f32.gmra.mxu0 %v629
    %v762 = vpop.f32.mrf.mxu0
    %v763 = vadd.f32 %v740, %v762
    %764 = vmatmul.f32.gmra.mxu0 %v633
    %v765 = vpop.f32.mrf.mxu0
    %v766 = vadd.f32 %v743, %v765
    %767 = vdwg.mxu0
    %768 = vmatpush.msra.mxu0 %v698
    %769 = vmatpush.msra.mxu0 %v697
    %770 = vmatpush.msra.mxu0 %v696
    %771 = vmatpush.msra.mxu0 %v695
    %772 = vmatpush.msra.mxu0 %v694
    %773 = vmatpush.msra.mxu0 %v693
    %774 = vmatpush.msra.mxu0 %v692
    %775 = vmatpush.msra.mxu0 %v691
    %776 = vmatpush.msra.mxu0 %v690
    %777 = vmatpush.msra.mxu0 %v689
    %778 = vmatpush.msra.mxu0 %v688
    %779 = vmatpush.msra.mxu0 %v687
    %780 = vmatpush.msra.mxu0 %v686
    %781 = vmatpush.msra.mxu0 %v685
    %782 = vmatpush.msra.mxu0 %v684
    %783 = vmatpush.msra.mxu0 %v683
    %784 = vmatmul.f32.gmra.mxu0 %v630
    %v785 = vpop.f32.mrf.mxu0
    %v786 = vadd.f32 %v763, %v785
    %787 = vmatmul.f32.gmra.mxu0 %v634
    %v788 = vpop.f32.mrf.mxu0
    %v789 = vadd.f32 %v766, %v788
    %790 = vdwg.mxu0
    %791 = vrot.lane.b32.xlu0 %v786, 8
    %v792 = vpop.permute.xlu0 %791
    %793 = vrot.lane.b32.xlu0 %v789, 8
    %v794 = vpop.permute.xlu0 %793
    %v795 = vmax.f32 %v786, %v792
    %v796 = vmax.f32 %v789, %v794
    %797 = vrot.lane.b32.xlu0 %v795, 16
    %v798 = vpop.permute.xlu0 %797
    %799 = vrot.lane.b32.xlu0 %v796, 16
    %v800 = vpop.permute.xlu0 %799
    %v801 = vmax.f32 %v795, %v798
    %v802 = vmax.f32 %v796, %v800
    %803 = vrot.lane.b32.xlu0 %v801, 32
    %v804 = vpop.permute.xlu0 %803
    %805 = vrot.lane.b32.xlu0 %v802, 32
    %v806 = vpop.permute.xlu0 %805
    %v807 = vmax.f32 %v801, %v804
    %v808 = vmax.f32 %v802, %v806
    %809 = vrot.lane.b32.xlu0 %v807, 64
    %v810 = vpop.permute.xlu0 %809
    %811 = vrot.lane.b32.xlu0 %v808, 64
    %v812 = vpop.permute.xlu0 %811
    %v813 = vmax.f32 %v807, %v810
    %v814 = vmax.f32 %v808, %v812
    %v815 = vsub.f32 %v786, %v813
    %v816 = vsub.f32 %v789, %v814
    %v817 = vmul.f32 %v815, 1.442695
    %v818 = vpow.pop %v817
    %v819 = vmul.f32 %v816, 1.442695
    %v820 = vpow.pop %v819
    %v821 = vmul.f32 %v818, %v127
    %v822 = vmul.f32 %v820, %v128
    %v823 = vld [vmem:[%s8] sm:$0xff]
    %v824 = vld [vmem:[%s8 + $0x8] sm:$0xff]
    %v825 = vld [vmem:[%s8 + $0x10] sm:$0xff]
    %v826 = vld [vmem:[%s8 + $0x18] sm:$0xff]
    %v827 = vld [vmem:[%s8 + $0x20] sm:$0xff]
    %v828 = vld [vmem:[%s8 + $0x28] sm:$0xff]
    %v829 = vld [vmem:[%s8 + $0x30] sm:$0xff]
    %v830 = vld [vmem:[%s8 + $0x38] sm:$0xff]
    %v831 = vld [vmem:[%s8 + $0x40] sm:$0xff]
    %v832 = vld [vmem:[%s8 + $0x48] sm:$0xff]
    %v833 = vld [vmem:[%s8 + $0x50] sm:$0xff]
    %v834 = vld [vmem:[%s8 + $0x58] sm:$0xff]
    %v835 = vld [vmem:[%s8 + $0x60] sm:$0xff]
    %v836 = vld [vmem:[%s8 + $0x68] sm:$0xff]
    %v837 = vld [vmem:[%s8 + $0x70] sm:$0xff]
    %v838 = vld [vmem:[%s8 + $0x78] sm:$0xff]
    %839 = vmatpush.msra.mxu0 %v838
    %840 = vmatpush.msra.mxu0 %v837
    %841 = vmatpush.msra.mxu0 %v836
    %842 = vmatpush.msra.mxu0 %v835
    %843 = vmatpush.msra.mxu0 %v834
    %844 = vmatpush.msra.mxu0 %v833
    %845 = vmatpush.msra.mxu0 %v832
    %846 = vmatpush.msra.mxu0 %v831
    %847 = vmatpush.msra.mxu0 %v830
    %848 = vmatpush.msra.mxu0 %v829
    %849 = vmatpush.msra.mxu0 %v828
    %850 = vmatpush.msra.mxu0 %v827
    %851 = vmatpush.msra.mxu0 %v826
    %852 = vmatpush.msra.mxu0 %v825
    %853 = vmatpush.msra.mxu0 %v824
    %854 = vmatpush.msra.mxu0 %v823
    %855 = vmatmul.f32.gmra.mxu0 %v821
    %v856 = vpop.f32.mrf.mxu0
    %v857 = vadd.f32 0.0, %v856
    %858 = vmatmul.f32.gmra.mxu0 %v822
    %v859 = vpop.f32.mrf.mxu0
    %v860 = vadd.f32 0.0, %v859
    %861 = vdwg.mxu0
    %v862 = vmax.f32 %v857, 1e-30
    %v863 = vmax.f32 %v860, 1e-30
    %v864 = vrcp.pop %v862
    %v865 = vmul.f32 %v862, %v864
    %v866 = vsub.f32 1.0, %v865
    %v867 = vmul.f32 %v864, %v866
    %v868 = vadd.f32 %v864, %v867
    %vm869 = vweird.f32 %v862
    %vm870 = vweird.f32 %v864
    %vm871 = vmor %vm869, %vm870
    %v872 = vsel %vm871, %v864, %v868
    %v873 = vand.u32 2147483647, %v862
    %vm874 = vcmp.eq.f32.partialorder %v873, 8.507059e+37
    %v875 = vand.u32 %v862, 2147483648
    %v876 = vor.u32 1.1754944e-38, %v875
    %v877 = vsel %vm874, %v876, %v872
    %v878 = vmul.f32 %v821, %v877
    %v879 = vrcp.pop %v863
    %v880 = vmul.f32 %v863, %v879
    %v881 = vsub.f32 1.0, %v880
    %v882 = vmul.f32 %v879, %v881
    %v883 = vadd.f32 %v879, %v882
    %vm884 = vweird.f32 %v863
    %vm885 = vweird.f32 %v879
    %vm886 = vmor %vm884, %vm885
    %v887 = vsel %vm886, %v879, %v883
    %v888 = vand.u32 2147483647, %v863
    %vm889 = vcmp.eq.f32.partialorder %v888, 8.507059e+37
    %v890 = vand.u32 %v863, 2147483648
    %v891 = vor.u32 1.1754944e-38, %v890
    %v892 = vsel %vm889, %v891, %v887
    %v893 = vmul.f32 %v822, %v892
    %v894 = vld [vmem:[%s9] sm:$0xff]
    %v895 = vld [vmem:[%s9 + $0x8] sm:$0xff]
    %v896 = vld [vmem:[%s9 + $0x10] sm:$0xff]
    %v897 = vld [vmem:[%s9 + $0x18] sm:$0xff]
    %v898 = vld [vmem:[%s9 + $0x20] sm:$0xff]
    %v899 = vld [vmem:[%s9 + $0x28] sm:$0xff]
    %v900 = vld [vmem:[%s9 + $0x30] sm:$0xff]
    %v901 = vld [vmem:[%s9 + $0x38] sm:$0xff]
    %v902 = vld [vmem:[%s9 + $0x40] sm:$0xff]
    %v903 = vld [vmem:[%s9 + $0x48] sm:$0xff]
    %v904 = vld [vmem:[%s9 + $0x50] sm:$0xff]
    %v905 = vld [vmem:[%s9 + $0x58] sm:$0xff]
    %v906 = vld [vmem:[%s9 + $0x60] sm:$0xff]
    %v907 = vld [vmem:[%s9 + $0x68] sm:$0xff]
    %v908 = vld [vmem:[%s9 + $0x70] sm:$0xff]
    %v909 = vld [vmem:[%s9 + $0x78] sm:$0xff]
    %v911 = vsel %vm414, %v894, 0
    %v914 = vsel %vm414, %v895, 0
    %v917 = vsel %vm414, %v896, 0
    %v920 = vsel %vm414, %v897, 0
    %v923 = vsel %vm414, %v898, 0
    %v926 = vsel %vm414, %v899, 0
    %v929 = vsel %vm414, %v900, 0
    %v932 = vsel %vm414, %v901, 0
    %v935 = vsel %vm414, %v902, 0
    %v938 = vsel %vm414, %v903, 0
    %v941 = vsel %vm414, %v904, 0
    %v944 = vsel %vm414, %v905, 0
    %v947 = vsel %vm414, %v906, 0
    %v950 = vsel %vm414, %v907, 0
    %v953 = vsel %vm414, %v908, 0
    %v956 = vsel %vm414, %v909, 0
    %958 = vmatpush.msra.mxu0 0.0
    %959 = vmatpush.msra.mxu0 0.0
    %960 = vmatpush.msra.mxu0 0.0
    %961 = vmatpush.msra.mxu0 0.0
    %962 = vmatpush.msra.mxu0 0.0
    %963 = vmatpush.msra.mxu0 0.0
    %964 = vmatpush.msra.mxu0 0.0
    %965 = vmatpush.msra.mxu0 0.0
    %966 = vmatpush.msra.mxu0 0.0
    %967 = vmatpush.msra.mxu0 0.0
    %968 = vmatpush.msra.mxu0 0.0
    %969 = vmatpush.msra.mxu0 0.0
    %970 = vmatpush.msra.mxu0 0.0
    %971 = vmatpush.msra.mxu0 0.0
    %972 = vmatpush.msra.mxu0 %v184
    %973 = vmatpush.msra.mxu0 %v181
    %974 = vmatmul.f32.gmra.mxu0 %v911
    %v975 = vpop.f32.mrf.mxu0
    %v976 = vadd.f32 0.0, %v975
    %977 = vmatmul.f32.gmra.mxu0 %v914
    %v978 = vpop.f32.mrf.mxu0
    %v979 = vadd.f32 0.0, %v978
    %980 = vmatmul.f32.gmra.mxu0 %v917
    %v981 = vpop.f32.mrf.mxu0
    %v982 = vadd.f32 0.0, %v981
    %983 = vmatmul.f32.gmra.mxu0 %v920
    %v984 = vpop.f32.mrf.mxu0
    %v985 = vadd.f32 0.0, %v984
    %986 = vmatmul.f32.gmra.mxu0 %v923
    %v987 = vpop.f32.mrf.mxu0
    %v988 = vadd.f32 0.0, %v987
    %989 = vmatmul.f32.gmra.mxu0 %v926
    %v990 = vpop.f32.mrf.mxu0
    %v991 = vadd.f32 0.0, %v990
    %992 = vmatmul.f32.gmra.mxu0 %v929
    %v993 = vpop.f32.mrf.mxu0
    %v994 = vadd.f32 0.0, %v993
    %995 = vmatmul.f32.gmra.mxu0 %v932
    %v996 = vpop.f32.mrf.mxu0
    %v997 = vadd.f32 0.0, %v996
    %998 = vmatmul.f32.gmra.mxu0 %v935
    %v999 = vpop.f32.mrf.mxu0
    %v1000 = vadd.f32 0.0, %v999
    %1001 = vmatmul.f32.gmra.mxu0 %v938
    %v1002 = vpop.f32.mrf.mxu0
    %v1003 = vadd.f32 0.0, %v1002
    %1004 = vmatmul.f32.gmra.mxu0 %v941
    %v1005 = vpop.f32.mrf.mxu0
    %v1006 = vadd.f32 0.0, %v1005
    %1007 = vmatmul.f32.gmra.mxu0 %v944
    %v1008 = vpop.f32.mrf.mxu0
    %v1009 = vadd.f32 0.0, %v1008
    %1010 = vmatmul.f32.gmra.mxu0 %v947
    %v1011 = vpop.f32.mrf.mxu0
    %v1012 = vadd.f32 0.0, %v1011
    %1013 = vmatmul.f32.gmra.mxu0 %v950
    %v1014 = vpop.f32.mrf.mxu0
    %v1015 = vadd.f32 0.0, %v1014
    %1016 = vmatmul.f32.gmra.mxu0 %v953
    %v1017 = vpop.f32.mrf.mxu0
    %v1018 = vadd.f32 0.0, %v1017
    %1019 = vmatmul.f32.gmra.mxu0 %v956
    %v1020 = vpop.f32.mrf.mxu0
    %v1021 = vadd.f32 0.0, %v1020
    %1022 = vdwg.mxu0
    %v1023 = vmul.f32 %v976, %v129
    %v1024 = vmul.f32 %v979, %v130
    %v1025 = vmul.f32 %v982, %v131
    %v1026 = vmul.f32 %v985, %v132
    %v1027 = vmul.f32 %v988, %v133
    %v1028 = vmul.f32 %v991, %v134
    %v1029 = vmul.f32 %v994, %v135
    %v1030 = vmul.f32 %v997, %v136
    %v1031 = vmul.f32 %v1000, %v137
    %v1032 = vmul.f32 %v1003, %v138
    %v1033 = vmul.f32 %v1006, %v139
    %v1034 = vmul.f32 %v1009, %v140
    %v1035 = vmul.f32 %v1012, %v141
    %v1036 = vmul.f32 %v1015, %v142
    %v1037 = vmul.f32 %v1018, %v143
    %v1038 = vmul.f32 %v1021, %v144
    %1041 = vrot.lane.b32.xlu0 %v181, 64
    %v1042 = vpop.permute.xlu0 %1041
    %1043 = vrot.lane.b32.xlu0 %v184, 64
    %v1044 = vpop.permute.xlu0 %1043
    %1047 = vmatpush.msra.mxu0 %v1038
    %1048 = vmatpush.msra.mxu0 %v1037
    %1049 = vmatpush.msra.mxu0 %v1036
    %1050 = vmatpush.msra.mxu0 %v1035
    %1051 = vmatpush.msra.mxu0 %v1034
    %1052 = vmatpush.msra.mxu0 %v1033
    %1053 = vmatpush.msra.mxu0 %v1032
    %1054 = vmatpush.msra.mxu0 %v1031
    %1055 = vmatpush.msra.mxu0 %v1030
    %1056 = vmatpush.msra.mxu0 %v1029
    %1057 = vmatpush.msra.mxu0 %v1028
    %1058 = vmatpush.msra.mxu0 %v1027
    %1059 = vmatpush.msra.mxu0 %v1026
    %1060 = vmatpush.msra.mxu0 %v1025
    %1061 = vmatpush.msra.mxu0 %v1024
    %1062 = vmatpush.msra.mxu0 %v1023
    %1063 = vmatmul.f32.gmra.mxu0 %v878
    %v1064 = vpop.f32.mrf.mxu0
    %v1065 = vadd.f32 %v1042, %v1064
    %1066 = vmatmul.f32.gmra.mxu0 %v893
    %v1067 = vpop.f32.mrf.mxu0
    %v1068 = vadd.f32 %v1044, %v1067
    %1069 = vdwg.mxu0
    %vm1070 = vcmp.gt.f32.partialorder %v1065, 0.0
    %vm1071 = vcmp.gt.f32.partialorder %v1068, 0.0
    %v1072 = vmin.f32 %v1065, 0.0
    %v1073 = vmin.f32 %v1068, 0.0
    %v1074 = vmul.f32 %v1072, 1.442695
    %v1075 = vpow.pop %v1074
    %v1076 = vmul.f32 %v1073, 1.442695
    %v1077 = vpow.pop %v1076
    %v1078 = vsub.f32 %v1075, 1.0
    %v1079 = vsub.f32 %v1077, 1.0
    %v1080 = vsel %vm1070, %v1065, %v1078
    %v1081 = vsel %vm1071, %v1068, %v1079
    %s1082 = scalar_lea.vmem [#allocation2], 32
    %v1083 = vld [vmem:[%s1082] sm:$0xff]
    %v1084 = vld [vmem:[%s1082 + $0x8] sm:$0xff]
    %v1085 = vld [vmem:[%s1082 + $0x10] sm:$0xff]
    %v1086 = vld [vmem:[%s1082 + $0x18] sm:$0xff]
    %s1087 = scalar_lea.vmem %s2, 1
    %v1088 = vld [vmem:[%s1087] sm:$0x1]
    %s1089 = scalar_lea.vmem %s3, 4
    %v1090 = vld [vmem:[%s1089] sm:$0xf]
    %v1092 = vperm.slane %v1088, 0
    %v1095 = vsel %vm156, %v1080, 0
    %v1098 = vsel %vm156, %v1081, 0
    %1100 = vmatpush.msra.mxu0 0.0
    %1101 = vmatpush.msra.mxu0 0.0
    %1102 = vmatpush.msra.mxu0 0.0
    %1103 = vmatpush.msra.mxu0 0.0
    %1104 = vmatpush.msra.mxu0 0.0
    %1105 = vmatpush.msra.mxu0 0.0
    %1106 = vmatpush.msra.mxu0 0.0
    %1107 = vmatpush.msra.mxu0 0.0
    %1108 = vmatpush.msra.mxu0 0.0
    %1109 = vmatpush.msra.mxu0 0.0
    %1110 = vmatpush.msra.mxu0 0.0
    %1111 = vmatpush.msra.mxu0 0.0
    %1112 = vmatpush.msra.mxu0 %v1086
    %1113 = vmatpush.msra.mxu0 %v1085
    %1114 = vmatpush.msra.mxu0 %v1084
    %1115 = vmatpush.msra.mxu0 %v1083
    %1116 = vmatmul.f32.gmra.mxu0 %v1095
    %v1117 = vpop.f32.mrf.mxu0
    %v1118 = vadd.f32 %v1092, %v1117
    %1119 = vmatmul.f32.gmra.mxu0 %v1098
    %v1120 = vpop.f32.mrf.mxu0
    %v1121 = vadd.f32 %v1092, %v1120
    %1122 = vdwg.mxu0
    %1123 = vmatpush.msra.mxu0 %v310
    %1124 = vmatpush.msra.mxu0 %v306
    %1125 = vmatpush.msra.mxu0 %v302
    %1126 = vmatpush.msra.mxu0 %v298
    %1127 = vmatpush.msra.mxu0 %v294
    %1128 = vmatpush.msra.mxu0 %v290
    %1129 = vmatpush.msra.mxu0 %v286
    %1130 = vmatpush.msra.mxu0 %v282
    %1131 = vmatpush.msra.mxu0 %v278
    %1132 = vmatpush.msra.mxu0 %v274
    %1133 = vmatpush.msra.mxu0 %v270
    %1134 = vmatpush.msra.mxu0 %v266
    %1135 = vmatpush.msra.mxu0 %v262
    %1136 = vmatpush.msra.mxu0 %v258
    %1137 = vmatpush.msra.mxu0 %v254
    %1138 = vmatpush.msra.mxu0 %v250
    %1139 = vmatmul.f32.gmra.mxu0 %v1118
    %v1140 = vpop.f32.mrf.mxu0
    %v1141 = vadd.f32 0.0, %v1140
    %1142 = vmatmul.f32.gmra.mxu0 %v1121
    %v1143 = vpop.f32.mrf.mxu0
    %v1144 = vadd.f32 0.0, %v1143
    %1145 = vdwg.mxu0
    %1146 = vmatpush.msra.mxu0 %v311
    %1147 = vmatpush.msra.mxu0 %v307
    %1148 = vmatpush.msra.mxu0 %v303
    %1149 = vmatpush.msra.mxu0 %v299
    %1150 = vmatpush.msra.mxu0 %v295
    %1151 = vmatpush.msra.mxu0 %v291
    %1152 = vmatpush.msra.mxu0 %v287
    %1153 = vmatpush.msra.mxu0 %v283
    %1154 = vmatpush.msra.mxu0 %v279
    %1155 = vmatpush.msra.mxu0 %v275
    %1156 = vmatpush.msra.mxu0 %v271
    %1157 = vmatpush.msra.mxu0 %v267
    %1158 = vmatpush.msra.mxu0 %v263
    %1159 = vmatpush.msra.mxu0 %v259
    %1160 = vmatpush.msra.mxu0 %v255
    %1161 = vmatpush.msra.mxu0 %v251
    %1162 = vmatmul.f32.gmra.mxu0 %v1118
    %v1163 = vpop.f32.mrf.mxu0
    %v1164 = vadd.f32 0.0, %v1163
    %1165 = vmatmul.f32.gmra.mxu0 %v1121
    %v1166 = vpop.f32.mrf.mxu0
    %v1167 = vadd.f32 0.0, %v1166
    %1168 = vdwg.mxu0
    %1169 = vmatpush.msra.mxu0 %v312
    %1170 = vmatpush.msra.mxu0 %v308
    %1171 = vmatpush.msra.mxu0 %v304
    %1172 = vmatpush.msra.mxu0 %v300
    %1173 = vmatpush.msra.mxu0 %v296
    %1174 = vmatpush.msra.mxu0 %v292
    %1175 = vmatpush.msra.mxu0 %v288
    %1176 = vmatpush.msra.mxu0 %v284
    %1177 = vmatpush.msra.mxu0 %v280
    %1178 = vmatpush.msra.mxu0 %v276
    %1179 = vmatpush.msra.mxu0 %v272
    %1180 = vmatpush.msra.mxu0 %v268
    %1181 = vmatpush.msra.mxu0 %v264
    %1182 = vmatpush.msra.mxu0 %v260
    %1183 = vmatpush.msra.mxu0 %v256
    %1184 = vmatpush.msra.mxu0 %v252
    %1185 = vmatmul.f32.gmra.mxu0 %v1118
    %v1186 = vpop.f32.mrf.mxu0
    %v1187 = vadd.f32 0.0, %v1186
    %1188 = vmatmul.f32.gmra.mxu0 %v1121
    %v1189 = vpop.f32.mrf.mxu0
    %v1190 = vadd.f32 0.0, %v1189
    %1191 = vdwg.mxu0
    %1192 = vmatpush.msra.mxu0 %v313
    %1193 = vmatpush.msra.mxu0 %v309
    %1194 = vmatpush.msra.mxu0 %v305
    %1195 = vmatpush.msra.mxu0 %v301
    %1196 = vmatpush.msra.mxu0 %v297
    %1197 = vmatpush.msra.mxu0 %v293
    %1198 = vmatpush.msra.mxu0 %v289
    %1199 = vmatpush.msra.mxu0 %v285
    %1200 = vmatpush.msra.mxu0 %v281
    %1201 = vmatpush.msra.mxu0 %v277
    %1202 = vmatpush.msra.mxu0 %v273
    %1203 = vmatpush.msra.mxu0 %v269
    %1204 = vmatpush.msra.mxu0 %v265
    %1205 = vmatpush.msra.mxu0 %v261
    %1206 = vmatpush.msra.mxu0 %v257
    %1207 = vmatpush.msra.mxu0 %v253
    %1208 = vmatmul.f32.gmra.mxu0 %v1118
    %v1209 = vpop.f32.mrf.mxu0
    %v1210 = vadd.f32 0.0, %v1209
    %1211 = vmatmul.f32.gmra.mxu0 %v1121
    %v1212 = vpop.f32.mrf.mxu0
    %v1213 = vadd.f32 0.0, %v1212
    %1214 = vdwg.mxu0
    %v1215 = vmul.f32 %v1141, %v117
    %v1216 = vmul.f32 %v1164, %v118
    %v1217 = vmul.f32 %v1187, %v119
    %v1218 = vmul.f32 %v1210, %v120
    %v1219 = vmul.f32 %v1144, %v121
    %v1220 = vmul.f32 %v1167, %v122
    %v1221 = vmul.f32 %v1190, %v123
    %v1222 = vmul.f32 %v1213, %v124
    %1223 = vmatpush.msra.mxu0 0.0
    %1224 = vmatpush.msra.mxu0 0.0
    %1225 = vmatpush.msra.mxu0 0.0
    %1226 = vmatpush.msra.mxu0 0.0
    %1227 = vmatpush.msra.mxu0 0.0
    %1228 = vmatpush.msra.mxu0 0.0
    %1229 = vmatpush.msra.mxu0 0.0
    %1230 = vmatpush.msra.mxu0 0.0
    %1231 = vmatpush.msra.mxu0 0.0
    %1232 = vmatpush.msra.mxu0 0.0
    %1233 = vmatpush.msra.mxu0 0.0
    %1234 = vmatpush.msra.mxu0 0.0
    %1235 = vmatpush.msra.mxu0 0.0
    %1236 = vmatpush.msra.mxu0 0.0
    %1237 = vmatpush.msra.mxu0 %v1219
    %1238 = vmatpush.msra.mxu0 %v1215
    %1239 = vmatmul.f32.gmra.mxu0 %v416
    %v1240 = vpop.f32.mrf.mxu0
    %v1241 = vadd.f32 0.0, %v1240
    %1242 = vdwg.mxu0
    %1243 = vmatpush.msra.mxu0 0.0
    %1244 = vmatpush.msra.mxu0 0.0
    %1245 = vmatpush.msra.mxu0 0.0
    %1246 = vmatpush.msra.mxu0 0.0
    %1247 = vmatpush.msra.mxu0 0.0
    %1248 = vmatpush.msra.mxu0 0.0
    %1249 = vmatpush.msra.mxu0 0.0
    %1250 = vmatpush.msra.mxu0 0.0
    %1251 = vmatpush.msra.mxu0 0.0
    %1252 = vmatpush.msra.mxu0 0.0
    %1253 = vmatpush.msra.mxu0 0.0
    %1254 = vmatpush.msra.mxu0 0.0
    %1255 = vmatpush.msra.mxu0 0.0
    %1256 = vmatpush.msra.mxu0 0.0
    %1257 = vmatpush.msra.mxu0 %v1220
    %1258 = vmatpush.msra.mxu0 %v1216
    %1259 = vmatmul.f32.gmra.mxu0 %v416
    %v1260 = vpop.f32.mrf.mxu0
    %v1261 = vadd.f32 0.0, %v1260
    %1262 = vdwg.mxu0
    %1263 = vmatpush.msra.mxu0 0.0
    %1264 = vmatpush.msra.mxu0 0.0
    %1265 = vmatpush.msra.mxu0 0.0
    %1266 = vmatpush.msra.mxu0 0.0
    %1267 = vmatpush.msra.mxu0 0.0
    %1268 = vmatpush.msra.mxu0 0.0
    %1269 = vmatpush.msra.mxu0 0.0
    %1270 = vmatpush.msra.mxu0 0.0
    %1271 = vmatpush.msra.mxu0 0.0
    %1272 = vmatpush.msra.mxu0 0.0
    %1273 = vmatpush.msra.mxu0 0.0
    %1274 = vmatpush.msra.mxu0 0.0
    %1275 = vmatpush.msra.mxu0 0.0
    %1276 = vmatpush.msra.mxu0 0.0
    %1277 = vmatpush.msra.mxu0 %v1221
    %1278 = vmatpush.msra.mxu0 %v1217
    %1279 = vmatmul.f32.gmra.mxu0 %v416
    %v1280 = vpop.f32.mrf.mxu0
    %v1281 = vadd.f32 0.0, %v1280
    %1282 = vdwg.mxu0
    %1283 = vmatpush.msra.mxu0 0.0
    %1284 = vmatpush.msra.mxu0 0.0
    %1285 = vmatpush.msra.mxu0 0.0
    %1286 = vmatpush.msra.mxu0 0.0
    %1287 = vmatpush.msra.mxu0 0.0
    %1288 = vmatpush.msra.mxu0 0.0
    %1289 = vmatpush.msra.mxu0 0.0
    %1290 = vmatpush.msra.mxu0 0.0
    %1291 = vmatpush.msra.mxu0 0.0
    %1292 = vmatpush.msra.mxu0 0.0
    %1293 = vmatpush.msra.mxu0 0.0
    %1294 = vmatpush.msra.mxu0 0.0
    %1295 = vmatpush.msra.mxu0 0.0
    %1296 = vmatpush.msra.mxu0 0.0
    %1297 = vmatpush.msra.mxu0 %v1222
    %1298 = vmatpush.msra.mxu0 %v1218
    %1299 = vmatmul.f32.gmra.mxu0 %v416
    %v1300 = vpop.f32.mrf.mxu0
    %v1301 = vadd.f32 0.0, %v1300
    %1302 = vdwg.mxu0
    %v1303 = vperm.slane %v1241, 0
    %v1304 = vperm.slane %v1261, 0
    %v1305 = vperm.slane %v1281, 0
    %v1306 = vperm.slane %v1301, 0
    %1307 = vmatpush.msra.mxu0 %v246
    %1308 = vmatpush.msra.mxu0 %v242
    %1309 = vmatpush.msra.mxu0 %v238
    %1310 = vmatpush.msra.mxu0 %v234
    %1311 = vmatpush.msra.mxu0 %v230
    %1312 = vmatpush.msra.mxu0 %v226
    %1313 = vmatpush.msra.mxu0 %v222
    %1314 = vmatpush.msra.mxu0 %v218
    %1315 = vmatpush.msra.mxu0 %v214
    %1316 = vmatpush.msra.mxu0 %v210
    %1317 = vmatpush.msra.mxu0 %v206
    %1318 = vmatpush.msra.mxu0 %v202
    %1319 = vmatpush.msra.mxu0 %v198
    %1320 = vmatpush.msra.mxu0 %v194
    %1321 = vmatpush.msra.mxu0 %v190
    %1322 = vmatpush.msra.mxu0 %v186
    %1323 = vmatmul.f32.gmra.mxu0 %v1118
    %v1324 = vpop.f32.mrf.mxu0
    %v1325 = vadd.f32 %v1303, %v1324
    %1326 = vmatmul.f32.gmra.mxu0 %v1121
    %v1327 = vpop.f32.mrf.mxu0
    %v1328 = vadd.f32 %v1303, %v1327
    %1329 = vdwg.mxu0
    %1330 = vmatpush.msra.mxu0 %v247
    %1331 = vmatpush.msra.mxu0 %v243
    %1332 = vmatpush.msra.mxu0 %v239
    %1333 = vmatpush.msra.mxu0 %v235
    %1334 = vmatpush.msra.mxu0 %v231
    %1335 = vmatpush.msra.mxu0 %v227
    %1336 = vmatpush.msra.mxu0 %v223
    %1337 = vmatpush.msra.mxu0 %v219
    %1338 = vmatpush.msra.mxu0 %v215
    %1339 = vmatpush.msra.mxu0 %v211
    %1340 = vmatpush.msra.mxu0 %v207
    %1341 = vmatpush.msra.mxu0 %v203
    %1342 = vmatpush.msra.mxu0 %v199
    %1343 = vmatpush.msra.mxu0 %v195
    %1344 = vmatpush.msra.mxu0 %v191
    %1345 = vmatpush.msra.mxu0 %v187
    %1346 = vmatmul.f32.gmra.mxu0 %v1118
    %v1347 = vpop.f32.mrf.mxu0
    %v1348 = vadd.f32 %v1304, %v1347
    %1349 = vmatmul.f32.gmra.mxu0 %v1121
    %v1350 = vpop.f32.mrf.mxu0
    %v1351 = vadd.f32 %v1304, %v1350
    %1352 = vdwg.mxu0
    %1353 = vmatpush.msra.mxu0 %v248
    %1354 = vmatpush.msra.mxu0 %v244
    %1355 = vmatpush.msra.mxu0 %v240
    %1356 = vmatpush.msra.mxu0 %v236
    %1357 = vmatpush.msra.mxu0 %v232
    %1358 = vmatpush.msra.mxu0 %v228
    %1359 = vmatpush.msra.mxu0 %v224
    %1360 = vmatpush.msra.mxu0 %v220
    %1361 = vmatpush.msra.mxu0 %v216
    %1362 = vmatpush.msra.mxu0 %v212
    %1363 = vmatpush.msra.mxu0 %v208
    %1364 = vmatpush.msra.mxu0 %v204
    %1365 = vmatpush.msra.mxu0 %v200
    %1366 = vmatpush.msra.mxu0 %v196
    %1367 = vmatpush.msra.mxu0 %v192
    %1368 = vmatpush.msra.mxu0 %v188
    %1369 = vmatmul.f32.gmra.mxu0 %v1118
    %v1370 = vpop.f32.mrf.mxu0
    %v1371 = vadd.f32 %v1305, %v1370
    %1372 = vmatmul.f32.gmra.mxu0 %v1121
    %v1373 = vpop.f32.mrf.mxu0
    %v1374 = vadd.f32 %v1305, %v1373
    %1375 = vdwg.mxu0
    %1376 = vmatpush.msra.mxu0 %v249
    %1377 = vmatpush.msra.mxu0 %v245
    %1378 = vmatpush.msra.mxu0 %v241
    %1379 = vmatpush.msra.mxu0 %v237
    %1380 = vmatpush.msra.mxu0 %v233
    %1381 = vmatpush.msra.mxu0 %v229
    %1382 = vmatpush.msra.mxu0 %v225
    %1383 = vmatpush.msra.mxu0 %v221
    %1384 = vmatpush.msra.mxu0 %v217
    %1385 = vmatpush.msra.mxu0 %v213
    %1386 = vmatpush.msra.mxu0 %v209
    %1387 = vmatpush.msra.mxu0 %v205
    %1388 = vmatpush.msra.mxu0 %v201
    %1389 = vmatpush.msra.mxu0 %v197
    %1390 = vmatpush.msra.mxu0 %v193
    %1391 = vmatpush.msra.mxu0 %v189
    %1392 = vmatmul.f32.gmra.mxu0 %v1118
    %v1393 = vpop.f32.mrf.mxu0
    %v1394 = vadd.f32 %v1306, %v1393
    %1395 = vmatmul.f32.gmra.mxu0 %v1121
    %v1396 = vpop.f32.mrf.mxu0
    %v1397 = vadd.f32 %v1306, %v1396
    %1398 = vdwg.mxu0
    %vm1399 = vcmp.gt.f32.partialorder %v1325, 0.0
    %vm1400 = vcmp.gt.f32.partialorder %v1348, 0.0
    %vm1401 = vcmp.gt.f32.partialorder %v1371, 0.0
    %vm1402 = vcmp.gt.f32.partialorder %v1394, 0.0
    %vm1403 = vcmp.gt.f32.partialorder %v1328, 0.0
    %vm1404 = vcmp.gt.f32.partialorder %v1351, 0.0
    %vm1405 = vcmp.gt.f32.partialorder %v1374, 0.0
    %vm1406 = vcmp.gt.f32.partialorder %v1397, 0.0
    %v1407 = vmul.f32 %v1325, 0.2
    %v1408 = vmul.f32 %v1348, 0.2
    %v1409 = vmul.f32 %v1371, 0.2
    %v1410 = vmul.f32 %v1394, 0.2
    %v1411 = vmul.f32 %v1328, 0.2
    %v1412 = vmul.f32 %v1351, 0.2
    %v1413 = vmul.f32 %v1374, 0.2
    %v1414 = vmul.f32 %v1397, 0.2
    %v1415 = vsel %vm1399, %v1325, %v1407
    %v1416 = vsel %vm1400, %v1348, %v1408
    %v1417 = vsel %vm1401, %v1371, %v1409
    %v1418 = vsel %vm1402, %v1394, %v1410
    %v1419 = vsel %vm1403, %v1328, %v1411
    %v1420 = vsel %vm1404, %v1351, %v1412
    %v1421 = vsel %vm1405, %v1374, %v1413
    %v1422 = vsel %vm1406, %v1397, %v1414
    %v1424 = vperm.slane %v1090, 0
    %v1425 = vperm.slane %v1090, 1
    %v1426 = vperm.slane %v1090, 2
    %v1427 = vperm.slane %v1090, 3
    %v1432 = vmul.f32 %v1415, %v1424
    %v1433 = vmul.f32 %v1416, %v1425
    %v1434 = vmul.f32 %v1417, %v1426
    %v1435 = vmul.f32 %v1418, %v1427
    %v1436 = vmul.f32 %v1419, %v1424
    %v1437 = vmul.f32 %v1420, %v1425
    %v1438 = vmul.f32 %v1421, %v1426
    %v1439 = vmul.f32 %v1422, %v1427
    %1440 = vmatpush.msra.mxu0 %v650
    %1441 = vmatpush.msra.mxu0 %v649
    %1442 = vmatpush.msra.mxu0 %v648
    %1443 = vmatpush.msra.mxu0 %v647
    %1444 = vmatpush.msra.mxu0 %v646
    %1445 = vmatpush.msra.mxu0 %v645
    %1446 = vmatpush.msra.mxu0 %v644
    %1447 = vmatpush.msra.mxu0 %v643
    %1448 = vmatpush.msra.mxu0 %v642
    %1449 = vmatpush.msra.mxu0 %v641
    %1450 = vmatpush.msra.mxu0 %v640
    %1451 = vmatpush.msra.mxu0 %v639
    %1452 = vmatpush.msra.mxu0 %v638
    %1453 = vmatpush.msra.mxu0 %v637
    %1454 = vmatpush.msra.mxu0 %v636
    %1455 = vmatpush.msra.mxu0 %v635
    %1456 = vmatmul.f32.gmra.mxu0 %v1432
    %v1457 = vpop.f32.mrf.mxu0
    %v1458 = vadd.f32 %v125, %v1457
    %1459 = vmatmul.f32.gmra.mxu0 %v1436
    %v1460 = vpop.f32.mrf.mxu0
    %v1461 = vadd.f32 %v126, %v1460
    %1462 = vdwg.mxu0
    %1463 = vmatpush.msra.mxu0 %v666
    %1464 = vmatpush.msra.mxu0 %v665
    %1465 = vmatpush.msra.mxu0 %v664
    %1466 = vmatpush.msra.mxu0 %v663
    %1467 = vmatpush.msra.mxu0 %v662
    %1468 = vmatpush.msra.mxu0 %v661
    %1469 = vmatpush.msra.mxu0 %v660
    %1470 = vmatpush.msra.mxu0 %v659
    %1471 = vmatpush.msra.mxu0 %v658
    %1472 = vmatpush.msra.mxu0 %v657
    %1473 = vmatpush.msra.mxu0 %v656
    %1474 = vmatpush.msra.mxu0 %v655
    %1475 = vmatpush.msra.mxu0 %v654
    %1476 = vmatpush.msra.mxu0 %v653
    %1477 = vmatpush.msra.mxu0 %v652
    %1478 = vmatpush.msra.mxu0 %v651
    %1479 = vmatmul.f32.gmra.mxu0 %v1433
    %v1480 = vpop.f32.mrf.mxu0
    %v1481 = vadd.f32 %v1458, %v1480
    %1482 = vmatmul.f32.gmra.mxu0 %v1437
    %v1483 = vpop.f32.mrf.mxu0
    %v1484 = vadd.f32 %v1461, %v1483
    %1485 = vdwg.mxu0
    %1486 = vmatpush.msra.mxu0 %v682
    %1487 = vmatpush.msra.mxu0 %v681
    %1488 = vmatpush.msra.mxu0 %v680
    %1489 = vmatpush.msra.mxu0 %v679
    %1490 = vmatpush.msra.mxu0 %v678
    %1491 = vmatpush.msra.mxu0 %v677
    %1492 = vmatpush.msra.mxu0 %v676
    %1493 = vmatpush.msra.mxu0 %v675
    %1494 = vmatpush.msra.mxu0 %v674
    %1495 = vmatpush.msra.mxu0 %v673
    %1496 = vmatpush.msra.mxu0 %v672
    %1497 = vmatpush.msra.mxu0 %v671
    %1498 = vmatpush.msra.mxu0 %v670
    %1499 = vmatpush.msra.mxu0 %v669
    %1500 = vmatpush.msra.mxu0 %v668
    %1501 = vmatpush.msra.mxu0 %v667
    %1502 = vmatmul.f32.gmra.mxu0 %v1434
    %v1503 = vpop.f32.mrf.mxu0
    %v1504 = vadd.f32 %v1481, %v1503
    %1505 = vmatmul.f32.gmra.mxu0 %v1438
    %v1506 = vpop.f32.mrf.mxu0
    %v1507 = vadd.f32 %v1484, %v1506
    %1508 = vdwg.mxu0
    %1509 = vmatpush.msra.mxu0 %v698
    %1510 = vmatpush.msra.mxu0 %v697
    %1511 = vmatpush.msra.mxu0 %v696
    %1512 = vmatpush.msra.mxu0 %v695
    %1513 = vmatpush.msra.mxu0 %v694
    %1514 = vmatpush.msra.mxu0 %v693
    %1515 = vmatpush.msra.mxu0 %v692
    %1516 = vmatpush.msra.mxu0 %v691
    %1517 = vmatpush.msra.mxu0 %v690
    %1518 = vmatpush.msra.mxu0 %v689
    %1519 = vmatpush.msra.mxu0 %v688
    %1520 = vmatpush.msra.mxu0 %v687
    %1521 = vmatpush.msra.mxu0 %v686
    %1522 = vmatpush.msra.mxu0 %v685
    %1523 = vmatpush.msra.mxu0 %v684
    %1524 = vmatpush.msra.mxu0 %v683
    %1525 = vmatmul.f32.gmra.mxu0 %v1435
    %v1526 = vpop.f32.mrf.mxu0
    %v1527 = vadd.f32 %v1504, %v1526
    %1528 = vmatmul.f32.gmra.mxu0 %v1439
    %v1529 = vpop.f32.mrf.mxu0
    %v1530 = vadd.f32 %v1507, %v1529
    %1531 = vdwg.mxu0
    %1532 = vrot.lane.b32.xlu0 %v1527, 8
    %v1533 = vpop.permute.xlu0 %1532
    %1534 = vrot.lane.b32.xlu0 %v1530, 8
    %v1535 = vpop.permute.xlu0 %1534
    %v1536 = vmax.f32 %v1527, %v1533
    %v1537 = vmax.f32 %v1530, %v1535
    %1538 = vrot.lane.b32.xlu0 %v1536, 16
    %v1539 = vpop.permute.xlu0 %1538
    %1540 = vrot.lane.b32.xlu0 %v1537, 16
    %v1541 = vpop.permute.xlu0 %1540
    %v1542 = vmax.f32 %v1536, %v1539
    %v1543 = vmax.f32 %v1537, %v1541
    %1544 = vrot.lane.b32.xlu0 %v1542, 32
    %v1545 = vpop.permute.xlu0 %1544
    %1546 = vrot.lane.b32.xlu0 %v1543, 32
    %v1547 = vpop.permute.xlu0 %1546
    %v1548 = vmax.f32 %v1542, %v1545
    %v1549 = vmax.f32 %v1543, %v1547
    %1550 = vrot.lane.b32.xlu0 %v1548, 64
    %v1551 = vpop.permute.xlu0 %1550
    %1552 = vrot.lane.b32.xlu0 %v1549, 64
    %v1553 = vpop.permute.xlu0 %1552
    %v1554 = vmax.f32 %v1548, %v1551
    %v1555 = vmax.f32 %v1549, %v1553
    %v1556 = vsub.f32 %v1527, %v1554
    %v1557 = vsub.f32 %v1530, %v1555
    %v1558 = vmul.f32 %v1556, 1.442695
    %v1559 = vpow.pop %v1558
    %v1560 = vmul.f32 %v1557, 1.442695
    %v1561 = vpow.pop %v1560
    %v1562 = vmul.f32 %v1559, %v127
    %v1563 = vmul.f32 %v1561, %v128
    %1564 = vmatpush.msra.mxu0 %v838
    %1565 = vmatpush.msra.mxu0 %v837
    %1566 = vmatpush.msra.mxu0 %v836
    %1567 = vmatpush.msra.mxu0 %v835
    %1568 = vmatpush.msra.mxu0 %v834
    %1569 = vmatpush.msra.mxu0 %v833
    %1570 = vmatpush.msra.mxu0 %v832
    %1571 = vmatpush.msra.mxu0 %v831
    %1572 = vmatpush.msra.mxu0 %v830
    %1573 = vmatpush.msra.mxu0 %v829
    %1574 = vmatpush.msra.mxu0 %v828
    %1575 = vmatpush.msra.mxu0 %v827
    %1576 = vmatpush.msra.mxu0 %v826
    %1577 = vmatpush.msra.mxu0 %v825
    %1578 = vmatpush.msra.mxu0 %v824
    %1579 = vmatpush.msra.mxu0 %v823
    %1580 = vmatmul.f32.gmra.mxu0 %v1562
    %v1581 = vpop.f32.mrf.mxu0
    %v1582 = vadd.f32 0.0, %v1581
    %1583 = vmatmul.f32.gmra.mxu0 %v1563
    %v1584 = vpop.f32.mrf.mxu0
    %v1585 = vadd.f32 0.0, %v1584
    %1586 = vdwg.mxu0
    %v1587 = vmax.f32 %v1582, 1e-30
    %v1588 = vmax.f32 %v1585, 1e-30
    %v1589 = vrcp.pop %v1587
    %v1590 = vmul.f32 %v1587, %v1589
    %v1591 = vsub.f32 1.0, %v1590
    %v1592 = vmul.f32 %v1589, %v1591
    %v1593 = vadd.f32 %v1589, %v1592
    %vm1594 = vweird.f32 %v1587
    %vm1595 = vweird.f32 %v1589
    %vm1596 = vmor %vm1594, %vm1595
    %v1597 = vsel %vm1596, %v1589, %v1593
    %v1598 = vand.u32 2147483647, %v1587
    %vm1599 = vcmp.eq.f32.partialorder %v1598, 8.507059e+37
    %v1600 = vand.u32 %v1587, 2147483648
    %v1601 = vor.u32 1.1754944e-38, %v1600
    %v1602 = vsel %vm1599, %v1601, %v1597
    %v1603 = vmul.f32 %v1562, %v1602
    %v1604 = vrcp.pop %v1588
    %v1605 = vmul.f32 %v1588, %v1604
    %v1606 = vsub.f32 1.0, %v1605
    %v1607 = vmul.f32 %v1604, %v1606
    %v1608 = vadd.f32 %v1604, %v1607
    %vm1609 = vweird.f32 %v1588
    %vm1610 = vweird.f32 %v1604
    %vm1611 = vmor %vm1609, %vm1610
    %v1612 = vsel %vm1611, %v1604, %v1608
    %v1613 = vand.u32 2147483647, %v1588
    %vm1614 = vcmp.eq.f32.partialorder %v1613, 8.507059e+37
    %v1615 = vand.u32 %v1588, 2147483648
    %v1616 = vor.u32 1.1754944e-38, %v1615
    %v1617 = vsel %vm1614, %v1616, %v1612
    %v1618 = vmul.f32 %v1563, %v1617
    %1619 = vmatpush.msra.mxu0 0.0
    %1620 = vmatpush.msra.mxu0 0.0
    %1621 = vmatpush.msra.mxu0 0.0
    %1622 = vmatpush.msra.mxu0 0.0
    %1623 = vmatpush.msra.mxu0 0.0
    %1624 = vmatpush.msra.mxu0 0.0
    %1625 = vmatpush.msra.mxu0 0.0
    %1626 = vmatpush.msra.mxu0 0.0
    %1627 = vmatpush.msra.mxu0 0.0
    %1628 = vmatpush.msra.mxu0 0.0
    %1629 = vmatpush.msra.mxu0 0.0
    %1630 = vmatpush.msra.mxu0 0.0
    %1631 = vmatpush.msra.mxu0 0.0
    %1632 = vmatpush.msra.mxu0 0.0
    %1633 = vmatpush.msra.mxu0 %v1121
    %1634 = vmatpush.msra.mxu0 %v1118
    %1635 = vmatmul.f32.gmra.mxu0 %v911
    %v1636 = vpop.f32.mrf.mxu0
    %v1637 = vadd.f32 0.0, %v1636
    %1638 = vmatmul.f32.gmra.mxu0 %v914
    %v1639 = vpop.f32.mrf.mxu0
    %v1640 = vadd.f32 0.0, %v1639
    %1641 = vmatmul.f32.gmra.mxu0 %v917
    %v1642 = vpop.f32.mrf.mxu0
    %v1643 = vadd.f32 0.0, %v1642
    %1644 = vmatmul.f32.gmra.mxu0 %v920
    %v1645 = vpop.f32.mrf.mxu0
    %v1646 = vadd.f32 0.0, %v1645
    %1647 = vmatmul.f32.gmra.mxu0 %v923
    %v1648 = vpop.f32.mrf.mxu0
    %v1649 = vadd.f32 0.0, %v1648
    %1650 = vmatmul.f32.gmra.mxu0 %v926
    %v1651 = vpop.f32.mrf.mxu0
    %v1652 = vadd.f32 0.0, %v1651
    %1653 = vmatmul.f32.gmra.mxu0 %v929
    %v1654 = vpop.f32.mrf.mxu0
    %v1655 = vadd.f32 0.0, %v1654
    %1656 = vmatmul.f32.gmra.mxu0 %v932
    %v1657 = vpop.f32.mrf.mxu0
    %v1658 = vadd.f32 0.0, %v1657
    %1659 = vmatmul.f32.gmra.mxu0 %v935
    %v1660 = vpop.f32.mrf.mxu0
    %v1661 = vadd.f32 0.0, %v1660
    %1662 = vmatmul.f32.gmra.mxu0 %v938
    %v1663 = vpop.f32.mrf.mxu0
    %v1664 = vadd.f32 0.0, %v1663
    %1665 = vmatmul.f32.gmra.mxu0 %v941
    %v1666 = vpop.f32.mrf.mxu0
    %v1667 = vadd.f32 0.0, %v1666
    %1668 = vmatmul.f32.gmra.mxu0 %v944
    %v1669 = vpop.f32.mrf.mxu0
    %v1670 = vadd.f32 0.0, %v1669
    %1671 = vmatmul.f32.gmra.mxu0 %v947
    %v1672 = vpop.f32.mrf.mxu0
    %v1673 = vadd.f32 0.0, %v1672
    %1674 = vmatmul.f32.gmra.mxu0 %v950
    %v1675 = vpop.f32.mrf.mxu0
    %v1676 = vadd.f32 0.0, %v1675
    %1677 = vmatmul.f32.gmra.mxu0 %v953
    %v1678 = vpop.f32.mrf.mxu0
    %v1679 = vadd.f32 0.0, %v1678
    %1680 = vmatmul.f32.gmra.mxu0 %v956
    %v1681 = vpop.f32.mrf.mxu0
    %v1682 = vadd.f32 0.0, %v1681
    %1683 = vdwg.mxu0
    %v1684 = vmul.f32 %v1637, %v129
    %v1685 = vmul.f32 %v1640, %v130
    %v1686 = vmul.f32 %v1643, %v131
    %v1687 = vmul.f32 %v1646, %v132
    %v1688 = vmul.f32 %v1649, %v133
    %v1689 = vmul.f32 %v1652, %v134
    %v1690 = vmul.f32 %v1655, %v135
    %v1691 = vmul.f32 %v1658, %v136
    %v1692 = vmul.f32 %v1661, %v137
    %v1693 = vmul.f32 %v1664, %v138
    %v1694 = vmul.f32 %v1667, %v139
    %v1695 = vmul.f32 %v1670, %v140
    %v1696 = vmul.f32 %v1673, %v141
    %v1697 = vmul.f32 %v1676, %v142
    %v1698 = vmul.f32 %v1679, %v143
    %v1699 = vmul.f32 %v1682, %v144
    %1702 = vrot.lane.b32.xlu0 %v1118, 64
    %v1703 = vpop.permute.xlu0 %1702
    %1704 = vrot.lane.b32.xlu0 %v1121, 64
    %v1705 = vpop.permute.xlu0 %1704
    %1708 = vmatpush.msra.mxu0 %v1699
    %1709 = vmatpush.msra.mxu0 %v1698
    %1710 = vmatpush.msra.mxu0 %v1697
    %1711 = vmatpush.msra.mxu0 %v1696
    %1712 = vmatpush.msra.mxu0 %v1695
    %1713 = vmatpush.msra.mxu0 %v1694
    %1714 = vmatpush.msra.mxu0 %v1693
    %1715 = vmatpush.msra.mxu0 %v1692
    %1716 = vmatpush.msra.mxu0 %v1691
    %1717 = vmatpush.msra.mxu0 %v1690
    %1718 = vmatpush.msra.mxu0 %v1689
    %1719 = vmatpush.msra.mxu0 %v1688
    %1720 = vmatpush.msra.mxu0 %v1687
    %1721 = vmatpush.msra.mxu0 %v1686
    %1722 = vmatpush.msra.mxu0 %v1685
    %1723 = vmatpush.msra.mxu0 %v1684
    %1724 = vmatmul.f32.gmra.mxu0 %v1603
    %v1725 = vpop.f32.mrf.mxu0
    %v1726 = vadd.f32 %v1703, %v1725
    %1727 = vmatmul.f32.gmra.mxu0 %v1618
    %v1728 = vpop.f32.mrf.mxu0
    %v1729 = vadd.f32 %v1705, %v1728
    %1730 = vdwg.mxu0
    %vm1731 = vcmp.gt.f32.partialorder %v1726, 0.0
    %vm1732 = vcmp.gt.f32.partialorder %v1729, 0.0
    %v1733 = vmin.f32 %v1726, 0.0
    %v1734 = vmin.f32 %v1729, 0.0
    %v1735 = vmul.f32 %v1733, 1.442695
    %v1736 = vpow.pop %v1735
    %v1737 = vmul.f32 %v1734, 1.442695
    %v1738 = vpow.pop %v1737
    %v1739 = vsub.f32 %v1736, 1.0
    %v1740 = vsub.f32 %v1738, 1.0
    %v1741 = vsel %vm1731, %v1726, %v1739
    %v1742 = vsel %vm1732, %v1729, %v1740
    %s1743 = scalar_lea.vmem [#allocation2], 64
    %v1744 = vld [vmem:[%s1743] sm:$0xff]
    %v1745 = vld [vmem:[%s1743 + $0x8] sm:$0xff]
    %v1746 = vld [vmem:[%s1743 + $0x10] sm:$0xff]
    %v1747 = vld [vmem:[%s1743 + $0x18] sm:$0xff]
    %s1748 = scalar_lea.vmem %s2, 2
    %v1749 = vld [vmem:[%s1748] sm:$0x1]
    %s1750 = scalar_lea.vmem %s3, 8
    %v1751 = vld [vmem:[%s1750] sm:$0xf]
    %v1753 = vperm.slane %v1749, 0
    %v1756 = vsel %vm156, %v1741, 0
    %v1759 = vsel %vm156, %v1742, 0
    %1761 = vmatpush.msra.mxu0 0.0
    %1762 = vmatpush.msra.mxu0 0.0
    %1763 = vmatpush.msra.mxu0 0.0
    %1764 = vmatpush.msra.mxu0 0.0
    %1765 = vmatpush.msra.mxu0 0.0
    %1766 = vmatpush.msra.mxu0 0.0
    %1767 = vmatpush.msra.mxu0 0.0
    %1768 = vmatpush.msra.mxu0 0.0
    %1769 = vmatpush.msra.mxu0 0.0
    %1770 = vmatpush.msra.mxu0 0.0
    %1771 = vmatpush.msra.mxu0 0.0
    %1772 = vmatpush.msra.mxu0 0.0
    %1773 = vmatpush.msra.mxu0 %v1747
    %1774 = vmatpush.msra.mxu0 %v1746
    %1775 = vmatpush.msra.mxu0 %v1745
    %1776 = vmatpush.msra.mxu0 %v1744
    %1777 = vmatmul.f32.gmra.mxu0 %v1756
    %v1778 = vpop.f32.mrf.mxu0
    %v1779 = vadd.f32 %v1753, %v1778
    %1780 = vmatmul.f32.gmra.mxu0 %v1759
    %v1781 = vpop.f32.mrf.mxu0
    %v1782 = vadd.f32 %v1753, %v1781
    %1783 = vdwg.mxu0
    %1784 = vmatpush.msra.mxu0 %v310
    %1785 = vmatpush.msra.mxu0 %v306
    %1786 = vmatpush.msra.mxu0 %v302
    %1787 = vmatpush.msra.mxu0 %v298
    %1788 = vmatpush.msra.mxu0 %v294
    %1789 = vmatpush.msra.mxu0 %v290
    %1790 = vmatpush.msra.mxu0 %v286
    %1791 = vmatpush.msra.mxu0 %v282
    %1792 = vmatpush.msra.mxu0 %v278
    %1793 = vmatpush.msra.mxu0 %v274
    %1794 = vmatpush.msra.mxu0 %v270
    %1795 = vmatpush.msra.mxu0 %v266
    %1796 = vmatpush.msra.mxu0 %v262
    %1797 = vmatpush.msra.mxu0 %v258
    %1798 = vmatpush.msra.mxu0 %v254
    %1799 = vmatpush.msra.mxu0 %v250
    %1800 = vmatmul.f32.gmra.mxu0 %v1779
    %v1801 = vpop.f32.mrf.mxu0
    %v1802 = vadd.f32 0.0, %v1801
    %1803 = vmatmul.f32.gmra.mxu0 %v1782
    %v1804 = vpop.f32.mrf.mxu0
    %v1805 = vadd.f32 0.0, %v1804
    %1806 = vdwg.mxu0
    %1807 = vmatpush.msra.mxu0 %v311
    %1808 = vmatpush.msra.mxu0 %v307
    %1809 = vmatpush.msra.mxu0 %v303
    %1810 = vmatpush.msra.mxu0 %v299
    %1811 = vmatpush.msra.mxu0 %v295
    %1812 = vmatpush.msra.mxu0 %v291
    %1813 = vmatpush.msra.mxu0 %v287
    %1814 = vmatpush.msra.mxu0 %v283
    %1815 = vmatpush.msra.mxu0 %v279
    %1816 = vmatpush.msra.mxu0 %v275
    %1817 = vmatpush.msra.mxu0 %v271
    %1818 = vmatpush.msra.mxu0 %v267
    %1819 = vmatpush.msra.mxu0 %v263
    %1820 = vmatpush.msra.mxu0 %v259
    %1821 = vmatpush.msra.mxu0 %v255
    %1822 = vmatpush.msra.mxu0 %v251
    %1823 = vmatmul.f32.gmra.mxu0 %v1779
    %v1824 = vpop.f32.mrf.mxu0
    %v1825 = vadd.f32 0.0, %v1824
    %1826 = vmatmul.f32.gmra.mxu0 %v1782
    %v1827 = vpop.f32.mrf.mxu0
    %v1828 = vadd.f32 0.0, %v1827
    %1829 = vdwg.mxu0
    %1830 = vmatpush.msra.mxu0 %v312
    %1831 = vmatpush.msra.mxu0 %v308
    %1832 = vmatpush.msra.mxu0 %v304
    %1833 = vmatpush.msra.mxu0 %v300
    %1834 = vmatpush.msra.mxu0 %v296
    %1835 = vmatpush.msra.mxu0 %v292
    %1836 = vmatpush.msra.mxu0 %v288
    %1837 = vmatpush.msra.mxu0 %v284
    %1838 = vmatpush.msra.mxu0 %v280
    %1839 = vmatpush.msra.mxu0 %v276
    %1840 = vmatpush.msra.mxu0 %v272
    %1841 = vmatpush.msra.mxu0 %v268
    %1842 = vmatpush.msra.mxu0 %v264
    %1843 = vmatpush.msra.mxu0 %v260
    %1844 = vmatpush.msra.mxu0 %v256
    %1845 = vmatpush.msra.mxu0 %v252
    %1846 = vmatmul.f32.gmra.mxu0 %v1779
    %v1847 = vpop.f32.mrf.mxu0
    %v1848 = vadd.f32 0.0, %v1847
    %1849 = vmatmul.f32.gmra.mxu0 %v1782
    %v1850 = vpop.f32.mrf.mxu0
    %v1851 = vadd.f32 0.0, %v1850
    %1852 = vdwg.mxu0
    %1853 = vmatpush.msra.mxu0 %v313
    %1854 = vmatpush.msra.mxu0 %v309
    %1855 = vmatpush.msra.mxu0 %v305
    %1856 = vmatpush.msra.mxu0 %v301
    %1857 = vmatpush.msra.mxu0 %v297
    %1858 = vmatpush.msra.mxu0 %v293
    %1859 = vmatpush.msra.mxu0 %v289
    %1860 = vmatpush.msra.mxu0 %v285
    %1861 = vmatpush.msra.mxu0 %v281
    %1862 = vmatpush.msra.mxu0 %v277
    %1863 = vmatpush.msra.mxu0 %v273
    %1864 = vmatpush.msra.mxu0 %v269
    %1865 = vmatpush.msra.mxu0 %v265
    %1866 = vmatpush.msra.mxu0 %v261
    %1867 = vmatpush.msra.mxu0 %v257
    %1868 = vmatpush.msra.mxu0 %v253
    %1869 = vmatmul.f32.gmra.mxu0 %v1779
    %v1870 = vpop.f32.mrf.mxu0
    %v1871 = vadd.f32 0.0, %v1870
    %1872 = vmatmul.f32.gmra.mxu0 %v1782
    %v1873 = vpop.f32.mrf.mxu0
    %v1874 = vadd.f32 0.0, %v1873
    %1875 = vdwg.mxu0
    %v1876 = vmul.f32 %v1802, %v117
    %v1877 = vmul.f32 %v1825, %v118
    %v1878 = vmul.f32 %v1848, %v119
    %v1879 = vmul.f32 %v1871, %v120
    %v1880 = vmul.f32 %v1805, %v121
    %v1881 = vmul.f32 %v1828, %v122
    %v1882 = vmul.f32 %v1851, %v123
    %v1883 = vmul.f32 %v1874, %v124
    %1884 = vmatpush.msra.mxu0 0.0
    %1885 = vmatpush.msra.mxu0 0.0
    %1886 = vmatpush.msra.mxu0 0.0
    %1887 = vmatpush.msra.mxu0 0.0
    %1888 = vmatpush.msra.mxu0 0.0
    %1889 = vmatpush.msra.mxu0 0.0
    %1890 = vmatpush.msra.mxu0 0.0
    %1891 = vmatpush.msra.mxu0 0.0
    %1892 = vmatpush.msra.mxu0 0.0
    %1893 = vmatpush.msra.mxu0 0.0
    %1894 = vmatpush.msra.mxu0 0.0
    %1895 = vmatpush.msra.mxu0 0.0
    %1896 = vmatpush.msra.mxu0 0.0
    %1897 = vmatpush.msra.mxu0 0.0
    %1898 = vmatpush.msra.mxu0 %v1880
    %1899 = vmatpush.msra.mxu0 %v1876
    %1900 = vmatmul.f32.gmra.mxu0 %v416
    %v1901 = vpop.f32.mrf.mxu0
    %v1902 = vadd.f32 0.0, %v1901
    %1903 = vdwg.mxu0
    %1904 = vmatpush.msra.mxu0 0.0
    %1905 = vmatpush.msra.mxu0 0.0
    %1906 = vmatpush.msra.mxu0 0.0
    %1907 = vmatpush.msra.mxu0 0.0
    %1908 = vmatpush.msra.mxu0 0.0
    %1909 = vmatpush.msra.mxu0 0.0
    %1910 = vmatpush.msra.mxu0 0.0
    %1911 = vmatpush.msra.mxu0 0.0
    %1912 = vmatpush.msra.mxu0 0.0
    %1913 = vmatpush.msra.mxu0 0.0
    %1914 = vmatpush.msra.mxu0 0.0
    %1915 = vmatpush.msra.mxu0 0.0
    %1916 = vmatpush.msra.mxu0 0.0
    %1917 = vmatpush.msra.mxu0 0.0
    %1918 = vmatpush.msra.mxu0 %v1881
    %1919 = vmatpush.msra.mxu0 %v1877
    %1920 = vmatmul.f32.gmra.mxu0 %v416
    %v1921 = vpop.f32.mrf.mxu0
    %v1922 = vadd.f32 0.0, %v1921
    %1923 = vdwg.mxu0
    %1924 = vmatpush.msra.mxu0 0.0
    %1925 = vmatpush.msra.mxu0 0.0
    %1926 = vmatpush.msra.mxu0 0.0
    %1927 = vmatpush.msra.mxu0 0.0
    %1928 = vmatpush.msra.mxu0 0.0
    %1929 = vmatpush.msra.mxu0 0.0
    %1930 = vmatpush.msra.mxu0 0.0
    %1931 = vmatpush.msra.mxu0 0.0
    %1932 = vmatpush.msra.mxu0 0.0
    %1933 = vmatpush.msra.mxu0 0.0
    %1934 = vmatpush.msra.mxu0 0.0
    %1935 = vmatpush.msra.mxu0 0.0
    %1936 = vmatpush.msra.mxu0 0.0
    %1937 = vmatpush.msra.mxu0 0.0
    %1938 = vmatpush.msra.mxu0 %v1882
    %1939 = vmatpush.msra.mxu0 %v1878
    %1940 = vmatmul.f32.gmra.mxu0 %v416
    %v1941 = vpop.f32.mrf.mxu0
    %v1942 = vadd.f32 0.0, %v1941
    %1943 = vdwg.mxu0
    %1944 = vmatpush.msra.mxu0 0.0
    %1945 = vmatpush.msra.mxu0 0.0
    %1946 = vmatpush.msra.mxu0 0.0
    %1947 = vmatpush.msra.mxu0 0.0
    %1948 = vmatpush.msra.mxu0 0.0
    %1949 = vmatpush.msra.mxu0 0.0
    %1950 = vmatpush.msra.mxu0 0.0
    %1951 = vmatpush.msra.mxu0 0.0
    %1952 = vmatpush.msra.mxu0 0.0
    %1953 = vmatpush.msra.mxu0 0.0
    %1954 = vmatpush.msra.mxu0 0.0
    %1955 = vmatpush.msra.mxu0 0.0
    %1956 = vmatpush.msra.mxu0 0.0
    %1957 = vmatpush.msra.mxu0 0.0
    %1958 = vmatpush.msra.mxu0 %v1883
    %1959 = vmatpush.msra.mxu0 %v1879
    %1960 = vmatmul.f32.gmra.mxu0 %v416
    %v1961 = vpop.f32.mrf.mxu0
    %v1962 = vadd.f32 0.0, %v1961
    %1963 = vdwg.mxu0
    %v1964 = vperm.slane %v1902, 0
    %v1965 = vperm.slane %v1922, 0
    %v1966 = vperm.slane %v1942, 0
    %v1967 = vperm.slane %v1962, 0
    %1968 = vmatpush.msra.mxu0 %v246
    %1969 = vmatpush.msra.mxu0 %v242
    %1970 = vmatpush.msra.mxu0 %v238
    %1971 = vmatpush.msra.mxu0 %v234
    %1972 = vmatpush.msra.mxu0 %v230
    %1973 = vmatpush.msra.mxu0 %v226
    %1974 = vmatpush.msra.mxu0 %v222
    %1975 = vmatpush.msra.mxu0 %v218
    %1976 = vmatpush.msra.mxu0 %v214
    %1977 = vmatpush.msra.mxu0 %v210
    %1978 = vmatpush.msra.mxu0 %v206
    %1979 = vmatpush.msra.mxu0 %v202
    %1980 = vmatpush.msra.mxu0 %v198
    %1981 = vmatpush.msra.mxu0 %v194
    %1982 = vmatpush.msra.mxu0 %v190
    %1983 = vmatpush.msra.mxu0 %v186
    %1984 = vmatmul.f32.gmra.mxu0 %v1779
    %v1985 = vpop.f32.mrf.mxu0
    %v1986 = vadd.f32 %v1964, %v1985
    %1987 = vmatmul.f32.gmra.mxu0 %v1782
    %v1988 = vpop.f32.mrf.mxu0
    %v1989 = vadd.f32 %v1964, %v1988
    %1990 = vdwg.mxu0
    %1991 = vmatpush.msra.mxu0 %v247
    %1992 = vmatpush.msra.mxu0 %v243
    %1993 = vmatpush.msra.mxu0 %v239
    %1994 = vmatpush.msra.mxu0 %v235
    %1995 = vmatpush.msra.mxu0 %v231
    %1996 = vmatpush.msra.mxu0 %v227
    %1997 = vmatpush.msra.mxu0 %v223
    %1998 = vmatpush.msra.mxu0 %v219
    %1999 = vmatpush.msra.mxu0 %v215
    %2000 = vmatpush.msra.mxu0 %v211
    %2001 = vmatpush.msra.mxu0 %v207
    %2002 = vmatpush.msra.mxu0 %v203
    %2003 = vmatpush.msra.mxu0 %v199
    %2004 = vmatpush.msra.mxu0 %v195
    %2005 = vmatpush.msra.mxu0 %v191
    %2006 = vmatpush.msra.mxu0 %v187
    %2007 = vmatmul.f32.gmra.mxu0 %v1779
    %v2008 = vpop.f32.mrf.mxu0
    %v2009 = vadd.f32 %v1965, %v2008
    %2010 = vmatmul.f32.gmra.mxu0 %v1782
    %v2011 = vpop.f32.mrf.mxu0
    %v2012 = vadd.f32 %v1965, %v2011
    %2013 = vdwg.mxu0
    %2014 = vmatpush.msra.mxu0 %v248
    %2015 = vmatpush.msra.mxu0 %v244
    %2016 = vmatpush.msra.mxu0 %v240
    %2017 = vmatpush.msra.mxu0 %v236
    %2018 = vmatpush.msra.mxu0 %v232
    %2019 = vmatpush.msra.mxu0 %v228
    %2020 = vmatpush.msra.mxu0 %v224
    %2021 = vmatpush.msra.mxu0 %v220
    %2022 = vmatpush.msra.mxu0 %v216
    %2023 = vmatpush.msra.mxu0 %v212
    %2024 = vmatpush.msra.mxu0 %v208
    %2025 = vmatpush.msra.mxu0 %v204
    %2026 = vmatpush.msra.mxu0 %v200
    %2027 = vmatpush.msra.mxu0 %v196
    %2028 = vmatpush.msra.mxu0 %v192
    %2029 = vmatpush.msra.mxu0 %v188
    %2030 = vmatmul.f32.gmra.mxu0 %v1779
    %v2031 = vpop.f32.mrf.mxu0
    %v2032 = vadd.f32 %v1966, %v2031
    %2033 = vmatmul.f32.gmra.mxu0 %v1782
    %v2034 = vpop.f32.mrf.mxu0
    %v2035 = vadd.f32 %v1966, %v2034
    %2036 = vdwg.mxu0
    %2037 = vmatpush.msra.mxu0 %v249
    %2038 = vmatpush.msra.mxu0 %v245
    %2039 = vmatpush.msra.mxu0 %v241
    %2040 = vmatpush.msra.mxu0 %v237
    %2041 = vmatpush.msra.mxu0 %v233
    %2042 = vmatpush.msra.mxu0 %v229
    %2043 = vmatpush.msra.mxu0 %v225
    %2044 = vmatpush.msra.mxu0 %v221
    %2045 = vmatpush.msra.mxu0 %v217
    %2046 = vmatpush.msra.mxu0 %v213
    %2047 = vmatpush.msra.mxu0 %v209
    %2048 = vmatpush.msra.mxu0 %v205
    %2049 = vmatpush.msra.mxu0 %v201
    %2050 = vmatpush.msra.mxu0 %v197
    %2051 = vmatpush.msra.mxu0 %v193
    %2052 = vmatpush.msra.mxu0 %v189
    %2053 = vmatmul.f32.gmra.mxu0 %v1779
    %v2054 = vpop.f32.mrf.mxu0
    %v2055 = vadd.f32 %v1967, %v2054
    %2056 = vmatmul.f32.gmra.mxu0 %v1782
    %v2057 = vpop.f32.mrf.mxu0
    %v2058 = vadd.f32 %v1967, %v2057
    %2059 = vdwg.mxu0
    %vm2060 = vcmp.gt.f32.partialorder %v1986, 0.0
    %vm2061 = vcmp.gt.f32.partialorder %v2009, 0.0
    %vm2062 = vcmp.gt.f32.partialorder %v2032, 0.0
    %vm2063 = vcmp.gt.f32.partialorder %v2055, 0.0
    %vm2064 = vcmp.gt.f32.partialorder %v1989, 0.0
    %vm2065 = vcmp.gt.f32.partialorder %v2012, 0.0
    %vm2066 = vcmp.gt.f32.partialorder %v2035, 0.0
    %vm2067 = vcmp.gt.f32.partialorder %v2058, 0.0
    %v2068 = vmul.f32 %v1986, 0.2
    %v2069 = vmul.f32 %v2009, 0.2
    %v2070 = vmul.f32 %v2032, 0.2
    %v2071 = vmul.f32 %v2055, 0.2
    %v2072 = vmul.f32 %v1989, 0.2
    %v2073 = vmul.f32 %v2012, 0.2
    %v2074 = vmul.f32 %v2035, 0.2
    %v2075 = vmul.f32 %v2058, 0.2
    %v2076 = vsel %vm2060, %v1986, %v2068
    %v2077 = vsel %vm2061, %v2009, %v2069
    %v2078 = vsel %vm2062, %v2032, %v2070
    %v2079 = vsel %vm2063, %v2055, %v2071
    %v2080 = vsel %vm2064, %v1989, %v2072
    %v2081 = vsel %vm2065, %v2012, %v2073
    %v2082 = vsel %vm2066, %v2035, %v2074
    %v2083 = vsel %vm2067, %v2058, %v2075
    %v2085 = vperm.slane %v1751, 0
    %v2086 = vperm.slane %v1751, 1
    %v2087 = vperm.slane %v1751, 2
    %v2088 = vperm.slane %v1751, 3
    %v2093 = vmul.f32 %v2076, %v2085
    %v2094 = vmul.f32 %v2077, %v2086
    %v2095 = vmul.f32 %v2078, %v2087
    %v2096 = vmul.f32 %v2079, %v2088
    %v2097 = vmul.f32 %v2080, %v2085
    %v2098 = vmul.f32 %v2081, %v2086
    %v2099 = vmul.f32 %v2082, %v2087
    %v2100 = vmul.f32 %v2083, %v2088
    %2101 = vmatpush.msra.mxu0 %v650
    %2102 = vmatpush.msra.mxu0 %v649
    %2103 = vmatpush.msra.mxu0 %v648
    %2104 = vmatpush.msra.mxu0 %v647
    %2105 = vmatpush.msra.mxu0 %v646
    %2106 = vmatpush.msra.mxu0 %v645
    %2107 = vmatpush.msra.mxu0 %v644
    %2108 = vmatpush.msra.mxu0 %v643
    %2109 = vmatpush.msra.mxu0 %v642
    %2110 = vmatpush.msra.mxu0 %v641
    %2111 = vmatpush.msra.mxu0 %v640
    %2112 = vmatpush.msra.mxu0 %v639
    %2113 = vmatpush.msra.mxu0 %v638
    %2114 = vmatpush.msra.mxu0 %v637
    %2115 = vmatpush.msra.mxu0 %v636
    %2116 = vmatpush.msra.mxu0 %v635
    %2117 = vmatmul.f32.gmra.mxu0 %v2093
    %v2118 = vpop.f32.mrf.mxu0
    %v2119 = vadd.f32 %v125, %v2118
    %2120 = vmatmul.f32.gmra.mxu0 %v2097
    %v2121 = vpop.f32.mrf.mxu0
    %v2122 = vadd.f32 %v126, %v2121
    %2123 = vdwg.mxu0
    %2124 = vmatpush.msra.mxu0 %v666
    %2125 = vmatpush.msra.mxu0 %v665
    %2126 = vmatpush.msra.mxu0 %v664
    %2127 = vmatpush.msra.mxu0 %v663
    %2128 = vmatpush.msra.mxu0 %v662
    %2129 = vmatpush.msra.mxu0 %v661
    %2130 = vmatpush.msra.mxu0 %v660
    %2131 = vmatpush.msra.mxu0 %v659
    %2132 = vmatpush.msra.mxu0 %v658
    %2133 = vmatpush.msra.mxu0 %v657
    %2134 = vmatpush.msra.mxu0 %v656
    %2135 = vmatpush.msra.mxu0 %v655
    %2136 = vmatpush.msra.mxu0 %v654
    %2137 = vmatpush.msra.mxu0 %v653
    %2138 = vmatpush.msra.mxu0 %v652
    %2139 = vmatpush.msra.mxu0 %v651
    %2140 = vmatmul.f32.gmra.mxu0 %v2094
    %v2141 = vpop.f32.mrf.mxu0
    %v2142 = vadd.f32 %v2119, %v2141
    %2143 = vmatmul.f32.gmra.mxu0 %v2098
    %v2144 = vpop.f32.mrf.mxu0
    %v2145 = vadd.f32 %v2122, %v2144
    %2146 = vdwg.mxu0
    %2147 = vmatpush.msra.mxu0 %v682
    %2148 = vmatpush.msra.mxu0 %v681
    %2149 = vmatpush.msra.mxu0 %v680
    %2150 = vmatpush.msra.mxu0 %v679
    %2151 = vmatpush.msra.mxu0 %v678
    %2152 = vmatpush.msra.mxu0 %v677
    %2153 = vmatpush.msra.mxu0 %v676
    %2154 = vmatpush.msra.mxu0 %v675
    %2155 = vmatpush.msra.mxu0 %v674
    %2156 = vmatpush.msra.mxu0 %v673
    %2157 = vmatpush.msra.mxu0 %v672
    %2158 = vmatpush.msra.mxu0 %v671
    %2159 = vmatpush.msra.mxu0 %v670
    %2160 = vmatpush.msra.mxu0 %v669
    %2161 = vmatpush.msra.mxu0 %v668
    %2162 = vmatpush.msra.mxu0 %v667
    %2163 = vmatmul.f32.gmra.mxu0 %v2095
    %v2164 = vpop.f32.mrf.mxu0
    %v2165 = vadd.f32 %v2142, %v2164
    %2166 = vmatmul.f32.gmra.mxu0 %v2099
    %v2167 = vpop.f32.mrf.mxu0
    %v2168 = vadd.f32 %v2145, %v2167
    %2169 = vdwg.mxu0
    %2170 = vmatpush.msra.mxu0 %v698
    %2171 = vmatpush.msra.mxu0 %v697
    %2172 = vmatpush.msra.mxu0 %v696
    %2173 = vmatpush.msra.mxu0 %v695
    %2174 = vmatpush.msra.mxu0 %v694
    %2175 = vmatpush.msra.mxu0 %v693
    %2176 = vmatpush.msra.mxu0 %v692
    %2177 = vmatpush.msra.mxu0 %v691
    %2178 = vmatpush.msra.mxu0 %v690
    %2179 = vmatpush.msra.mxu0 %v689
    %2180 = vmatpush.msra.mxu0 %v688
    %2181 = vmatpush.msra.mxu0 %v687
    %2182 = vmatpush.msra.mxu0 %v686
    %2183 = vmatpush.msra.mxu0 %v685
    %2184 = vmatpush.msra.mxu0 %v684
    %2185 = vmatpush.msra.mxu0 %v683
    %2186 = vmatmul.f32.gmra.mxu0 %v2096
    %v2187 = vpop.f32.mrf.mxu0
    %v2188 = vadd.f32 %v2165, %v2187
    %2189 = vmatmul.f32.gmra.mxu0 %v2100
    %v2190 = vpop.f32.mrf.mxu0
    %v2191 = vadd.f32 %v2168, %v2190
    %2192 = vdwg.mxu0
    %2193 = vrot.lane.b32.xlu0 %v2188, 8
    %v2194 = vpop.permute.xlu0 %2193
    %2195 = vrot.lane.b32.xlu0 %v2191, 8
    %v2196 = vpop.permute.xlu0 %2195
    %v2197 = vmax.f32 %v2188, %v2194
    %v2198 = vmax.f32 %v2191, %v2196
    %2199 = vrot.lane.b32.xlu0 %v2197, 16
    %v2200 = vpop.permute.xlu0 %2199
    %2201 = vrot.lane.b32.xlu0 %v2198, 16
    %v2202 = vpop.permute.xlu0 %2201
    %v2203 = vmax.f32 %v2197, %v2200
    %v2204 = vmax.f32 %v2198, %v2202
    %2205 = vrot.lane.b32.xlu0 %v2203, 32
    %v2206 = vpop.permute.xlu0 %2205
    %2207 = vrot.lane.b32.xlu0 %v2204, 32
    %v2208 = vpop.permute.xlu0 %2207
    %v2209 = vmax.f32 %v2203, %v2206
    %v2210 = vmax.f32 %v2204, %v2208
    %2211 = vrot.lane.b32.xlu0 %v2209, 64
    %v2212 = vpop.permute.xlu0 %2211
    %2213 = vrot.lane.b32.xlu0 %v2210, 64
    %v2214 = vpop.permute.xlu0 %2213
    %v2215 = vmax.f32 %v2209, %v2212
    %v2216 = vmax.f32 %v2210, %v2214
    %v2217 = vsub.f32 %v2188, %v2215
    %v2218 = vsub.f32 %v2191, %v2216
    %v2219 = vmul.f32 %v2217, 1.442695
    %v2220 = vpow.pop %v2219
    %v2221 = vmul.f32 %v2218, 1.442695
    %v2222 = vpow.pop %v2221
    %v2223 = vmul.f32 %v2220, %v127
    %v2224 = vmul.f32 %v2222, %v128
    %2225 = vmatpush.msra.mxu0 %v838
    %2226 = vmatpush.msra.mxu0 %v837
    %2227 = vmatpush.msra.mxu0 %v836
    %2228 = vmatpush.msra.mxu0 %v835
    %2229 = vmatpush.msra.mxu0 %v834
    %2230 = vmatpush.msra.mxu0 %v833
    %2231 = vmatpush.msra.mxu0 %v832
    %2232 = vmatpush.msra.mxu0 %v831
    %2233 = vmatpush.msra.mxu0 %v830
    %2234 = vmatpush.msra.mxu0 %v829
    %2235 = vmatpush.msra.mxu0 %v828
    %2236 = vmatpush.msra.mxu0 %v827
    %2237 = vmatpush.msra.mxu0 %v826
    %2238 = vmatpush.msra.mxu0 %v825
    %2239 = vmatpush.msra.mxu0 %v824
    %2240 = vmatpush.msra.mxu0 %v823
    %2241 = vmatmul.f32.gmra.mxu0 %v2223
    %v2242 = vpop.f32.mrf.mxu0
    %v2243 = vadd.f32 0.0, %v2242
    %2244 = vmatmul.f32.gmra.mxu0 %v2224
    %v2245 = vpop.f32.mrf.mxu0
    %v2246 = vadd.f32 0.0, %v2245
    %2247 = vdwg.mxu0
    %v2248 = vmax.f32 %v2243, 1e-30
    %v2249 = vmax.f32 %v2246, 1e-30
    %v2250 = vrcp.pop %v2248
    %v2251 = vmul.f32 %v2248, %v2250
    %v2252 = vsub.f32 1.0, %v2251
    %v2253 = vmul.f32 %v2250, %v2252
    %v2254 = vadd.f32 %v2250, %v2253
    %vm2255 = vweird.f32 %v2248
    %vm2256 = vweird.f32 %v2250
    %vm2257 = vmor %vm2255, %vm2256
    %v2258 = vsel %vm2257, %v2250, %v2254
    %v2259 = vand.u32 2147483647, %v2248
    %vm2260 = vcmp.eq.f32.partialorder %v2259, 8.507059e+37
    %v2261 = vand.u32 %v2248, 2147483648
    %v2262 = vor.u32 1.1754944e-38, %v2261
    %v2263 = vsel %vm2260, %v2262, %v2258
    %v2264 = vmul.f32 %v2223, %v2263
    %v2265 = vrcp.pop %v2249
    %v2266 = vmul.f32 %v2249, %v2265
    %v2267 = vsub.f32 1.0, %v2266
    %v2268 = vmul.f32 %v2265, %v2267
    %v2269 = vadd.f32 %v2265, %v2268
    %vm2270 = vweird.f32 %v2249
    %vm2271 = vweird.f32 %v2265
    %vm2272 = vmor %vm2270, %vm2271
    %v2273 = vsel %vm2272, %v2265, %v2269
    %v2274 = vand.u32 2147483647, %v2249
    %vm2275 = vcmp.eq.f32.partialorder %v2274, 8.507059e+37
    %v2276 = vand.u32 %v2249, 2147483648
    %v2277 = vor.u32 1.1754944e-38, %v2276
    %v2278 = vsel %vm2275, %v2277, %v2273
    %v2279 = vmul.f32 %v2224, %v2278
    %2280 = vmatpush.msra.mxu0 0.0
    %2281 = vmatpush.msra.mxu0 0.0
    %2282 = vmatpush.msra.mxu0 0.0
    %2283 = vmatpush.msra.mxu0 0.0
    %2284 = vmatpush.msra.mxu0 0.0
    %2285 = vmatpush.msra.mxu0 0.0
    %2286 = vmatpush.msra.mxu0 0.0
    %2287 = vmatpush.msra.mxu0 0.0
    %2288 = vmatpush.msra.mxu0 0.0
    %2289 = vmatpush.msra.mxu0 0.0
    %2290 = vmatpush.msra.mxu0 0.0
    %2291 = vmatpush.msra.mxu0 0.0
    %2292 = vmatpush.msra.mxu0 0.0
    %2293 = vmatpush.msra.mxu0 0.0
    %2294 = vmatpush.msra.mxu0 %v1782
    %2295 = vmatpush.msra.mxu0 %v1779
    %2296 = vmatmul.f32.gmra.mxu0 %v911
    %v2297 = vpop.f32.mrf.mxu0
    %v2298 = vadd.f32 0.0, %v2297
    %2299 = vmatmul.f32.gmra.mxu0 %v914
    %v2300 = vpop.f32.mrf.mxu0
    %v2301 = vadd.f32 0.0, %v2300
    %2302 = vmatmul.f32.gmra.mxu0 %v917
    %v2303 = vpop.f32.mrf.mxu0
    %v2304 = vadd.f32 0.0, %v2303
    %2305 = vmatmul.f32.gmra.mxu0 %v920
    %v2306 = vpop.f32.mrf.mxu0
    %v2307 = vadd.f32 0.0, %v2306
    %2308 = vmatmul.f32.gmra.mxu0 %v923
    %v2309 = vpop.f32.mrf.mxu0
    %v2310 = vadd.f32 0.0, %v2309
    %2311 = vmatmul.f32.gmra.mxu0 %v926
    %v2312 = vpop.f32.mrf.mxu0
    %v2313 = vadd.f32 0.0, %v2312
    %2314 = vmatmul.f32.gmra.mxu0 %v929
    %v2315 = vpop.f32.mrf.mxu0
    %v2316 = vadd.f32 0.0, %v2315
    %2317 = vmatmul.f32.gmra.mxu0 %v932
    %v2318 = vpop.f32.mrf.mxu0
    %v2319 = vadd.f32 0.0, %v2318
    %2320 = vmatmul.f32.gmra.mxu0 %v935
    %v2321 = vpop.f32.mrf.mxu0
    %v2322 = vadd.f32 0.0, %v2321
    %2323 = vmatmul.f32.gmra.mxu0 %v938
    %v2324 = vpop.f32.mrf.mxu0
    %v2325 = vadd.f32 0.0, %v2324
    %2326 = vmatmul.f32.gmra.mxu0 %v941
    %v2327 = vpop.f32.mrf.mxu0
    %v2328 = vadd.f32 0.0, %v2327
    %2329 = vmatmul.f32.gmra.mxu0 %v944
    %v2330 = vpop.f32.mrf.mxu0
    %v2331 = vadd.f32 0.0, %v2330
    %2332 = vmatmul.f32.gmra.mxu0 %v947
    %v2333 = vpop.f32.mrf.mxu0
    %v2334 = vadd.f32 0.0, %v2333
    %2335 = vmatmul.f32.gmra.mxu0 %v950
    %v2336 = vpop.f32.mrf.mxu0
    %v2337 = vadd.f32 0.0, %v2336
    %2338 = vmatmul.f32.gmra.mxu0 %v953
    %v2339 = vpop.f32.mrf.mxu0
    %v2340 = vadd.f32 0.0, %v2339
    %2341 = vmatmul.f32.gmra.mxu0 %v956
    %v2342 = vpop.f32.mrf.mxu0
    %v2343 = vadd.f32 0.0, %v2342
    %2344 = vdwg.mxu0
    %v2345 = vmul.f32 %v2298, %v129
    %v2346 = vmul.f32 %v2301, %v130
    %v2347 = vmul.f32 %v2304, %v131
    %v2348 = vmul.f32 %v2307, %v132
    %v2349 = vmul.f32 %v2310, %v133
    %v2350 = vmul.f32 %v2313, %v134
    %v2351 = vmul.f32 %v2316, %v135
    %v2352 = vmul.f32 %v2319, %v136
    %v2353 = vmul.f32 %v2322, %v137
    %v2354 = vmul.f32 %v2325, %v138
    %v2355 = vmul.f32 %v2328, %v139
    %v2356 = vmul.f32 %v2331, %v140
    %v2357 = vmul.f32 %v2334, %v141
    %v2358 = vmul.f32 %v2337, %v142
    %v2359 = vmul.f32 %v2340, %v143
    %v2360 = vmul.f32 %v2343, %v144
    %2363 = vrot.lane.b32.xlu0 %v1779, 64
    %v2364 = vpop.permute.xlu0 %2363
    %2365 = vrot.lane.b32.xlu0 %v1782, 64
    %v2366 = vpop.permute.xlu0 %2365
    %2369 = vmatpush.msra.mxu0 %v2360
    %2370 = vmatpush.msra.mxu0 %v2359
    %2371 = vmatpush.msra.mxu0 %v2358
    %2372 = vmatpush.msra.mxu0 %v2357
    %2373 = vmatpush.msra.mxu0 %v2356
    %2374 = vmatpush.msra.mxu0 %v2355
    %2375 = vmatpush.msra.mxu0 %v2354
    %2376 = vmatpush.msra.mxu0 %v2353
    %2377 = vmatpush.msra.mxu0 %v2352
    %2378 = vmatpush.msra.mxu0 %v2351
    %2379 = vmatpush.msra.mxu0 %v2350
    %2380 = vmatpush.msra.mxu0 %v2349
    %2381 = vmatpush.msra.mxu0 %v2348
    %2382 = vmatpush.msra.mxu0 %v2347
    %2383 = vmatpush.msra.mxu0 %v2346
    %2384 = vmatpush.msra.mxu0 %v2345
    %2385 = vmatmul.f32.gmra.mxu0 %v2264
    %v2386 = vpop.f32.mrf.mxu0
    %v2387 = vadd.f32 %v2364, %v2386
    %2388 = vmatmul.f32.gmra.mxu0 %v2279
    %v2389 = vpop.f32.mrf.mxu0
    %v2390 = vadd.f32 %v2366, %v2389
    %2391 = vdwg.mxu0
    %vm2392 = vcmp.gt.f32.partialorder %v2387, 0.0
    %vm2393 = vcmp.gt.f32.partialorder %v2390, 0.0
    %v2394 = vmin.f32 %v2387, 0.0
    %v2395 = vmin.f32 %v2390, 0.0
    %v2396 = vmul.f32 %v2394, 1.442695
    %v2397 = vpow.pop %v2396
    %v2398 = vmul.f32 %v2395, 1.442695
    %v2399 = vpow.pop %v2398
    %v2400 = vsub.f32 %v2397, 1.0
    %v2401 = vsub.f32 %v2399, 1.0
    %v2402 = vsel %vm2392, %v2387, %v2400
    %v2403 = vsel %vm2393, %v2390, %v2401
    %s2404 = scalar_lea.vmem [#allocation2], 96
    %v2405 = vld [vmem:[%s2404] sm:$0xff]
    %v2406 = vld [vmem:[%s2404 + $0x8] sm:$0xff]
    %v2407 = vld [vmem:[%s2404 + $0x10] sm:$0xff]
    %v2408 = vld [vmem:[%s2404 + $0x18] sm:$0xff]
    %s2409 = scalar_lea.vmem %s2, 3
    %v2410 = vld [vmem:[%s2409] sm:$0x1]
    %s2411 = scalar_lea.vmem %s3, 12
    %v2412 = vld [vmem:[%s2411] sm:$0xf]
    %v2414 = vperm.slane %v2410, 0
    %v2417 = vsel %vm156, %v2402, 0
    %v2420 = vsel %vm156, %v2403, 0
    %2422 = vmatpush.msra.mxu0 0.0
    %2423 = vmatpush.msra.mxu0 0.0
    %2424 = vmatpush.msra.mxu0 0.0
    %2425 = vmatpush.msra.mxu0 0.0
    %2426 = vmatpush.msra.mxu0 0.0
    %2427 = vmatpush.msra.mxu0 0.0
    %2428 = vmatpush.msra.mxu0 0.0
    %2429 = vmatpush.msra.mxu0 0.0
    %2430 = vmatpush.msra.mxu0 0.0
    %2431 = vmatpush.msra.mxu0 0.0
    %2432 = vmatpush.msra.mxu0 0.0
    %2433 = vmatpush.msra.mxu0 0.0
    %2434 = vmatpush.msra.mxu0 %v2408
    %2435 = vmatpush.msra.mxu0 %v2407
    %2436 = vmatpush.msra.mxu0 %v2406
    %2437 = vmatpush.msra.mxu0 %v2405
    %2438 = vmatmul.f32.gmra.mxu0 %v2417
    %v2439 = vpop.f32.mrf.mxu0
    %v2440 = vadd.f32 %v2414, %v2439
    %2441 = vmatmul.f32.gmra.mxu0 %v2420
    %v2442 = vpop.f32.mrf.mxu0
    %v2443 = vadd.f32 %v2414, %v2442
    %2444 = vdwg.mxu0
    %2445 = vmatpush.msra.mxu0 %v310
    %2446 = vmatpush.msra.mxu0 %v306
    %2447 = vmatpush.msra.mxu0 %v302
    %2448 = vmatpush.msra.mxu0 %v298
    %2449 = vmatpush.msra.mxu0 %v294
    %2450 = vmatpush.msra.mxu0 %v290
    %2451 = vmatpush.msra.mxu0 %v286
    %2452 = vmatpush.msra.mxu0 %v282
    %2453 = vmatpush.msra.mxu0 %v278
    %2454 = vmatpush.msra.mxu0 %v274
    %2455 = vmatpush.msra.mxu0 %v270
    %2456 = vmatpush.msra.mxu0 %v266
    %2457 = vmatpush.msra.mxu0 %v262
    %2458 = vmatpush.msra.mxu0 %v258
    %2459 = vmatpush.msra.mxu0 %v254
    %2460 = vmatpush.msra.mxu0 %v250
    %2461 = vmatmul.f32.gmra.mxu0 %v2440
    %v2462 = vpop.f32.mrf.mxu0
    %v2463 = vadd.f32 0.0, %v2462
    %2464 = vmatmul.f32.gmra.mxu0 %v2443
    %v2465 = vpop.f32.mrf.mxu0
    %v2466 = vadd.f32 0.0, %v2465
    %2467 = vdwg.mxu0
    %2468 = vmatpush.msra.mxu0 %v311
    %2469 = vmatpush.msra.mxu0 %v307
    %2470 = vmatpush.msra.mxu0 %v303
    %2471 = vmatpush.msra.mxu0 %v299
    %2472 = vmatpush.msra.mxu0 %v295
    %2473 = vmatpush.msra.mxu0 %v291
    %2474 = vmatpush.msra.mxu0 %v287
    %2475 = vmatpush.msra.mxu0 %v283
    %2476 = vmatpush.msra.mxu0 %v279
    %2477 = vmatpush.msra.mxu0 %v275
    %2478 = vmatpush.msra.mxu0 %v271
    %2479 = vmatpush.msra.mxu0 %v267
    %2480 = vmatpush.msra.mxu0 %v263
    %2481 = vmatpush.msra.mxu0 %v259
    %2482 = vmatpush.msra.mxu0 %v255
    %2483 = vmatpush.msra.mxu0 %v251
    %2484 = vmatmul.f32.gmra.mxu0 %v2440
    %v2485 = vpop.f32.mrf.mxu0
    %v2486 = vadd.f32 0.0, %v2485
    %2487 = vmatmul.f32.gmra.mxu0 %v2443
    %v2488 = vpop.f32.mrf.mxu0
    %v2489 = vadd.f32 0.0, %v2488
    %2490 = vdwg.mxu0
    %2491 = vmatpush.msra.mxu0 %v312
    %2492 = vmatpush.msra.mxu0 %v308
    %2493 = vmatpush.msra.mxu0 %v304
    %2494 = vmatpush.msra.mxu0 %v300
    %2495 = vmatpush.msra.mxu0 %v296
    %2496 = vmatpush.msra.mxu0 %v292
    %2497 = vmatpush.msra.mxu0 %v288
    %2498 = vmatpush.msra.mxu0 %v284
    %2499 = vmatpush.msra.mxu0 %v280
    %2500 = vmatpush.msra.mxu0 %v276
    %2501 = vmatpush.msra.mxu0 %v272
    %2502 = vmatpush.msra.mxu0 %v268
    %2503 = vmatpush.msra.mxu0 %v264
    %2504 = vmatpush.msra.mxu0 %v260
    %2505 = vmatpush.msra.mxu0 %v256
    %2506 = vmatpush.msra.mxu0 %v252
    %2507 = vmatmul.f32.gmra.mxu0 %v2440
    %v2508 = vpop.f32.mrf.mxu0
    %v2509 = vadd.f32 0.0, %v2508
    %2510 = vmatmul.f32.gmra.mxu0 %v2443
    %v2511 = vpop.f32.mrf.mxu0
    %v2512 = vadd.f32 0.0, %v2511
    %2513 = vdwg.mxu0
    %2514 = vmatpush.msra.mxu0 %v313
    %2515 = vmatpush.msra.mxu0 %v309
    %2516 = vmatpush.msra.mxu0 %v305
    %2517 = vmatpush.msra.mxu0 %v301
    %2518 = vmatpush.msra.mxu0 %v297
    %2519 = vmatpush.msra.mxu0 %v293
    %2520 = vmatpush.msra.mxu0 %v289
    %2521 = vmatpush.msra.mxu0 %v285
    %2522 = vmatpush.msra.mxu0 %v281
    %2523 = vmatpush.msra.mxu0 %v277
    %2524 = vmatpush.msra.mxu0 %v273
    %2525 = vmatpush.msra.mxu0 %v269
    %2526 = vmatpush.msra.mxu0 %v265
    %2527 = vmatpush.msra.mxu0 %v261
    %2528 = vmatpush.msra.mxu0 %v257
    %2529 = vmatpush.msra.mxu0 %v253
    %2530 = vmatmul.f32.gmra.mxu0 %v2440
    %v2531 = vpop.f32.mrf.mxu0
    %v2532 = vadd.f32 0.0, %v2531
    %2533 = vmatmul.f32.gmra.mxu0 %v2443
    %v2534 = vpop.f32.mrf.mxu0
    %v2535 = vadd.f32 0.0, %v2534
    %2536 = vdwg.mxu0
    %v2537 = vmul.f32 %v2463, %v117
    %v2538 = vmul.f32 %v2486, %v118
    %v2539 = vmul.f32 %v2509, %v119
    %v2540 = vmul.f32 %v2532, %v120
    %v2541 = vmul.f32 %v2466, %v121
    %v2542 = vmul.f32 %v2489, %v122
    %v2543 = vmul.f32 %v2512, %v123
    %v2544 = vmul.f32 %v2535, %v124
    %2545 = vmatpush.msra.mxu0 0.0
    %2546 = vmatpush.msra.mxu0 0.0
    %2547 = vmatpush.msra.mxu0 0.0
    %2548 = vmatpush.msra.mxu0 0.0
    %2549 = vmatpush.msra.mxu0 0.0
    %2550 = vmatpush.msra.mxu0 0.0
    %2551 = vmatpush.msra.mxu0 0.0
    %2552 = vmatpush.msra.mxu0 0.0
    %2553 = vmatpush.msra.mxu0 0.0
    %2554 = vmatpush.msra.mxu0 0.0
    %2555 = vmatpush.msra.mxu0 0.0
    %2556 = vmatpush.msra.mxu0 0.0
    %2557 = vmatpush.msra.mxu0 0.0
    %2558 = vmatpush.msra.mxu0 0.0
    %2559 = vmatpush.msra.mxu0 %v2541
    %2560 = vmatpush.msra.mxu0 %v2537
    %2561 = vmatmul.f32.gmra.mxu0 %v416
    %v2562 = vpop.f32.mrf.mxu0
    %v2563 = vadd.f32 0.0, %v2562
    %2564 = vdwg.mxu0
    %2565 = vmatpush.msra.mxu0 0.0
    %2566 = vmatpush.msra.mxu0 0.0
    %2567 = vmatpush.msra.mxu0 0.0
    %2568 = vmatpush.msra.mxu0 0.0
    %2569 = vmatpush.msra.mxu0 0.0
    %2570 = vmatpush.msra.mxu0 0.0
    %2571 = vmatpush.msra.mxu0 0.0
    %2572 = vmatpush.msra.mxu0 0.0
    %2573 = vmatpush.msra.mxu0 0.0
    %2574 = vmatpush.msra.mxu0 0.0
    %2575 = vmatpush.msra.mxu0 0.0
    %2576 = vmatpush.msra.mxu0 0.0
    %2577 = vmatpush.msra.mxu0 0.0
    %2578 = vmatpush.msra.mxu0 0.0
    %2579 = vmatpush.msra.mxu0 %v2542
    %2580 = vmatpush.msra.mxu0 %v2538
    %2581 = vmatmul.f32.gmra.mxu0 %v416
    %v2582 = vpop.f32.mrf.mxu0
    %v2583 = vadd.f32 0.0, %v2582
    %2584 = vdwg.mxu0
    %2585 = vmatpush.msra.mxu0 0.0
    %2586 = vmatpush.msra.mxu0 0.0
    %2587 = vmatpush.msra.mxu0 0.0
    %2588 = vmatpush.msra.mxu0 0.0
    %2589 = vmatpush.msra.mxu0 0.0
    %2590 = vmatpush.msra.mxu0 0.0
    %2591 = vmatpush.msra.mxu0 0.0
    %2592 = vmatpush.msra.mxu0 0.0
    %2593 = vmatpush.msra.mxu0 0.0
    %2594 = vmatpush.msra.mxu0 0.0
    %2595 = vmatpush.msra.mxu0 0.0
    %2596 = vmatpush.msra.mxu0 0.0
    %2597 = vmatpush.msra.mxu0 0.0
    %2598 = vmatpush.msra.mxu0 0.0
    %2599 = vmatpush.msra.mxu0 %v2543
    %2600 = vmatpush.msra.mxu0 %v2539
    %2601 = vmatmul.f32.gmra.mxu0 %v416
    %v2602 = vpop.f32.mrf.mxu0
    %v2603 = vadd.f32 0.0, %v2602
    %2604 = vdwg.mxu0
    %2605 = vmatpush.msra.mxu0 0.0
    %2606 = vmatpush.msra.mxu0 0.0
    %2607 = vmatpush.msra.mxu0 0.0
    %2608 = vmatpush.msra.mxu0 0.0
    %2609 = vmatpush.msra.mxu0 0.0
    %2610 = vmatpush.msra.mxu0 0.0
    %2611 = vmatpush.msra.mxu0 0.0
    %2612 = vmatpush.msra.mxu0 0.0
    %2613 = vmatpush.msra.mxu0 0.0
    %2614 = vmatpush.msra.mxu0 0.0
    %2615 = vmatpush.msra.mxu0 0.0
    %2616 = vmatpush.msra.mxu0 0.0
    %2617 = vmatpush.msra.mxu0 0.0
    %2618 = vmatpush.msra.mxu0 0.0
    %2619 = vmatpush.msra.mxu0 %v2544
    %2620 = vmatpush.msra.mxu0 %v2540
    %2621 = vmatmul.f32.gmra.mxu0 %v416
    %v2622 = vpop.f32.mrf.mxu0
    %v2623 = vadd.f32 0.0, %v2622
    %2624 = vdwg.mxu0
    %v2625 = vperm.slane %v2563, 0
    %v2626 = vperm.slane %v2583, 0
    %v2627 = vperm.slane %v2603, 0
    %v2628 = vperm.slane %v2623, 0
    %2629 = vmatpush.msra.mxu0 %v246
    %2630 = vmatpush.msra.mxu0 %v242
    %2631 = vmatpush.msra.mxu0 %v238
    %2632 = vmatpush.msra.mxu0 %v234
    %2633 = vmatpush.msra.mxu0 %v230
    %2634 = vmatpush.msra.mxu0 %v226
    %2635 = vmatpush.msra.mxu0 %v222
    %2636 = vmatpush.msra.mxu0 %v218
    %2637 = vmatpush.msra.mxu0 %v214
    %2638 = vmatpush.msra.mxu0 %v210
    %2639 = vmatpush.msra.mxu0 %v206
    %2640 = vmatpush.msra.mxu0 %v202
    %2641 = vmatpush.msra.mxu0 %v198
    %2642 = vmatpush.msra.mxu0 %v194
    %2643 = vmatpush.msra.mxu0 %v190
    %2644 = vmatpush.msra.mxu0 %v186
    %2645 = vmatmul.f32.gmra.mxu0 %v2440
    %v2646 = vpop.f32.mrf.mxu0
    %v2647 = vadd.f32 %v2625, %v2646
    %2648 = vmatmul.f32.gmra.mxu0 %v2443
    %v2649 = vpop.f32.mrf.mxu0
    %v2650 = vadd.f32 %v2625, %v2649
    %2651 = vdwg.mxu0
    %2652 = vmatpush.msra.mxu0 %v247
    %2653 = vmatpush.msra.mxu0 %v243
    %2654 = vmatpush.msra.mxu0 %v239
    %2655 = vmatpush.msra.mxu0 %v235
    %2656 = vmatpush.msra.mxu0 %v231
    %2657 = vmatpush.msra.mxu0 %v227
    %2658 = vmatpush.msra.mxu0 %v223
    %2659 = vmatpush.msra.mxu0 %v219
    %2660 = vmatpush.msra.mxu0 %v215
    %2661 = vmatpush.msra.mxu0 %v211
    %2662 = vmatpush.msra.mxu0 %v207
    %2663 = vmatpush.msra.mxu0 %v203
    %2664 = vmatpush.msra.mxu0 %v199
    %2665 = vmatpush.msra.mxu0 %v195
    %2666 = vmatpush.msra.mxu0 %v191
    %2667 = vmatpush.msra.mxu0 %v187
    %2668 = vmatmul.f32.gmra.mxu0 %v2440
    %v2669 = vpop.f32.mrf.mxu0
    %v2670 = vadd.f32 %v2626, %v2669
    %2671 = vmatmul.f32.gmra.mxu0 %v2443
    %v2672 = vpop.f32.mrf.mxu0
    %v2673 = vadd.f32 %v2626, %v2672
    %2674 = vdwg.mxu0
    %2675 = vmatpush.msra.mxu0 %v248
    %2676 = vmatpush.msra.mxu0 %v244
    %2677 = vmatpush.msra.mxu0 %v240
    %2678 = vmatpush.msra.mxu0 %v236
    %2679 = vmatpush.msra.mxu0 %v232
    %2680 = vmatpush.msra.mxu0 %v228
    %2681 = vmatpush.msra.mxu0 %v224
    %2682 = vmatpush.msra.mxu0 %v220
    %2683 = vmatpush.msra.mxu0 %v216
    %2684 = vmatpush.msra.mxu0 %v212
    %2685 = vmatpush.msra.mxu0 %v208
    %2686 = vmatpush.msra.mxu0 %v204
    %2687 = vmatpush.msra.mxu0 %v200
    %2688 = vmatpush.msra.mxu0 %v196
    %2689 = vmatpush.msra.mxu0 %v192
    %2690 = vmatpush.msra.mxu0 %v188
    %2691 = vmatmul.f32.gmra.mxu0 %v2440
    %v2692 = vpop.f32.mrf.mxu0
    %v2693 = vadd.f32 %v2627, %v2692
    %2694 = vmatmul.f32.gmra.mxu0 %v2443
    %v2695 = vpop.f32.mrf.mxu0
    %v2696 = vadd.f32 %v2627, %v2695
    %2697 = vdwg.mxu0
    %2698 = vmatpush.msra.mxu0 %v249
    %2699 = vmatpush.msra.mxu0 %v245
    %2700 = vmatpush.msra.mxu0 %v241
    %2701 = vmatpush.msra.mxu0 %v237
    %2702 = vmatpush.msra.mxu0 %v233
    %2703 = vmatpush.msra.mxu0 %v229
    %2704 = vmatpush.msra.mxu0 %v225
    %2705 = vmatpush.msra.mxu0 %v221
    %2706 = vmatpush.msra.mxu0 %v217
    %2707 = vmatpush.msra.mxu0 %v213
    %2708 = vmatpush.msra.mxu0 %v209
    %2709 = vmatpush.msra.mxu0 %v205
    %2710 = vmatpush.msra.mxu0 %v201
    %2711 = vmatpush.msra.mxu0 %v197
    %2712 = vmatpush.msra.mxu0 %v193
    %2713 = vmatpush.msra.mxu0 %v189
    %2714 = vmatmul.f32.gmra.mxu0 %v2440
    %v2715 = vpop.f32.mrf.mxu0
    %v2716 = vadd.f32 %v2628, %v2715
    %2717 = vmatmul.f32.gmra.mxu0 %v2443
    %v2718 = vpop.f32.mrf.mxu0
    %v2719 = vadd.f32 %v2628, %v2718
    %2720 = vdwg.mxu0
    %vm2721 = vcmp.gt.f32.partialorder %v2647, 0.0
    %vm2722 = vcmp.gt.f32.partialorder %v2670, 0.0
    %vm2723 = vcmp.gt.f32.partialorder %v2693, 0.0
    %vm2724 = vcmp.gt.f32.partialorder %v2716, 0.0
    %vm2725 = vcmp.gt.f32.partialorder %v2650, 0.0
    %vm2726 = vcmp.gt.f32.partialorder %v2673, 0.0
    %vm2727 = vcmp.gt.f32.partialorder %v2696, 0.0
    %vm2728 = vcmp.gt.f32.partialorder %v2719, 0.0
    %v2729 = vmul.f32 %v2647, 0.2
    %v2730 = vmul.f32 %v2670, 0.2
    %v2731 = vmul.f32 %v2693, 0.2
    %v2732 = vmul.f32 %v2716, 0.2
    %v2733 = vmul.f32 %v2650, 0.2
    %v2734 = vmul.f32 %v2673, 0.2
    %v2735 = vmul.f32 %v2696, 0.2
    %v2736 = vmul.f32 %v2719, 0.2
    %v2737 = vsel %vm2721, %v2647, %v2729
    %v2738 = vsel %vm2722, %v2670, %v2730
    %v2739 = vsel %vm2723, %v2693, %v2731
    %v2740 = vsel %vm2724, %v2716, %v2732
    %v2741 = vsel %vm2725, %v2650, %v2733
    %v2742 = vsel %vm2726, %v2673, %v2734
    %v2743 = vsel %vm2727, %v2696, %v2735
    %v2744 = vsel %vm2728, %v2719, %v2736
    %v2746 = vperm.slane %v2412, 0
    %v2747 = vperm.slane %v2412, 1
    %v2748 = vperm.slane %v2412, 2
    %v2749 = vperm.slane %v2412, 3
    %v2754 = vmul.f32 %v2737, %v2746
    %v2755 = vmul.f32 %v2738, %v2747
    %v2756 = vmul.f32 %v2739, %v2748
    %v2757 = vmul.f32 %v2740, %v2749
    %v2758 = vmul.f32 %v2741, %v2746
    %v2759 = vmul.f32 %v2742, %v2747
    %v2760 = vmul.f32 %v2743, %v2748
    %v2761 = vmul.f32 %v2744, %v2749
    %2762 = vmatpush.msra.mxu0 %v650
    %2763 = vmatpush.msra.mxu0 %v649
    %2764 = vmatpush.msra.mxu0 %v648
    %2765 = vmatpush.msra.mxu0 %v647
    %2766 = vmatpush.msra.mxu0 %v646
    %2767 = vmatpush.msra.mxu0 %v645
    %2768 = vmatpush.msra.mxu0 %v644
    %2769 = vmatpush.msra.mxu0 %v643
    %2770 = vmatpush.msra.mxu0 %v642
    %2771 = vmatpush.msra.mxu0 %v641
    %2772 = vmatpush.msra.mxu0 %v640
    %2773 = vmatpush.msra.mxu0 %v639
    %2774 = vmatpush.msra.mxu0 %v638
    %2775 = vmatpush.msra.mxu0 %v637
    %2776 = vmatpush.msra.mxu0 %v636
    %2777 = vmatpush.msra.mxu0 %v635
    %2778 = vmatmul.f32.gmra.mxu0 %v2754
    %v2779 = vpop.f32.mrf.mxu0
    %v2780 = vadd.f32 %v125, %v2779
    %2781 = vmatmul.f32.gmra.mxu0 %v2758
    %v2782 = vpop.f32.mrf.mxu0
    %v2783 = vadd.f32 %v126, %v2782
    %2784 = vdwg.mxu0
    %2785 = vmatpush.msra.mxu0 %v666
    %2786 = vmatpush.msra.mxu0 %v665
    %2787 = vmatpush.msra.mxu0 %v664
    %2788 = vmatpush.msra.mxu0 %v663
    %2789 = vmatpush.msra.mxu0 %v662
    %2790 = vmatpush.msra.mxu0 %v661
    %2791 = vmatpush.msra.mxu0 %v660
    %2792 = vmatpush.msra.mxu0 %v659
    %2793 = vmatpush.msra.mxu0 %v658
    %2794 = vmatpush.msra.mxu0 %v657
    %2795 = vmatpush.msra.mxu0 %v656
    %2796 = vmatpush.msra.mxu0 %v655
    %2797 = vmatpush.msra.mxu0 %v654
    %2798 = vmatpush.msra.mxu0 %v653
    %2799 = vmatpush.msra.mxu0 %v652
    %2800 = vmatpush.msra.mxu0 %v651
    %2801 = vmatmul.f32.gmra.mxu0 %v2755
    %v2802 = vpop.f32.mrf.mxu0
    %v2803 = vadd.f32 %v2780, %v2802
    %2804 = vmatmul.f32.gmra.mxu0 %v2759
    %v2805 = vpop.f32.mrf.mxu0
    %v2806 = vadd.f32 %v2783, %v2805
    %2807 = vdwg.mxu0
    %2808 = vmatpush.msra.mxu0 %v682
    %2809 = vmatpush.msra.mxu0 %v681
    %2810 = vmatpush.msra.mxu0 %v680
    %2811 = vmatpush.msra.mxu0 %v679
    %2812 = vmatpush.msra.mxu0 %v678
    %2813 = vmatpush.msra.mxu0 %v677
    %2814 = vmatpush.msra.mxu0 %v676
    %2815 = vmatpush.msra.mxu0 %v675
    %2816 = vmatpush.msra.mxu0 %v674
    %2817 = vmatpush.msra.mxu0 %v673
    %2818 = vmatpush.msra.mxu0 %v672
    %2819 = vmatpush.msra.mxu0 %v671
    %2820 = vmatpush.msra.mxu0 %v670
    %2821 = vmatpush.msra.mxu0 %v669
    %2822 = vmatpush.msra.mxu0 %v668
    %2823 = vmatpush.msra.mxu0 %v667
    %2824 = vmatmul.f32.gmra.mxu0 %v2756
    %v2825 = vpop.f32.mrf.mxu0
    %v2826 = vadd.f32 %v2803, %v2825
    %2827 = vmatmul.f32.gmra.mxu0 %v2760
    %v2828 = vpop.f32.mrf.mxu0
    %v2829 = vadd.f32 %v2806, %v2828
    %2830 = vdwg.mxu0
    %2831 = vmatpush.msra.mxu0 %v698
    %2832 = vmatpush.msra.mxu0 %v697
    %2833 = vmatpush.msra.mxu0 %v696
    %2834 = vmatpush.msra.mxu0 %v695
    %2835 = vmatpush.msra.mxu0 %v694
    %2836 = vmatpush.msra.mxu0 %v693
    %2837 = vmatpush.msra.mxu0 %v692
    %2838 = vmatpush.msra.mxu0 %v691
    %2839 = vmatpush.msra.mxu0 %v690
    %2840 = vmatpush.msra.mxu0 %v689
    %2841 = vmatpush.msra.mxu0 %v688
    %2842 = vmatpush.msra.mxu0 %v687
    %2843 = vmatpush.msra.mxu0 %v686
    %2844 = vmatpush.msra.mxu0 %v685
    %2845 = vmatpush.msra.mxu0 %v684
    %2846 = vmatpush.msra.mxu0 %v683
    %2847 = vmatmul.f32.gmra.mxu0 %v2757
    %v2848 = vpop.f32.mrf.mxu0
    %v2849 = vadd.f32 %v2826, %v2848
    %2850 = vmatmul.f32.gmra.mxu0 %v2761
    %v2851 = vpop.f32.mrf.mxu0
    %v2852 = vadd.f32 %v2829, %v2851
    %2853 = vdwg.mxu0
    %2854 = vrot.lane.b32.xlu0 %v2849, 8
    %v2855 = vpop.permute.xlu0 %2854
    %2856 = vrot.lane.b32.xlu0 %v2852, 8
    %v2857 = vpop.permute.xlu0 %2856
    %v2858 = vmax.f32 %v2849, %v2855
    %v2859 = vmax.f32 %v2852, %v2857
    %2860 = vrot.lane.b32.xlu0 %v2858, 16
    %v2861 = vpop.permute.xlu0 %2860
    %2862 = vrot.lane.b32.xlu0 %v2859, 16
    %v2863 = vpop.permute.xlu0 %2862
    %v2864 = vmax.f32 %v2858, %v2861
    %v2865 = vmax.f32 %v2859, %v2863
    %2866 = vrot.lane.b32.xlu0 %v2864, 32
    %v2867 = vpop.permute.xlu0 %2866
    %2868 = vrot.lane.b32.xlu0 %v2865, 32
    %v2869 = vpop.permute.xlu0 %2868
    %v2870 = vmax.f32 %v2864, %v2867
    %v2871 = vmax.f32 %v2865, %v2869
    %2872 = vrot.lane.b32.xlu0 %v2870, 64
    %v2873 = vpop.permute.xlu0 %2872
    %2874 = vrot.lane.b32.xlu0 %v2871, 64
    %v2875 = vpop.permute.xlu0 %2874
    %v2876 = vmax.f32 %v2870, %v2873
    %v2877 = vmax.f32 %v2871, %v2875
    %v2878 = vsub.f32 %v2849, %v2876
    %v2879 = vsub.f32 %v2852, %v2877
    %v2880 = vmul.f32 %v2878, 1.442695
    %v2881 = vpow.pop %v2880
    %v2882 = vmul.f32 %v2879, 1.442695
    %v2883 = vpow.pop %v2882
    %v2884 = vmul.f32 %v2881, %v127
    %v2885 = vmul.f32 %v2883, %v128
    %2886 = vmatpush.msra.mxu0 %v838
    %2887 = vmatpush.msra.mxu0 %v837
    %2888 = vmatpush.msra.mxu0 %v836
    %2889 = vmatpush.msra.mxu0 %v835
    %2890 = vmatpush.msra.mxu0 %v834
    %2891 = vmatpush.msra.mxu0 %v833
    %2892 = vmatpush.msra.mxu0 %v832
    %2893 = vmatpush.msra.mxu0 %v831
    %2894 = vmatpush.msra.mxu0 %v830
    %2895 = vmatpush.msra.mxu0 %v829
    %2896 = vmatpush.msra.mxu0 %v828
    %2897 = vmatpush.msra.mxu0 %v827
    %2898 = vmatpush.msra.mxu0 %v826
    %2899 = vmatpush.msra.mxu0 %v825
    %2900 = vmatpush.msra.mxu0 %v824
    %2901 = vmatpush.msra.mxu0 %v823
    %2902 = vmatmul.f32.gmra.mxu0 %v2884
    %v2903 = vpop.f32.mrf.mxu0
    %v2904 = vadd.f32 0.0, %v2903
    %2905 = vmatmul.f32.gmra.mxu0 %v2885
    %v2906 = vpop.f32.mrf.mxu0
    %v2907 = vadd.f32 0.0, %v2906
    %2908 = vdwg.mxu0
    %v2909 = vmax.f32 %v2904, 1e-30
    %v2910 = vmax.f32 %v2907, 1e-30
    %v2911 = vrcp.pop %v2909
    %v2912 = vmul.f32 %v2909, %v2911
    %v2913 = vsub.f32 1.0, %v2912
    %v2914 = vmul.f32 %v2911, %v2913
    %v2915 = vadd.f32 %v2911, %v2914
    %vm2916 = vweird.f32 %v2909
    %vm2917 = vweird.f32 %v2911
    %vm2918 = vmor %vm2916, %vm2917
    %v2919 = vsel %vm2918, %v2911, %v2915
    %v2920 = vand.u32 2147483647, %v2909
    %vm2921 = vcmp.eq.f32.partialorder %v2920, 8.507059e+37
    %v2922 = vand.u32 %v2909, 2147483648
    %v2923 = vor.u32 1.1754944e-38, %v2922
    %v2924 = vsel %vm2921, %v2923, %v2919
    %v2925 = vmul.f32 %v2884, %v2924
    %v2926 = vrcp.pop %v2910
    %v2927 = vmul.f32 %v2910, %v2926
    %v2928 = vsub.f32 1.0, %v2927
    %v2929 = vmul.f32 %v2926, %v2928
    %v2930 = vadd.f32 %v2926, %v2929
    %vm2931 = vweird.f32 %v2910
    %vm2932 = vweird.f32 %v2926
    %vm2933 = vmor %vm2931, %vm2932
    %v2934 = vsel %vm2933, %v2926, %v2930
    %v2935 = vand.u32 2147483647, %v2910
    %vm2936 = vcmp.eq.f32.partialorder %v2935, 8.507059e+37
    %v2937 = vand.u32 %v2910, 2147483648
    %v2938 = vor.u32 1.1754944e-38, %v2937
    %v2939 = vsel %vm2936, %v2938, %v2934
    %v2940 = vmul.f32 %v2885, %v2939
    %2941 = vmatpush.msra.mxu0 0.0
    %2942 = vmatpush.msra.mxu0 0.0
    %2943 = vmatpush.msra.mxu0 0.0
    %2944 = vmatpush.msra.mxu0 0.0
    %2945 = vmatpush.msra.mxu0 0.0
    %2946 = vmatpush.msra.mxu0 0.0
    %2947 = vmatpush.msra.mxu0 0.0
    %2948 = vmatpush.msra.mxu0 0.0
    %2949 = vmatpush.msra.mxu0 0.0
    %2950 = vmatpush.msra.mxu0 0.0
    %2951 = vmatpush.msra.mxu0 0.0
    %2952 = vmatpush.msra.mxu0 0.0
    %2953 = vmatpush.msra.mxu0 0.0
    %2954 = vmatpush.msra.mxu0 0.0
    %2955 = vmatpush.msra.mxu0 %v2443
    %2956 = vmatpush.msra.mxu0 %v2440
    %2957 = vmatmul.f32.gmra.mxu0 %v911
    %v2958 = vpop.f32.mrf.mxu0
    %v2959 = vadd.f32 0.0, %v2958
    %2960 = vmatmul.f32.gmra.mxu0 %v914
    %v2961 = vpop.f32.mrf.mxu0
    %v2962 = vadd.f32 0.0, %v2961
    %2963 = vmatmul.f32.gmra.mxu0 %v917
    %v2964 = vpop.f32.mrf.mxu0
    %v2965 = vadd.f32 0.0, %v2964
    %2966 = vmatmul.f32.gmra.mxu0 %v920
    %v2967 = vpop.f32.mrf.mxu0
    %v2968 = vadd.f32 0.0, %v2967
    %2969 = vmatmul.f32.gmra.mxu0 %v923
    %v2970 = vpop.f32.mrf.mxu0
    %v2971 = vadd.f32 0.0, %v2970
    %2972 = vmatmul.f32.gmra.mxu0 %v926
    %v2973 = vpop.f32.mrf.mxu0
    %v2974 = vadd.f32 0.0, %v2973
    %2975 = vmatmul.f32.gmra.mxu0 %v929
    %v2976 = vpop.f32.mrf.mxu0
    %v2977 = vadd.f32 0.0, %v2976
    %2978 = vmatmul.f32.gmra.mxu0 %v932
    %v2979 = vpop.f32.mrf.mxu0
    %v2980 = vadd.f32 0.0, %v2979
    %2981 = vmatmul.f32.gmra.mxu0 %v935
    %v2982 = vpop.f32.mrf.mxu0
    %v2983 = vadd.f32 0.0, %v2982
    %2984 = vmatmul.f32.gmra.mxu0 %v938
    %v2985 = vpop.f32.mrf.mxu0
    %v2986 = vadd.f32 0.0, %v2985
    %2987 = vmatmul.f32.gmra.mxu0 %v941
    %v2988 = vpop.f32.mrf.mxu0
    %v2989 = vadd.f32 0.0, %v2988
    %2990 = vmatmul.f32.gmra.mxu0 %v944
    %v2991 = vpop.f32.mrf.mxu0
    %v2992 = vadd.f32 0.0, %v2991
    %2993 = vmatmul.f32.gmra.mxu0 %v947
    %v2994 = vpop.f32.mrf.mxu0
    %v2995 = vadd.f32 0.0, %v2994
    %2996 = vmatmul.f32.gmra.mxu0 %v950
    %v2997 = vpop.f32.mrf.mxu0
    %v2998 = vadd.f32 0.0, %v2997
    %2999 = vmatmul.f32.gmra.mxu0 %v953
    %v3000 = vpop.f32.mrf.mxu0
    %v3001 = vadd.f32 0.0, %v3000
    %3002 = vmatmul.f32.gmra.mxu0 %v956
    %v3003 = vpop.f32.mrf.mxu0
    %v3004 = vadd.f32 0.0, %v3003
    %3005 = vdwg.mxu0
    %v3006 = vmul.f32 %v2959, %v129
    %v3007 = vmul.f32 %v2962, %v130
    %v3008 = vmul.f32 %v2965, %v131
    %v3009 = vmul.f32 %v2968, %v132
    %v3010 = vmul.f32 %v2971, %v133
    %v3011 = vmul.f32 %v2974, %v134
    %v3012 = vmul.f32 %v2977, %v135
    %v3013 = vmul.f32 %v2980, %v136
    %v3014 = vmul.f32 %v2983, %v137
    %v3015 = vmul.f32 %v2986, %v138
    %v3016 = vmul.f32 %v2989, %v139
    %v3017 = vmul.f32 %v2992, %v140
    %v3018 = vmul.f32 %v2995, %v141
    %v3019 = vmul.f32 %v2998, %v142
    %v3020 = vmul.f32 %v3001, %v143
    %v3021 = vmul.f32 %v3004, %v144
    %3024 = vrot.lane.b32.xlu0 %v2440, 64
    %v3025 = vpop.permute.xlu0 %3024
    %3026 = vrot.lane.b32.xlu0 %v2443, 64
    %v3027 = vpop.permute.xlu0 %3026
    %3030 = vmatpush.msra.mxu0 %v3021
    %3031 = vmatpush.msra.mxu0 %v3020
    %3032 = vmatpush.msra.mxu0 %v3019
    %3033 = vmatpush.msra.mxu0 %v3018
    %3034 = vmatpush.msra.mxu0 %v3017
    %3035 = vmatpush.msra.mxu0 %v3016
    %3036 = vmatpush.msra.mxu0 %v3015
    %3037 = vmatpush.msra.mxu0 %v3014
    %3038 = vmatpush.msra.mxu0 %v3013
    %3039 = vmatpush.msra.mxu0 %v3012
    %3040 = vmatpush.msra.mxu0 %v3011
    %3041 = vmatpush.msra.mxu0 %v3010
    %3042 = vmatpush.msra.mxu0 %v3009
    %3043 = vmatpush.msra.mxu0 %v3008
    %3044 = vmatpush.msra.mxu0 %v3007
    %3045 = vmatpush.msra.mxu0 %v3006
    %3046 = vmatmul.f32.gmra.mxu0 %v2925
    %v3047 = vpop.f32.mrf.mxu0
    %v3048 = vadd.f32 %v3025, %v3047
    %3049 = vmatmul.f32.gmra.mxu0 %v2940
    %v3050 = vpop.f32.mrf.mxu0
    %v3051 = vadd.f32 %v3027, %v3050
    %3052 = vdwg.mxu0
    %vm3053 = vcmp.gt.f32.partialorder %v3048, 0.0
    %vm3054 = vcmp.gt.f32.partialorder %v3051, 0.0
    %v3055 = vmin.f32 %v3048, 0.0
    %v3056 = vmin.f32 %v3051, 0.0
    %v3057 = vmul.f32 %v3055, 1.442695
    %v3058 = vpow.pop %v3057
    %v3059 = vmul.f32 %v3056, 1.442695
    %v3060 = vpow.pop %v3059
    %v3061 = vsub.f32 %v3058, 1.0
    %v3062 = vsub.f32 %v3060, 1.0
    %v3063 = vsel %vm3053, %v3048, %v3061
    %v3064 = vsel %vm3054, %v3051, %v3062
    %s3065 = scalar_lea.vmem [#allocation2], 128
    %v3066 = vld [vmem:[%s3065] sm:$0xff]
    %v3067 = vld [vmem:[%s3065 + $0x8] sm:$0xff]
    %v3068 = vld [vmem:[%s3065 + $0x10] sm:$0xff]
    %v3069 = vld [vmem:[%s3065 + $0x18] sm:$0xff]
    %s3070 = scalar_lea.vmem %s2, 4
    %v3071 = vld [vmem:[%s3070] sm:$0x1]
    %s3072 = scalar_lea.vmem %s3, 16
    %v3073 = vld [vmem:[%s3072] sm:$0xf]
    %v3075 = vperm.slane %v3071, 0
    %v3078 = vsel %vm156, %v3063, 0
    %v3081 = vsel %vm156, %v3064, 0
    %3083 = vmatpush.msra.mxu0 0.0
    %3084 = vmatpush.msra.mxu0 0.0
    %3085 = vmatpush.msra.mxu0 0.0
    %3086 = vmatpush.msra.mxu0 0.0
    %3087 = vmatpush.msra.mxu0 0.0
    %3088 = vmatpush.msra.mxu0 0.0
    %3089 = vmatpush.msra.mxu0 0.0
    %3090 = vmatpush.msra.mxu0 0.0
    %3091 = vmatpush.msra.mxu0 0.0
    %3092 = vmatpush.msra.mxu0 0.0
    %3093 = vmatpush.msra.mxu0 0.0
    %3094 = vmatpush.msra.mxu0 0.0
    %3095 = vmatpush.msra.mxu0 %v3069
    %3096 = vmatpush.msra.mxu0 %v3068
    %3097 = vmatpush.msra.mxu0 %v3067
    %3098 = vmatpush.msra.mxu0 %v3066
    %3099 = vmatmul.f32.gmra.mxu0 %v3078
    %v3100 = vpop.f32.mrf.mxu0
    %v3101 = vadd.f32 %v3075, %v3100
    %3102 = vmatmul.f32.gmra.mxu0 %v3081
    %v3103 = vpop.f32.mrf.mxu0
    %v3104 = vadd.f32 %v3075, %v3103
    %3105 = vdwg.mxu0
    %3106 = vmatpush.msra.mxu0 %v310
    %3107 = vmatpush.msra.mxu0 %v306
    %3108 = vmatpush.msra.mxu0 %v302
    %3109 = vmatpush.msra.mxu0 %v298
    %3110 = vmatpush.msra.mxu0 %v294
    %3111 = vmatpush.msra.mxu0 %v290
    %3112 = vmatpush.msra.mxu0 %v286
    %3113 = vmatpush.msra.mxu0 %v282
    %3114 = vmatpush.msra.mxu0 %v278
    %3115 = vmatpush.msra.mxu0 %v274
    %3116 = vmatpush.msra.mxu0 %v270
    %3117 = vmatpush.msra.mxu0 %v266
    %3118 = vmatpush.msra.mxu0 %v262
    %3119 = vmatpush.msra.mxu0 %v258
    %3120 = vmatpush.msra.mxu0 %v254
    %3121 = vmatpush.msra.mxu0 %v250
    %3122 = vmatmul.f32.gmra.mxu0 %v3101
    %v3123 = vpop.f32.mrf.mxu0
    %v3124 = vadd.f32 0.0, %v3123
    %3125 = vmatmul.f32.gmra.mxu0 %v3104
    %v3126 = vpop.f32.mrf.mxu0
    %v3127 = vadd.f32 0.0, %v3126
    %3128 = vdwg.mxu0
    %3129 = vmatpush.msra.mxu0 %v311
    %3130 = vmatpush.msra.mxu0 %v307
    %3131 = vmatpush.msra.mxu0 %v303
    %3132 = vmatpush.msra.mxu0 %v299
    %3133 = vmatpush.msra.mxu0 %v295
    %3134 = vmatpush.msra.mxu0 %v291
    %3135 = vmatpush.msra.mxu0 %v287
    %3136 = vmatpush.msra.mxu0 %v283
    %3137 = vmatpush.msra.mxu0 %v279
    %3138 = vmatpush.msra.mxu0 %v275
    %3139 = vmatpush.msra.mxu0 %v271
    %3140 = vmatpush.msra.mxu0 %v267
    %3141 = vmatpush.msra.mxu0 %v263
    %3142 = vmatpush.msra.mxu0 %v259
    %3143 = vmatpush.msra.mxu0 %v255
    %3144 = vmatpush.msra.mxu0 %v251
    %3145 = vmatmul.f32.gmra.mxu0 %v3101
    %v3146 = vpop.f32.mrf.mxu0
    %v3147 = vadd.f32 0.0, %v3146
    %3148 = vmatmul.f32.gmra.mxu0 %v3104
    %v3149 = vpop.f32.mrf.mxu0
    %v3150 = vadd.f32 0.0, %v3149
    %3151 = vdwg.mxu0
    %3152 = vmatpush.msra.mxu0 %v312
    %3153 = vmatpush.msra.mxu0 %v308
    %3154 = vmatpush.msra.mxu0 %v304
    %3155 = vmatpush.msra.mxu0 %v300
    %3156 = vmatpush.msra.mxu0 %v296
    %3157 = vmatpush.msra.mxu0 %v292
    %3158 = vmatpush.msra.mxu0 %v288
    %3159 = vmatpush.msra.mxu0 %v284
    %3160 = vmatpush.msra.mxu0 %v280
    %3161 = vmatpush.msra.mxu0 %v276
    %3162 = vmatpush.msra.mxu0 %v272
    %3163 = vmatpush.msra.mxu0 %v268
    %3164 = vmatpush.msra.mxu0 %v264
    %3165 = vmatpush.msra.mxu0 %v260
    %3166 = vmatpush.msra.mxu0 %v256
    %3167 = vmatpush.msra.mxu0 %v252
    %3168 = vmatmul.f32.gmra.mxu0 %v3101
    %v3169 = vpop.f32.mrf.mxu0
    %v3170 = vadd.f32 0.0, %v3169
    %3171 = vmatmul.f32.gmra.mxu0 %v3104
    %v3172 = vpop.f32.mrf.mxu0
    %v3173 = vadd.f32 0.0, %v3172
    %3174 = vdwg.mxu0
    %3175 = vmatpush.msra.mxu0 %v313
    %3176 = vmatpush.msra.mxu0 %v309
    %3177 = vmatpush.msra.mxu0 %v305
    %3178 = vmatpush.msra.mxu0 %v301
    %3179 = vmatpush.msra.mxu0 %v297
    %3180 = vmatpush.msra.mxu0 %v293
    %3181 = vmatpush.msra.mxu0 %v289
    %3182 = vmatpush.msra.mxu0 %v285
    %3183 = vmatpush.msra.mxu0 %v281
    %3184 = vmatpush.msra.mxu0 %v277
    %3185 = vmatpush.msra.mxu0 %v273
    %3186 = vmatpush.msra.mxu0 %v269
    %3187 = vmatpush.msra.mxu0 %v265
    %3188 = vmatpush.msra.mxu0 %v261
    %3189 = vmatpush.msra.mxu0 %v257
    %3190 = vmatpush.msra.mxu0 %v253
    %3191 = vmatmul.f32.gmra.mxu0 %v3101
    %v3192 = vpop.f32.mrf.mxu0
    %v3193 = vadd.f32 0.0, %v3192
    %3194 = vmatmul.f32.gmra.mxu0 %v3104
    %v3195 = vpop.f32.mrf.mxu0
    %v3196 = vadd.f32 0.0, %v3195
    %3197 = vdwg.mxu0
    %v3198 = vmul.f32 %v3124, %v117
    %v3199 = vmul.f32 %v3147, %v118
    %v3200 = vmul.f32 %v3170, %v119
    %v3201 = vmul.f32 %v3193, %v120
    %v3202 = vmul.f32 %v3127, %v121
    %v3203 = vmul.f32 %v3150, %v122
    %v3204 = vmul.f32 %v3173, %v123
    %v3205 = vmul.f32 %v3196, %v124
    %3206 = vmatpush.msra.mxu0 0.0
    %3207 = vmatpush.msra.mxu0 0.0
    %3208 = vmatpush.msra.mxu0 0.0
    %3209 = vmatpush.msra.mxu0 0.0
    %3210 = vmatpush.msra.mxu0 0.0
    %3211 = vmatpush.msra.mxu0 0.0
    %3212 = vmatpush.msra.mxu0 0.0
    %3213 = vmatpush.msra.mxu0 0.0
    %3214 = vmatpush.msra.mxu0 0.0
    %3215 = vmatpush.msra.mxu0 0.0
    %3216 = vmatpush.msra.mxu0 0.0
    %3217 = vmatpush.msra.mxu0 0.0
    %3218 = vmatpush.msra.mxu0 0.0
    %3219 = vmatpush.msra.mxu0 0.0
    %3220 = vmatpush.msra.mxu0 %v3202
    %3221 = vmatpush.msra.mxu0 %v3198
    %3222 = vmatmul.f32.gmra.mxu0 %v416
    %v3223 = vpop.f32.mrf.mxu0
    %v3224 = vadd.f32 0.0, %v3223
    %3225 = vdwg.mxu0
    %3226 = vmatpush.msra.mxu0 0.0
    %3227 = vmatpush.msra.mxu0 0.0
    %3228 = vmatpush.msra.mxu0 0.0
    %3229 = vmatpush.msra.mxu0 0.0
    %3230 = vmatpush.msra.mxu0 0.0
    %3231 = vmatpush.msra.mxu0 0.0
    %3232 = vmatpush.msra.mxu0 0.0
    %3233 = vmatpush.msra.mxu0 0.0
    %3234 = vmatpush.msra.mxu0 0.0
    %3235 = vmatpush.msra.mxu0 0.0
    %3236 = vmatpush.msra.mxu0 0.0
    %3237 = vmatpush.msra.mxu0 0.0
    %3238 = vmatpush.msra.mxu0 0.0
    %3239 = vmatpush.msra.mxu0 0.0
    %3240 = vmatpush.msra.mxu0 %v3203
    %3241 = vmatpush.msra.mxu0 %v3199
    %3242 = vmatmul.f32.gmra.mxu0 %v416
    %v3243 = vpop.f32.mrf.mxu0
    %v3244 = vadd.f32 0.0, %v3243
    %3245 = vdwg.mxu0
    %3246 = vmatpush.msra.mxu0 0.0
    %3247 = vmatpush.msra.mxu0 0.0
    %3248 = vmatpush.msra.mxu0 0.0
    %3249 = vmatpush.msra.mxu0 0.0
    %3250 = vmatpush.msra.mxu0 0.0
    %3251 = vmatpush.msra.mxu0 0.0
    %3252 = vmatpush.msra.mxu0 0.0
    %3253 = vmatpush.msra.mxu0 0.0
    %3254 = vmatpush.msra.mxu0 0.0
    %3255 = vmatpush.msra.mxu0 0.0
    %3256 = vmatpush.msra.mxu0 0.0
    %3257 = vmatpush.msra.mxu0 0.0
    %3258 = vmatpush.msra.mxu0 0.0
    %3259 = vmatpush.msra.mxu0 0.0
    %3260 = vmatpush.msra.mxu0 %v3204
    %3261 = vmatpush.msra.mxu0 %v3200
    %3262 = vmatmul.f32.gmra.mxu0 %v416
    %v3263 = vpop.f32.mrf.mxu0
    %v3264 = vadd.f32 0.0, %v3263
    %3265 = vdwg.mxu0
    %3266 = vmatpush.msra.mxu0 0.0
    %3267 = vmatpush.msra.mxu0 0.0
    %3268 = vmatpush.msra.mxu0 0.0
    %3269 = vmatpush.msra.mxu0 0.0
    %3270 = vmatpush.msra.mxu0 0.0
    %3271 = vmatpush.msra.mxu0 0.0
    %3272 = vmatpush.msra.mxu0 0.0
    %3273 = vmatpush.msra.mxu0 0.0
    %3274 = vmatpush.msra.mxu0 0.0
    %3275 = vmatpush.msra.mxu0 0.0
    %3276 = vmatpush.msra.mxu0 0.0
    %3277 = vmatpush.msra.mxu0 0.0
    %3278 = vmatpush.msra.mxu0 0.0
    %3279 = vmatpush.msra.mxu0 0.0
    %3280 = vmatpush.msra.mxu0 %v3205
    %3281 = vmatpush.msra.mxu0 %v3201
    %3282 = vmatmul.f32.gmra.mxu0 %v416
    %v3283 = vpop.f32.mrf.mxu0
    %v3284 = vadd.f32 0.0, %v3283
    %3285 = vdwg.mxu0
    %v3286 = vperm.slane %v3224, 0
    %v3287 = vperm.slane %v3244, 0
    %v3288 = vperm.slane %v3264, 0
    %v3289 = vperm.slane %v3284, 0
    %3290 = vmatpush.msra.mxu0 %v246
    %3291 = vmatpush.msra.mxu0 %v242
    %3292 = vmatpush.msra.mxu0 %v238
    %3293 = vmatpush.msra.mxu0 %v234
    %3294 = vmatpush.msra.mxu0 %v230
    %3295 = vmatpush.msra.mxu0 %v226
    %3296 = vmatpush.msra.mxu0 %v222
    %3297 = vmatpush.msra.mxu0 %v218
    %3298 = vmatpush.msra.mxu0 %v214
    %3299 = vmatpush.msra.mxu0 %v210
    %3300 = vmatpush.msra.mxu0 %v206
    %3301 = vmatpush.msra.mxu0 %v202
    %3302 = vmatpush.msra.mxu0 %v198
    %3303 = vmatpush.msra.mxu0 %v194
    %3304 = vmatpush.msra.mxu0 %v190
    %3305 = vmatpush.msra.mxu0 %v186
    %3306 = vmatmul.f32.gmra.mxu0 %v3101
    %v3307 = vpop.f32.mrf.mxu0
    %v3308 = vadd.f32 %v3286, %v3307
    %3309 = vmatmul.f32.gmra.mxu0 %v3104
    %v3310 = vpop.f32.mrf.mxu0
    %v3311 = vadd.f32 %v3286, %v3310
    %3312 = vdwg.mxu0
    %3313 = vmatpush.msra.mxu0 %v247
    %3314 = vmatpush.msra.mxu0 %v243
    %3315 = vmatpush.msra.mxu0 %v239
    %3316 = vmatpush.msra.mxu0 %v235
    %3317 = vmatpush.msra.mxu0 %v231
    %3318 = vmatpush.msra.mxu0 %v227
    %3319 = vmatpush.msra.mxu0 %v223
    %3320 = vmatpush.msra.mxu0 %v219
    %3321 = vmatpush.msra.mxu0 %v215
    %3322 = vmatpush.msra.mxu0 %v211
    %3323 = vmatpush.msra.mxu0 %v207
    %3324 = vmatpush.msra.mxu0 %v203
    %3325 = vmatpush.msra.mxu0 %v199
    %3326 = vmatpush.msra.mxu0 %v195
    %3327 = vmatpush.msra.mxu0 %v191
    %3328 = vmatpush.msra.mxu0 %v187
    %3329 = vmatmul.f32.gmra.mxu0 %v3101
    %v3330 = vpop.f32.mrf.mxu0
    %v3331 = vadd.f32 %v3287, %v3330
    %3332 = vmatmul.f32.gmra.mxu0 %v3104
    %v3333 = vpop.f32.mrf.mxu0
    %v3334 = vadd.f32 %v3287, %v3333
    %3335 = vdwg.mxu0
    %3336 = vmatpush.msra.mxu0 %v248
    %3337 = vmatpush.msra.mxu0 %v244
    %3338 = vmatpush.msra.mxu0 %v240
    %3339 = vmatpush.msra.mxu0 %v236
    %3340 = vmatpush.msra.mxu0 %v232
    %3341 = vmatpush.msra.mxu0 %v228
    %3342 = vmatpush.msra.mxu0 %v224
    %3343 = vmatpush.msra.mxu0 %v220
    %3344 = vmatpush.msra.mxu0 %v216
    %3345 = vmatpush.msra.mxu0 %v212
    %3346 = vmatpush.msra.mxu0 %v208
    %3347 = vmatpush.msra.mxu0 %v204
    %3348 = vmatpush.msra.mxu0 %v200
    %3349 = vmatpush.msra.mxu0 %v196
    %3350 = vmatpush.msra.mxu0 %v192
    %3351 = vmatpush.msra.mxu0 %v188
    %3352 = vmatmul.f32.gmra.mxu0 %v3101
    %v3353 = vpop.f32.mrf.mxu0
    %v3354 = vadd.f32 %v3288, %v3353
    %3355 = vmatmul.f32.gmra.mxu0 %v3104
    %v3356 = vpop.f32.mrf.mxu0
    %v3357 = vadd.f32 %v3288, %v3356
    %3358 = vdwg.mxu0
    %3359 = vmatpush.msra.mxu0 %v249
    %3360 = vmatpush.msra.mxu0 %v245
    %3361 = vmatpush.msra.mxu0 %v241
    %3362 = vmatpush.msra.mxu0 %v237
    %3363 = vmatpush.msra.mxu0 %v233
    %3364 = vmatpush.msra.mxu0 %v229
    %3365 = vmatpush.msra.mxu0 %v225
    %3366 = vmatpush.msra.mxu0 %v221
    %3367 = vmatpush.msra.mxu0 %v217
    %3368 = vmatpush.msra.mxu0 %v213
    %3369 = vmatpush.msra.mxu0 %v209
    %3370 = vmatpush.msra.mxu0 %v205
    %3371 = vmatpush.msra.mxu0 %v201
    %3372 = vmatpush.msra.mxu0 %v197
    %3373 = vmatpush.msra.mxu0 %v193
    %3374 = vmatpush.msra.mxu0 %v189
    %3375 = vmatmul.f32.gmra.mxu0 %v3101
    %v3376 = vpop.f32.mrf.mxu0
    %v3377 = vadd.f32 %v3289, %v3376
    %3378 = vmatmul.f32.gmra.mxu0 %v3104
    %v3379 = vpop.f32.mrf.mxu0
    %v3380 = vadd.f32 %v3289, %v3379
    %3381 = vdwg.mxu0
    %vm3382 = vcmp.gt.f32.partialorder %v3308, 0.0
    %vm3383 = vcmp.gt.f32.partialorder %v3331, 0.0
    %vm3384 = vcmp.gt.f32.partialorder %v3354, 0.0
    %vm3385 = vcmp.gt.f32.partialorder %v3377, 0.0
    %vm3386 = vcmp.gt.f32.partialorder %v3311, 0.0
    %vm3387 = vcmp.gt.f32.partialorder %v3334, 0.0
    %vm3388 = vcmp.gt.f32.partialorder %v3357, 0.0
    %vm3389 = vcmp.gt.f32.partialorder %v3380, 0.0
    %v3390 = vmul.f32 %v3308, 0.2
    %v3391 = vmul.f32 %v3331, 0.2
    %v3392 = vmul.f32 %v3354, 0.2
    %v3393 = vmul.f32 %v3377, 0.2
    %v3394 = vmul.f32 %v3311, 0.2
    %v3395 = vmul.f32 %v3334, 0.2
    %v3396 = vmul.f32 %v3357, 0.2
    %v3397 = vmul.f32 %v3380, 0.2
    %v3398 = vsel %vm3382, %v3308, %v3390
    %v3399 = vsel %vm3383, %v3331, %v3391
    %v3400 = vsel %vm3384, %v3354, %v3392
    %v3401 = vsel %vm3385, %v3377, %v3393
    %v3402 = vsel %vm3386, %v3311, %v3394
    %v3403 = vsel %vm3387, %v3334, %v3395
    %v3404 = vsel %vm3388, %v3357, %v3396
    %v3405 = vsel %vm3389, %v3380, %v3397
    %v3407 = vperm.slane %v3073, 0
    %v3408 = vperm.slane %v3073, 1
    %v3409 = vperm.slane %v3073, 2
    %v3410 = vperm.slane %v3073, 3
    %v3415 = vmul.f32 %v3398, %v3407
    %v3416 = vmul.f32 %v3399, %v3408
    %v3417 = vmul.f32 %v3400, %v3409
    %v3418 = vmul.f32 %v3401, %v3410
    %v3419 = vmul.f32 %v3402, %v3407
    %v3420 = vmul.f32 %v3403, %v3408
    %v3421 = vmul.f32 %v3404, %v3409
    %v3422 = vmul.f32 %v3405, %v3410
    %3423 = vmatpush.msra.mxu0 %v650
    %3424 = vmatpush.msra.mxu0 %v649
    %3425 = vmatpush.msra.mxu0 %v648
    %3426 = vmatpush.msra.mxu0 %v647
    %3427 = vmatpush.msra.mxu0 %v646
    %3428 = vmatpush.msra.mxu0 %v645
    %3429 = vmatpush.msra.mxu0 %v644
    %3430 = vmatpush.msra.mxu0 %v643
    %3431 = vmatpush.msra.mxu0 %v642
    %3432 = vmatpush.msra.mxu0 %v641
    %3433 = vmatpush.msra.mxu0 %v640
    %3434 = vmatpush.msra.mxu0 %v639
    %3435 = vmatpush.msra.mxu0 %v638
    %3436 = vmatpush.msra.mxu0 %v637
    %3437 = vmatpush.msra.mxu0 %v636
    %3438 = vmatpush.msra.mxu0 %v635
    %3439 = vmatmul.f32.gmra.mxu0 %v3415
    %v3440 = vpop.f32.mrf.mxu0
    %v3441 = vadd.f32 %v125, %v3440
    %3442 = vmatmul.f32.gmra.mxu0 %v3419
    %v3443 = vpop.f32.mrf.mxu0
    %v3444 = vadd.f32 %v126, %v3443
    %3445 = vdwg.mxu0
    %3446 = vmatpush.msra.mxu0 %v666
    %3447 = vmatpush.msra.mxu0 %v665
    %3448 = vmatpush.msra.mxu0 %v664
    %3449 = vmatpush.msra.mxu0 %v663
    %3450 = vmatpush.msra.mxu0 %v662
    %3451 = vmatpush.msra.mxu0 %v661
    %3452 = vmatpush.msra.mxu0 %v660
    %3453 = vmatpush.msra.mxu0 %v659
    %3454 = vmatpush.msra.mxu0 %v658
    %3455 = vmatpush.msra.mxu0 %v657
    %3456 = vmatpush.msra.mxu0 %v656
    %3457 = vmatpush.msra.mxu0 %v655
    %3458 = vmatpush.msra.mxu0 %v654
    %3459 = vmatpush.msra.mxu0 %v653
    %3460 = vmatpush.msra.mxu0 %v652
    %3461 = vmatpush.msra.mxu0 %v651
    %3462 = vmatmul.f32.gmra.mxu0 %v3416
    %v3463 = vpop.f32.mrf.mxu0
    %v3464 = vadd.f32 %v3441, %v3463
    %3465 = vmatmul.f32.gmra.mxu0 %v3420
    %v3466 = vpop.f32.mrf.mxu0
    %v3467 = vadd.f32 %v3444, %v3466
    %3468 = vdwg.mxu0
    %3469 = vmatpush.msra.mxu0 %v682
    %3470 = vmatpush.msra.mxu0 %v681
    %3471 = vmatpush.msra.mxu0 %v680
    %3472 = vmatpush.msra.mxu0 %v679
    %3473 = vmatpush.msra.mxu0 %v678
    %3474 = vmatpush.msra.mxu0 %v677
    %3475 = vmatpush.msra.mxu0 %v676
    %3476 = vmatpush.msra.mxu0 %v675
    %3477 = vmatpush.msra.mxu0 %v674
    %3478 = vmatpush.msra.mxu0 %v673
    %3479 = vmatpush.msra.mxu0 %v672
    %3480 = vmatpush.msra.mxu0 %v671
    %3481 = vmatpush.msra.mxu0 %v670
    %3482 = vmatpush.msra.mxu0 %v669
    %3483 = vmatpush.msra.mxu0 %v668
    %3484 = vmatpush.msra.mxu0 %v667
    %3485 = vmatmul.f32.gmra.mxu0 %v3417
    %v3486 = vpop.f32.mrf.mxu0
    %v3487 = vadd.f32 %v3464, %v3486
    %3488 = vmatmul.f32.gmra.mxu0 %v3421
    %v3489 = vpop.f32.mrf.mxu0
    %v3490 = vadd.f32 %v3467, %v3489
    %3491 = vdwg.mxu0
    %3492 = vmatpush.msra.mxu0 %v698
    %3493 = vmatpush.msra.mxu0 %v697
    %3494 = vmatpush.msra.mxu0 %v696
    %3495 = vmatpush.msra.mxu0 %v695
    %3496 = vmatpush.msra.mxu0 %v694
    %3497 = vmatpush.msra.mxu0 %v693
    %3498 = vmatpush.msra.mxu0 %v692
    %3499 = vmatpush.msra.mxu0 %v691
    %3500 = vmatpush.msra.mxu0 %v690
    %3501 = vmatpush.msra.mxu0 %v689
    %3502 = vmatpush.msra.mxu0 %v688
    %3503 = vmatpush.msra.mxu0 %v687
    %3504 = vmatpush.msra.mxu0 %v686
    %3505 = vmatpush.msra.mxu0 %v685
    %3506 = vmatpush.msra.mxu0 %v684
    %3507 = vmatpush.msra.mxu0 %v683
    %3508 = vmatmul.f32.gmra.mxu0 %v3418
    %v3509 = vpop.f32.mrf.mxu0
    %v3510 = vadd.f32 %v3487, %v3509
    %3511 = vmatmul.f32.gmra.mxu0 %v3422
    %v3512 = vpop.f32.mrf.mxu0
    %v3513 = vadd.f32 %v3490, %v3512
    %3514 = vdwg.mxu0
    %3515 = vrot.lane.b32.xlu0 %v3510, 8
    %v3516 = vpop.permute.xlu0 %3515
    %3517 = vrot.lane.b32.xlu0 %v3513, 8
    %v3518 = vpop.permute.xlu0 %3517
    %v3519 = vmax.f32 %v3510, %v3516
    %v3520 = vmax.f32 %v3513, %v3518
    %3521 = vrot.lane.b32.xlu0 %v3519, 16
    %v3522 = vpop.permute.xlu0 %3521
    %3523 = vrot.lane.b32.xlu0 %v3520, 16
    %v3524 = vpop.permute.xlu0 %3523
    %v3525 = vmax.f32 %v3519, %v3522
    %v3526 = vmax.f32 %v3520, %v3524
    %3527 = vrot.lane.b32.xlu0 %v3525, 32
    %v3528 = vpop.permute.xlu0 %3527
    %3529 = vrot.lane.b32.xlu0 %v3526, 32
    %v3530 = vpop.permute.xlu0 %3529
    %v3531 = vmax.f32 %v3525, %v3528
    %v3532 = vmax.f32 %v3526, %v3530
    %3533 = vrot.lane.b32.xlu0 %v3531, 64
    %v3534 = vpop.permute.xlu0 %3533
    %3535 = vrot.lane.b32.xlu0 %v3532, 64
    %v3536 = vpop.permute.xlu0 %3535
    %v3537 = vmax.f32 %v3531, %v3534
    %v3538 = vmax.f32 %v3532, %v3536
    %v3539 = vsub.f32 %v3510, %v3537
    %v3540 = vsub.f32 %v3513, %v3538
    %v3541 = vmul.f32 %v3539, 1.442695
    %v3542 = vpow.pop %v3541
    %v3543 = vmul.f32 %v3540, 1.442695
    %v3544 = vpow.pop %v3543
    %v3545 = vmul.f32 %v3542, %v127
    %v3546 = vmul.f32 %v3544, %v128
    %3547 = vmatpush.msra.mxu0 %v838
    %3548 = vmatpush.msra.mxu0 %v837
    %3549 = vmatpush.msra.mxu0 %v836
    %3550 = vmatpush.msra.mxu0 %v835
    %3551 = vmatpush.msra.mxu0 %v834
    %3552 = vmatpush.msra.mxu0 %v833
    %3553 = vmatpush.msra.mxu0 %v832
    %3554 = vmatpush.msra.mxu0 %v831
    %3555 = vmatpush.msra.mxu0 %v830
    %3556 = vmatpush.msra.mxu0 %v829
    %3557 = vmatpush.msra.mxu0 %v828
    %3558 = vmatpush.msra.mxu0 %v827
    %3559 = vmatpush.msra.mxu0 %v826
    %3560 = vmatpush.msra.mxu0 %v825
    %3561 = vmatpush.msra.mxu0 %v824
    %3562 = vmatpush.msra.mxu0 %v823
    %3563 = vmatmul.f32.gmra.mxu0 %v3545
    %v3564 = vpop.f32.mrf.mxu0
    %v3565 = vadd.f32 0.0, %v3564
    %3566 = vmatmul.f32.gmra.mxu0 %v3546
    %v3567 = vpop.f32.mrf.mxu0
    %v3568 = vadd.f32 0.0, %v3567
    %3569 = vdwg.mxu0
    %v3570 = vmax.f32 %v3565, 1e-30
    %v3571 = vmax.f32 %v3568, 1e-30
    %v3572 = vrcp.pop %v3570
    %v3573 = vmul.f32 %v3570, %v3572
    %v3574 = vsub.f32 1.0, %v3573
    %v3575 = vmul.f32 %v3572, %v3574
    %v3576 = vadd.f32 %v3572, %v3575
    %vm3577 = vweird.f32 %v3570
    %vm3578 = vweird.f32 %v3572
    %vm3579 = vmor %vm3577, %vm3578
    %v3580 = vsel %vm3579, %v3572, %v3576
    %v3581 = vand.u32 2147483647, %v3570
    %vm3582 = vcmp.eq.f32.partialorder %v3581, 8.507059e+37
    %v3583 = vand.u32 %v3570, 2147483648
    %v3584 = vor.u32 1.1754944e-38, %v3583
    %v3585 = vsel %vm3582, %v3584, %v3580
    %v3586 = vmul.f32 %v3545, %v3585
    %v3587 = vrcp.pop %v3571
    %v3588 = vmul.f32 %v3571, %v3587
    %v3589 = vsub.f32 1.0, %v3588
    %v3590 = vmul.f32 %v3587, %v3589
    %v3591 = vadd.f32 %v3587, %v3590
    %vm3592 = vweird.f32 %v3571
    %vm3593 = vweird.f32 %v3587
    %vm3594 = vmor %vm3592, %vm3593
    %v3595 = vsel %vm3594, %v3587, %v3591
    %v3596 = vand.u32 2147483647, %v3571
    %vm3597 = vcmp.eq.f32.partialorder %v3596, 8.507059e+37
    %v3598 = vand.u32 %v3571, 2147483648
    %v3599 = vor.u32 1.1754944e-38, %v3598
    %v3600 = vsel %vm3597, %v3599, %v3595
    %v3601 = vmul.f32 %v3546, %v3600
    %3602 = vmatpush.msra.mxu0 0.0
    %3603 = vmatpush.msra.mxu0 0.0
    %3604 = vmatpush.msra.mxu0 0.0
    %3605 = vmatpush.msra.mxu0 0.0
    %3606 = vmatpush.msra.mxu0 0.0
    %3607 = vmatpush.msra.mxu0 0.0
    %3608 = vmatpush.msra.mxu0 0.0
    %3609 = vmatpush.msra.mxu0 0.0
    %3610 = vmatpush.msra.mxu0 0.0
    %3611 = vmatpush.msra.mxu0 0.0
    %3612 = vmatpush.msra.mxu0 0.0
    %3613 = vmatpush.msra.mxu0 0.0
    %3614 = vmatpush.msra.mxu0 0.0
    %3615 = vmatpush.msra.mxu0 0.0
    %3616 = vmatpush.msra.mxu0 %v3104
    %3617 = vmatpush.msra.mxu0 %v3101
    %3618 = vmatmul.f32.gmra.mxu0 %v911
    %v3619 = vpop.f32.mrf.mxu0
    %v3620 = vadd.f32 0.0, %v3619
    %3621 = vmatmul.f32.gmra.mxu0 %v914
    %v3622 = vpop.f32.mrf.mxu0
    %v3623 = vadd.f32 0.0, %v3622
    %3624 = vmatmul.f32.gmra.mxu0 %v917
    %v3625 = vpop.f32.mrf.mxu0
    %v3626 = vadd.f32 0.0, %v3625
    %3627 = vmatmul.f32.gmra.mxu0 %v920
    %v3628 = vpop.f32.mrf.mxu0
    %v3629 = vadd.f32 0.0, %v3628
    %3630 = vmatmul.f32.gmra.mxu0 %v923
    %v3631 = vpop.f32.mrf.mxu0
    %v3632 = vadd.f32 0.0, %v3631
    %3633 = vmatmul.f32.gmra.mxu0 %v926
    %v3634 = vpop.f32.mrf.mxu0
    %v3635 = vadd.f32 0.0, %v3634
    %3636 = vmatmul.f32.gmra.mxu0 %v929
    %v3637 = vpop.f32.mrf.mxu0
    %v3638 = vadd.f32 0.0, %v3637
    %3639 = vmatmul.f32.gmra.mxu0 %v932
    %v3640 = vpop.f32.mrf.mxu0
    %v3641 = vadd.f32 0.0, %v3640
    %3642 = vmatmul.f32.gmra.mxu0 %v935
    %v3643 = vpop.f32.mrf.mxu0
    %v3644 = vadd.f32 0.0, %v3643
    %3645 = vmatmul.f32.gmra.mxu0 %v938
    %v3646 = vpop.f32.mrf.mxu0
    %v3647 = vadd.f32 0.0, %v3646
    %3648 = vmatmul.f32.gmra.mxu0 %v941
    %v3649 = vpop.f32.mrf.mxu0
    %v3650 = vadd.f32 0.0, %v3649
    %3651 = vmatmul.f32.gmra.mxu0 %v944
    %v3652 = vpop.f32.mrf.mxu0
    %v3653 = vadd.f32 0.0, %v3652
    %3654 = vmatmul.f32.gmra.mxu0 %v947
    %v3655 = vpop.f32.mrf.mxu0
    %v3656 = vadd.f32 0.0, %v3655
    %3657 = vmatmul.f32.gmra.mxu0 %v950
    %v3658 = vpop.f32.mrf.mxu0
    %v3659 = vadd.f32 0.0, %v3658
    %3660 = vmatmul.f32.gmra.mxu0 %v953
    %v3661 = vpop.f32.mrf.mxu0
    %v3662 = vadd.f32 0.0, %v3661
    %3663 = vmatmul.f32.gmra.mxu0 %v956
    %v3664 = vpop.f32.mrf.mxu0
    %v3665 = vadd.f32 0.0, %v3664
    %3666 = vdwg.mxu0
    %v3667 = vmul.f32 %v3620, %v129
    %v3668 = vmul.f32 %v3623, %v130
    %v3669 = vmul.f32 %v3626, %v131
    %v3670 = vmul.f32 %v3629, %v132
    %v3671 = vmul.f32 %v3632, %v133
    %v3672 = vmul.f32 %v3635, %v134
    %v3673 = vmul.f32 %v3638, %v135
    %v3674 = vmul.f32 %v3641, %v136
    %v3675 = vmul.f32 %v3644, %v137
    %v3676 = vmul.f32 %v3647, %v138
    %v3677 = vmul.f32 %v3650, %v139
    %v3678 = vmul.f32 %v3653, %v140
    %v3679 = vmul.f32 %v3656, %v141
    %v3680 = vmul.f32 %v3659, %v142
    %v3681 = vmul.f32 %v3662, %v143
    %v3682 = vmul.f32 %v3665, %v144
    %3685 = vrot.lane.b32.xlu0 %v3101, 64
    %v3686 = vpop.permute.xlu0 %3685
    %3687 = vrot.lane.b32.xlu0 %v3104, 64
    %v3688 = vpop.permute.xlu0 %3687
    %3691 = vmatpush.msra.mxu0 %v3682
    %3692 = vmatpush.msra.mxu0 %v3681
    %3693 = vmatpush.msra.mxu0 %v3680
    %3694 = vmatpush.msra.mxu0 %v3679
    %3695 = vmatpush.msra.mxu0 %v3678
    %3696 = vmatpush.msra.mxu0 %v3677
    %3697 = vmatpush.msra.mxu0 %v3676
    %3698 = vmatpush.msra.mxu0 %v3675
    %3699 = vmatpush.msra.mxu0 %v3674
    %3700 = vmatpush.msra.mxu0 %v3673
    %3701 = vmatpush.msra.mxu0 %v3672
    %3702 = vmatpush.msra.mxu0 %v3671
    %3703 = vmatpush.msra.mxu0 %v3670
    %3704 = vmatpush.msra.mxu0 %v3669
    %3705 = vmatpush.msra.mxu0 %v3668
    %3706 = vmatpush.msra.mxu0 %v3667
    %3707 = vmatmul.f32.gmra.mxu0 %v3586
    %v3708 = vpop.f32.mrf.mxu0
    %v3709 = vadd.f32 %v3686, %v3708
    %3710 = vmatmul.f32.gmra.mxu0 %v3601
    %v3711 = vpop.f32.mrf.mxu0
    %v3712 = vadd.f32 %v3688, %v3711
    %3713 = vdwg.mxu0
    %vm3714 = vcmp.gt.f32.partialorder %v3709, 0.0
    %vm3715 = vcmp.gt.f32.partialorder %v3712, 0.0
    %v3716 = vmin.f32 %v3709, 0.0
    %v3717 = vmin.f32 %v3712, 0.0
    %v3718 = vmul.f32 %v3716, 1.442695
    %v3719 = vpow.pop %v3718
    %v3720 = vmul.f32 %v3717, 1.442695
    %v3721 = vpow.pop %v3720
    %v3722 = vsub.f32 %v3719, 1.0
    %v3723 = vsub.f32 %v3721, 1.0
    %v3724 = vsel %vm3714, %v3709, %v3722
    %v3725 = vsel %vm3715, %v3712, %v3723
    %s3726 = scalar_lea.vmem [#allocation2], 160
    %v3727 = vld [vmem:[%s3726] sm:$0xff]
    %v3728 = vld [vmem:[%s3726 + $0x8] sm:$0xff]
    %v3729 = vld [vmem:[%s3726 + $0x10] sm:$0xff]
    %v3730 = vld [vmem:[%s3726 + $0x18] sm:$0xff]
    %s3731 = scalar_lea.vmem %s2, 5
    %v3732 = vld [vmem:[%s3731] sm:$0x1]
    %s3733 = scalar_lea.vmem %s3, 20
    %v3734 = vld [vmem:[%s3733] sm:$0xf]
    %v3736 = vperm.slane %v3732, 0
    %v3739 = vsel %vm156, %v3724, 0
    %v3742 = vsel %vm156, %v3725, 0
    %3744 = vmatpush.msra.mxu0 0.0
    %3745 = vmatpush.msra.mxu0 0.0
    %3746 = vmatpush.msra.mxu0 0.0
    %3747 = vmatpush.msra.mxu0 0.0
    %3748 = vmatpush.msra.mxu0 0.0
    %3749 = vmatpush.msra.mxu0 0.0
    %3750 = vmatpush.msra.mxu0 0.0
    %3751 = vmatpush.msra.mxu0 0.0
    %3752 = vmatpush.msra.mxu0 0.0
    %3753 = vmatpush.msra.mxu0 0.0
    %3754 = vmatpush.msra.mxu0 0.0
    %3755 = vmatpush.msra.mxu0 0.0
    %3756 = vmatpush.msra.mxu0 %v3730
    %3757 = vmatpush.msra.mxu0 %v3729
    %3758 = vmatpush.msra.mxu0 %v3728
    %3759 = vmatpush.msra.mxu0 %v3727
    %3760 = vmatmul.f32.gmra.mxu0 %v3739
    %v3761 = vpop.f32.mrf.mxu0
    %v3762 = vadd.f32 %v3736, %v3761
    %3763 = vmatmul.f32.gmra.mxu0 %v3742
    %v3764 = vpop.f32.mrf.mxu0
    %v3765 = vadd.f32 %v3736, %v3764
    %3766 = vdwg.mxu0
    %3767 = vmatpush.msra.mxu0 %v310
    %3768 = vmatpush.msra.mxu0 %v306
    %3769 = vmatpush.msra.mxu0 %v302
    %3770 = vmatpush.msra.mxu0 %v298
    %3771 = vmatpush.msra.mxu0 %v294
    %3772 = vmatpush.msra.mxu0 %v290
    %3773 = vmatpush.msra.mxu0 %v286
    %3774 = vmatpush.msra.mxu0 %v282
    %3775 = vmatpush.msra.mxu0 %v278
    %3776 = vmatpush.msra.mxu0 %v274
    %3777 = vmatpush.msra.mxu0 %v270
    %3778 = vmatpush.msra.mxu0 %v266
    %3779 = vmatpush.msra.mxu0 %v262
    %3780 = vmatpush.msra.mxu0 %v258
    %3781 = vmatpush.msra.mxu0 %v254
    %3782 = vmatpush.msra.mxu0 %v250
    %3783 = vmatmul.f32.gmra.mxu0 %v3762
    %v3784 = vpop.f32.mrf.mxu0
    %v3785 = vadd.f32 0.0, %v3784
    %3786 = vmatmul.f32.gmra.mxu0 %v3765
    %v3787 = vpop.f32.mrf.mxu0
    %v3788 = vadd.f32 0.0, %v3787
    %3789 = vdwg.mxu0
    %3790 = vmatpush.msra.mxu0 %v311
    %3791 = vmatpush.msra.mxu0 %v307
    %3792 = vmatpush.msra.mxu0 %v303
    %3793 = vmatpush.msra.mxu0 %v299
    %3794 = vmatpush.msra.mxu0 %v295
    %3795 = vmatpush.msra.mxu0 %v291
    %3796 = vmatpush.msra.mxu0 %v287
    %3797 = vmatpush.msra.mxu0 %v283
    %3798 = vmatpush.msra.mxu0 %v279
    %3799 = vmatpush.msra.mxu0 %v275
    %3800 = vmatpush.msra.mxu0 %v271
    %3801 = vmatpush.msra.mxu0 %v267
    %3802 = vmatpush.msra.mxu0 %v263
    %3803 = vmatpush.msra.mxu0 %v259
    %3804 = vmatpush.msra.mxu0 %v255
    %3805 = vmatpush.msra.mxu0 %v251
    %3806 = vmatmul.f32.gmra.mxu0 %v3762
    %v3807 = vpop.f32.mrf.mxu0
    %v3808 = vadd.f32 0.0, %v3807
    %3809 = vmatmul.f32.gmra.mxu0 %v3765
    %v3810 = vpop.f32.mrf.mxu0
    %v3811 = vadd.f32 0.0, %v3810
    %3812 = vdwg.mxu0
    %3813 = vmatpush.msra.mxu0 %v312
    %3814 = vmatpush.msra.mxu0 %v308
    %3815 = vmatpush.msra.mxu0 %v304
    %3816 = vmatpush.msra.mxu0 %v300
    %3817 = vmatpush.msra.mxu0 %v296
    %3818 = vmatpush.msra.mxu0 %v292
    %3819 = vmatpush.msra.mxu0 %v288
    %3820 = vmatpush.msra.mxu0 %v284
    %3821 = vmatpush.msra.mxu0 %v280
    %3822 = vmatpush.msra.mxu0 %v276
    %3823 = vmatpush.msra.mxu0 %v272
    %3824 = vmatpush.msra.mxu0 %v268
    %3825 = vmatpush.msra.mxu0 %v264
    %3826 = vmatpush.msra.mxu0 %v260
    %3827 = vmatpush.msra.mxu0 %v256
    %3828 = vmatpush.msra.mxu0 %v252
    %3829 = vmatmul.f32.gmra.mxu0 %v3762
    %v3830 = vpop.f32.mrf.mxu0
    %v3831 = vadd.f32 0.0, %v3830
    %3832 = vmatmul.f32.gmra.mxu0 %v3765
    %v3833 = vpop.f32.mrf.mxu0
    %v3834 = vadd.f32 0.0, %v3833
    %3835 = vdwg.mxu0
    %3836 = vmatpush.msra.mxu0 %v313
    %3837 = vmatpush.msra.mxu0 %v309
    %3838 = vmatpush.msra.mxu0 %v305
    %3839 = vmatpush.msra.mxu0 %v301
    %3840 = vmatpush.msra.mxu0 %v297
    %3841 = vmatpush.msra.mxu0 %v293
    %3842 = vmatpush.msra.mxu0 %v289
    %3843 = vmatpush.msra.mxu0 %v285
    %3844 = vmatpush.msra.mxu0 %v281
    %3845 = vmatpush.msra.mxu0 %v277
    %3846 = vmatpush.msra.mxu0 %v273
    %3847 = vmatpush.msra.mxu0 %v269
    %3848 = vmatpush.msra.mxu0 %v265
    %3849 = vmatpush.msra.mxu0 %v261
    %3850 = vmatpush.msra.mxu0 %v257
    %3851 = vmatpush.msra.mxu0 %v253
    %3852 = vmatmul.f32.gmra.mxu0 %v3762
    %v3853 = vpop.f32.mrf.mxu0
    %v3854 = vadd.f32 0.0, %v3853
    %3855 = vmatmul.f32.gmra.mxu0 %v3765
    %v3856 = vpop.f32.mrf.mxu0
    %v3857 = vadd.f32 0.0, %v3856
    %3858 = vdwg.mxu0
    %v3859 = vmul.f32 %v3785, %v117
    %v3860 = vmul.f32 %v3808, %v118
    %v3861 = vmul.f32 %v3831, %v119
    %v3862 = vmul.f32 %v3854, %v120
    %v3863 = vmul.f32 %v3788, %v121
    %v3864 = vmul.f32 %v3811, %v122
    %v3865 = vmul.f32 %v3834, %v123
    %v3866 = vmul.f32 %v3857, %v124
    %3867 = vmatpush.msra.mxu0 0.0
    %3868 = vmatpush.msra.mxu0 0.0
    %3869 = vmatpush.msra.mxu0 0.0
    %3870 = vmatpush.msra.mxu0 0.0
    %3871 = vmatpush.msra.mxu0 0.0
    %3872 = vmatpush.msra.mxu0 0.0
    %3873 = vmatpush.msra.mxu0 0.0
    %3874 = vmatpush.msra.mxu0 0.0
    %3875 = vmatpush.msra.mxu0 0.0
    %3876 = vmatpush.msra.mxu0 0.0
    %3877 = vmatpush.msra.mxu0 0.0
    %3878 = vmatpush.msra.mxu0 0.0
    %3879 = vmatpush.msra.mxu0 0.0
    %3880 = vmatpush.msra.mxu0 0.0
    %3881 = vmatpush.msra.mxu0 %v3863
    %3882 = vmatpush.msra.mxu0 %v3859
    %3883 = vmatmul.f32.gmra.mxu0 %v416
    %v3884 = vpop.f32.mrf.mxu0
    %v3885 = vadd.f32 0.0, %v3884
    %3886 = vdwg.mxu0
    %3887 = vmatpush.msra.mxu0 0.0
    %3888 = vmatpush.msra.mxu0 0.0
    %3889 = vmatpush.msra.mxu0 0.0
    %3890 = vmatpush.msra.mxu0 0.0
    %3891 = vmatpush.msra.mxu0 0.0
    %3892 = vmatpush.msra.mxu0 0.0
    %3893 = vmatpush.msra.mxu0 0.0
    %3894 = vmatpush.msra.mxu0 0.0
    %3895 = vmatpush.msra.mxu0 0.0
    %3896 = vmatpush.msra.mxu0 0.0
    %3897 = vmatpush.msra.mxu0 0.0
    %3898 = vmatpush.msra.mxu0 0.0
    %3899 = vmatpush.msra.mxu0 0.0
    %3900 = vmatpush.msra.mxu0 0.0
    %3901 = vmatpush.msra.mxu0 %v3864
    %3902 = vmatpush.msra.mxu0 %v3860
    %3903 = vmatmul.f32.gmra.mxu0 %v416
    %v3904 = vpop.f32.mrf.mxu0
    %v3905 = vadd.f32 0.0, %v3904
    %3906 = vdwg.mxu0
    %3907 = vmatpush.msra.mxu0 0.0
    %3908 = vmatpush.msra.mxu0 0.0
    %3909 = vmatpush.msra.mxu0 0.0
    %3910 = vmatpush.msra.mxu0 0.0
    %3911 = vmatpush.msra.mxu0 0.0
    %3912 = vmatpush.msra.mxu0 0.0
    %3913 = vmatpush.msra.mxu0 0.0
    %3914 = vmatpush.msra.mxu0 0.0
    %3915 = vmatpush.msra.mxu0 0.0
    %3916 = vmatpush.msra.mxu0 0.0
    %3917 = vmatpush.msra.mxu0 0.0
    %3918 = vmatpush.msra.mxu0 0.0
    %3919 = vmatpush.msra.mxu0 0.0
    %3920 = vmatpush.msra.mxu0 0.0
    %3921 = vmatpush.msra.mxu0 %v3865
    %3922 = vmatpush.msra.mxu0 %v3861
    %3923 = vmatmul.f32.gmra.mxu0 %v416
    %v3924 = vpop.f32.mrf.mxu0
    %v3925 = vadd.f32 0.0, %v3924
    %3926 = vdwg.mxu0
    %3927 = vmatpush.msra.mxu0 0.0
    %3928 = vmatpush.msra.mxu0 0.0
    %3929 = vmatpush.msra.mxu0 0.0
    %3930 = vmatpush.msra.mxu0 0.0
    %3931 = vmatpush.msra.mxu0 0.0
    %3932 = vmatpush.msra.mxu0 0.0
    %3933 = vmatpush.msra.mxu0 0.0
    %3934 = vmatpush.msra.mxu0 0.0
    %3935 = vmatpush.msra.mxu0 0.0
    %3936 = vmatpush.msra.mxu0 0.0
    %3937 = vmatpush.msra.mxu0 0.0
    %3938 = vmatpush.msra.mxu0 0.0
    %3939 = vmatpush.msra.mxu0 0.0
    %3940 = vmatpush.msra.mxu0 0.0
    %3941 = vmatpush.msra.mxu0 %v3866
    %3942 = vmatpush.msra.mxu0 %v3862
    %3943 = vmatmul.f32.gmra.mxu0 %v416
    %v3944 = vpop.f32.mrf.mxu0
    %v3945 = vadd.f32 0.0, %v3944
    %3946 = vdwg.mxu0
    %v3947 = vperm.slane %v3885, 0
    %v3948 = vperm.slane %v3905, 0
    %v3949 = vperm.slane %v3925, 0
    %v3950 = vperm.slane %v3945, 0
    %3951 = vmatpush.msra.mxu0 %v246
    %3952 = vmatpush.msra.mxu0 %v242
    %3953 = vmatpush.msra.mxu0 %v238
    %3954 = vmatpush.msra.mxu0 %v234
    %3955 = vmatpush.msra.mxu0 %v230
    %3956 = vmatpush.msra.mxu0 %v226
    %3957 = vmatpush.msra.mxu0 %v222
    %3958 = vmatpush.msra.mxu0 %v218
    %3959 = vmatpush.msra.mxu0 %v214
    %3960 = vmatpush.msra.mxu0 %v210
    %3961 = vmatpush.msra.mxu0 %v206
    %3962 = vmatpush.msra.mxu0 %v202
    %3963 = vmatpush.msra.mxu0 %v198
    %3964 = vmatpush.msra.mxu0 %v194
    %3965 = vmatpush.msra.mxu0 %v190
    %3966 = vmatpush.msra.mxu0 %v186
    %3967 = vmatmul.f32.gmra.mxu0 %v3762
    %v3968 = vpop.f32.mrf.mxu0
    %v3969 = vadd.f32 %v3947, %v3968
    %3970 = vmatmul.f32.gmra.mxu0 %v3765
    %v3971 = vpop.f32.mrf.mxu0
    %v3972 = vadd.f32 %v3947, %v3971
    %3973 = vdwg.mxu0
    %3974 = vmatpush.msra.mxu0 %v247
    %3975 = vmatpush.msra.mxu0 %v243
    %3976 = vmatpush.msra.mxu0 %v239
    %3977 = vmatpush.msra.mxu0 %v235
    %3978 = vmatpush.msra.mxu0 %v231
    %3979 = vmatpush.msra.mxu0 %v227
    %3980 = vmatpush.msra.mxu0 %v223
    %3981 = vmatpush.msra.mxu0 %v219
    %3982 = vmatpush.msra.mxu0 %v215
    %3983 = vmatpush.msra.mxu0 %v211
    %3984 = vmatpush.msra.mxu0 %v207
    %3985 = vmatpush.msra.mxu0 %v203
    %3986 = vmatpush.msra.mxu0 %v199
    %3987 = vmatpush.msra.mxu0 %v195
    %3988 = vmatpush.msra.mxu0 %v191
    %3989 = vmatpush.msra.mxu0 %v187
    %3990 = vmatmul.f32.gmra.mxu0 %v3762
    %v3991 = vpop.f32.mrf.mxu0
    %v3992 = vadd.f32 %v3948, %v3991
    %3993 = vmatmul.f32.gmra.mxu0 %v3765
    %v3994 = vpop.f32.mrf.mxu0
    %v3995 = vadd.f32 %v3948, %v3994
    %3996 = vdwg.mxu0
    %3997 = vmatpush.msra.mxu0 %v248
    %3998 = vmatpush.msra.mxu0 %v244
    %3999 = vmatpush.msra.mxu0 %v240
    %4000 = vmatpush.msra.mxu0 %v236
    %4001 = vmatpush.msra.mxu0 %v232
    %4002 = vmatpush.msra.mxu0 %v228
    %4003 = vmatpush.msra.mxu0 %v224
    %4004 = vmatpush.msra.mxu0 %v220
    %4005 = vmatpush.msra.mxu0 %v216
    %4006 = vmatpush.msra.mxu0 %v212
    %4007 = vmatpush.msra.mxu0 %v208
    %4008 = vmatpush.msra.mxu0 %v204
    %4009 = vmatpush.msra.mxu0 %v200
    %4010 = vmatpush.msra.mxu0 %v196
    %4011 = vmatpush.msra.mxu0 %v192
    %4012 = vmatpush.msra.mxu0 %v188
    %4013 = vmatmul.f32.gmra.mxu0 %v3762
    %v4014 = vpop.f32.mrf.mxu0
    %v4015 = vadd.f32 %v3949, %v4014
    %4016 = vmatmul.f32.gmra.mxu0 %v3765
    %v4017 = vpop.f32.mrf.mxu0
    %v4018 = vadd.f32 %v3949, %v4017
    %4019 = vdwg.mxu0
    %4020 = vmatpush.msra.mxu0 %v249
    %4021 = vmatpush.msra.mxu0 %v245
    %4022 = vmatpush.msra.mxu0 %v241
    %4023 = vmatpush.msra.mxu0 %v237
    %4024 = vmatpush.msra.mxu0 %v233
    %4025 = vmatpush.msra.mxu0 %v229
    %4026 = vmatpush.msra.mxu0 %v225
    %4027 = vmatpush.msra.mxu0 %v221
    %4028 = vmatpush.msra.mxu0 %v217
    %4029 = vmatpush.msra.mxu0 %v213
    %4030 = vmatpush.msra.mxu0 %v209
    %4031 = vmatpush.msra.mxu0 %v205
    %4032 = vmatpush.msra.mxu0 %v201
    %4033 = vmatpush.msra.mxu0 %v197
    %4034 = vmatpush.msra.mxu0 %v193
    %4035 = vmatpush.msra.mxu0 %v189
    %4036 = vmatmul.f32.gmra.mxu0 %v3762
    %v4037 = vpop.f32.mrf.mxu0
    %v4038 = vadd.f32 %v3950, %v4037
    %4039 = vmatmul.f32.gmra.mxu0 %v3765
    %v4040 = vpop.f32.mrf.mxu0
    %v4041 = vadd.f32 %v3950, %v4040
    %4042 = vdwg.mxu0
    %vm4043 = vcmp.gt.f32.partialorder %v3969, 0.0
    %vm4044 = vcmp.gt.f32.partialorder %v3992, 0.0
    %vm4045 = vcmp.gt.f32.partialorder %v4015, 0.0
    %vm4046 = vcmp.gt.f32.partialorder %v4038, 0.0
    %vm4047 = vcmp.gt.f32.partialorder %v3972, 0.0
    %vm4048 = vcmp.gt.f32.partialorder %v3995, 0.0
    %vm4049 = vcmp.gt.f32.partialorder %v4018, 0.0
    %vm4050 = vcmp.gt.f32.partialorder %v4041, 0.0
    %v4051 = vmul.f32 %v3969, 0.2
    %v4052 = vmul.f32 %v3992, 0.2
    %v4053 = vmul.f32 %v4015, 0.2
    %v4054 = vmul.f32 %v4038, 0.2
    %v4055 = vmul.f32 %v3972, 0.2
    %v4056 = vmul.f32 %v3995, 0.2
    %v4057 = vmul.f32 %v4018, 0.2
    %v4058 = vmul.f32 %v4041, 0.2
    %v4059 = vsel %vm4043, %v3969, %v4051
    %v4060 = vsel %vm4044, %v3992, %v4052
    %v4061 = vsel %vm4045, %v4015, %v4053
    %v4062 = vsel %vm4046, %v4038, %v4054
    %v4063 = vsel %vm4047, %v3972, %v4055
    %v4064 = vsel %vm4048, %v3995, %v4056
    %v4065 = vsel %vm4049, %v4018, %v4057
    %v4066 = vsel %vm4050, %v4041, %v4058
    %v4068 = vperm.slane %v3734, 0
    %v4069 = vperm.slane %v3734, 1
    %v4070 = vperm.slane %v3734, 2
    %v4071 = vperm.slane %v3734, 3
    %v4076 = vmul.f32 %v4059, %v4068
    %v4077 = vmul.f32 %v4060, %v4069
    %v4078 = vmul.f32 %v4061, %v4070
    %v4079 = vmul.f32 %v4062, %v4071
    %v4080 = vmul.f32 %v4063, %v4068
    %v4081 = vmul.f32 %v4064, %v4069
    %v4082 = vmul.f32 %v4065, %v4070
    %v4083 = vmul.f32 %v4066, %v4071
    %4084 = vmatpush.msra.mxu0 %v650
    %4085 = vmatpush.msra.mxu0 %v649
    %4086 = vmatpush.msra.mxu0 %v648
    %4087 = vmatpush.msra.mxu0 %v647
    %4088 = vmatpush.msra.mxu0 %v646
    %4089 = vmatpush.msra.mxu0 %v645
    %4090 = vmatpush.msra.mxu0 %v644
    %4091 = vmatpush.msra.mxu0 %v643
    %4092 = vmatpush.msra.mxu0 %v642
    %4093 = vmatpush.msra.mxu0 %v641
    %4094 = vmatpush.msra.mxu0 %v640
    %4095 = vmatpush.msra.mxu0 %v639
    %4096 = vmatpush.msra.mxu0 %v638
    %4097 = vmatpush.msra.mxu0 %v637
    %4098 = vmatpush.msra.mxu0 %v636
    %4099 = vmatpush.msra.mxu0 %v635
    %4100 = vmatmul.f32.gmra.mxu0 %v4076
    %v4101 = vpop.f32.mrf.mxu0
    %v4102 = vadd.f32 %v125, %v4101
    %4103 = vmatmul.f32.gmra.mxu0 %v4080
    %v4104 = vpop.f32.mrf.mxu0
    %v4105 = vadd.f32 %v126, %v4104
    %4106 = vdwg.mxu0
    %4107 = vmatpush.msra.mxu0 %v666
    %4108 = vmatpush.msra.mxu0 %v665
    %4109 = vmatpush.msra.mxu0 %v664
    %4110 = vmatpush.msra.mxu0 %v663
    %4111 = vmatpush.msra.mxu0 %v662
    %4112 = vmatpush.msra.mxu0 %v661
    %4113 = vmatpush.msra.mxu0 %v660
    %4114 = vmatpush.msra.mxu0 %v659
    %4115 = vmatpush.msra.mxu0 %v658
    %4116 = vmatpush.msra.mxu0 %v657
    %4117 = vmatpush.msra.mxu0 %v656
    %4118 = vmatpush.msra.mxu0 %v655
    %4119 = vmatpush.msra.mxu0 %v654
    %4120 = vmatpush.msra.mxu0 %v653
    %4121 = vmatpush.msra.mxu0 %v652
    %4122 = vmatpush.msra.mxu0 %v651
    %4123 = vmatmul.f32.gmra.mxu0 %v4077
    %v4124 = vpop.f32.mrf.mxu0
    %v4125 = vadd.f32 %v4102, %v4124
    %4126 = vmatmul.f32.gmra.mxu0 %v4081
    %v4127 = vpop.f32.mrf.mxu0
    %v4128 = vadd.f32 %v4105, %v4127
    %4129 = vdwg.mxu0
    %4130 = vmatpush.msra.mxu0 %v682
    %4131 = vmatpush.msra.mxu0 %v681
    %4132 = vmatpush.msra.mxu0 %v680
    %4133 = vmatpush.msra.mxu0 %v679
    %4134 = vmatpush.msra.mxu0 %v678
    %4135 = vmatpush.msra.mxu0 %v677
    %4136 = vmatpush.msra.mxu0 %v676
    %4137 = vmatpush.msra.mxu0 %v675
    %4138 = vmatpush.msra.mxu0 %v674
    %4139 = vmatpush.msra.mxu0 %v673
    %4140 = vmatpush.msra.mxu0 %v672
    %4141 = vmatpush.msra.mxu0 %v671
    %4142 = vmatpush.msra.mxu0 %v670
    %4143 = vmatpush.msra.mxu0 %v669
    %4144 = vmatpush.msra.mxu0 %v668
    %4145 = vmatpush.msra.mxu0 %v667
    %4146 = vmatmul.f32.gmra.mxu0 %v4078
    %v4147 = vpop.f32.mrf.mxu0
    %v4148 = vadd.f32 %v4125, %v4147
    %4149 = vmatmul.f32.gmra.mxu0 %v4082
    %v4150 = vpop.f32.mrf.mxu0
    %v4151 = vadd.f32 %v4128, %v4150
    %4152 = vdwg.mxu0
    %4153 = vmatpush.msra.mxu0 %v698
    %4154 = vmatpush.msra.mxu0 %v697
    %4155 = vmatpush.msra.mxu0 %v696
    %4156 = vmatpush.msra.mxu0 %v695
    %4157 = vmatpush.msra.mxu0 %v694
    %4158 = vmatpush.msra.mxu0 %v693
    %4159 = vmatpush.msra.mxu0 %v692
    %4160 = vmatpush.msra.mxu0 %v691
    %4161 = vmatpush.msra.mxu0 %v690
    %4162 = vmatpush.msra.mxu0 %v689
    %4163 = vmatpush.msra.mxu0 %v688
    %4164 = vmatpush.msra.mxu0 %v687
    %4165 = vmatpush.msra.mxu0 %v686
    %4166 = vmatpush.msra.mxu0 %v685
    %4167 = vmatpush.msra.mxu0 %v684
    %4168 = vmatpush.msra.mxu0 %v683
    %4169 = vmatmul.f32.gmra.mxu0 %v4079
    %v4170 = vpop.f32.mrf.mxu0
    %v4171 = vadd.f32 %v4148, %v4170
    %4172 = vmatmul.f32.gmra.mxu0 %v4083
    %v4173 = vpop.f32.mrf.mxu0
    %v4174 = vadd.f32 %v4151, %v4173
    %4175 = vdwg.mxu0
    %4176 = vrot.lane.b32.xlu0 %v4171, 8
    %v4177 = vpop.permute.xlu0 %4176
    %4178 = vrot.lane.b32.xlu0 %v4174, 8
    %v4179 = vpop.permute.xlu0 %4178
    %v4180 = vmax.f32 %v4171, %v4177
    %v4181 = vmax.f32 %v4174, %v4179
    %4182 = vrot.lane.b32.xlu0 %v4180, 16
    %v4183 = vpop.permute.xlu0 %4182
    %4184 = vrot.lane.b32.xlu0 %v4181, 16
    %v4185 = vpop.permute.xlu0 %4184
    %v4186 = vmax.f32 %v4180, %v4183
    %v4187 = vmax.f32 %v4181, %v4185
    %4188 = vrot.lane.b32.xlu0 %v4186, 32
    %v4189 = vpop.permute.xlu0 %4188
    %4190 = vrot.lane.b32.xlu0 %v4187, 32
    %v4191 = vpop.permute.xlu0 %4190
    %v4192 = vmax.f32 %v4186, %v4189
    %v4193 = vmax.f32 %v4187, %v4191
    %4194 = vrot.lane.b32.xlu0 %v4192, 64
    %v4195 = vpop.permute.xlu0 %4194
    %4196 = vrot.lane.b32.xlu0 %v4193, 64
    %v4197 = vpop.permute.xlu0 %4196
    %v4198 = vmax.f32 %v4192, %v4195
    %v4199 = vmax.f32 %v4193, %v4197
    %v4200 = vsub.f32 %v4171, %v4198
    %v4201 = vsub.f32 %v4174, %v4199
    %v4202 = vmul.f32 %v4200, 1.442695
    %v4203 = vpow.pop %v4202
    %v4204 = vmul.f32 %v4201, 1.442695
    %v4205 = vpow.pop %v4204
    %v4206 = vmul.f32 %v4203, %v127
    %v4207 = vmul.f32 %v4205, %v128
    %4208 = vmatpush.msra.mxu0 %v838
    %4209 = vmatpush.msra.mxu0 %v837
    %4210 = vmatpush.msra.mxu0 %v836
    %4211 = vmatpush.msra.mxu0 %v835
    %4212 = vmatpush.msra.mxu0 %v834
    %4213 = vmatpush.msra.mxu0 %v833
    %4214 = vmatpush.msra.mxu0 %v832
    %4215 = vmatpush.msra.mxu0 %v831
    %4216 = vmatpush.msra.mxu0 %v830
    %4217 = vmatpush.msra.mxu0 %v829
    %4218 = vmatpush.msra.mxu0 %v828
    %4219 = vmatpush.msra.mxu0 %v827
    %4220 = vmatpush.msra.mxu0 %v826
    %4221 = vmatpush.msra.mxu0 %v825
    %4222 = vmatpush.msra.mxu0 %v824
    %4223 = vmatpush.msra.mxu0 %v823
    %4224 = vmatmul.f32.gmra.mxu0 %v4206
    %v4225 = vpop.f32.mrf.mxu0
    %v4226 = vadd.f32 0.0, %v4225
    %4227 = vmatmul.f32.gmra.mxu0 %v4207
    %v4228 = vpop.f32.mrf.mxu0
    %v4229 = vadd.f32 0.0, %v4228
    %4230 = vdwg.mxu0
    %v4231 = vmax.f32 %v4226, 1e-30
    %v4232 = vmax.f32 %v4229, 1e-30
    %v4233 = vrcp.pop %v4231
    %v4234 = vmul.f32 %v4231, %v4233
    %v4235 = vsub.f32 1.0, %v4234
    %v4236 = vmul.f32 %v4233, %v4235
    %v4237 = vadd.f32 %v4233, %v4236
    %vm4238 = vweird.f32 %v4231
    %vm4239 = vweird.f32 %v4233
    %vm4240 = vmor %vm4238, %vm4239
    %v4241 = vsel %vm4240, %v4233, %v4237
    %v4242 = vand.u32 2147483647, %v4231
    %vm4243 = vcmp.eq.f32.partialorder %v4242, 8.507059e+37
    %v4244 = vand.u32 %v4231, 2147483648
    %v4245 = vor.u32 1.1754944e-38, %v4244
    %v4246 = vsel %vm4243, %v4245, %v4241
    %v4247 = vmul.f32 %v4206, %v4246
    %v4248 = vrcp.pop %v4232
    %v4249 = vmul.f32 %v4232, %v4248
    %v4250 = vsub.f32 1.0, %v4249
    %v4251 = vmul.f32 %v4248, %v4250
    %v4252 = vadd.f32 %v4248, %v4251
    %vm4253 = vweird.f32 %v4232
    %vm4254 = vweird.f32 %v4248
    %vm4255 = vmor %vm4253, %vm4254
    %v4256 = vsel %vm4255, %v4248, %v4252
    %v4257 = vand.u32 2147483647, %v4232
    %vm4258 = vcmp.eq.f32.partialorder %v4257, 8.507059e+37
    %v4259 = vand.u32 %v4232, 2147483648
    %v4260 = vor.u32 1.1754944e-38, %v4259
    %v4261 = vsel %vm4258, %v4260, %v4256
    %v4262 = vmul.f32 %v4207, %v4261
    %4263 = vmatpush.msra.mxu0 0.0
    %4264 = vmatpush.msra.mxu0 0.0
    %4265 = vmatpush.msra.mxu0 0.0
    %4266 = vmatpush.msra.mxu0 0.0
    %4267 = vmatpush.msra.mxu0 0.0
    %4268 = vmatpush.msra.mxu0 0.0
    %4269 = vmatpush.msra.mxu0 0.0
    %4270 = vmatpush.msra.mxu0 0.0
    %4271 = vmatpush.msra.mxu0 0.0
    %4272 = vmatpush.msra.mxu0 0.0
    %4273 = vmatpush.msra.mxu0 0.0
    %4274 = vmatpush.msra.mxu0 0.0
    %4275 = vmatpush.msra.mxu0 0.0
    %4276 = vmatpush.msra.mxu0 0.0
    %4277 = vmatpush.msra.mxu0 %v3765
    %4278 = vmatpush.msra.mxu0 %v3762
    %4279 = vmatmul.f32.gmra.mxu0 %v911
    %v4280 = vpop.f32.mrf.mxu0
    %v4281 = vadd.f32 0.0, %v4280
    %4282 = vmatmul.f32.gmra.mxu0 %v914
    %v4283 = vpop.f32.mrf.mxu0
    %v4284 = vadd.f32 0.0, %v4283
    %4285 = vmatmul.f32.gmra.mxu0 %v917
    %v4286 = vpop.f32.mrf.mxu0
    %v4287 = vadd.f32 0.0, %v4286
    %4288 = vmatmul.f32.gmra.mxu0 %v920
    %v4289 = vpop.f32.mrf.mxu0
    %v4290 = vadd.f32 0.0, %v4289
    %4291 = vmatmul.f32.gmra.mxu0 %v923
    %v4292 = vpop.f32.mrf.mxu0
    %v4293 = vadd.f32 0.0, %v4292
    %4294 = vmatmul.f32.gmra.mxu0 %v926
    %v4295 = vpop.f32.mrf.mxu0
    %v4296 = vadd.f32 0.0, %v4295
    %4297 = vmatmul.f32.gmra.mxu0 %v929
    %v4298 = vpop.f32.mrf.mxu0
    %v4299 = vadd.f32 0.0, %v4298
    %4300 = vmatmul.f32.gmra.mxu0 %v932
    %v4301 = vpop.f32.mrf.mxu0
    %v4302 = vadd.f32 0.0, %v4301
    %4303 = vmatmul.f32.gmra.mxu0 %v935
    %v4304 = vpop.f32.mrf.mxu0
    %v4305 = vadd.f32 0.0, %v4304
    %4306 = vmatmul.f32.gmra.mxu0 %v938
    %v4307 = vpop.f32.mrf.mxu0
    %v4308 = vadd.f32 0.0, %v4307
    %4309 = vmatmul.f32.gmra.mxu0 %v941
    %v4310 = vpop.f32.mrf.mxu0
    %v4311 = vadd.f32 0.0, %v4310
    %4312 = vmatmul.f32.gmra.mxu0 %v944
    %v4313 = vpop.f32.mrf.mxu0
    %v4314 = vadd.f32 0.0, %v4313
    %4315 = vmatmul.f32.gmra.mxu0 %v947
    %v4316 = vpop.f32.mrf.mxu0
    %v4317 = vadd.f32 0.0, %v4316
    %4318 = vmatmul.f32.gmra.mxu0 %v950
    %v4319 = vpop.f32.mrf.mxu0
    %v4320 = vadd.f32 0.0, %v4319
    %4321 = vmatmul.f32.gmra.mxu0 %v953
    %v4322 = vpop.f32.mrf.mxu0
    %v4323 = vadd.f32 0.0, %v4322
    %4324 = vmatmul.f32.gmra.mxu0 %v956
    %v4325 = vpop.f32.mrf.mxu0
    %v4326 = vadd.f32 0.0, %v4325
    %4327 = vdwg.mxu0
    %v4328 = vmul.f32 %v4281, %v129
    %v4329 = vmul.f32 %v4284, %v130
    %v4330 = vmul.f32 %v4287, %v131
    %v4331 = vmul.f32 %v4290, %v132
    %v4332 = vmul.f32 %v4293, %v133
    %v4333 = vmul.f32 %v4296, %v134
    %v4334 = vmul.f32 %v4299, %v135
    %v4335 = vmul.f32 %v4302, %v136
    %v4336 = vmul.f32 %v4305, %v137
    %v4337 = vmul.f32 %v4308, %v138
    %v4338 = vmul.f32 %v4311, %v139
    %v4339 = vmul.f32 %v4314, %v140
    %v4340 = vmul.f32 %v4317, %v141
    %v4341 = vmul.f32 %v4320, %v142
    %v4342 = vmul.f32 %v4323, %v143
    %v4343 = vmul.f32 %v4326, %v144
    %4346 = vrot.lane.b32.xlu0 %v3762, 64
    %v4347 = vpop.permute.xlu0 %4346
    %4348 = vrot.lane.b32.xlu0 %v3765, 64
    %v4349 = vpop.permute.xlu0 %4348
    %4352 = vmatpush.msra.mxu0 %v4343
    %4353 = vmatpush.msra.mxu0 %v4342
    %4354 = vmatpush.msra.mxu0 %v4341
    %4355 = vmatpush.msra.mxu0 %v4340
    %4356 = vmatpush.msra.mxu0 %v4339
    %4357 = vmatpush.msra.mxu0 %v4338
    %4358 = vmatpush.msra.mxu0 %v4337
    %4359 = vmatpush.msra.mxu0 %v4336
    %4360 = vmatpush.msra.mxu0 %v4335
    %4361 = vmatpush.msra.mxu0 %v4334
    %4362 = vmatpush.msra.mxu0 %v4333
    %4363 = vmatpush.msra.mxu0 %v4332
    %4364 = vmatpush.msra.mxu0 %v4331
    %4365 = vmatpush.msra.mxu0 %v4330
    %4366 = vmatpush.msra.mxu0 %v4329
    %4367 = vmatpush.msra.mxu0 %v4328
    %4368 = vmatmul.f32.gmra.mxu0 %v4247
    %v4369 = vpop.f32.mrf.mxu0
    %v4370 = vadd.f32 %v4347, %v4369
    %4371 = vmatmul.f32.gmra.mxu0 %v4262
    %v4372 = vpop.f32.mrf.mxu0
    %v4373 = vadd.f32 %v4349, %v4372
    %4374 = vdwg.mxu0
    %vm4375 = vcmp.gt.f32.partialorder %v4370, 0.0
    %vm4376 = vcmp.gt.f32.partialorder %v4373, 0.0
    %v4377 = vmin.f32 %v4370, 0.0
    %v4378 = vmin.f32 %v4373, 0.0
    %v4379 = vmul.f32 %v4377, 1.442695
    %v4380 = vpow.pop %v4379
    %v4381 = vmul.f32 %v4378, 1.442695
    %v4382 = vpow.pop %v4381
    %v4383 = vsub.f32 %v4380, 1.0
    %v4384 = vsub.f32 %v4382, 1.0
    %v4385 = vsel %vm4375, %v4370, %v4383
    %v4386 = vsel %vm4376, %v4373, %v4384
    %s4387 = scalar_lea.vmem [#allocation2], 192
    %v4388 = vld [vmem:[%s4387] sm:$0xff]
    %v4389 = vld [vmem:[%s4387 + $0x8] sm:$0xff]
    %v4390 = vld [vmem:[%s4387 + $0x10] sm:$0xff]
    %v4391 = vld [vmem:[%s4387 + $0x18] sm:$0xff]
    %s4392 = scalar_lea.vmem %s2, 6
    %v4393 = vld [vmem:[%s4392] sm:$0x1]
    %s4394 = scalar_lea.vmem %s3, 24
    %v4395 = vld [vmem:[%s4394] sm:$0xf]
    %v4397 = vperm.slane %v4393, 0
    %v4400 = vsel %vm156, %v4385, 0
    %v4403 = vsel %vm156, %v4386, 0
    %4405 = vmatpush.msra.mxu0 0.0
    %4406 = vmatpush.msra.mxu0 0.0
    %4407 = vmatpush.msra.mxu0 0.0
    %4408 = vmatpush.msra.mxu0 0.0
    %4409 = vmatpush.msra.mxu0 0.0
    %4410 = vmatpush.msra.mxu0 0.0
    %4411 = vmatpush.msra.mxu0 0.0
    %4412 = vmatpush.msra.mxu0 0.0
    %4413 = vmatpush.msra.mxu0 0.0
    %4414 = vmatpush.msra.mxu0 0.0
    %4415 = vmatpush.msra.mxu0 0.0
    %4416 = vmatpush.msra.mxu0 0.0
    %4417 = vmatpush.msra.mxu0 %v4391
    %4418 = vmatpush.msra.mxu0 %v4390
    %4419 = vmatpush.msra.mxu0 %v4389
    %4420 = vmatpush.msra.mxu0 %v4388
    %4421 = vmatmul.f32.gmra.mxu0 %v4400
    %v4422 = vpop.f32.mrf.mxu0
    %v4423 = vadd.f32 %v4397, %v4422
    %4424 = vmatmul.f32.gmra.mxu0 %v4403
    %v4425 = vpop.f32.mrf.mxu0
    %v4426 = vadd.f32 %v4397, %v4425
    %4427 = vdwg.mxu0
    %4428 = vmatpush.msra.mxu0 %v310
    %4429 = vmatpush.msra.mxu0 %v306
    %4430 = vmatpush.msra.mxu0 %v302
    %4431 = vmatpush.msra.mxu0 %v298
    %4432 = vmatpush.msra.mxu0 %v294
    %4433 = vmatpush.msra.mxu0 %v290
    %4434 = vmatpush.msra.mxu0 %v286
    %4435 = vmatpush.msra.mxu0 %v282
    %4436 = vmatpush.msra.mxu0 %v278
    %4437 = vmatpush.msra.mxu0 %v274
    %4438 = vmatpush.msra.mxu0 %v270
    %4439 = vmatpush.msra.mxu0 %v266
    %4440 = vmatpush.msra.mxu0 %v262
    %4441 = vmatpush.msra.mxu0 %v258
    %4442 = vmatpush.msra.mxu0 %v254
    %4443 = vmatpush.msra.mxu0 %v250
    %4444 = vmatmul.f32.gmra.mxu0 %v4423
    %v4445 = vpop.f32.mrf.mxu0
    %v4446 = vadd.f32 0.0, %v4445
    %4447 = vmatmul.f32.gmra.mxu0 %v4426
    %v4448 = vpop.f32.mrf.mxu0
    %v4449 = vadd.f32 0.0, %v4448
    %4450 = vdwg.mxu0
    %4451 = vmatpush.msra.mxu0 %v311
    %4452 = vmatpush.msra.mxu0 %v307
    %4453 = vmatpush.msra.mxu0 %v303
    %4454 = vmatpush.msra.mxu0 %v299
    %4455 = vmatpush.msra.mxu0 %v295
    %4456 = vmatpush.msra.mxu0 %v291
    %4457 = vmatpush.msra.mxu0 %v287
    %4458 = vmatpush.msra.mxu0 %v283
    %4459 = vmatpush.msra.mxu0 %v279
    %4460 = vmatpush.msra.mxu0 %v275
    %4461 = vmatpush.msra.mxu0 %v271
    %4462 = vmatpush.msra.mxu0 %v267
    %4463 = vmatpush.msra.mxu0 %v263
    %4464 = vmatpush.msra.mxu0 %v259
    %4465 = vmatpush.msra.mxu0 %v255
    %4466 = vmatpush.msra.mxu0 %v251
    %4467 = vmatmul.f32.gmra.mxu0 %v4423
    %v4468 = vpop.f32.mrf.mxu0
    %v4469 = vadd.f32 0.0, %v4468
    %4470 = vmatmul.f32.gmra.mxu0 %v4426
    %v4471 = vpop.f32.mrf.mxu0
    %v4472 = vadd.f32 0.0, %v4471
    %4473 = vdwg.mxu0
    %4474 = vmatpush.msra.mxu0 %v312
    %4475 = vmatpush.msra.mxu0 %v308
    %4476 = vmatpush.msra.mxu0 %v304
    %4477 = vmatpush.msra.mxu0 %v300
    %4478 = vmatpush.msra.mxu0 %v296
    %4479 = vmatpush.msra.mxu0 %v292
    %4480 = vmatpush.msra.mxu0 %v288
    %4481 = vmatpush.msra.mxu0 %v284
    %4482 = vmatpush.msra.mxu0 %v280
    %4483 = vmatpush.msra.mxu0 %v276
    %4484 = vmatpush.msra.mxu0 %v272
    %4485 = vmatpush.msra.mxu0 %v268
    %4486 = vmatpush.msra.mxu0 %v264
    %4487 = vmatpush.msra.mxu0 %v260
    %4488 = vmatpush.msra.mxu0 %v256
    %4489 = vmatpush.msra.mxu0 %v252
    %4490 = vmatmul.f32.gmra.mxu0 %v4423
    %v4491 = vpop.f32.mrf.mxu0
    %v4492 = vadd.f32 0.0, %v4491
    %4493 = vmatmul.f32.gmra.mxu0 %v4426
    %v4494 = vpop.f32.mrf.mxu0
    %v4495 = vadd.f32 0.0, %v4494
    %4496 = vdwg.mxu0
    %4497 = vmatpush.msra.mxu0 %v313
    %4498 = vmatpush.msra.mxu0 %v309
    %4499 = vmatpush.msra.mxu0 %v305
    %4500 = vmatpush.msra.mxu0 %v301
    %4501 = vmatpush.msra.mxu0 %v297
    %4502 = vmatpush.msra.mxu0 %v293
    %4503 = vmatpush.msra.mxu0 %v289
    %4504 = vmatpush.msra.mxu0 %v285
    %4505 = vmatpush.msra.mxu0 %v281
    %4506 = vmatpush.msra.mxu0 %v277
    %4507 = vmatpush.msra.mxu0 %v273
    %4508 = vmatpush.msra.mxu0 %v269
    %4509 = vmatpush.msra.mxu0 %v265
    %4510 = vmatpush.msra.mxu0 %v261
    %4511 = vmatpush.msra.mxu0 %v257
    %4512 = vmatpush.msra.mxu0 %v253
    %4513 = vmatmul.f32.gmra.mxu0 %v4423
    %v4514 = vpop.f32.mrf.mxu0
    %v4515 = vadd.f32 0.0, %v4514
    %4516 = vmatmul.f32.gmra.mxu0 %v4426
    %v4517 = vpop.f32.mrf.mxu0
    %v4518 = vadd.f32 0.0, %v4517
    %4519 = vdwg.mxu0
    %v4520 = vmul.f32 %v4446, %v117
    %v4521 = vmul.f32 %v4469, %v118
    %v4522 = vmul.f32 %v4492, %v119
    %v4523 = vmul.f32 %v4515, %v120
    %v4524 = vmul.f32 %v4449, %v121
    %v4525 = vmul.f32 %v4472, %v122
    %v4526 = vmul.f32 %v4495, %v123
    %v4527 = vmul.f32 %v4518, %v124
    %4528 = vmatpush.msra.mxu0 0.0
    %4529 = vmatpush.msra.mxu0 0.0
    %4530 = vmatpush.msra.mxu0 0.0
    %4531 = vmatpush.msra.mxu0 0.0
    %4532 = vmatpush.msra.mxu0 0.0
    %4533 = vmatpush.msra.mxu0 0.0
    %4534 = vmatpush.msra.mxu0 0.0
    %4535 = vmatpush.msra.mxu0 0.0
    %4536 = vmatpush.msra.mxu0 0.0
    %4537 = vmatpush.msra.mxu0 0.0
    %4538 = vmatpush.msra.mxu0 0.0
    %4539 = vmatpush.msra.mxu0 0.0
    %4540 = vmatpush.msra.mxu0 0.0
    %4541 = vmatpush.msra.mxu0 0.0
    %4542 = vmatpush.msra.mxu0 %v4524
    %4543 = vmatpush.msra.mxu0 %v4520
    %4544 = vmatmul.f32.gmra.mxu0 %v416
    %v4545 = vpop.f32.mrf.mxu0
    %v4546 = vadd.f32 0.0, %v4545
    %4547 = vdwg.mxu0
    %4548 = vmatpush.msra.mxu0 0.0
    %4549 = vmatpush.msra.mxu0 0.0
    %4550 = vmatpush.msra.mxu0 0.0
    %4551 = vmatpush.msra.mxu0 0.0
    %4552 = vmatpush.msra.mxu0 0.0
    %4553 = vmatpush.msra.mxu0 0.0
    %4554 = vmatpush.msra.mxu0 0.0
    %4555 = vmatpush.msra.mxu0 0.0
    %4556 = vmatpush.msra.mxu0 0.0
    %4557 = vmatpush.msra.mxu0 0.0
    %4558 = vmatpush.msra.mxu0 0.0
    %4559 = vmatpush.msra.mxu0 0.0
    %4560 = vmatpush.msra.mxu0 0.0
    %4561 = vmatpush.msra.mxu0 0.0
    %4562 = vmatpush.msra.mxu0 %v4525
    %4563 = vmatpush.msra.mxu0 %v4521
    %4564 = vmatmul.f32.gmra.mxu0 %v416
    %v4565 = vpop.f32.mrf.mxu0
    %v4566 = vadd.f32 0.0, %v4565
    %4567 = vdwg.mxu0
    %4568 = vmatpush.msra.mxu0 0.0
    %4569 = vmatpush.msra.mxu0 0.0
    %4570 = vmatpush.msra.mxu0 0.0
    %4571 = vmatpush.msra.mxu0 0.0
    %4572 = vmatpush.msra.mxu0 0.0
    %4573 = vmatpush.msra.mxu0 0.0
    %4574 = vmatpush.msra.mxu0 0.0
    %4575 = vmatpush.msra.mxu0 0.0
    %4576 = vmatpush.msra.mxu0 0.0
    %4577 = vmatpush.msra.mxu0 0.0
    %4578 = vmatpush.msra.mxu0 0.0
    %4579 = vmatpush.msra.mxu0 0.0
    %4580 = vmatpush.msra.mxu0 0.0
    %4581 = vmatpush.msra.mxu0 0.0
    %4582 = vmatpush.msra.mxu0 %v4526
    %4583 = vmatpush.msra.mxu0 %v4522
    %4584 = vmatmul.f32.gmra.mxu0 %v416
    %v4585 = vpop.f32.mrf.mxu0
    %v4586 = vadd.f32 0.0, %v4585
    %4587 = vdwg.mxu0
    %4588 = vmatpush.msra.mxu0 0.0
    %4589 = vmatpush.msra.mxu0 0.0
    %4590 = vmatpush.msra.mxu0 0.0
    %4591 = vmatpush.msra.mxu0 0.0
    %4592 = vmatpush.msra.mxu0 0.0
    %4593 = vmatpush.msra.mxu0 0.0
    %4594 = vmatpush.msra.mxu0 0.0
    %4595 = vmatpush.msra.mxu0 0.0
    %4596 = vmatpush.msra.mxu0 0.0
    %4597 = vmatpush.msra.mxu0 0.0
    %4598 = vmatpush.msra.mxu0 0.0
    %4599 = vmatpush.msra.mxu0 0.0
    %4600 = vmatpush.msra.mxu0 0.0
    %4601 = vmatpush.msra.mxu0 0.0
    %4602 = vmatpush.msra.mxu0 %v4527
    %4603 = vmatpush.msra.mxu0 %v4523
    %4604 = vmatmul.f32.gmra.mxu0 %v416
    %v4605 = vpop.f32.mrf.mxu0
    %v4606 = vadd.f32 0.0, %v4605
    %4607 = vdwg.mxu0
    %v4608 = vperm.slane %v4546, 0
    %v4609 = vperm.slane %v4566, 0
    %v4610 = vperm.slane %v4586, 0
    %v4611 = vperm.slane %v4606, 0
    %4612 = vmatpush.msra.mxu0 %v246
    %4613 = vmatpush.msra.mxu0 %v242
    %4614 = vmatpush.msra.mxu0 %v238
    %4615 = vmatpush.msra.mxu0 %v234
    %4616 = vmatpush.msra.mxu0 %v230
    %4617 = vmatpush.msra.mxu0 %v226
    %4618 = vmatpush.msra.mxu0 %v222
    %4619 = vmatpush.msra.mxu0 %v218
    %4620 = vmatpush.msra.mxu0 %v214
    %4621 = vmatpush.msra.mxu0 %v210
    %4622 = vmatpush.msra.mxu0 %v206
    %4623 = vmatpush.msra.mxu0 %v202
    %4624 = vmatpush.msra.mxu0 %v198
    %4625 = vmatpush.msra.mxu0 %v194
    %4626 = vmatpush.msra.mxu0 %v190
    %4627 = vmatpush.msra.mxu0 %v186
    %4628 = vmatmul.f32.gmra.mxu0 %v4423
    %v4629 = vpop.f32.mrf.mxu0
    %v4630 = vadd.f32 %v4608, %v4629
    %4631 = vmatmul.f32.gmra.mxu0 %v4426
    %v4632 = vpop.f32.mrf.mxu0
    %v4633 = vadd.f32 %v4608, %v4632
    %4634 = vdwg.mxu0
    %4635 = vmatpush.msra.mxu0 %v247
    %4636 = vmatpush.msra.mxu0 %v243
    %4637 = vmatpush.msra.mxu0 %v239
    %4638 = vmatpush.msra.mxu0 %v235
    %4639 = vmatpush.msra.mxu0 %v231
    %4640 = vmatpush.msra.mxu0 %v227
    %4641 = vmatpush.msra.mxu0 %v223
    %4642 = vmatpush.msra.mxu0 %v219
    %4643 = vmatpush.msra.mxu0 %v215
    %4644 = vmatpush.msra.mxu0 %v211
    %4645 = vmatpush.msra.mxu0 %v207
    %4646 = vmatpush.msra.mxu0 %v203
    %4647 = vmatpush.msra.mxu0 %v199
    %4648 = vmatpush.msra.mxu0 %v195
    %4649 = vmatpush.msra.mxu0 %v191
    %4650 = vmatpush.msra.mxu0 %v187
    %4651 = vmatmul.f32.gmra.mxu0 %v4423
    %v4652 = vpop.f32.mrf.mxu0
    %v4653 = vadd.f32 %v4609, %v4652
    %4654 = vmatmul.f32.gmra.mxu0 %v4426
    %v4655 = vpop.f32.mrf.mxu0
    %v4656 = vadd.f32 %v4609, %v4655
    %4657 = vdwg.mxu0
    %4658 = vmatpush.msra.mxu0 %v248
    %4659 = vmatpush.msra.mxu0 %v244
    %4660 = vmatpush.msra.mxu0 %v240
    %4661 = vmatpush.msra.mxu0 %v236
    %4662 = vmatpush.msra.mxu0 %v232
    %4663 = vmatpush.msra.mxu0 %v228
    %4664 = vmatpush.msra.mxu0 %v224
    %4665 = vmatpush.msra.mxu0 %v220
    %4666 = vmatpush.msra.mxu0 %v216
    %4667 = vmatpush.msra.mxu0 %v212
    %4668 = vmatpush.msra.mxu0 %v208
    %4669 = vmatpush.msra.mxu0 %v204
    %4670 = vmatpush.msra.mxu0 %v200
    %4671 = vmatpush.msra.mxu0 %v196
    %4672 = vmatpush.msra.mxu0 %v192
    %4673 = vmatpush.msra.mxu0 %v188
    %4674 = vmatmul.f32.gmra.mxu0 %v4423
    %v4675 = vpop.f32.mrf.mxu0
    %v4676 = vadd.f32 %v4610, %v4675
    %4677 = vmatmul.f32.gmra.mxu0 %v4426
    %v4678 = vpop.f32.mrf.mxu0
    %v4679 = vadd.f32 %v4610, %v4678
    %4680 = vdwg.mxu0
    %4681 = vmatpush.msra.mxu0 %v249
    %4682 = vmatpush.msra.mxu0 %v245
    %4683 = vmatpush.msra.mxu0 %v241
    %4684 = vmatpush.msra.mxu0 %v237
    %4685 = vmatpush.msra.mxu0 %v233
    %4686 = vmatpush.msra.mxu0 %v229
    %4687 = vmatpush.msra.mxu0 %v225
    %4688 = vmatpush.msra.mxu0 %v221
    %4689 = vmatpush.msra.mxu0 %v217
    %4690 = vmatpush.msra.mxu0 %v213
    %4691 = vmatpush.msra.mxu0 %v209
    %4692 = vmatpush.msra.mxu0 %v205
    %4693 = vmatpush.msra.mxu0 %v201
    %4694 = vmatpush.msra.mxu0 %v197
    %4695 = vmatpush.msra.mxu0 %v193
    %4696 = vmatpush.msra.mxu0 %v189
    %4697 = vmatmul.f32.gmra.mxu0 %v4423
    %v4698 = vpop.f32.mrf.mxu0
    %v4699 = vadd.f32 %v4611, %v4698
    %4700 = vmatmul.f32.gmra.mxu0 %v4426
    %v4701 = vpop.f32.mrf.mxu0
    %v4702 = vadd.f32 %v4611, %v4701
    %4703 = vdwg.mxu0
    %vm4704 = vcmp.gt.f32.partialorder %v4630, 0.0
    %vm4705 = vcmp.gt.f32.partialorder %v4653, 0.0
    %vm4706 = vcmp.gt.f32.partialorder %v4676, 0.0
    %vm4707 = vcmp.gt.f32.partialorder %v4699, 0.0
    %vm4708 = vcmp.gt.f32.partialorder %v4633, 0.0
    %vm4709 = vcmp.gt.f32.partialorder %v4656, 0.0
    %vm4710 = vcmp.gt.f32.partialorder %v4679, 0.0
    %vm4711 = vcmp.gt.f32.partialorder %v4702, 0.0
    %v4712 = vmul.f32 %v4630, 0.2
    %v4713 = vmul.f32 %v4653, 0.2
    %v4714 = vmul.f32 %v4676, 0.2
    %v4715 = vmul.f32 %v4699, 0.2
    %v4716 = vmul.f32 %v4633, 0.2
    %v4717 = vmul.f32 %v4656, 0.2
    %v4718 = vmul.f32 %v4679, 0.2
    %v4719 = vmul.f32 %v4702, 0.2
    %v4720 = vsel %vm4704, %v4630, %v4712
    %v4721 = vsel %vm4705, %v4653, %v4713
    %v4722 = vsel %vm4706, %v4676, %v4714
    %v4723 = vsel %vm4707, %v4699, %v4715
    %v4724 = vsel %vm4708, %v4633, %v4716
    %v4725 = vsel %vm4709, %v4656, %v4717
    %v4726 = vsel %vm4710, %v4679, %v4718
    %v4727 = vsel %vm4711, %v4702, %v4719
    %v4729 = vperm.slane %v4395, 0
    %v4730 = vperm.slane %v4395, 1
    %v4731 = vperm.slane %v4395, 2
    %v4732 = vperm.slane %v4395, 3
    %v4737 = vmul.f32 %v4720, %v4729
    %v4738 = vmul.f32 %v4721, %v4730
    %v4739 = vmul.f32 %v4722, %v4731
    %v4740 = vmul.f32 %v4723, %v4732
    %v4741 = vmul.f32 %v4724, %v4729
    %v4742 = vmul.f32 %v4725, %v4730
    %v4743 = vmul.f32 %v4726, %v4731
    %v4744 = vmul.f32 %v4727, %v4732
    %4745 = vmatpush.msra.mxu0 %v650
    %4746 = vmatpush.msra.mxu0 %v649
    %4747 = vmatpush.msra.mxu0 %v648
    %4748 = vmatpush.msra.mxu0 %v647
    %4749 = vmatpush.msra.mxu0 %v646
    %4750 = vmatpush.msra.mxu0 %v645
    %4751 = vmatpush.msra.mxu0 %v644
    %4752 = vmatpush.msra.mxu0 %v643
    %4753 = vmatpush.msra.mxu0 %v642
    %4754 = vmatpush.msra.mxu0 %v641
    %4755 = vmatpush.msra.mxu0 %v640
    %4756 = vmatpush.msra.mxu0 %v639
    %4757 = vmatpush.msra.mxu0 %v638
    %4758 = vmatpush.msra.mxu0 %v637
    %4759 = vmatpush.msra.mxu0 %v636
    %4760 = vmatpush.msra.mxu0 %v635
    %4761 = vmatmul.f32.gmra.mxu0 %v4737
    %v4762 = vpop.f32.mrf.mxu0
    %v4763 = vadd.f32 %v125, %v4762
    %4764 = vmatmul.f32.gmra.mxu0 %v4741
    %v4765 = vpop.f32.mrf.mxu0
    %v4766 = vadd.f32 %v126, %v4765
    %4767 = vdwg.mxu0
    %4768 = vmatpush.msra.mxu0 %v666
    %4769 = vmatpush.msra.mxu0 %v665
    %4770 = vmatpush.msra.mxu0 %v664
    %4771 = vmatpush.msra.mxu0 %v663
    %4772 = vmatpush.msra.mxu0 %v662
    %4773 = vmatpush.msra.mxu0 %v661
    %4774 = vmatpush.msra.mxu0 %v660
    %4775 = vmatpush.msra.mxu0 %v659
    %4776 = vmatpush.msra.mxu0 %v658
    %4777 = vmatpush.msra.mxu0 %v657
    %4778 = vmatpush.msra.mxu0 %v656
    %4779 = vmatpush.msra.mxu0 %v655
    %4780 = vmatpush.msra.mxu0 %v654
    %4781 = vmatpush.msra.mxu0 %v653
    %4782 = vmatpush.msra.mxu0 %v652
    %4783 = vmatpush.msra.mxu0 %v651
    %4784 = vmatmul.f32.gmra.mxu0 %v4738
    %v4785 = vpop.f32.mrf.mxu0
    %v4786 = vadd.f32 %v4763, %v4785
    %4787 = vmatmul.f32.gmra.mxu0 %v4742
    %v4788 = vpop.f32.mrf.mxu0
    %v4789 = vadd.f32 %v4766, %v4788
    %4790 = vdwg.mxu0
    %4791 = vmatpush.msra.mxu0 %v682
    %4792 = vmatpush.msra.mxu0 %v681
    %4793 = vmatpush.msra.mxu0 %v680
    %4794 = vmatpush.msra.mxu0 %v679
    %4795 = vmatpush.msra.mxu0 %v678
    %4796 = vmatpush.msra.mxu0 %v677
    %4797 = vmatpush.msra.mxu0 %v676
    %4798 = vmatpush.msra.mxu0 %v675
    %4799 = vmatpush.msra.mxu0 %v674
    %4800 = vmatpush.msra.mxu0 %v673
    %4801 = vmatpush.msra.mxu0 %v672
    %4802 = vmatpush.msra.mxu0 %v671
    %4803 = vmatpush.msra.mxu0 %v670
    %4804 = vmatpush.msra.mxu0 %v669
    %4805 = vmatpush.msra.mxu0 %v668
    %4806 = vmatpush.msra.mxu0 %v667
    %4807 = vmatmul.f32.gmra.mxu0 %v4739
    %v4808 = vpop.f32.mrf.mxu0
    %v4809 = vadd.f32 %v4786, %v4808
    %4810 = vmatmul.f32.gmra.mxu0 %v4743
    %v4811 = vpop.f32.mrf.mxu0
    %v4812 = vadd.f32 %v4789, %v4811
    %4813 = vdwg.mxu0
    %4814 = vmatpush.msra.mxu0 %v698
    %4815 = vmatpush.msra.mxu0 %v697
    %4816 = vmatpush.msra.mxu0 %v696
    %4817 = vmatpush.msra.mxu0 %v695
    %4818 = vmatpush.msra.mxu0 %v694
    %4819 = vmatpush.msra.mxu0 %v693
    %4820 = vmatpush.msra.mxu0 %v692
    %4821 = vmatpush.msra.mxu0 %v691
    %4822 = vmatpush.msra.mxu0 %v690
    %4823 = vmatpush.msra.mxu0 %v689
    %4824 = vmatpush.msra.mxu0 %v688
    %4825 = vmatpush.msra.mxu0 %v687
    %4826 = vmatpush.msra.mxu0 %v686
    %4827 = vmatpush.msra.mxu0 %v685
    %4828 = vmatpush.msra.mxu0 %v684
    %4829 = vmatpush.msra.mxu0 %v683
    %4830 = vmatmul.f32.gmra.mxu0 %v4740
    %v4831 = vpop.f32.mrf.mxu0
    %v4832 = vadd.f32 %v4809, %v4831
    %4833 = vmatmul.f32.gmra.mxu0 %v4744
    %v4834 = vpop.f32.mrf.mxu0
    %v4835 = vadd.f32 %v4812, %v4834
    %4836 = vdwg.mxu0
    %4837 = vrot.lane.b32.xlu0 %v4832, 8
    %v4838 = vpop.permute.xlu0 %4837
    %4839 = vrot.lane.b32.xlu0 %v4835, 8
    %v4840 = vpop.permute.xlu0 %4839
    %v4841 = vmax.f32 %v4832, %v4838
    %v4842 = vmax.f32 %v4835, %v4840
    %4843 = vrot.lane.b32.xlu0 %v4841, 16
    %v4844 = vpop.permute.xlu0 %4843
    %4845 = vrot.lane.b32.xlu0 %v4842, 16
    %v4846 = vpop.permute.xlu0 %4845
    %v4847 = vmax.f32 %v4841, %v4844
    %v4848 = vmax.f32 %v4842, %v4846
    %4849 = vrot.lane.b32.xlu0 %v4847, 32
    %v4850 = vpop.permute.xlu0 %4849
    %4851 = vrot.lane.b32.xlu0 %v4848, 32
    %v4852 = vpop.permute.xlu0 %4851
    %v4853 = vmax.f32 %v4847, %v4850
    %v4854 = vmax.f32 %v4848, %v4852
    %4855 = vrot.lane.b32.xlu0 %v4853, 64
    %v4856 = vpop.permute.xlu0 %4855
    %4857 = vrot.lane.b32.xlu0 %v4854, 64
    %v4858 = vpop.permute.xlu0 %4857
    %v4859 = vmax.f32 %v4853, %v4856
    %v4860 = vmax.f32 %v4854, %v4858
    %v4861 = vsub.f32 %v4832, %v4859
    %v4862 = vsub.f32 %v4835, %v4860
    %v4863 = vmul.f32 %v4861, 1.442695
    %v4864 = vpow.pop %v4863
    %v4865 = vmul.f32 %v4862, 1.442695
    %v4866 = vpow.pop %v4865
    %v4867 = vmul.f32 %v4864, %v127
    %v4868 = vmul.f32 %v4866, %v128
    %4869 = vmatpush.msra.mxu0 %v838
    %4870 = vmatpush.msra.mxu0 %v837
    %4871 = vmatpush.msra.mxu0 %v836
    %4872 = vmatpush.msra.mxu0 %v835
    %4873 = vmatpush.msra.mxu0 %v834
    %4874 = vmatpush.msra.mxu0 %v833
    %4875 = vmatpush.msra.mxu0 %v832
    %4876 = vmatpush.msra.mxu0 %v831
    %4877 = vmatpush.msra.mxu0 %v830
    %4878 = vmatpush.msra.mxu0 %v829
    %4879 = vmatpush.msra.mxu0 %v828
    %4880 = vmatpush.msra.mxu0 %v827
    %4881 = vmatpush.msra.mxu0 %v826
    %4882 = vmatpush.msra.mxu0 %v825
    %4883 = vmatpush.msra.mxu0 %v824
    %4884 = vmatpush.msra.mxu0 %v823
    %4885 = vmatmul.f32.gmra.mxu0 %v4867
    %v4886 = vpop.f32.mrf.mxu0
    %v4887 = vadd.f32 0.0, %v4886
    %4888 = vmatmul.f32.gmra.mxu0 %v4868
    %v4889 = vpop.f32.mrf.mxu0
    %v4890 = vadd.f32 0.0, %v4889
    %4891 = vdwg.mxu0
    %v4892 = vmax.f32 %v4887, 1e-30
    %v4893 = vmax.f32 %v4890, 1e-30
    %v4894 = vrcp.pop %v4892
    %v4895 = vmul.f32 %v4892, %v4894
    %v4896 = vsub.f32 1.0, %v4895
    %v4897 = vmul.f32 %v4894, %v4896
    %v4898 = vadd.f32 %v4894, %v4897
    %vm4899 = vweird.f32 %v4892
    %vm4900 = vweird.f32 %v4894
    %vm4901 = vmor %vm4899, %vm4900
    %v4902 = vsel %vm4901, %v4894, %v4898
    %v4903 = vand.u32 2147483647, %v4892
    %vm4904 = vcmp.eq.f32.partialorder %v4903, 8.507059e+37
    %v4905 = vand.u32 %v4892, 2147483648
    %v4906 = vor.u32 1.1754944e-38, %v4905
    %v4907 = vsel %vm4904, %v4906, %v4902
    %v4908 = vmul.f32 %v4867, %v4907
    %v4909 = vrcp.pop %v4893
    %v4910 = vmul.f32 %v4893, %v4909
    %v4911 = vsub.f32 1.0, %v4910
    %v4912 = vmul.f32 %v4909, %v4911
    %v4913 = vadd.f32 %v4909, %v4912
    %vm4914 = vweird.f32 %v4893
    %vm4915 = vweird.f32 %v4909
    %vm4916 = vmor %vm4914, %vm4915
    %v4917 = vsel %vm4916, %v4909, %v4913
    %v4918 = vand.u32 2147483647, %v4893
    %vm4919 = vcmp.eq.f32.partialorder %v4918, 8.507059e+37
    %v4920 = vand.u32 %v4893, 2147483648
    %v4921 = vor.u32 1.1754944e-38, %v4920
    %v4922 = vsel %vm4919, %v4921, %v4917
    %v4923 = vmul.f32 %v4868, %v4922
    %4924 = vmatpush.msra.mxu0 0.0
    %4925 = vmatpush.msra.mxu0 0.0
    %4926 = vmatpush.msra.mxu0 0.0
    %4927 = vmatpush.msra.mxu0 0.0
    %4928 = vmatpush.msra.mxu0 0.0
    %4929 = vmatpush.msra.mxu0 0.0
    %4930 = vmatpush.msra.mxu0 0.0
    %4931 = vmatpush.msra.mxu0 0.0
    %4932 = vmatpush.msra.mxu0 0.0
    %4933 = vmatpush.msra.mxu0 0.0
    %4934 = vmatpush.msra.mxu0 0.0
    %4935 = vmatpush.msra.mxu0 0.0
    %4936 = vmatpush.msra.mxu0 0.0
    %4937 = vmatpush.msra.mxu0 0.0
    %4938 = vmatpush.msra.mxu0 %v4426
    %4939 = vmatpush.msra.mxu0 %v4423
    %4940 = vmatmul.f32.gmra.mxu0 %v911
    %v4941 = vpop.f32.mrf.mxu0
    %v4942 = vadd.f32 0.0, %v4941
    %4943 = vmatmul.f32.gmra.mxu0 %v914
    %v4944 = vpop.f32.mrf.mxu0
    %v4945 = vadd.f32 0.0, %v4944
    %4946 = vmatmul.f32.gmra.mxu0 %v917
    %v4947 = vpop.f32.mrf.mxu0
    %v4948 = vadd.f32 0.0, %v4947
    %4949 = vmatmul.f32.gmra.mxu0 %v920
    %v4950 = vpop.f32.mrf.mxu0
    %v4951 = vadd.f32 0.0, %v4950
    %4952 = vmatmul.f32.gmra.mxu0 %v923
    %v4953 = vpop.f32.mrf.mxu0
    %v4954 = vadd.f32 0.0, %v4953
    %4955 = vmatmul.f32.gmra.mxu0 %v926
    %v4956 = vpop.f32.mrf.mxu0
    %v4957 = vadd.f32 0.0, %v4956
    %4958 = vmatmul.f32.gmra.mxu0 %v929
    %v4959 = vpop.f32.mrf.mxu0
    %v4960 = vadd.f32 0.0, %v4959
    %4961 = vmatmul.f32.gmra.mxu0 %v932
    %v4962 = vpop.f32.mrf.mxu0
    %v4963 = vadd.f32 0.0, %v4962
    %4964 = vmatmul.f32.gmra.mxu0 %v935
    %v4965 = vpop.f32.mrf.mxu0
    %v4966 = vadd.f32 0.0, %v4965
    %4967 = vmatmul.f32.gmra.mxu0 %v938
    %v4968 = vpop.f32.mrf.mxu0
    %v4969 = vadd.f32 0.0, %v4968
    %4970 = vmatmul.f32.gmra.mxu0 %v941
    %v4971 = vpop.f32.mrf.mxu0
    %v4972 = vadd.f32 0.0, %v4971
    %4973 = vmatmul.f32.gmra.mxu0 %v944
    %v4974 = vpop.f32.mrf.mxu0
    %v4975 = vadd.f32 0.0, %v4974
    %4976 = vmatmul.f32.gmra.mxu0 %v947
    %v4977 = vpop.f32.mrf.mxu0
    %v4978 = vadd.f32 0.0, %v4977
    %4979 = vmatmul.f32.gmra.mxu0 %v950
    %v4980 = vpop.f32.mrf.mxu0
    %v4981 = vadd.f32 0.0, %v4980
    %4982 = vmatmul.f32.gmra.mxu0 %v953
    %v4983 = vpop.f32.mrf.mxu0
    %v4984 = vadd.f32 0.0, %v4983
    %4985 = vmatmul.f32.gmra.mxu0 %v956
    %v4986 = vpop.f32.mrf.mxu0
    %v4987 = vadd.f32 0.0, %v4986
    %4988 = vdwg.mxu0
    %v4989 = vmul.f32 %v4942, %v129
    %v4990 = vmul.f32 %v4945, %v130
    %v4991 = vmul.f32 %v4948, %v131
    %v4992 = vmul.f32 %v4951, %v132
    %v4993 = vmul.f32 %v4954, %v133
    %v4994 = vmul.f32 %v4957, %v134
    %v4995 = vmul.f32 %v4960, %v135
    %v4996 = vmul.f32 %v4963, %v136
    %v4997 = vmul.f32 %v4966, %v137
    %v4998 = vmul.f32 %v4969, %v138
    %v4999 = vmul.f32 %v4972, %v139
    %v5000 = vmul.f32 %v4975, %v140
    %v5001 = vmul.f32 %v4978, %v141
    %v5002 = vmul.f32 %v4981, %v142
    %v5003 = vmul.f32 %v4984, %v143
    %v5004 = vmul.f32 %v4987, %v144
    %5007 = vrot.lane.b32.xlu0 %v4423, 64
    %v5008 = vpop.permute.xlu0 %5007
    %5009 = vrot.lane.b32.xlu0 %v4426, 64
    %v5010 = vpop.permute.xlu0 %5009
    %5013 = vmatpush.msra.mxu0 %v5004
    %5014 = vmatpush.msra.mxu0 %v5003
    %5015 = vmatpush.msra.mxu0 %v5002
    %5016 = vmatpush.msra.mxu0 %v5001
    %5017 = vmatpush.msra.mxu0 %v5000
    %5018 = vmatpush.msra.mxu0 %v4999
    %5019 = vmatpush.msra.mxu0 %v4998
    %5020 = vmatpush.msra.mxu0 %v4997
    %5021 = vmatpush.msra.mxu0 %v4996
    %5022 = vmatpush.msra.mxu0 %v4995
    %5023 = vmatpush.msra.mxu0 %v4994
    %5024 = vmatpush.msra.mxu0 %v4993
    %5025 = vmatpush.msra.mxu0 %v4992
    %5026 = vmatpush.msra.mxu0 %v4991
    %5027 = vmatpush.msra.mxu0 %v4990
    %5028 = vmatpush.msra.mxu0 %v4989
    %5029 = vmatmul.f32.gmra.mxu0 %v4908
    %v5030 = vpop.f32.mrf.mxu0
    %v5031 = vadd.f32 %v5008, %v5030
    %5032 = vmatmul.f32.gmra.mxu0 %v4923
    %v5033 = vpop.f32.mrf.mxu0
    %v5034 = vadd.f32 %v5010, %v5033
    %5035 = vdwg.mxu0
    %vm5036 = vcmp.gt.f32.partialorder %v5031, 0.0
    %vm5037 = vcmp.gt.f32.partialorder %v5034, 0.0
    %v5038 = vmin.f32 %v5031, 0.0
    %v5039 = vmin.f32 %v5034, 0.0
    %v5040 = vmul.f32 %v5038, 1.442695
    %v5041 = vpow.pop %v5040
    %v5042 = vmul.f32 %v5039, 1.442695
    %v5043 = vpow.pop %v5042
    %v5044 = vsub.f32 %v5041, 1.0
    %v5045 = vsub.f32 %v5043, 1.0
    %v5046 = vsel %vm5036, %v5031, %v5044
    %v5047 = vsel %vm5037, %v5034, %v5045
    %s5048 = scalar_lea.vmem [#allocation2], 224
    %v5049 = vld [vmem:[%s5048] sm:$0xff]
    %v5050 = vld [vmem:[%s5048 + $0x8] sm:$0xff]
    %v5051 = vld [vmem:[%s5048 + $0x10] sm:$0xff]
    %v5052 = vld [vmem:[%s5048 + $0x18] sm:$0xff]
    %s5053 = scalar_lea.vmem %s2, 7
    %v5054 = vld [vmem:[%s5053] sm:$0x1]
    %s5055 = scalar_lea.vmem %s3, 28
    %v5056 = vld [vmem:[%s5055] sm:$0xf]
    %v5058 = vperm.slane %v5054, 0
    %v5061 = vsel %vm156, %v5046, 0
    %v5064 = vsel %vm156, %v5047, 0
    %5066 = vmatpush.msra.mxu0 0.0
    %5067 = vmatpush.msra.mxu0 0.0
    %5068 = vmatpush.msra.mxu0 0.0
    %5069 = vmatpush.msra.mxu0 0.0
    %5070 = vmatpush.msra.mxu0 0.0
    %5071 = vmatpush.msra.mxu0 0.0
    %5072 = vmatpush.msra.mxu0 0.0
    %5073 = vmatpush.msra.mxu0 0.0
    %5074 = vmatpush.msra.mxu0 0.0
    %5075 = vmatpush.msra.mxu0 0.0
    %5076 = vmatpush.msra.mxu0 0.0
    %5077 = vmatpush.msra.mxu0 0.0
    %5078 = vmatpush.msra.mxu0 %v5052
    %5079 = vmatpush.msra.mxu0 %v5051
    %5080 = vmatpush.msra.mxu0 %v5050
    %5081 = vmatpush.msra.mxu0 %v5049
    %5082 = vmatmul.f32.gmra.mxu0 %v5061
    %v5083 = vpop.f32.mrf.mxu0
    %v5084 = vadd.f32 %v5058, %v5083
    %5085 = vmatmul.f32.gmra.mxu0 %v5064
    %v5086 = vpop.f32.mrf.mxu0
    %v5087 = vadd.f32 %v5058, %v5086
    %5088 = vdwg.mxu0
    %5089 = vmatpush.msra.mxu0 %v310
    %5090 = vmatpush.msra.mxu0 %v306
    %5091 = vmatpush.msra.mxu0 %v302
    %5092 = vmatpush.msra.mxu0 %v298
    %5093 = vmatpush.msra.mxu0 %v294
    %5094 = vmatpush.msra.mxu0 %v290
    %5095 = vmatpush.msra.mxu0 %v286
    %5096 = vmatpush.msra.mxu0 %v282
    %5097 = vmatpush.msra.mxu0 %v278
    %5098 = vmatpush.msra.mxu0 %v274
    %5099 = vmatpush.msra.mxu0 %v270
    %5100 = vmatpush.msra.mxu0 %v266
    %5101 = vmatpush.msra.mxu0 %v262
    %5102 = vmatpush.msra.mxu0 %v258
    %5103 = vmatpush.msra.mxu0 %v254
    %5104 = vmatpush.msra.mxu0 %v250
    %5105 = vmatmul.f32.gmra.mxu0 %v5084
    %v5106 = vpop.f32.mrf.mxu0
    %v5107 = vadd.f32 0.0, %v5106
    %5108 = vmatmul.f32.gmra.mxu0 %v5087
    %v5109 = vpop.f32.mrf.mxu0
    %v5110 = vadd.f32 0.0, %v5109
    %5111 = vdwg.mxu0
    %5112 = vmatpush.msra.mxu0 %v311
    %5113 = vmatpush.msra.mxu0 %v307
    %5114 = vmatpush.msra.mxu0 %v303
    %5115 = vmatpush.msra.mxu0 %v299
    %5116 = vmatpush.msra.mxu0 %v295
    %5117 = vmatpush.msra.mxu0 %v291
    %5118 = vmatpush.msra.mxu0 %v287
    %5119 = vmatpush.msra.mxu0 %v283
    %5120 = vmatpush.msra.mxu0 %v279
    %5121 = vmatpush.msra.mxu0 %v275
    %5122 = vmatpush.msra.mxu0 %v271
    %5123 = vmatpush.msra.mxu0 %v267
    %5124 = vmatpush.msra.mxu0 %v263
    %5125 = vmatpush.msra.mxu0 %v259
    %5126 = vmatpush.msra.mxu0 %v255
    %5127 = vmatpush.msra.mxu0 %v251
    %5128 = vmatmul.f32.gmra.mxu0 %v5084
    %v5129 = vpop.f32.mrf.mxu0
    %v5130 = vadd.f32 0.0, %v5129
    %5131 = vmatmul.f32.gmra.mxu0 %v5087
    %v5132 = vpop.f32.mrf.mxu0
    %v5133 = vadd.f32 0.0, %v5132
    %5134 = vdwg.mxu0
    %5135 = vmatpush.msra.mxu0 %v312
    %5136 = vmatpush.msra.mxu0 %v308
    %5137 = vmatpush.msra.mxu0 %v304
    %5138 = vmatpush.msra.mxu0 %v300
    %5139 = vmatpush.msra.mxu0 %v296
    %5140 = vmatpush.msra.mxu0 %v292
    %5141 = vmatpush.msra.mxu0 %v288
    %5142 = vmatpush.msra.mxu0 %v284
    %5143 = vmatpush.msra.mxu0 %v280
    %5144 = vmatpush.msra.mxu0 %v276
    %5145 = vmatpush.msra.mxu0 %v272
    %5146 = vmatpush.msra.mxu0 %v268
    %5147 = vmatpush.msra.mxu0 %v264
    %5148 = vmatpush.msra.mxu0 %v260
    %5149 = vmatpush.msra.mxu0 %v256
    %5150 = vmatpush.msra.mxu0 %v252
    %5151 = vmatmul.f32.gmra.mxu0 %v5084
    %v5152 = vpop.f32.mrf.mxu0
    %v5153 = vadd.f32 0.0, %v5152
    %5154 = vmatmul.f32.gmra.mxu0 %v5087
    %v5155 = vpop.f32.mrf.mxu0
    %v5156 = vadd.f32 0.0, %v5155
    %5157 = vdwg.mxu0
    %5158 = vmatpush.msra.mxu0 %v313
    %5159 = vmatpush.msra.mxu0 %v309
    %5160 = vmatpush.msra.mxu0 %v305
    %5161 = vmatpush.msra.mxu0 %v301
    %5162 = vmatpush.msra.mxu0 %v297
    %5163 = vmatpush.msra.mxu0 %v293
    %5164 = vmatpush.msra.mxu0 %v289
    %5165 = vmatpush.msra.mxu0 %v285
    %5166 = vmatpush.msra.mxu0 %v281
    %5167 = vmatpush.msra.mxu0 %v277
    %5168 = vmatpush.msra.mxu0 %v273
    %5169 = vmatpush.msra.mxu0 %v269
    %5170 = vmatpush.msra.mxu0 %v265
    %5171 = vmatpush.msra.mxu0 %v261
    %5172 = vmatpush.msra.mxu0 %v257
    %5173 = vmatpush.msra.mxu0 %v253
    %5174 = vmatmul.f32.gmra.mxu0 %v5084
    %v5175 = vpop.f32.mrf.mxu0
    %v5176 = vadd.f32 0.0, %v5175
    %5177 = vmatmul.f32.gmra.mxu0 %v5087
    %v5178 = vpop.f32.mrf.mxu0
    %v5179 = vadd.f32 0.0, %v5178
    %5180 = vdwg.mxu0
    %v5181 = vmul.f32 %v5107, %v117
    %v5182 = vmul.f32 %v5130, %v118
    %v5183 = vmul.f32 %v5153, %v119
    %v5184 = vmul.f32 %v5176, %v120
    %v5185 = vmul.f32 %v5110, %v121
    %v5186 = vmul.f32 %v5133, %v122
    %v5187 = vmul.f32 %v5156, %v123
    %v5188 = vmul.f32 %v5179, %v124
    %5189 = vmatpush.msra.mxu0 0.0
    %5190 = vmatpush.msra.mxu0 0.0
    %5191 = vmatpush.msra.mxu0 0.0
    %5192 = vmatpush.msra.mxu0 0.0
    %5193 = vmatpush.msra.mxu0 0.0
    %5194 = vmatpush.msra.mxu0 0.0
    %5195 = vmatpush.msra.mxu0 0.0
    %5196 = vmatpush.msra.mxu0 0.0
    %5197 = vmatpush.msra.mxu0 0.0
    %5198 = vmatpush.msra.mxu0 0.0
    %5199 = vmatpush.msra.mxu0 0.0
    %5200 = vmatpush.msra.mxu0 0.0
    %5201 = vmatpush.msra.mxu0 0.0
    %5202 = vmatpush.msra.mxu0 0.0
    %5203 = vmatpush.msra.mxu0 %v5185
    %5204 = vmatpush.msra.mxu0 %v5181
    %5205 = vmatmul.f32.gmra.mxu0 %v416
    %v5206 = vpop.f32.mrf.mxu0
    %v5207 = vadd.f32 0.0, %v5206
    %5208 = vdwg.mxu0
    %5209 = vmatpush.msra.mxu0 0.0
    %5210 = vmatpush.msra.mxu0 0.0
    %5211 = vmatpush.msra.mxu0 0.0
    %5212 = vmatpush.msra.mxu0 0.0
    %5213 = vmatpush.msra.mxu0 0.0
    %5214 = vmatpush.msra.mxu0 0.0
    %5215 = vmatpush.msra.mxu0 0.0
    %5216 = vmatpush.msra.mxu0 0.0
    %5217 = vmatpush.msra.mxu0 0.0
    %5218 = vmatpush.msra.mxu0 0.0
    %5219 = vmatpush.msra.mxu0 0.0
    %5220 = vmatpush.msra.mxu0 0.0
    %5221 = vmatpush.msra.mxu0 0.0
    %5222 = vmatpush.msra.mxu0 0.0
    %5223 = vmatpush.msra.mxu0 %v5186
    %5224 = vmatpush.msra.mxu0 %v5182
    %5225 = vmatmul.f32.gmra.mxu0 %v416
    %v5226 = vpop.f32.mrf.mxu0
    %v5227 = vadd.f32 0.0, %v5226
    %5228 = vdwg.mxu0
    %5229 = vmatpush.msra.mxu0 0.0
    %5230 = vmatpush.msra.mxu0 0.0
    %5231 = vmatpush.msra.mxu0 0.0
    %5232 = vmatpush.msra.mxu0 0.0
    %5233 = vmatpush.msra.mxu0 0.0
    %5234 = vmatpush.msra.mxu0 0.0
    %5235 = vmatpush.msra.mxu0 0.0
    %5236 = vmatpush.msra.mxu0 0.0
    %5237 = vmatpush.msra.mxu0 0.0
    %5238 = vmatpush.msra.mxu0 0.0
    %5239 = vmatpush.msra.mxu0 0.0
    %5240 = vmatpush.msra.mxu0 0.0
    %5241 = vmatpush.msra.mxu0 0.0
    %5242 = vmatpush.msra.mxu0 0.0
    %5243 = vmatpush.msra.mxu0 %v5187
    %5244 = vmatpush.msra.mxu0 %v5183
    %5245 = vmatmul.f32.gmra.mxu0 %v416
    %v5246 = vpop.f32.mrf.mxu0
    %v5247 = vadd.f32 0.0, %v5246
    %5248 = vdwg.mxu0
    %5249 = vmatpush.msra.mxu0 0.0
    %5250 = vmatpush.msra.mxu0 0.0
    %5251 = vmatpush.msra.mxu0 0.0
    %5252 = vmatpush.msra.mxu0 0.0
    %5253 = vmatpush.msra.mxu0 0.0
    %5254 = vmatpush.msra.mxu0 0.0
    %5255 = vmatpush.msra.mxu0 0.0
    %5256 = vmatpush.msra.mxu0 0.0
    %5257 = vmatpush.msra.mxu0 0.0
    %5258 = vmatpush.msra.mxu0 0.0
    %5259 = vmatpush.msra.mxu0 0.0
    %5260 = vmatpush.msra.mxu0 0.0
    %5261 = vmatpush.msra.mxu0 0.0
    %5262 = vmatpush.msra.mxu0 0.0
    %5263 = vmatpush.msra.mxu0 %v5188
    %5264 = vmatpush.msra.mxu0 %v5184
    %5265 = vmatmul.f32.gmra.mxu0 %v416
    %v5266 = vpop.f32.mrf.mxu0
    %v5267 = vadd.f32 0.0, %v5266
    %5268 = vdwg.mxu0
    %v5269 = vperm.slane %v5207, 0
    %v5270 = vperm.slane %v5227, 0
    %v5271 = vperm.slane %v5247, 0
    %v5272 = vperm.slane %v5267, 0
    %5273 = vmatpush.msra.mxu0 %v246
    %5274 = vmatpush.msra.mxu0 %v242
    %5275 = vmatpush.msra.mxu0 %v238
    %5276 = vmatpush.msra.mxu0 %v234
    %5277 = vmatpush.msra.mxu0 %v230
    %5278 = vmatpush.msra.mxu0 %v226
    %5279 = vmatpush.msra.mxu0 %v222
    %5280 = vmatpush.msra.mxu0 %v218
    %5281 = vmatpush.msra.mxu0 %v214
    %5282 = vmatpush.msra.mxu0 %v210
    %5283 = vmatpush.msra.mxu0 %v206
    %5284 = vmatpush.msra.mxu0 %v202
    %5285 = vmatpush.msra.mxu0 %v198
    %5286 = vmatpush.msra.mxu0 %v194
    %5287 = vmatpush.msra.mxu0 %v190
    %5288 = vmatpush.msra.mxu0 %v186
    %5289 = vmatmul.f32.gmra.mxu0 %v5084
    %v5290 = vpop.f32.mrf.mxu0
    %v5291 = vadd.f32 %v5269, %v5290
    %5292 = vmatmul.f32.gmra.mxu0 %v5087
    %v5293 = vpop.f32.mrf.mxu0
    %v5294 = vadd.f32 %v5269, %v5293
    %5295 = vdwg.mxu0
    %5296 = vmatpush.msra.mxu0 %v247
    %5297 = vmatpush.msra.mxu0 %v243
    %5298 = vmatpush.msra.mxu0 %v239
    %5299 = vmatpush.msra.mxu0 %v235
    %5300 = vmatpush.msra.mxu0 %v231
    %5301 = vmatpush.msra.mxu0 %v227
    %5302 = vmatpush.msra.mxu0 %v223
    %5303 = vmatpush.msra.mxu0 %v219
    %5304 = vmatpush.msra.mxu0 %v215
    %5305 = vmatpush.msra.mxu0 %v211
    %5306 = vmatpush.msra.mxu0 %v207
    %5307 = vmatpush.msra.mxu0 %v203
    %5308 = vmatpush.msra.mxu0 %v199
    %5309 = vmatpush.msra.mxu0 %v195
    %5310 = vmatpush.msra.mxu0 %v191
    %5311 = vmatpush.msra.mxu0 %v187
    %5312 = vmatmul.f32.gmra.mxu0 %v5084
    %v5313 = vpop.f32.mrf.mxu0
    %v5314 = vadd.f32 %v5270, %v5313
    %5315 = vmatmul.f32.gmra.mxu0 %v5087
    %v5316 = vpop.f32.mrf.mxu0
    %v5317 = vadd.f32 %v5270, %v5316
    %5318 = vdwg.mxu0
    %5319 = vmatpush.msra.mxu0 %v248
    %5320 = vmatpush.msra.mxu0 %v244
    %5321 = vmatpush.msra.mxu0 %v240
    %5322 = vmatpush.msra.mxu0 %v236
    %5323 = vmatpush.msra.mxu0 %v232
    %5324 = vmatpush.msra.mxu0 %v228
    %5325 = vmatpush.msra.mxu0 %v224
    %5326 = vmatpush.msra.mxu0 %v220
    %5327 = vmatpush.msra.mxu0 %v216
    %5328 = vmatpush.msra.mxu0 %v212
    %5329 = vmatpush.msra.mxu0 %v208
    %5330 = vmatpush.msra.mxu0 %v204
    %5331 = vmatpush.msra.mxu0 %v200
    %5332 = vmatpush.msra.mxu0 %v196
    %5333 = vmatpush.msra.mxu0 %v192
    %5334 = vmatpush.msra.mxu0 %v188
    %5335 = vmatmul.f32.gmra.mxu0 %v5084
    %v5336 = vpop.f32.mrf.mxu0
    %v5337 = vadd.f32 %v5271, %v5336
    %5338 = vmatmul.f32.gmra.mxu0 %v5087
    %v5339 = vpop.f32.mrf.mxu0
    %v5340 = vadd.f32 %v5271, %v5339
    %5341 = vdwg.mxu0
    %5342 = vmatpush.msra.mxu0 %v249
    %5343 = vmatpush.msra.mxu0 %v245
    %5344 = vmatpush.msra.mxu0 %v241
    %5345 = vmatpush.msra.mxu0 %v237
    %5346 = vmatpush.msra.mxu0 %v233
    %5347 = vmatpush.msra.mxu0 %v229
    %5348 = vmatpush.msra.mxu0 %v225
    %5349 = vmatpush.msra.mxu0 %v221
    %5350 = vmatpush.msra.mxu0 %v217
    %5351 = vmatpush.msra.mxu0 %v213
    %5352 = vmatpush.msra.mxu0 %v209
    %5353 = vmatpush.msra.mxu0 %v205
    %5354 = vmatpush.msra.mxu0 %v201
    %5355 = vmatpush.msra.mxu0 %v197
    %5356 = vmatpush.msra.mxu0 %v193
    %5357 = vmatpush.msra.mxu0 %v189
    %5358 = vmatmul.f32.gmra.mxu0 %v5084
    %v5359 = vpop.f32.mrf.mxu0
    %v5360 = vadd.f32 %v5272, %v5359
    %5361 = vmatmul.f32.gmra.mxu0 %v5087
    %v5362 = vpop.f32.mrf.mxu0
    %v5363 = vadd.f32 %v5272, %v5362
    %5364 = vdwg.mxu0
    %vm5365 = vcmp.gt.f32.partialorder %v5291, 0.0
    %vm5366 = vcmp.gt.f32.partialorder %v5314, 0.0
    %vm5367 = vcmp.gt.f32.partialorder %v5337, 0.0
    %vm5368 = vcmp.gt.f32.partialorder %v5360, 0.0
    %vm5369 = vcmp.gt.f32.partialorder %v5294, 0.0
    %vm5370 = vcmp.gt.f32.partialorder %v5317, 0.0
    %vm5371 = vcmp.gt.f32.partialorder %v5340, 0.0
    %vm5372 = vcmp.gt.f32.partialorder %v5363, 0.0
    %v5373 = vmul.f32 %v5291, 0.2
    %v5374 = vmul.f32 %v5314, 0.2
    %v5375 = vmul.f32 %v5337, 0.2
    %v5376 = vmul.f32 %v5360, 0.2
    %v5377 = vmul.f32 %v5294, 0.2
    %v5378 = vmul.f32 %v5317, 0.2
    %v5379 = vmul.f32 %v5340, 0.2
    %v5380 = vmul.f32 %v5363, 0.2
    %v5381 = vsel %vm5365, %v5291, %v5373
    %v5382 = vsel %vm5366, %v5314, %v5374
    %v5383 = vsel %vm5367, %v5337, %v5375
    %v5384 = vsel %vm5368, %v5360, %v5376
    %v5385 = vsel %vm5369, %v5294, %v5377
    %v5386 = vsel %vm5370, %v5317, %v5378
    %v5387 = vsel %vm5371, %v5340, %v5379
    %v5388 = vsel %vm5372, %v5363, %v5380
    %v5390 = vperm.slane %v5056, 0
    %v5391 = vperm.slane %v5056, 1
    %v5392 = vperm.slane %v5056, 2
    %v5393 = vperm.slane %v5056, 3
    %v5398 = vmul.f32 %v5381, %v5390
    %v5399 = vmul.f32 %v5382, %v5391
    %v5400 = vmul.f32 %v5383, %v5392
    %v5401 = vmul.f32 %v5384, %v5393
    %v5402 = vmul.f32 %v5385, %v5390
    %v5403 = vmul.f32 %v5386, %v5391
    %v5404 = vmul.f32 %v5387, %v5392
    %v5405 = vmul.f32 %v5388, %v5393
    %5406 = vmatpush.msra.mxu0 %v650
    %5407 = vmatpush.msra.mxu0 %v649
    %5408 = vmatpush.msra.mxu0 %v648
    %5409 = vmatpush.msra.mxu0 %v647
    %5410 = vmatpush.msra.mxu0 %v646
    %5411 = vmatpush.msra.mxu0 %v645
    %5412 = vmatpush.msra.mxu0 %v644
    %5413 = vmatpush.msra.mxu0 %v643
    %5414 = vmatpush.msra.mxu0 %v642
    %5415 = vmatpush.msra.mxu0 %v641
    %5416 = vmatpush.msra.mxu0 %v640
    %5417 = vmatpush.msra.mxu0 %v639
    %5418 = vmatpush.msra.mxu0 %v638
    %5419 = vmatpush.msra.mxu0 %v637
    %5420 = vmatpush.msra.mxu0 %v636
    %5421 = vmatpush.msra.mxu0 %v635
    %5422 = vmatmul.f32.gmra.mxu0 %v5398
    %v5423 = vpop.f32.mrf.mxu0
    %v5424 = vadd.f32 %v125, %v5423
    %5425 = vmatmul.f32.gmra.mxu0 %v5402
    %v5426 = vpop.f32.mrf.mxu0
    %v5427 = vadd.f32 %v126, %v5426
    %5428 = vdwg.mxu0
    %5429 = vmatpush.msra.mxu0 %v666
    %5430 = vmatpush.msra.mxu0 %v665
    %5431 = vmatpush.msra.mxu0 %v664
    %5432 = vmatpush.msra.mxu0 %v663
    %5433 = vmatpush.msra.mxu0 %v662
    %5434 = vmatpush.msra.mxu0 %v661
    %5435 = vmatpush.msra.mxu0 %v660
    %5436 = vmatpush.msra.mxu0 %v659
    %5437 = vmatpush.msra.mxu0 %v658
    %5438 = vmatpush.msra.mxu0 %v657
    %5439 = vmatpush.msra.mxu0 %v656
    %5440 = vmatpush.msra.mxu0 %v655
    %5441 = vmatpush.msra.mxu0 %v654
    %5442 = vmatpush.msra.mxu0 %v653
    %5443 = vmatpush.msra.mxu0 %v652
    %5444 = vmatpush.msra.mxu0 %v651
    %5445 = vmatmul.f32.gmra.mxu0 %v5399
    %v5446 = vpop.f32.mrf.mxu0
    %v5447 = vadd.f32 %v5424, %v5446
    %5448 = vmatmul.f32.gmra.mxu0 %v5403
    %v5449 = vpop.f32.mrf.mxu0
    %v5450 = vadd.f32 %v5427, %v5449
    %5451 = vdwg.mxu0
    %5452 = vmatpush.msra.mxu0 %v682
    %5453 = vmatpush.msra.mxu0 %v681
    %5454 = vmatpush.msra.mxu0 %v680
    %5455 = vmatpush.msra.mxu0 %v679
    %5456 = vmatpush.msra.mxu0 %v678
    %5457 = vmatpush.msra.mxu0 %v677
    %5458 = vmatpush.msra.mxu0 %v676
    %5459 = vmatpush.msra.mxu0 %v675
    %5460 = vmatpush.msra.mxu0 %v674
    %5461 = vmatpush.msra.mxu0 %v673
    %5462 = vmatpush.msra.mxu0 %v672
    %5463 = vmatpush.msra.mxu0 %v671
    %5464 = vmatpush.msra.mxu0 %v670
    %5465 = vmatpush.msra.mxu0 %v669
    %5466 = vmatpush.msra.mxu0 %v668
    %5467 = vmatpush.msra.mxu0 %v667
    %5468 = vmatmul.f32.gmra.mxu0 %v5400
    %v5469 = vpop.f32.mrf.mxu0
    %v5470 = vadd.f32 %v5447, %v5469
    %5471 = vmatmul.f32.gmra.mxu0 %v5404
    %v5472 = vpop.f32.mrf.mxu0
    %v5473 = vadd.f32 %v5450, %v5472
    %5474 = vdwg.mxu0
    %5475 = vmatpush.msra.mxu0 %v698
    %5476 = vmatpush.msra.mxu0 %v697
    %5477 = vmatpush.msra.mxu0 %v696
    %5478 = vmatpush.msra.mxu0 %v695
    %5479 = vmatpush.msra.mxu0 %v694
    %5480 = vmatpush.msra.mxu0 %v693
    %5481 = vmatpush.msra.mxu0 %v692
    %5482 = vmatpush.msra.mxu0 %v691
    %5483 = vmatpush.msra.mxu0 %v690
    %5484 = vmatpush.msra.mxu0 %v689
    %5485 = vmatpush.msra.mxu0 %v688
    %5486 = vmatpush.msra.mxu0 %v687
    %5487 = vmatpush.msra.mxu0 %v686
    %5488 = vmatpush.msra.mxu0 %v685
    %5489 = vmatpush.msra.mxu0 %v684
    %5490 = vmatpush.msra.mxu0 %v683
    %5491 = vmatmul.f32.gmra.mxu0 %v5401
    %v5492 = vpop.f32.mrf.mxu0
    %v5493 = vadd.f32 %v5470, %v5492
    %5494 = vmatmul.f32.gmra.mxu0 %v5405
    %v5495 = vpop.f32.mrf.mxu0
    %v5496 = vadd.f32 %v5473, %v5495
    %5497 = vdwg.mxu0
    %5498 = vrot.lane.b32.xlu0 %v5493, 8
    %v5499 = vpop.permute.xlu0 %5498
    %5500 = vrot.lane.b32.xlu0 %v5496, 8
    %v5501 = vpop.permute.xlu0 %5500
    %v5502 = vmax.f32 %v5493, %v5499
    %v5503 = vmax.f32 %v5496, %v5501
    %5504 = vrot.lane.b32.xlu0 %v5502, 16
    %v5505 = vpop.permute.xlu0 %5504
    %5506 = vrot.lane.b32.xlu0 %v5503, 16
    %v5507 = vpop.permute.xlu0 %5506
    %v5508 = vmax.f32 %v5502, %v5505
    %v5509 = vmax.f32 %v5503, %v5507
    %5510 = vrot.lane.b32.xlu0 %v5508, 32
    %v5511 = vpop.permute.xlu0 %5510
    %5512 = vrot.lane.b32.xlu0 %v5509, 32
    %v5513 = vpop.permute.xlu0 %5512
    %v5514 = vmax.f32 %v5508, %v5511
    %v5515 = vmax.f32 %v5509, %v5513
    %5516 = vrot.lane.b32.xlu0 %v5514, 64
    %v5517 = vpop.permute.xlu0 %5516
    %5518 = vrot.lane.b32.xlu0 %v5515, 64
    %v5519 = vpop.permute.xlu0 %5518
    %v5520 = vmax.f32 %v5514, %v5517
    %v5521 = vmax.f32 %v5515, %v5519
    %v5522 = vsub.f32 %v5493, %v5520
    %v5523 = vsub.f32 %v5496, %v5521
    %v5524 = vmul.f32 %v5522, 1.442695
    %v5525 = vpow.pop %v5524
    %v5526 = vmul.f32 %v5523, 1.442695
    %v5527 = vpow.pop %v5526
    %v5528 = vmul.f32 %v5525, %v127
    %v5529 = vmul.f32 %v5527, %v128
    %5530 = vmatpush.msra.mxu0 %v838
    %5531 = vmatpush.msra.mxu0 %v837
    %5532 = vmatpush.msra.mxu0 %v836
    %5533 = vmatpush.msra.mxu0 %v835
    %5534 = vmatpush.msra.mxu0 %v834
    %5535 = vmatpush.msra.mxu0 %v833
    %5536 = vmatpush.msra.mxu0 %v832
    %5537 = vmatpush.msra.mxu0 %v831
    %5538 = vmatpush.msra.mxu0 %v830
    %5539 = vmatpush.msra.mxu0 %v829
    %5540 = vmatpush.msra.mxu0 %v828
    %5541 = vmatpush.msra.mxu0 %v827
    %5542 = vmatpush.msra.mxu0 %v826
    %5543 = vmatpush.msra.mxu0 %v825
    %5544 = vmatpush.msra.mxu0 %v824
    %5545 = vmatpush.msra.mxu0 %v823
    %5546 = vmatmul.f32.gmra.mxu0 %v5528
    %v5547 = vpop.f32.mrf.mxu0
    %v5548 = vadd.f32 0.0, %v5547
    %5549 = vmatmul.f32.gmra.mxu0 %v5529
    %v5550 = vpop.f32.mrf.mxu0
    %v5551 = vadd.f32 0.0, %v5550
    %5552 = vdwg.mxu0
    %v5553 = vmax.f32 %v5548, 1e-30
    %v5554 = vmax.f32 %v5551, 1e-30
    %v5555 = vrcp.pop %v5553
    %v5556 = vmul.f32 %v5553, %v5555
    %v5557 = vsub.f32 1.0, %v5556
    %v5558 = vmul.f32 %v5555, %v5557
    %v5559 = vadd.f32 %v5555, %v5558
    %vm5560 = vweird.f32 %v5553
    %vm5561 = vweird.f32 %v5555
    %vm5562 = vmor %vm5560, %vm5561
    %v5563 = vsel %vm5562, %v5555, %v5559
    %v5564 = vand.u32 2147483647, %v5553
    %vm5565 = vcmp.eq.f32.partialorder %v5564, 8.507059e+37
    %v5566 = vand.u32 %v5553, 2147483648
    %v5567 = vor.u32 1.1754944e-38, %v5566
    %v5568 = vsel %vm5565, %v5567, %v5563
    %v5569 = vmul.f32 %v5528, %v5568
    %v5570 = vrcp.pop %v5554
    %v5571 = vmul.f32 %v5554, %v5570
    %v5572 = vsub.f32 1.0, %v5571
    %v5573 = vmul.f32 %v5570, %v5572
    %v5574 = vadd.f32 %v5570, %v5573
    %vm5575 = vweird.f32 %v5554
    %vm5576 = vweird.f32 %v5570
    %vm5577 = vmor %vm5575, %vm5576
    %v5578 = vsel %vm5577, %v5570, %v5574
    %v5579 = vand.u32 2147483647, %v5554
    %vm5580 = vcmp.eq.f32.partialorder %v5579, 8.507059e+37
    %v5581 = vand.u32 %v5554, 2147483648
    %v5582 = vor.u32 1.1754944e-38, %v5581
    %v5583 = vsel %vm5580, %v5582, %v5578
    %v5584 = vmul.f32 %v5529, %v5583
    %5585 = vmatpush.msra.mxu0 0.0
    %5586 = vmatpush.msra.mxu0 0.0
    %5587 = vmatpush.msra.mxu0 0.0
    %5588 = vmatpush.msra.mxu0 0.0
    %5589 = vmatpush.msra.mxu0 0.0
    %5590 = vmatpush.msra.mxu0 0.0
    %5591 = vmatpush.msra.mxu0 0.0
    %5592 = vmatpush.msra.mxu0 0.0
    %5593 = vmatpush.msra.mxu0 0.0
    %5594 = vmatpush.msra.mxu0 0.0
    %5595 = vmatpush.msra.mxu0 0.0
    %5596 = vmatpush.msra.mxu0 0.0
    %5597 = vmatpush.msra.mxu0 0.0
    %5598 = vmatpush.msra.mxu0 0.0
    %5599 = vmatpush.msra.mxu0 %v5087
    %5600 = vmatpush.msra.mxu0 %v5084
    %5601 = vmatmul.f32.gmra.mxu0 %v911
    %v5602 = vpop.f32.mrf.mxu0
    %v5603 = vadd.f32 0.0, %v5602
    %5604 = vmatmul.f32.gmra.mxu0 %v914
    %v5605 = vpop.f32.mrf.mxu0
    %v5606 = vadd.f32 0.0, %v5605
    %5607 = vmatmul.f32.gmra.mxu0 %v917
    %v5608 = vpop.f32.mrf.mxu0
    %v5609 = vadd.f32 0.0, %v5608
    %5610 = vmatmul.f32.gmra.mxu0 %v920
    %v5611 = vpop.f32.mrf.mxu0
    %v5612 = vadd.f32 0.0, %v5611
    %5613 = vmatmul.f32.gmra.mxu0 %v923
    %v5614 = vpop.f32.mrf.mxu0
    %v5615 = vadd.f32 0.0, %v5614
    %5616 = vmatmul.f32.gmra.mxu0 %v926
    %v5617 = vpop.f32.mrf.mxu0
    %v5618 = vadd.f32 0.0, %v5617
    %5619 = vmatmul.f32.gmra.mxu0 %v929
    %v5620 = vpop.f32.mrf.mxu0
    %v5621 = vadd.f32 0.0, %v5620
    %5622 = vmatmul.f32.gmra.mxu0 %v932
    %v5623 = vpop.f32.mrf.mxu0
    %v5624 = vadd.f32 0.0, %v5623
    %5625 = vmatmul.f32.gmra.mxu0 %v935
    %v5626 = vpop.f32.mrf.mxu0
    %v5627 = vadd.f32 0.0, %v5626
    %5628 = vmatmul.f32.gmra.mxu0 %v938
    %v5629 = vpop.f32.mrf.mxu0
    %v5630 = vadd.f32 0.0, %v5629
    %5631 = vmatmul.f32.gmra.mxu0 %v941
    %v5632 = vpop.f32.mrf.mxu0
    %v5633 = vadd.f32 0.0, %v5632
    %5634 = vmatmul.f32.gmra.mxu0 %v944
    %v5635 = vpop.f32.mrf.mxu0
    %v5636 = vadd.f32 0.0, %v5635
    %5637 = vmatmul.f32.gmra.mxu0 %v947
    %v5638 = vpop.f32.mrf.mxu0
    %v5639 = vadd.f32 0.0, %v5638
    %5640 = vmatmul.f32.gmra.mxu0 %v950
    %v5641 = vpop.f32.mrf.mxu0
    %v5642 = vadd.f32 0.0, %v5641
    %5643 = vmatmul.f32.gmra.mxu0 %v953
    %v5644 = vpop.f32.mrf.mxu0
    %v5645 = vadd.f32 0.0, %v5644
    %5646 = vmatmul.f32.gmra.mxu0 %v956
    %v5647 = vpop.f32.mrf.mxu0
    %v5648 = vadd.f32 0.0, %v5647
    %5649 = vdwg.mxu0
    %v5650 = vmul.f32 %v5603, %v129
    %v5651 = vmul.f32 %v5606, %v130
    %v5652 = vmul.f32 %v5609, %v131
    %v5653 = vmul.f32 %v5612, %v132
    %v5654 = vmul.f32 %v5615, %v133
    %v5655 = vmul.f32 %v5618, %v134
    %v5656 = vmul.f32 %v5621, %v135
    %v5657 = vmul.f32 %v5624, %v136
    %v5658 = vmul.f32 %v5627, %v137
    %v5659 = vmul.f32 %v5630, %v138
    %v5660 = vmul.f32 %v5633, %v139
    %v5661 = vmul.f32 %v5636, %v140
    %v5662 = vmul.f32 %v5639, %v141
    %v5663 = vmul.f32 %v5642, %v142
    %v5664 = vmul.f32 %v5645, %v143
    %v5665 = vmul.f32 %v5648, %v144
    %5668 = vrot.lane.b32.xlu0 %v5084, 64
    %v5669 = vpop.permute.xlu0 %5668
    %5670 = vrot.lane.b32.xlu0 %v5087, 64
    %v5671 = vpop.permute.xlu0 %5670
    %5674 = vmatpush.msra.mxu0 %v5665
    %5675 = vmatpush.msra.mxu0 %v5664
    %5676 = vmatpush.msra.mxu0 %v5663
    %5677 = vmatpush.msra.mxu0 %v5662
    %5678 = vmatpush.msra.mxu0 %v5661
    %5679 = vmatpush.msra.mxu0 %v5660
    %5680 = vmatpush.msra.mxu0 %v5659
    %5681 = vmatpush.msra.mxu0 %v5658
    %5682 = vmatpush.msra.mxu0 %v5657
    %5683 = vmatpush.msra.mxu0 %v5656
    %5684 = vmatpush.msra.mxu0 %v5655
    %5685 = vmatpush.msra.mxu0 %v5654
    %5686 = vmatpush.msra.mxu0 %v5653
    %5687 = vmatpush.msra.mxu0 %v5652
    %5688 = vmatpush.msra.mxu0 %v5651
    %5689 = vmatpush.msra.mxu0 %v5650
    %5690 = vmatmul.f32.gmra.mxu0 %v5569
    %v5691 = vpop.f32.mrf.mxu0
    %v5692 = vadd.f32 %v5669, %v5691
    %5693 = vmatmul.f32.gmra.mxu0 %v5584
    %v5694 = vpop.f32.mrf.mxu0
    %v5695 = vadd.f32 %v5671, %v5694
    %5696 = vdwg.mxu0
    %vm5697 = vcmp.gt.f32.partialorder %v5692, 0.0
    %vm5698 = vcmp.gt.f32.partialorder %v5695, 0.0
    %v5699 = vmin.f32 %v5692, 0.0
    %v5700 = vmin.f32 %v5695, 0.0
    %v5701 = vmul.f32 %v5699, 1.442695
    %v5702 = vpow.pop %v5701
    %v5703 = vmul.f32 %v5700, 1.442695
    %v5704 = vpow.pop %v5703
    %v5705 = vsub.f32 %v5702, 1.0
    %v5706 = vsub.f32 %v5704, 1.0
    %v5707 = vsel %vm5697, %v5692, %v5705
    %v5708 = vsel %vm5698, %v5695, %v5706
    %s5709 = scalar_lea.vmem [#allocation2], 256
    %v5710 = vld [vmem:[%s5709] sm:$0xff]
    %v5711 = vld [vmem:[%s5709 + $0x8] sm:$0xff]
    %v5712 = vld [vmem:[%s5709 + $0x10] sm:$0xff]
    %v5713 = vld [vmem:[%s5709 + $0x18] sm:$0xff]
    %s5714 = scalar_lea.vmem %s2, 8
    %v5715 = vld [vmem:[%s5714] sm:$0x1]
    %s5716 = scalar_lea.vmem %s3, 32
    %v5717 = vld [vmem:[%s5716] sm:$0xf]
    %v5719 = vperm.slane %v5715, 0
    %v5722 = vsel %vm156, %v5707, 0
    %v5725 = vsel %vm156, %v5708, 0
    %5727 = vmatpush.msra.mxu0 0.0
    %5728 = vmatpush.msra.mxu0 0.0
    %5729 = vmatpush.msra.mxu0 0.0
    %5730 = vmatpush.msra.mxu0 0.0
    %5731 = vmatpush.msra.mxu0 0.0
    %5732 = vmatpush.msra.mxu0 0.0
    %5733 = vmatpush.msra.mxu0 0.0
    %5734 = vmatpush.msra.mxu0 0.0
    %5735 = vmatpush.msra.mxu0 0.0
    %5736 = vmatpush.msra.mxu0 0.0
    %5737 = vmatpush.msra.mxu0 0.0
    %5738 = vmatpush.msra.mxu0 0.0
    %5739 = vmatpush.msra.mxu0 %v5713
    %5740 = vmatpush.msra.mxu0 %v5712
    %5741 = vmatpush.msra.mxu0 %v5711
    %5742 = vmatpush.msra.mxu0 %v5710
    %5743 = vmatmul.f32.gmra.mxu0 %v5722
    %v5744 = vpop.f32.mrf.mxu0
    %v5745 = vadd.f32 %v5719, %v5744
    %5746 = vmatmul.f32.gmra.mxu0 %v5725
    %v5747 = vpop.f32.mrf.mxu0
    %v5748 = vadd.f32 %v5719, %v5747
    %5749 = vdwg.mxu0
    %5750 = vmatpush.msra.mxu0 %v310
    %5751 = vmatpush.msra.mxu0 %v306
    %5752 = vmatpush.msra.mxu0 %v302
    %5753 = vmatpush.msra.mxu0 %v298
    %5754 = vmatpush.msra.mxu0 %v294
    %5755 = vmatpush.msra.mxu0 %v290
    %5756 = vmatpush.msra.mxu0 %v286
    %5757 = vmatpush.msra.mxu0 %v282
    %5758 = vmatpush.msra.mxu0 %v278
    %5759 = vmatpush.msra.mxu0 %v274
    %5760 = vmatpush.msra.mxu0 %v270
    %5761 = vmatpush.msra.mxu0 %v266
    %5762 = vmatpush.msra.mxu0 %v262
    %5763 = vmatpush.msra.mxu0 %v258
    %5764 = vmatpush.msra.mxu0 %v254
    %5765 = vmatpush.msra.mxu0 %v250
    %5766 = vmatmul.f32.gmra.mxu0 %v5745
    %v5767 = vpop.f32.mrf.mxu0
    %v5768 = vadd.f32 0.0, %v5767
    %5769 = vmatmul.f32.gmra.mxu0 %v5748
    %v5770 = vpop.f32.mrf.mxu0
    %v5771 = vadd.f32 0.0, %v5770
    %5772 = vdwg.mxu0
    %5773 = vmatpush.msra.mxu0 %v311
    %5774 = vmatpush.msra.mxu0 %v307
    %5775 = vmatpush.msra.mxu0 %v303
    %5776 = vmatpush.msra.mxu0 %v299
    %5777 = vmatpush.msra.mxu0 %v295
    %5778 = vmatpush.msra.mxu0 %v291
    %5779 = vmatpush.msra.mxu0 %v287
    %5780 = vmatpush.msra.mxu0 %v283
    %5781 = vmatpush.msra.mxu0 %v279
    %5782 = vmatpush.msra.mxu0 %v275
    %5783 = vmatpush.msra.mxu0 %v271
    %5784 = vmatpush.msra.mxu0 %v267
    %5785 = vmatpush.msra.mxu0 %v263
    %5786 = vmatpush.msra.mxu0 %v259
    %5787 = vmatpush.msra.mxu0 %v255
    %5788 = vmatpush.msra.mxu0 %v251
    %5789 = vmatmul.f32.gmra.mxu0 %v5745
    %v5790 = vpop.f32.mrf.mxu0
    %v5791 = vadd.f32 0.0, %v5790
    %5792 = vmatmul.f32.gmra.mxu0 %v5748
    %v5793 = vpop.f32.mrf.mxu0
    %v5794 = vadd.f32 0.0, %v5793
    %5795 = vdwg.mxu0
    %5796 = vmatpush.msra.mxu0 %v312
    %5797 = vmatpush.msra.mxu0 %v308
    %5798 = vmatpush.msra.mxu0 %v304
    %5799 = vmatpush.msra.mxu0 %v300
    %5800 = vmatpush.msra.mxu0 %v296
    %5801 = vmatpush.msra.mxu0 %v292
    %5802 = vmatpush.msra.mxu0 %v288
    %5803 = vmatpush.msra.mxu0 %v284
    %5804 = vmatpush.msra.mxu0 %v280
    %5805 = vmatpush.msra.mxu0 %v276
    %5806 = vmatpush.msra.mxu0 %v272
    %5807 = vmatpush.msra.mxu0 %v268
    %5808 = vmatpush.msra.mxu0 %v264
    %5809 = vmatpush.msra.mxu0 %v260
    %5810 = vmatpush.msra.mxu0 %v256
    %5811 = vmatpush.msra.mxu0 %v252
    %5812 = vmatmul.f32.gmra.mxu0 %v5745
    %v5813 = vpop.f32.mrf.mxu0
    %v5814 = vadd.f32 0.0, %v5813
    %5815 = vmatmul.f32.gmra.mxu0 %v5748
    %v5816 = vpop.f32.mrf.mxu0
    %v5817 = vadd.f32 0.0, %v5816
    %5818 = vdwg.mxu0
    %5819 = vmatpush.msra.mxu0 %v313
    %5820 = vmatpush.msra.mxu0 %v309
    %5821 = vmatpush.msra.mxu0 %v305
    %5822 = vmatpush.msra.mxu0 %v301
    %5823 = vmatpush.msra.mxu0 %v297
    %5824 = vmatpush.msra.mxu0 %v293
    %5825 = vmatpush.msra.mxu0 %v289
    %5826 = vmatpush.msra.mxu0 %v285
    %5827 = vmatpush.msra.mxu0 %v281
    %5828 = vmatpush.msra.mxu0 %v277
    %5829 = vmatpush.msra.mxu0 %v273
    %5830 = vmatpush.msra.mxu0 %v269
    %5831 = vmatpush.msra.mxu0 %v265
    %5832 = vmatpush.msra.mxu0 %v261
    %5833 = vmatpush.msra.mxu0 %v257
    %5834 = vmatpush.msra.mxu0 %v253
    %5835 = vmatmul.f32.gmra.mxu0 %v5745
    %v5836 = vpop.f32.mrf.mxu0
    %v5837 = vadd.f32 0.0, %v5836
    %5838 = vmatmul.f32.gmra.mxu0 %v5748
    %v5839 = vpop.f32.mrf.mxu0
    %v5840 = vadd.f32 0.0, %v5839
    %5841 = vdwg.mxu0
    %v5842 = vmul.f32 %v5768, %v117
    %v5843 = vmul.f32 %v5791, %v118
    %v5844 = vmul.f32 %v5814, %v119
    %v5845 = vmul.f32 %v5837, %v120
    %v5846 = vmul.f32 %v5771, %v121
    %v5847 = vmul.f32 %v5794, %v122
    %v5848 = vmul.f32 %v5817, %v123
    %v5849 = vmul.f32 %v5840, %v124
    %5850 = vmatpush.msra.mxu0 0.0
    %5851 = vmatpush.msra.mxu0 0.0
    %5852 = vmatpush.msra.mxu0 0.0
    %5853 = vmatpush.msra.mxu0 0.0
    %5854 = vmatpush.msra.mxu0 0.0
    %5855 = vmatpush.msra.mxu0 0.0
    %5856 = vmatpush.msra.mxu0 0.0
    %5857 = vmatpush.msra.mxu0 0.0
    %5858 = vmatpush.msra.mxu0 0.0
    %5859 = vmatpush.msra.mxu0 0.0
    %5860 = vmatpush.msra.mxu0 0.0
    %5861 = vmatpush.msra.mxu0 0.0
    %5862 = vmatpush.msra.mxu0 0.0
    %5863 = vmatpush.msra.mxu0 0.0
    %5864 = vmatpush.msra.mxu0 %v5846
    %5865 = vmatpush.msra.mxu0 %v5842
    %5866 = vmatmul.f32.gmra.mxu0 %v416
    %v5867 = vpop.f32.mrf.mxu0
    %v5868 = vadd.f32 0.0, %v5867
    %5869 = vdwg.mxu0
    %5870 = vmatpush.msra.mxu0 0.0
    %5871 = vmatpush.msra.mxu0 0.0
    %5872 = vmatpush.msra.mxu0 0.0
    %5873 = vmatpush.msra.mxu0 0.0
    %5874 = vmatpush.msra.mxu0 0.0
    %5875 = vmatpush.msra.mxu0 0.0
    %5876 = vmatpush.msra.mxu0 0.0
    %5877 = vmatpush.msra.mxu0 0.0
    %5878 = vmatpush.msra.mxu0 0.0
    %5879 = vmatpush.msra.mxu0 0.0
    %5880 = vmatpush.msra.mxu0 0.0
    %5881 = vmatpush.msra.mxu0 0.0
    %5882 = vmatpush.msra.mxu0 0.0
    %5883 = vmatpush.msra.mxu0 0.0
    %5884 = vmatpush.msra.mxu0 %v5847
    %5885 = vmatpush.msra.mxu0 %v5843
    %5886 = vmatmul.f32.gmra.mxu0 %v416
    %v5887 = vpop.f32.mrf.mxu0
    %v5888 = vadd.f32 0.0, %v5887
    %5889 = vdwg.mxu0
    %5890 = vmatpush.msra.mxu0 0.0
    %5891 = vmatpush.msra.mxu0 0.0
    %5892 = vmatpush.msra.mxu0 0.0
    %5893 = vmatpush.msra.mxu0 0.0
    %5894 = vmatpush.msra.mxu0 0.0
    %5895 = vmatpush.msra.mxu0 0.0
    %5896 = vmatpush.msra.mxu0 0.0
    %5897 = vmatpush.msra.mxu0 0.0
    %5898 = vmatpush.msra.mxu0 0.0
    %5899 = vmatpush.msra.mxu0 0.0
    %5900 = vmatpush.msra.mxu0 0.0
    %5901 = vmatpush.msra.mxu0 0.0
    %5902 = vmatpush.msra.mxu0 0.0
    %5903 = vmatpush.msra.mxu0 0.0
    %5904 = vmatpush.msra.mxu0 %v5848
    %5905 = vmatpush.msra.mxu0 %v5844
    %5906 = vmatmul.f32.gmra.mxu0 %v416
    %v5907 = vpop.f32.mrf.mxu0
    %v5908 = vadd.f32 0.0, %v5907
    %5909 = vdwg.mxu0
    %5910 = vmatpush.msra.mxu0 0.0
    %5911 = vmatpush.msra.mxu0 0.0
    %5912 = vmatpush.msra.mxu0 0.0
    %5913 = vmatpush.msra.mxu0 0.0
    %5914 = vmatpush.msra.mxu0 0.0
    %5915 = vmatpush.msra.mxu0 0.0
    %5916 = vmatpush.msra.mxu0 0.0
    %5917 = vmatpush.msra.mxu0 0.0
    %5918 = vmatpush.msra.mxu0 0.0
    %5919 = vmatpush.msra.mxu0 0.0
    %5920 = vmatpush.msra.mxu0 0.0
    %5921 = vmatpush.msra.mxu0 0.0
    %5922 = vmatpush.msra.mxu0 0.0
    %5923 = vmatpush.msra.mxu0 0.0
    %5924 = vmatpush.msra.mxu0 %v5849
    %5925 = vmatpush.msra.mxu0 %v5845
    %5926 = vmatmul.f32.gmra.mxu0 %v416
    %v5927 = vpop.f32.mrf.mxu0
    %v5928 = vadd.f32 0.0, %v5927
    %5929 = vdwg.mxu0
    %v5930 = vperm.slane %v5868, 0
    %v5931 = vperm.slane %v5888, 0
    %v5932 = vperm.slane %v5908, 0
    %v5933 = vperm.slane %v5928, 0
    %5934 = vmatpush.msra.mxu0 %v246
    %5935 = vmatpush.msra.mxu0 %v242
    %5936 = vmatpush.msra.mxu0 %v238
    %5937 = vmatpush.msra.mxu0 %v234
    %5938 = vmatpush.msra.mxu0 %v230
    %5939 = vmatpush.msra.mxu0 %v226
    %5940 = vmatpush.msra.mxu0 %v222
    %5941 = vmatpush.msra.mxu0 %v218
    %5942 = vmatpush.msra.mxu0 %v214
    %5943 = vmatpush.msra.mxu0 %v210
    %5944 = vmatpush.msra.mxu0 %v206
    %5945 = vmatpush.msra.mxu0 %v202
    %5946 = vmatpush.msra.mxu0 %v198
    %5947 = vmatpush.msra.mxu0 %v194
    %5948 = vmatpush.msra.mxu0 %v190
    %5949 = vmatpush.msra.mxu0 %v186
    %5950 = vmatmul.f32.gmra.mxu0 %v5745
    %v5951 = vpop.f32.mrf.mxu0
    %v5952 = vadd.f32 %v5930, %v5951
    %5953 = vmatmul.f32.gmra.mxu0 %v5748
    %v5954 = vpop.f32.mrf.mxu0
    %v5955 = vadd.f32 %v5930, %v5954
    %5956 = vdwg.mxu0
    %5957 = vmatpush.msra.mxu0 %v247
    %5958 = vmatpush.msra.mxu0 %v243
    %5959 = vmatpush.msra.mxu0 %v239
    %5960 = vmatpush.msra.mxu0 %v235
    %5961 = vmatpush.msra.mxu0 %v231
    %5962 = vmatpush.msra.mxu0 %v227
    %5963 = vmatpush.msra.mxu0 %v223
    %5964 = vmatpush.msra.mxu0 %v219
    %5965 = vmatpush.msra.mxu0 %v215
    %5966 = vmatpush.msra.mxu0 %v211
    %5967 = vmatpush.msra.mxu0 %v207
    %5968 = vmatpush.msra.mxu0 %v203
    %5969 = vmatpush.msra.mxu0 %v199
    %5970 = vmatpush.msra.mxu0 %v195
    %5971 = vmatpush.msra.mxu0 %v191
    %5972 = vmatpush.msra.mxu0 %v187
    %5973 = vmatmul.f32.gmra.mxu0 %v5745
    %v5974 = vpop.f32.mrf.mxu0
    %v5975 = vadd.f32 %v5931, %v5974
    %5976 = vmatmul.f32.gmra.mxu0 %v5748
    %v5977 = vpop.f32.mrf.mxu0
    %v5978 = vadd.f32 %v5931, %v5977
    %5979 = vdwg.mxu0
    %5980 = vmatpush.msra.mxu0 %v248
    %5981 = vmatpush.msra.mxu0 %v244
    %5982 = vmatpush.msra.mxu0 %v240
    %5983 = vmatpush.msra.mxu0 %v236
    %5984 = vmatpush.msra.mxu0 %v232
    %5985 = vmatpush.msra.mxu0 %v228
    %5986 = vmatpush.msra.mxu0 %v224
    %5987 = vmatpush.msra.mxu0 %v220
    %5988 = vmatpush.msra.mxu0 %v216
    %5989 = vmatpush.msra.mxu0 %v212
    %5990 = vmatpush.msra.mxu0 %v208
    %5991 = vmatpush.msra.mxu0 %v204
    %5992 = vmatpush.msra.mxu0 %v200
    %5993 = vmatpush.msra.mxu0 %v196
    %5994 = vmatpush.msra.mxu0 %v192
    %5995 = vmatpush.msra.mxu0 %v188
    %5996 = vmatmul.f32.gmra.mxu0 %v5745
    %v5997 = vpop.f32.mrf.mxu0
    %v5998 = vadd.f32 %v5932, %v5997
    %5999 = vmatmul.f32.gmra.mxu0 %v5748
    %v6000 = vpop.f32.mrf.mxu0
    %v6001 = vadd.f32 %v5932, %v6000
    %6002 = vdwg.mxu0
    %6003 = vmatpush.msra.mxu0 %v249
    %6004 = vmatpush.msra.mxu0 %v245
    %6005 = vmatpush.msra.mxu0 %v241
    %6006 = vmatpush.msra.mxu0 %v237
    %6007 = vmatpush.msra.mxu0 %v233
    %6008 = vmatpush.msra.mxu0 %v229
    %6009 = vmatpush.msra.mxu0 %v225
    %6010 = vmatpush.msra.mxu0 %v221
    %6011 = vmatpush.msra.mxu0 %v217
    %6012 = vmatpush.msra.mxu0 %v213
    %6013 = vmatpush.msra.mxu0 %v209
    %6014 = vmatpush.msra.mxu0 %v205
    %6015 = vmatpush.msra.mxu0 %v201
    %6016 = vmatpush.msra.mxu0 %v197
    %6017 = vmatpush.msra.mxu0 %v193
    %6018 = vmatpush.msra.mxu0 %v189
    %6019 = vmatmul.f32.gmra.mxu0 %v5745
    %v6020 = vpop.f32.mrf.mxu0
    %v6021 = vadd.f32 %v5933, %v6020
    %6022 = vmatmul.f32.gmra.mxu0 %v5748
    %v6023 = vpop.f32.mrf.mxu0
    %v6024 = vadd.f32 %v5933, %v6023
    %6025 = vdwg.mxu0
    %vm6026 = vcmp.gt.f32.partialorder %v5952, 0.0
    %vm6027 = vcmp.gt.f32.partialorder %v5975, 0.0
    %vm6028 = vcmp.gt.f32.partialorder %v5998, 0.0
    %vm6029 = vcmp.gt.f32.partialorder %v6021, 0.0
    %vm6030 = vcmp.gt.f32.partialorder %v5955, 0.0
    %vm6031 = vcmp.gt.f32.partialorder %v5978, 0.0
    %vm6032 = vcmp.gt.f32.partialorder %v6001, 0.0
    %vm6033 = vcmp.gt.f32.partialorder %v6024, 0.0
    %v6034 = vmul.f32 %v5952, 0.2
    %v6035 = vmul.f32 %v5975, 0.2
    %v6036 = vmul.f32 %v5998, 0.2
    %v6037 = vmul.f32 %v6021, 0.2
    %v6038 = vmul.f32 %v5955, 0.2
    %v6039 = vmul.f32 %v5978, 0.2
    %v6040 = vmul.f32 %v6001, 0.2
    %v6041 = vmul.f32 %v6024, 0.2
    %v6042 = vsel %vm6026, %v5952, %v6034
    %v6043 = vsel %vm6027, %v5975, %v6035
    %v6044 = vsel %vm6028, %v5998, %v6036
    %v6045 = vsel %vm6029, %v6021, %v6037
    %v6046 = vsel %vm6030, %v5955, %v6038
    %v6047 = vsel %vm6031, %v5978, %v6039
    %v6048 = vsel %vm6032, %v6001, %v6040
    %v6049 = vsel %vm6033, %v6024, %v6041
    %v6051 = vperm.slane %v5717, 0
    %v6052 = vperm.slane %v5717, 1
    %v6053 = vperm.slane %v5717, 2
    %v6054 = vperm.slane %v5717, 3
    %v6059 = vmul.f32 %v6042, %v6051
    %v6060 = vmul.f32 %v6043, %v6052
    %v6061 = vmul.f32 %v6044, %v6053
    %v6062 = vmul.f32 %v6045, %v6054
    %v6063 = vmul.f32 %v6046, %v6051
    %v6064 = vmul.f32 %v6047, %v6052
    %v6065 = vmul.f32 %v6048, %v6053
    %v6066 = vmul.f32 %v6049, %v6054
    %6067 = vmatpush.msra.mxu0 %v650
    %6068 = vmatpush.msra.mxu0 %v649
    %6069 = vmatpush.msra.mxu0 %v648
    %6070 = vmatpush.msra.mxu0 %v647
    %6071 = vmatpush.msra.mxu0 %v646
    %6072 = vmatpush.msra.mxu0 %v645
    %6073 = vmatpush.msra.mxu0 %v644
    %6074 = vmatpush.msra.mxu0 %v643
    %6075 = vmatpush.msra.mxu0 %v642
    %6076 = vmatpush.msra.mxu0 %v641
    %6077 = vmatpush.msra.mxu0 %v640
    %6078 = vmatpush.msra.mxu0 %v639
    %6079 = vmatpush.msra.mxu0 %v638
    %6080 = vmatpush.msra.mxu0 %v637
    %6081 = vmatpush.msra.mxu0 %v636
    %6082 = vmatpush.msra.mxu0 %v635
    %6083 = vmatmul.f32.gmra.mxu0 %v6059
    %v6084 = vpop.f32.mrf.mxu0
    %v6085 = vadd.f32 %v125, %v6084
    %6086 = vmatmul.f32.gmra.mxu0 %v6063
    %v6087 = vpop.f32.mrf.mxu0
    %v6088 = vadd.f32 %v126, %v6087
    %6089 = vdwg.mxu0
    %6090 = vmatpush.msra.mxu0 %v666
    %6091 = vmatpush.msra.mxu0 %v665
    %6092 = vmatpush.msra.mxu0 %v664
    %6093 = vmatpush.msra.mxu0 %v663
    %6094 = vmatpush.msra.mxu0 %v662
    %6095 = vmatpush.msra.mxu0 %v661
    %6096 = vmatpush.msra.mxu0 %v660
    %6097 = vmatpush.msra.mxu0 %v659
    %6098 = vmatpush.msra.mxu0 %v658
    %6099 = vmatpush.msra.mxu0 %v657
    %6100 = vmatpush.msra.mxu0 %v656
    %6101 = vmatpush.msra.mxu0 %v655
    %6102 = vmatpush.msra.mxu0 %v654
    %6103 = vmatpush.msra.mxu0 %v653
    %6104 = vmatpush.msra.mxu0 %v652
    %6105 = vmatpush.msra.mxu0 %v651
    %6106 = vmatmul.f32.gmra.mxu0 %v6060
    %v6107 = vpop.f32.mrf.mxu0
    %v6108 = vadd.f32 %v6085, %v6107
    %6109 = vmatmul.f32.gmra.mxu0 %v6064
    %v6110 = vpop.f32.mrf.mxu0
    %v6111 = vadd.f32 %v6088, %v6110
    %6112 = vdwg.mxu0
    %6113 = vmatpush.msra.mxu0 %v682
    %6114 = vmatpush.msra.mxu0 %v681
    %6115 = vmatpush.msra.mxu0 %v680
    %6116 = vmatpush.msra.mxu0 %v679
    %6117 = vmatpush.msra.mxu0 %v678
    %6118 = vmatpush.msra.mxu0 %v677
    %6119 = vmatpush.msra.mxu0 %v676
    %6120 = vmatpush.msra.mxu0 %v675
    %6121 = vmatpush.msra.mxu0 %v674
    %6122 = vmatpush.msra.mxu0 %v673
    %6123 = vmatpush.msra.mxu0 %v672
    %6124 = vmatpush.msra.mxu0 %v671
    %6125 = vmatpush.msra.mxu0 %v670
    %6126 = vmatpush.msra.mxu0 %v669
    %6127 = vmatpush.msra.mxu0 %v668
    %6128 = vmatpush.msra.mxu0 %v667
    %6129 = vmatmul.f32.gmra.mxu0 %v6061
    %v6130 = vpop.f32.mrf.mxu0
    %v6131 = vadd.f32 %v6108, %v6130
    %6132 = vmatmul.f32.gmra.mxu0 %v6065
    %v6133 = vpop.f32.mrf.mxu0
    %v6134 = vadd.f32 %v6111, %v6133
    %6135 = vdwg.mxu0
    %6136 = vmatpush.msra.mxu0 %v698
    %6137 = vmatpush.msra.mxu0 %v697
    %6138 = vmatpush.msra.mxu0 %v696
    %6139 = vmatpush.msra.mxu0 %v695
    %6140 = vmatpush.msra.mxu0 %v694
    %6141 = vmatpush.msra.mxu0 %v693
    %6142 = vmatpush.msra.mxu0 %v692
    %6143 = vmatpush.msra.mxu0 %v691
    %6144 = vmatpush.msra.mxu0 %v690
    %6145 = vmatpush.msra.mxu0 %v689
    %6146 = vmatpush.msra.mxu0 %v688
    %6147 = vmatpush.msra.mxu0 %v687
    %6148 = vmatpush.msra.mxu0 %v686
    %6149 = vmatpush.msra.mxu0 %v685
    %6150 = vmatpush.msra.mxu0 %v684
    %6151 = vmatpush.msra.mxu0 %v683
    %6152 = vmatmul.f32.gmra.mxu0 %v6062
    %v6153 = vpop.f32.mrf.mxu0
    %v6154 = vadd.f32 %v6131, %v6153
    %6155 = vmatmul.f32.gmra.mxu0 %v6066
    %v6156 = vpop.f32.mrf.mxu0
    %v6157 = vadd.f32 %v6134, %v6156
    %6158 = vdwg.mxu0
    %6159 = vrot.lane.b32.xlu0 %v6154, 8
    %v6160 = vpop.permute.xlu0 %6159
    %6161 = vrot.lane.b32.xlu0 %v6157, 8
    %v6162 = vpop.permute.xlu0 %6161
    %v6163 = vmax.f32 %v6154, %v6160
    %v6164 = vmax.f32 %v6157, %v6162
    %6165 = vrot.lane.b32.xlu0 %v6163, 16
    %v6166 = vpop.permute.xlu0 %6165
    %6167 = vrot.lane.b32.xlu0 %v6164, 16
    %v6168 = vpop.permute.xlu0 %6167
    %v6169 = vmax.f32 %v6163, %v6166
    %v6170 = vmax.f32 %v6164, %v6168
    %6171 = vrot.lane.b32.xlu0 %v6169, 32
    %v6172 = vpop.permute.xlu0 %6171
    %6173 = vrot.lane.b32.xlu0 %v6170, 32
    %v6174 = vpop.permute.xlu0 %6173
    %v6175 = vmax.f32 %v6169, %v6172
    %v6176 = vmax.f32 %v6170, %v6174
    %6177 = vrot.lane.b32.xlu0 %v6175, 64
    %v6178 = vpop.permute.xlu0 %6177
    %6179 = vrot.lane.b32.xlu0 %v6176, 64
    %v6180 = vpop.permute.xlu0 %6179
    %v6181 = vmax.f32 %v6175, %v6178
    %v6182 = vmax.f32 %v6176, %v6180
    %v6183 = vsub.f32 %v6154, %v6181
    %v6184 = vsub.f32 %v6157, %v6182
    %v6185 = vmul.f32 %v6183, 1.442695
    %v6186 = vpow.pop %v6185
    %v6187 = vmul.f32 %v6184, 1.442695
    %v6188 = vpow.pop %v6187
    %v6189 = vmul.f32 %v6186, %v127
    %v6190 = vmul.f32 %v6188, %v128
    %6191 = vmatpush.msra.mxu0 %v838
    %6192 = vmatpush.msra.mxu0 %v837
    %6193 = vmatpush.msra.mxu0 %v836
    %6194 = vmatpush.msra.mxu0 %v835
    %6195 = vmatpush.msra.mxu0 %v834
    %6196 = vmatpush.msra.mxu0 %v833
    %6197 = vmatpush.msra.mxu0 %v832
    %6198 = vmatpush.msra.mxu0 %v831
    %6199 = vmatpush.msra.mxu0 %v830
    %6200 = vmatpush.msra.mxu0 %v829
    %6201 = vmatpush.msra.mxu0 %v828
    %6202 = vmatpush.msra.mxu0 %v827
    %6203 = vmatpush.msra.mxu0 %v826
    %6204 = vmatpush.msra.mxu0 %v825
    %6205 = vmatpush.msra.mxu0 %v824
    %6206 = vmatpush.msra.mxu0 %v823
    %6207 = vmatmul.f32.gmra.mxu0 %v6189
    %v6208 = vpop.f32.mrf.mxu0
    %v6209 = vadd.f32 0.0, %v6208
    %6210 = vmatmul.f32.gmra.mxu0 %v6190
    %v6211 = vpop.f32.mrf.mxu0
    %v6212 = vadd.f32 0.0, %v6211
    %6213 = vdwg.mxu0
    %v6214 = vmax.f32 %v6209, 1e-30
    %v6215 = vmax.f32 %v6212, 1e-30
    %v6216 = vrcp.pop %v6214
    %v6217 = vmul.f32 %v6214, %v6216
    %v6218 = vsub.f32 1.0, %v6217
    %v6219 = vmul.f32 %v6216, %v6218
    %v6220 = vadd.f32 %v6216, %v6219
    %vm6221 = vweird.f32 %v6214
    %vm6222 = vweird.f32 %v6216
    %vm6223 = vmor %vm6221, %vm6222
    %v6224 = vsel %vm6223, %v6216, %v6220
    %v6225 = vand.u32 2147483647, %v6214
    %vm6226 = vcmp.eq.f32.partialorder %v6225, 8.507059e+37
    %v6227 = vand.u32 %v6214, 2147483648
    %v6228 = vor.u32 1.1754944e-38, %v6227
    %v6229 = vsel %vm6226, %v6228, %v6224
    %v6230 = vmul.f32 %v6189, %v6229
    %v6231 = vrcp.pop %v6215
    %v6232 = vmul.f32 %v6215, %v6231
    %v6233 = vsub.f32 1.0, %v6232
    %v6234 = vmul.f32 %v6231, %v6233
    %v6235 = vadd.f32 %v6231, %v6234
    %vm6236 = vweird.f32 %v6215
    %vm6237 = vweird.f32 %v6231
    %vm6238 = vmor %vm6236, %vm6237
    %v6239 = vsel %vm6238, %v6231, %v6235
    %v6240 = vand.u32 2147483647, %v6215
    %vm6241 = vcmp.eq.f32.partialorder %v6240, 8.507059e+37
    %v6242 = vand.u32 %v6215, 2147483648
    %v6243 = vor.u32 1.1754944e-38, %v6242
    %v6244 = vsel %vm6241, %v6243, %v6239
    %v6245 = vmul.f32 %v6190, %v6244
    %6246 = vmatpush.msra.mxu0 0.0
    %6247 = vmatpush.msra.mxu0 0.0
    %6248 = vmatpush.msra.mxu0 0.0
    %6249 = vmatpush.msra.mxu0 0.0
    %6250 = vmatpush.msra.mxu0 0.0
    %6251 = vmatpush.msra.mxu0 0.0
    %6252 = vmatpush.msra.mxu0 0.0
    %6253 = vmatpush.msra.mxu0 0.0
    %6254 = vmatpush.msra.mxu0 0.0
    %6255 = vmatpush.msra.mxu0 0.0
    %6256 = vmatpush.msra.mxu0 0.0
    %6257 = vmatpush.msra.mxu0 0.0
    %6258 = vmatpush.msra.mxu0 0.0
    %6259 = vmatpush.msra.mxu0 0.0
    %6260 = vmatpush.msra.mxu0 %v5748
    %6261 = vmatpush.msra.mxu0 %v5745
    %6262 = vmatmul.f32.gmra.mxu0 %v911
    %v6263 = vpop.f32.mrf.mxu0
    %v6264 = vadd.f32 0.0, %v6263
    %6265 = vmatmul.f32.gmra.mxu0 %v914
    %v6266 = vpop.f32.mrf.mxu0
    %v6267 = vadd.f32 0.0, %v6266
    %6268 = vmatmul.f32.gmra.mxu0 %v917
    %v6269 = vpop.f32.mrf.mxu0
    %v6270 = vadd.f32 0.0, %v6269
    %6271 = vmatmul.f32.gmra.mxu0 %v920
    %v6272 = vpop.f32.mrf.mxu0
    %v6273 = vadd.f32 0.0, %v6272
    %6274 = vmatmul.f32.gmra.mxu0 %v923
    %v6275 = vpop.f32.mrf.mxu0
    %v6276 = vadd.f32 0.0, %v6275
    %6277 = vmatmul.f32.gmra.mxu0 %v926
    %v6278 = vpop.f32.mrf.mxu0
    %v6279 = vadd.f32 0.0, %v6278
    %6280 = vmatmul.f32.gmra.mxu0 %v929
    %v6281 = vpop.f32.mrf.mxu0
    %v6282 = vadd.f32 0.0, %v6281
    %6283 = vmatmul.f32.gmra.mxu0 %v932
    %v6284 = vpop.f32.mrf.mxu0
    %v6285 = vadd.f32 0.0, %v6284
    %6286 = vmatmul.f32.gmra.mxu0 %v935
    %v6287 = vpop.f32.mrf.mxu0
    %v6288 = vadd.f32 0.0, %v6287
    %6289 = vmatmul.f32.gmra.mxu0 %v938
    %v6290 = vpop.f32.mrf.mxu0
    %v6291 = vadd.f32 0.0, %v6290
    %6292 = vmatmul.f32.gmra.mxu0 %v941
    %v6293 = vpop.f32.mrf.mxu0
    %v6294 = vadd.f32 0.0, %v6293
    %6295 = vmatmul.f32.gmra.mxu0 %v944
    %v6296 = vpop.f32.mrf.mxu0
    %v6297 = vadd.f32 0.0, %v6296
    %6298 = vmatmul.f32.gmra.mxu0 %v947
    %v6299 = vpop.f32.mrf.mxu0
    %v6300 = vadd.f32 0.0, %v6299
    %6301 = vmatmul.f32.gmra.mxu0 %v950
    %v6302 = vpop.f32.mrf.mxu0
    %v6303 = vadd.f32 0.0, %v6302
    %6304 = vmatmul.f32.gmra.mxu0 %v953
    %v6305 = vpop.f32.mrf.mxu0
    %v6306 = vadd.f32 0.0, %v6305
    %6307 = vmatmul.f32.gmra.mxu0 %v956
    %v6308 = vpop.f32.mrf.mxu0
    %v6309 = vadd.f32 0.0, %v6308
    %6310 = vdwg.mxu0
    %v6311 = vmul.f32 %v6264, %v129
    %v6312 = vmul.f32 %v6267, %v130
    %v6313 = vmul.f32 %v6270, %v131
    %v6314 = vmul.f32 %v6273, %v132
    %v6315 = vmul.f32 %v6276, %v133
    %v6316 = vmul.f32 %v6279, %v134
    %v6317 = vmul.f32 %v6282, %v135
    %v6318 = vmul.f32 %v6285, %v136
    %v6319 = vmul.f32 %v6288, %v137
    %v6320 = vmul.f32 %v6291, %v138
    %v6321 = vmul.f32 %v6294, %v139
    %v6322 = vmul.f32 %v6297, %v140
    %v6323 = vmul.f32 %v6300, %v141
    %v6324 = vmul.f32 %v6303, %v142
    %v6325 = vmul.f32 %v6306, %v143
    %v6326 = vmul.f32 %v6309, %v144
    %6329 = vrot.lane.b32.xlu0 %v5745, 64
    %v6330 = vpop.permute.xlu0 %6329
    %6331 = vrot.lane.b32.xlu0 %v5748, 64
    %v6332 = vpop.permute.xlu0 %6331
    %6335 = vmatpush.msra.mxu0 %v6326
    %6336 = vmatpush.msra.mxu0 %v6325
    %6337 = vmatpush.msra.mxu0 %v6324
    %6338 = vmatpush.msra.mxu0 %v6323
    %6339 = vmatpush.msra.mxu0 %v6322
    %6340 = vmatpush.msra.mxu0 %v6321
    %6341 = vmatpush.msra.mxu0 %v6320
    %6342 = vmatpush.msra.mxu0 %v6319
    %6343 = vmatpush.msra.mxu0 %v6318
    %6344 = vmatpush.msra.mxu0 %v6317
    %6345 = vmatpush.msra.mxu0 %v6316
    %6346 = vmatpush.msra.mxu0 %v6315
    %6347 = vmatpush.msra.mxu0 %v6314
    %6348 = vmatpush.msra.mxu0 %v6313
    %6349 = vmatpush.msra.mxu0 %v6312
    %6350 = vmatpush.msra.mxu0 %v6311
    %6351 = vmatmul.f32.gmra.mxu0 %v6230
    %v6352 = vpop.f32.mrf.mxu0
    %v6353 = vadd.f32 %v6330, %v6352
    %6354 = vmatmul.f32.gmra.mxu0 %v6245
    %v6355 = vpop.f32.mrf.mxu0
    %v6356 = vadd.f32 %v6332, %v6355
    %6357 = vdwg.mxu0
    %vm6358 = vcmp.gt.f32.partialorder %v6353, 0.0
    %vm6359 = vcmp.gt.f32.partialorder %v6356, 0.0
    %v6360 = vmin.f32 %v6353, 0.0
    %v6361 = vmin.f32 %v6356, 0.0
    %v6362 = vmul.f32 %v6360, 1.442695
    %v6363 = vpow.pop %v6362
    %v6364 = vmul.f32 %v6361, 1.442695
    %v6365 = vpow.pop %v6364
    %v6366 = vsub.f32 %v6363, 1.0
    %v6367 = vsub.f32 %v6365, 1.0
    %v6368 = vsel %vm6358, %v6353, %v6366
    %v6369 = vsel %vm6359, %v6356, %v6367
    %s6370 = scalar_lea.vmem [#allocation2], 288
    %v6371 = vld [vmem:[%s6370] sm:$0xff]
    %v6372 = vld [vmem:[%s6370 + $0x8] sm:$0xff]
    %v6373 = vld [vmem:[%s6370 + $0x10] sm:$0xff]
    %v6374 = vld [vmem:[%s6370 + $0x18] sm:$0xff]
    %s6375 = scalar_lea.vmem %s2, 9
    %v6376 = vld [vmem:[%s6375] sm:$0x1]
    %s6377 = scalar_lea.vmem %s3, 36
    %v6378 = vld [vmem:[%s6377] sm:$0xf]
    %v6380 = vperm.slane %v6376, 0
    %v6383 = vsel %vm156, %v6368, 0
    %v6386 = vsel %vm156, %v6369, 0
    %6388 = vmatpush.msra.mxu0 0.0
    %6389 = vmatpush.msra.mxu0 0.0
    %6390 = vmatpush.msra.mxu0 0.0
    %6391 = vmatpush.msra.mxu0 0.0
    %6392 = vmatpush.msra.mxu0 0.0
    %6393 = vmatpush.msra.mxu0 0.0
    %6394 = vmatpush.msra.mxu0 0.0
    %6395 = vmatpush.msra.mxu0 0.0
    %6396 = vmatpush.msra.mxu0 0.0
    %6397 = vmatpush.msra.mxu0 0.0
    %6398 = vmatpush.msra.mxu0 0.0
    %6399 = vmatpush.msra.mxu0 0.0
    %6400 = vmatpush.msra.mxu0 %v6374
    %6401 = vmatpush.msra.mxu0 %v6373
    %6402 = vmatpush.msra.mxu0 %v6372
    %6403 = vmatpush.msra.mxu0 %v6371
    %6404 = vmatmul.f32.gmra.mxu0 %v6383
    %v6405 = vpop.f32.mrf.mxu0
    %v6406 = vadd.f32 %v6380, %v6405
    %6407 = vmatmul.f32.gmra.mxu0 %v6386
    %v6408 = vpop.f32.mrf.mxu0
    %v6409 = vadd.f32 %v6380, %v6408
    %6410 = vdwg.mxu0
    %6411 = vmatpush.msra.mxu0 %v310
    %6412 = vmatpush.msra.mxu0 %v306
    %6413 = vmatpush.msra.mxu0 %v302
    %6414 = vmatpush.msra.mxu0 %v298
    %6415 = vmatpush.msra.mxu0 %v294
    %6416 = vmatpush.msra.mxu0 %v290
    %6417 = vmatpush.msra.mxu0 %v286
    %6418 = vmatpush.msra.mxu0 %v282
    %6419 = vmatpush.msra.mxu0 %v278
    %6420 = vmatpush.msra.mxu0 %v274
    %6421 = vmatpush.msra.mxu0 %v270
    %6422 = vmatpush.msra.mxu0 %v266
    %6423 = vmatpush.msra.mxu0 %v262
    %6424 = vmatpush.msra.mxu0 %v258
    %6425 = vmatpush.msra.mxu0 %v254
    %6426 = vmatpush.msra.mxu0 %v250
    %6427 = vmatmul.f32.gmra.mxu0 %v6406
    %v6428 = vpop.f32.mrf.mxu0
    %v6429 = vadd.f32 0.0, %v6428
    %6430 = vmatmul.f32.gmra.mxu0 %v6409
    %v6431 = vpop.f32.mrf.mxu0
    %v6432 = vadd.f32 0.0, %v6431
    %6433 = vdwg.mxu0
    %6434 = vmatpush.msra.mxu0 %v311
    %6435 = vmatpush.msra.mxu0 %v307
    %6436 = vmatpush.msra.mxu0 %v303
    %6437 = vmatpush.msra.mxu0 %v299
    %6438 = vmatpush.msra.mxu0 %v295
    %6439 = vmatpush.msra.mxu0 %v291
    %6440 = vmatpush.msra.mxu0 %v287
    %6441 = vmatpush.msra.mxu0 %v283
    %6442 = vmatpush.msra.mxu0 %v279
    %6443 = vmatpush.msra.mxu0 %v275
    %6444 = vmatpush.msra.mxu0 %v271
    %6445 = vmatpush.msra.mxu0 %v267
    %6446 = vmatpush.msra.mxu0 %v263
    %6447 = vmatpush.msra.mxu0 %v259
    %6448 = vmatpush.msra.mxu0 %v255
    %6449 = vmatpush.msra.mxu0 %v251
    %6450 = vmatmul.f32.gmra.mxu0 %v6406
    %v6451 = vpop.f32.mrf.mxu0
    %v6452 = vadd.f32 0.0, %v6451
    %6453 = vmatmul.f32.gmra.mxu0 %v6409
    %v6454 = vpop.f32.mrf.mxu0
    %v6455 = vadd.f32 0.0, %v6454
    %6456 = vdwg.mxu0
    %6457 = vmatpush.msra.mxu0 %v312
    %6458 = vmatpush.msra.mxu0 %v308
    %6459 = vmatpush.msra.mxu0 %v304
    %6460 = vmatpush.msra.mxu0 %v300
    %6461 = vmatpush.msra.mxu0 %v296
    %6462 = vmatpush.msra.mxu0 %v292
    %6463 = vmatpush.msra.mxu0 %v288
    %6464 = vmatpush.msra.mxu0 %v284
    %6465 = vmatpush.msra.mxu0 %v280
    %6466 = vmatpush.msra.mxu0 %v276
    %6467 = vmatpush.msra.mxu0 %v272
    %6468 = vmatpush.msra.mxu0 %v268
    %6469 = vmatpush.msra.mxu0 %v264
    %6470 = vmatpush.msra.mxu0 %v260
    %6471 = vmatpush.msra.mxu0 %v256
    %6472 = vmatpush.msra.mxu0 %v252
    %6473 = vmatmul.f32.gmra.mxu0 %v6406
    %v6474 = vpop.f32.mrf.mxu0
    %v6475 = vadd.f32 0.0, %v6474
    %6476 = vmatmul.f32.gmra.mxu0 %v6409
    %v6477 = vpop.f32.mrf.mxu0
    %v6478 = vadd.f32 0.0, %v6477
    %6479 = vdwg.mxu0
    %6480 = vmatpush.msra.mxu0 %v313
    %6481 = vmatpush.msra.mxu0 %v309
    %6482 = vmatpush.msra.mxu0 %v305
    %6483 = vmatpush.msra.mxu0 %v301
    %6484 = vmatpush.msra.mxu0 %v297
    %6485 = vmatpush.msra.mxu0 %v293
    %6486 = vmatpush.msra.mxu0 %v289
    %6487 = vmatpush.msra.mxu0 %v285
    %6488 = vmatpush.msra.mxu0 %v281
    %6489 = vmatpush.msra.mxu0 %v277
    %6490 = vmatpush.msra.mxu0 %v273
    %6491 = vmatpush.msra.mxu0 %v269
    %6492 = vmatpush.msra.mxu0 %v265
    %6493 = vmatpush.msra.mxu0 %v261
    %6494 = vmatpush.msra.mxu0 %v257
    %6495 = vmatpush.msra.mxu0 %v253
    %6496 = vmatmul.f32.gmra.mxu0 %v6406
    %v6497 = vpop.f32.mrf.mxu0
    %v6498 = vadd.f32 0.0, %v6497
    %6499 = vmatmul.f32.gmra.mxu0 %v6409
    %v6500 = vpop.f32.mrf.mxu0
    %v6501 = vadd.f32 0.0, %v6500
    %6502 = vdwg.mxu0
    %v6503 = vmul.f32 %v6429, %v117
    %v6504 = vmul.f32 %v6452, %v118
    %v6505 = vmul.f32 %v6475, %v119
    %v6506 = vmul.f32 %v6498, %v120
    %v6507 = vmul.f32 %v6432, %v121
    %v6508 = vmul.f32 %v6455, %v122
    %v6509 = vmul.f32 %v6478, %v123
    %v6510 = vmul.f32 %v6501, %v124
    %6511 = vmatpush.msra.mxu0 0.0
    %6512 = vmatpush.msra.mxu0 0.0
    %6513 = vmatpush.msra.mxu0 0.0
    %6514 = vmatpush.msra.mxu0 0.0
    %6515 = vmatpush.msra.mxu0 0.0
    %6516 = vmatpush.msra.mxu0 0.0
    %6517 = vmatpush.msra.mxu0 0.0
    %6518 = vmatpush.msra.mxu0 0.0
    %6519 = vmatpush.msra.mxu0 0.0
    %6520 = vmatpush.msra.mxu0 0.0
    %6521 = vmatpush.msra.mxu0 0.0
    %6522 = vmatpush.msra.mxu0 0.0
    %6523 = vmatpush.msra.mxu0 0.0
    %6524 = vmatpush.msra.mxu0 0.0
    %6525 = vmatpush.msra.mxu0 %v6507
    %6526 = vmatpush.msra.mxu0 %v6503
    %6527 = vmatmul.f32.gmra.mxu0 %v416
    %v6528 = vpop.f32.mrf.mxu0
    %v6529 = vadd.f32 0.0, %v6528
    %6530 = vdwg.mxu0
    %6531 = vmatpush.msra.mxu0 0.0
    %6532 = vmatpush.msra.mxu0 0.0
    %6533 = vmatpush.msra.mxu0 0.0
    %6534 = vmatpush.msra.mxu0 0.0
    %6535 = vmatpush.msra.mxu0 0.0
    %6536 = vmatpush.msra.mxu0 0.0
    %6537 = vmatpush.msra.mxu0 0.0
    %6538 = vmatpush.msra.mxu0 0.0
    %6539 = vmatpush.msra.mxu0 0.0
    %6540 = vmatpush.msra.mxu0 0.0
    %6541 = vmatpush.msra.mxu0 0.0
    %6542 = vmatpush.msra.mxu0 0.0
    %6543 = vmatpush.msra.mxu0 0.0
    %6544 = vmatpush.msra.mxu0 0.0
    %6545 = vmatpush.msra.mxu0 %v6508
    %6546 = vmatpush.msra.mxu0 %v6504
    %6547 = vmatmul.f32.gmra.mxu0 %v416
    %v6548 = vpop.f32.mrf.mxu0
    %v6549 = vadd.f32 0.0, %v6548
    %6550 = vdwg.mxu0
    %6551 = vmatpush.msra.mxu0 0.0
    %6552 = vmatpush.msra.mxu0 0.0
    %6553 = vmatpush.msra.mxu0 0.0
    %6554 = vmatpush.msra.mxu0 0.0
    %6555 = vmatpush.msra.mxu0 0.0
    %6556 = vmatpush.msra.mxu0 0.0
    %6557 = vmatpush.msra.mxu0 0.0
    %6558 = vmatpush.msra.mxu0 0.0
    %6559 = vmatpush.msra.mxu0 0.0
    %6560 = vmatpush.msra.mxu0 0.0
    %6561 = vmatpush.msra.mxu0 0.0
    %6562 = vmatpush.msra.mxu0 0.0
    %6563 = vmatpush.msra.mxu0 0.0
    %6564 = vmatpush.msra.mxu0 0.0
    %6565 = vmatpush.msra.mxu0 %v6509
    %6566 = vmatpush.msra.mxu0 %v6505
    %6567 = vmatmul.f32.gmra.mxu0 %v416
    %v6568 = vpop.f32.mrf.mxu0
    %v6569 = vadd.f32 0.0, %v6568
    %6570 = vdwg.mxu0
    %6571 = vmatpush.msra.mxu0 0.0
    %6572 = vmatpush.msra.mxu0 0.0
    %6573 = vmatpush.msra.mxu0 0.0
    %6574 = vmatpush.msra.mxu0 0.0
    %6575 = vmatpush.msra.mxu0 0.0
    %6576 = vmatpush.msra.mxu0 0.0
    %6577 = vmatpush.msra.mxu0 0.0
    %6578 = vmatpush.msra.mxu0 0.0
    %6579 = vmatpush.msra.mxu0 0.0
    %6580 = vmatpush.msra.mxu0 0.0
    %6581 = vmatpush.msra.mxu0 0.0
    %6582 = vmatpush.msra.mxu0 0.0
    %6583 = vmatpush.msra.mxu0 0.0
    %6584 = vmatpush.msra.mxu0 0.0
    %6585 = vmatpush.msra.mxu0 %v6510
    %6586 = vmatpush.msra.mxu0 %v6506
    %6587 = vmatmul.f32.gmra.mxu0 %v416
    %v6588 = vpop.f32.mrf.mxu0
    %v6589 = vadd.f32 0.0, %v6588
    %6590 = vdwg.mxu0
    %v6591 = vperm.slane %v6529, 0
    %v6592 = vperm.slane %v6549, 0
    %v6593 = vperm.slane %v6569, 0
    %v6594 = vperm.slane %v6589, 0
    %6595 = vmatpush.msra.mxu0 %v246
    %6596 = vmatpush.msra.mxu0 %v242
    %6597 = vmatpush.msra.mxu0 %v238
    %6598 = vmatpush.msra.mxu0 %v234
    %6599 = vmatpush.msra.mxu0 %v230
    %6600 = vmatpush.msra.mxu0 %v226
    %6601 = vmatpush.msra.mxu0 %v222
    %6602 = vmatpush.msra.mxu0 %v218
    %6603 = vmatpush.msra.mxu0 %v214
    %6604 = vmatpush.msra.mxu0 %v210
    %6605 = vmatpush.msra.mxu0 %v206
    %6606 = vmatpush.msra.mxu0 %v202
    %6607 = vmatpush.msra.mxu0 %v198
    %6608 = vmatpush.msra.mxu0 %v194
    %6609 = vmatpush.msra.mxu0 %v190
    %6610 = vmatpush.msra.mxu0 %v186
    %6611 = vmatmul.f32.gmra.mxu0 %v6406
    %v6612 = vpop.f32.mrf.mxu0
    %v6613 = vadd.f32 %v6591, %v6612
    %6614 = vmatmul.f32.gmra.mxu0 %v6409
    %v6615 = vpop.f32.mrf.mxu0
    %v6616 = vadd.f32 %v6591, %v6615
    %6617 = vdwg.mxu0
    %6618 = vmatpush.msra.mxu0 %v247
    %6619 = vmatpush.msra.mxu0 %v243
    %6620 = vmatpush.msra.mxu0 %v239
    %6621 = vmatpush.msra.mxu0 %v235
    %6622 = vmatpush.msra.mxu0 %v231
    %6623 = vmatpush.msra.mxu0 %v227
    %6624 = vmatpush.msra.mxu0 %v223
    %6625 = vmatpush.msra.mxu0 %v219
    %6626 = vmatpush.msra.mxu0 %v215
    %6627 = vmatpush.msra.mxu0 %v211
    %6628 = vmatpush.msra.mxu0 %v207
    %6629 = vmatpush.msra.mxu0 %v203
    %6630 = vmatpush.msra.mxu0 %v199
    %6631 = vmatpush.msra.mxu0 %v195
    %6632 = vmatpush.msra.mxu0 %v191
    %6633 = vmatpush.msra.mxu0 %v187
    %6634 = vmatmul.f32.gmra.mxu0 %v6406
    %v6635 = vpop.f32.mrf.mxu0
    %v6636 = vadd.f32 %v6592, %v6635
    %6637 = vmatmul.f32.gmra.mxu0 %v6409
    %v6638 = vpop.f32.mrf.mxu0
    %v6639 = vadd.f32 %v6592, %v6638
    %6640 = vdwg.mxu0
    %6641 = vmatpush.msra.mxu0 %v248
    %6642 = vmatpush.msra.mxu0 %v244
    %6643 = vmatpush.msra.mxu0 %v240
    %6644 = vmatpush.msra.mxu0 %v236
    %6645 = vmatpush.msra.mxu0 %v232
    %6646 = vmatpush.msra.mxu0 %v228
    %6647 = vmatpush.msra.mxu0 %v224
    %6648 = vmatpush.msra.mxu0 %v220
    %6649 = vmatpush.msra.mxu0 %v216
    %6650 = vmatpush.msra.mxu0 %v212
    %6651 = vmatpush.msra.mxu0 %v208
    %6652 = vmatpush.msra.mxu0 %v204
    %6653 = vmatpush.msra.mxu0 %v200
    %6654 = vmatpush.msra.mxu0 %v196
    %6655 = vmatpush.msra.mxu0 %v192
    %6656 = vmatpush.msra.mxu0 %v188
    %6657 = vmatmul.f32.gmra.mxu0 %v6406
    %v6658 = vpop.f32.mrf.mxu0
    %v6659 = vadd.f32 %v6593, %v6658
    %6660 = vmatmul.f32.gmra.mxu0 %v6409
    %v6661 = vpop.f32.mrf.mxu0
    %v6662 = vadd.f32 %v6593, %v6661
    %6663 = vdwg.mxu0
    %6664 = vmatpush.msra.mxu0 %v249
    %6665 = vmatpush.msra.mxu0 %v245
    %6666 = vmatpush.msra.mxu0 %v241
    %6667 = vmatpush.msra.mxu0 %v237
    %6668 = vmatpush.msra.mxu0 %v233
    %6669 = vmatpush.msra.mxu0 %v229
    %6670 = vmatpush.msra.mxu0 %v225
    %6671 = vmatpush.msra.mxu0 %v221
    %6672 = vmatpush.msra.mxu0 %v217
    %6673 = vmatpush.msra.mxu0 %v213
    %6674 = vmatpush.msra.mxu0 %v209
    %6675 = vmatpush.msra.mxu0 %v205
    %6676 = vmatpush.msra.mxu0 %v201
    %6677 = vmatpush.msra.mxu0 %v197
    %6678 = vmatpush.msra.mxu0 %v193
    %6679 = vmatpush.msra.mxu0 %v189
    %6680 = vmatmul.f32.gmra.mxu0 %v6406
    %v6681 = vpop.f32.mrf.mxu0
    %v6682 = vadd.f32 %v6594, %v6681
    %6683 = vmatmul.f32.gmra.mxu0 %v6409
    %v6684 = vpop.f32.mrf.mxu0
    %v6685 = vadd.f32 %v6594, %v6684
    %6686 = vdwg.mxu0
    %vm6687 = vcmp.gt.f32.partialorder %v6613, 0.0
    %vm6688 = vcmp.gt.f32.partialorder %v6636, 0.0
    %vm6689 = vcmp.gt.f32.partialorder %v6659, 0.0
    %vm6690 = vcmp.gt.f32.partialorder %v6682, 0.0
    %vm6691 = vcmp.gt.f32.partialorder %v6616, 0.0
    %vm6692 = vcmp.gt.f32.partialorder %v6639, 0.0
    %vm6693 = vcmp.gt.f32.partialorder %v6662, 0.0
    %vm6694 = vcmp.gt.f32.partialorder %v6685, 0.0
    %v6695 = vmul.f32 %v6613, 0.2
    %v6696 = vmul.f32 %v6636, 0.2
    %v6697 = vmul.f32 %v6659, 0.2
    %v6698 = vmul.f32 %v6682, 0.2
    %v6699 = vmul.f32 %v6616, 0.2
    %v6700 = vmul.f32 %v6639, 0.2
    %v6701 = vmul.f32 %v6662, 0.2
    %v6702 = vmul.f32 %v6685, 0.2
    %v6703 = vsel %vm6687, %v6613, %v6695
    %v6704 = vsel %vm6688, %v6636, %v6696
    %v6705 = vsel %vm6689, %v6659, %v6697
    %v6706 = vsel %vm6690, %v6682, %v6698
    %v6707 = vsel %vm6691, %v6616, %v6699
    %v6708 = vsel %vm6692, %v6639, %v6700
    %v6709 = vsel %vm6693, %v6662, %v6701
    %v6710 = vsel %vm6694, %v6685, %v6702
    %v6712 = vperm.slane %v6378, 0
    %v6713 = vperm.slane %v6378, 1
    %v6714 = vperm.slane %v6378, 2
    %v6715 = vperm.slane %v6378, 3
    %v6720 = vmul.f32 %v6703, %v6712
    %v6721 = vmul.f32 %v6704, %v6713
    %v6722 = vmul.f32 %v6705, %v6714
    %v6723 = vmul.f32 %v6706, %v6715
    %v6724 = vmul.f32 %v6707, %v6712
    %v6725 = vmul.f32 %v6708, %v6713
    %v6726 = vmul.f32 %v6709, %v6714
    %v6727 = vmul.f32 %v6710, %v6715
    %6728 = vmatpush.msra.mxu0 %v650
    %6729 = vmatpush.msra.mxu0 %v649
    %6730 = vmatpush.msra.mxu0 %v648
    %6731 = vmatpush.msra.mxu0 %v647
    %6732 = vmatpush.msra.mxu0 %v646
    %6733 = vmatpush.msra.mxu0 %v645
    %6734 = vmatpush.msra.mxu0 %v644
    %6735 = vmatpush.msra.mxu0 %v643
    %6736 = vmatpush.msra.mxu0 %v642
    %6737 = vmatpush.msra.mxu0 %v641
    %6738 = vmatpush.msra.mxu0 %v640
    %6739 = vmatpush.msra.mxu0 %v639
    %6740 = vmatpush.msra.mxu0 %v638
    %6741 = vmatpush.msra.mxu0 %v637
    %6742 = vmatpush.msra.mxu0 %v636
    %6743 = vmatpush.msra.mxu0 %v635
    %6744 = vmatmul.f32.gmra.mxu0 %v6720
    %v6745 = vpop.f32.mrf.mxu0
    %v6746 = vadd.f32 %v125, %v6745
    %6747 = vmatmul.f32.gmra.mxu0 %v6724
    %v6748 = vpop.f32.mrf.mxu0
    %v6749 = vadd.f32 %v126, %v6748
    %6750 = vdwg.mxu0
    %6751 = vmatpush.msra.mxu0 %v666
    %6752 = vmatpush.msra.mxu0 %v665
    %6753 = vmatpush.msra.mxu0 %v664
    %6754 = vmatpush.msra.mxu0 %v663
    %6755 = vmatpush.msra.mxu0 %v662
    %6756 = vmatpush.msra.mxu0 %v661
    %6757 = vmatpush.msra.mxu0 %v660
    %6758 = vmatpush.msra.mxu0 %v659
    %6759 = vmatpush.msra.mxu0 %v658
    %6760 = vmatpush.msra.mxu0 %v657
    %6761 = vmatpush.msra.mxu0 %v656
    %6762 = vmatpush.msra.mxu0 %v655
    %6763 = vmatpush.msra.mxu0 %v654
    %6764 = vmatpush.msra.mxu0 %v653
    %6765 = vmatpush.msra.mxu0 %v652
    %6766 = vmatpush.msra.mxu0 %v651
    %6767 = vmatmul.f32.gmra.mxu0 %v6721
    %v6768 = vpop.f32.mrf.mxu0
    %v6769 = vadd.f32 %v6746, %v6768
    %6770 = vmatmul.f32.gmra.mxu0 %v6725
    %v6771 = vpop.f32.mrf.mxu0
    %v6772 = vadd.f32 %v6749, %v6771
    %6773 = vdwg.mxu0
    %6774 = vmatpush.msra.mxu0 %v682
    %6775 = vmatpush.msra.mxu0 %v681
    %6776 = vmatpush.msra.mxu0 %v680
    %6777 = vmatpush.msra.mxu0 %v679
    %6778 = vmatpush.msra.mxu0 %v678
    %6779 = vmatpush.msra.mxu0 %v677
    %6780 = vmatpush.msra.mxu0 %v676
    %6781 = vmatpush.msra.mxu0 %v675
    %6782 = vmatpush.msra.mxu0 %v674
    %6783 = vmatpush.msra.mxu0 %v673
    %6784 = vmatpush.msra.mxu0 %v672
    %6785 = vmatpush.msra.mxu0 %v671
    %6786 = vmatpush.msra.mxu0 %v670
    %6787 = vmatpush.msra.mxu0 %v669
    %6788 = vmatpush.msra.mxu0 %v668
    %6789 = vmatpush.msra.mxu0 %v667
    %6790 = vmatmul.f32.gmra.mxu0 %v6722
    %v6791 = vpop.f32.mrf.mxu0
    %v6792 = vadd.f32 %v6769, %v6791
    %6793 = vmatmul.f32.gmra.mxu0 %v6726
    %v6794 = vpop.f32.mrf.mxu0
    %v6795 = vadd.f32 %v6772, %v6794
    %6796 = vdwg.mxu0
    %6797 = vmatpush.msra.mxu0 %v698
    %6798 = vmatpush.msra.mxu0 %v697
    %6799 = vmatpush.msra.mxu0 %v696
    %6800 = vmatpush.msra.mxu0 %v695
    %6801 = vmatpush.msra.mxu0 %v694
    %6802 = vmatpush.msra.mxu0 %v693
    %6803 = vmatpush.msra.mxu0 %v692
    %6804 = vmatpush.msra.mxu0 %v691
    %6805 = vmatpush.msra.mxu0 %v690
    %6806 = vmatpush.msra.mxu0 %v689
    %6807 = vmatpush.msra.mxu0 %v688
    %6808 = vmatpush.msra.mxu0 %v687
    %6809 = vmatpush.msra.mxu0 %v686
    %6810 = vmatpush.msra.mxu0 %v685
    %6811 = vmatpush.msra.mxu0 %v684
    %6812 = vmatpush.msra.mxu0 %v683
    %6813 = vmatmul.f32.gmra.mxu0 %v6723
    %v6814 = vpop.f32.mrf.mxu0
    %v6815 = vadd.f32 %v6792, %v6814
    %6816 = vmatmul.f32.gmra.mxu0 %v6727
    %v6817 = vpop.f32.mrf.mxu0
    %v6818 = vadd.f32 %v6795, %v6817
    %6819 = vdwg.mxu0
    %6820 = vrot.lane.b32.xlu0 %v6815, 8
    %v6821 = vpop.permute.xlu0 %6820
    %6822 = vrot.lane.b32.xlu0 %v6818, 8
    %v6823 = vpop.permute.xlu0 %6822
    %v6824 = vmax.f32 %v6815, %v6821
    %v6825 = vmax.f32 %v6818, %v6823
    %6826 = vrot.lane.b32.xlu0 %v6824, 16
    %v6827 = vpop.permute.xlu0 %6826
    %6828 = vrot.lane.b32.xlu0 %v6825, 16
    %v6829 = vpop.permute.xlu0 %6828
    %v6830 = vmax.f32 %v6824, %v6827
    %v6831 = vmax.f32 %v6825, %v6829
    %6832 = vrot.lane.b32.xlu0 %v6830, 32
    %v6833 = vpop.permute.xlu0 %6832
    %6834 = vrot.lane.b32.xlu0 %v6831, 32
    %v6835 = vpop.permute.xlu0 %6834
    %v6836 = vmax.f32 %v6830, %v6833
    %v6837 = vmax.f32 %v6831, %v6835
    %6838 = vrot.lane.b32.xlu0 %v6836, 64
    %v6839 = vpop.permute.xlu0 %6838
    %6840 = vrot.lane.b32.xlu0 %v6837, 64
    %v6841 = vpop.permute.xlu0 %6840
    %v6842 = vmax.f32 %v6836, %v6839
    %v6843 = vmax.f32 %v6837, %v6841
    %v6844 = vsub.f32 %v6815, %v6842
    %v6845 = vsub.f32 %v6818, %v6843
    %v6846 = vmul.f32 %v6844, 1.442695
    %v6847 = vpow.pop %v6846
    %v6848 = vmul.f32 %v6845, 1.442695
    %v6849 = vpow.pop %v6848
    %v6850 = vmul.f32 %v6847, %v127
    %v6851 = vmul.f32 %v6849, %v128
    %6852 = vmatpush.msra.mxu0 %v838
    %6853 = vmatpush.msra.mxu0 %v837
    %6854 = vmatpush.msra.mxu0 %v836
    %6855 = vmatpush.msra.mxu0 %v835
    %6856 = vmatpush.msra.mxu0 %v834
    %6857 = vmatpush.msra.mxu0 %v833
    %6858 = vmatpush.msra.mxu0 %v832
    %6859 = vmatpush.msra.mxu0 %v831
    %6860 = vmatpush.msra.mxu0 %v830
    %6861 = vmatpush.msra.mxu0 %v829
    %6862 = vmatpush.msra.mxu0 %v828
    %6863 = vmatpush.msra.mxu0 %v827
    %6864 = vmatpush.msra.mxu0 %v826
    %6865 = vmatpush.msra.mxu0 %v825
    %6866 = vmatpush.msra.mxu0 %v824
    %6867 = vmatpush.msra.mxu0 %v823
    %6868 = vmatmul.f32.gmra.mxu0 %v6850
    %v6869 = vpop.f32.mrf.mxu0
    %v6870 = vadd.f32 0.0, %v6869
    %6871 = vmatmul.f32.gmra.mxu0 %v6851
    %v6872 = vpop.f32.mrf.mxu0
    %v6873 = vadd.f32 0.0, %v6872
    %6874 = vdwg.mxu0
    %v6875 = vmax.f32 %v6870, 1e-30
    %v6876 = vmax.f32 %v6873, 1e-30
    %v6877 = vrcp.pop %v6875
    %v6878 = vmul.f32 %v6875, %v6877
    %v6879 = vsub.f32 1.0, %v6878
    %v6880 = vmul.f32 %v6877, %v6879
    %v6881 = vadd.f32 %v6877, %v6880
    %vm6882 = vweird.f32 %v6875
    %vm6883 = vweird.f32 %v6877
    %vm6884 = vmor %vm6882, %vm6883
    %v6885 = vsel %vm6884, %v6877, %v6881
    %v6886 = vand.u32 2147483647, %v6875
    %vm6887 = vcmp.eq.f32.partialorder %v6886, 8.507059e+37
    %v6888 = vand.u32 %v6875, 2147483648
    %v6889 = vor.u32 1.1754944e-38, %v6888
    %v6890 = vsel %vm6887, %v6889, %v6885
    %v6891 = vmul.f32 %v6850, %v6890
    %v6892 = vrcp.pop %v6876
    %v6893 = vmul.f32 %v6876, %v6892
    %v6894 = vsub.f32 1.0, %v6893
    %v6895 = vmul.f32 %v6892, %v6894
    %v6896 = vadd.f32 %v6892, %v6895
    %vm6897 = vweird.f32 %v6876
    %vm6898 = vweird.f32 %v6892
    %vm6899 = vmor %vm6897, %vm6898
    %v6900 = vsel %vm6899, %v6892, %v6896
    %v6901 = vand.u32 2147483647, %v6876
    %vm6902 = vcmp.eq.f32.partialorder %v6901, 8.507059e+37
    %v6903 = vand.u32 %v6876, 2147483648
    %v6904 = vor.u32 1.1754944e-38, %v6903
    %v6905 = vsel %vm6902, %v6904, %v6900
    %v6906 = vmul.f32 %v6851, %v6905
    %6907 = vmatpush.msra.mxu0 0.0
    %6908 = vmatpush.msra.mxu0 0.0
    %6909 = vmatpush.msra.mxu0 0.0
    %6910 = vmatpush.msra.mxu0 0.0
    %6911 = vmatpush.msra.mxu0 0.0
    %6912 = vmatpush.msra.mxu0 0.0
    %6913 = vmatpush.msra.mxu0 0.0
    %6914 = vmatpush.msra.mxu0 0.0
    %6915 = vmatpush.msra.mxu0 0.0
    %6916 = vmatpush.msra.mxu0 0.0
    %6917 = vmatpush.msra.mxu0 0.0
    %6918 = vmatpush.msra.mxu0 0.0
    %6919 = vmatpush.msra.mxu0 0.0
    %6920 = vmatpush.msra.mxu0 0.0
    %6921 = vmatpush.msra.mxu0 %v6409
    %6922 = vmatpush.msra.mxu0 %v6406
    %6923 = vmatmul.f32.gmra.mxu0 %v911
    %v6924 = vpop.f32.mrf.mxu0
    %v6925 = vadd.f32 0.0, %v6924
    %6926 = vmatmul.f32.gmra.mxu0 %v914
    %v6927 = vpop.f32.mrf.mxu0
    %v6928 = vadd.f32 0.0, %v6927
    %6929 = vmatmul.f32.gmra.mxu0 %v917
    %v6930 = vpop.f32.mrf.mxu0
    %v6931 = vadd.f32 0.0, %v6930
    %6932 = vmatmul.f32.gmra.mxu0 %v920
    %v6933 = vpop.f32.mrf.mxu0
    %v6934 = vadd.f32 0.0, %v6933
    %6935 = vmatmul.f32.gmra.mxu0 %v923
    %v6936 = vpop.f32.mrf.mxu0
    %v6937 = vadd.f32 0.0, %v6936
    %6938 = vmatmul.f32.gmra.mxu0 %v926
    %v6939 = vpop.f32.mrf.mxu0
    %v6940 = vadd.f32 0.0, %v6939
    %6941 = vmatmul.f32.gmra.mxu0 %v929
    %v6942 = vpop.f32.mrf.mxu0
    %v6943 = vadd.f32 0.0, %v6942
    %6944 = vmatmul.f32.gmra.mxu0 %v932
    %v6945 = vpop.f32.mrf.mxu0
    %v6946 = vadd.f32 0.0, %v6945
    %6947 = vmatmul.f32.gmra.mxu0 %v935
    %v6948 = vpop.f32.mrf.mxu0
    %v6949 = vadd.f32 0.0, %v6948
    %6950 = vmatmul.f32.gmra.mxu0 %v938
    %v6951 = vpop.f32.mrf.mxu0
    %v6952 = vadd.f32 0.0, %v6951
    %6953 = vmatmul.f32.gmra.mxu0 %v941
    %v6954 = vpop.f32.mrf.mxu0
    %v6955 = vadd.f32 0.0, %v6954
    %6956 = vmatmul.f32.gmra.mxu0 %v944
    %v6957 = vpop.f32.mrf.mxu0
    %v6958 = vadd.f32 0.0, %v6957
    %6959 = vmatmul.f32.gmra.mxu0 %v947
    %v6960 = vpop.f32.mrf.mxu0
    %v6961 = vadd.f32 0.0, %v6960
    %6962 = vmatmul.f32.gmra.mxu0 %v950
    %v6963 = vpop.f32.mrf.mxu0
    %v6964 = vadd.f32 0.0, %v6963
    %6965 = vmatmul.f32.gmra.mxu0 %v953
    %v6966 = vpop.f32.mrf.mxu0
    %v6967 = vadd.f32 0.0, %v6966
    %6968 = vmatmul.f32.gmra.mxu0 %v956
    %v6969 = vpop.f32.mrf.mxu0
    %v6970 = vadd.f32 0.0, %v6969
    %6971 = vdwg.mxu0
    %v6972 = vmul.f32 %v6925, %v129
    %v6973 = vmul.f32 %v6928, %v130
    %v6974 = vmul.f32 %v6931, %v131
    %v6975 = vmul.f32 %v6934, %v132
    %v6976 = vmul.f32 %v6937, %v133
    %v6977 = vmul.f32 %v6940, %v134
    %v6978 = vmul.f32 %v6943, %v135
    %v6979 = vmul.f32 %v6946, %v136
    %v6980 = vmul.f32 %v6949, %v137
    %v6981 = vmul.f32 %v6952, %v138
    %v6982 = vmul.f32 %v6955, %v139
    %v6983 = vmul.f32 %v6958, %v140
    %v6984 = vmul.f32 %v6961, %v141
    %v6985 = vmul.f32 %v6964, %v142
    %v6986 = vmul.f32 %v6967, %v143
    %v6987 = vmul.f32 %v6970, %v144
    %6990 = vrot.lane.b32.xlu0 %v6406, 64
    %v6991 = vpop.permute.xlu0 %6990
    %6992 = vrot.lane.b32.xlu0 %v6409, 64
    %v6993 = vpop.permute.xlu0 %6992
    %6996 = vmatpush.msra.mxu0 %v6987
    %6997 = vmatpush.msra.mxu0 %v6986
    %6998 = vmatpush.msra.mxu0 %v6985
    %6999 = vmatpush.msra.mxu0 %v6984
    %7000 = vmatpush.msra.mxu0 %v6983
    %7001 = vmatpush.msra.mxu0 %v6982
    %7002 = vmatpush.msra.mxu0 %v6981
    %7003 = vmatpush.msra.mxu0 %v6980
    %7004 = vmatpush.msra.mxu0 %v6979
    %7005 = vmatpush.msra.mxu0 %v6978
    %7006 = vmatpush.msra.mxu0 %v6977
    %7007 = vmatpush.msra.mxu0 %v6976
    %7008 = vmatpush.msra.mxu0 %v6975
    %7009 = vmatpush.msra.mxu0 %v6974
    %7010 = vmatpush.msra.mxu0 %v6973
    %7011 = vmatpush.msra.mxu0 %v6972
    %7012 = vmatmul.f32.gmra.mxu0 %v6891
    %v7013 = vpop.f32.mrf.mxu0
    %v7014 = vadd.f32 %v6991, %v7013
    %7015 = vmatmul.f32.gmra.mxu0 %v6906
    %v7016 = vpop.f32.mrf.mxu0
    %v7017 = vadd.f32 %v6993, %v7016
    %7018 = vdwg.mxu0
    %vm7019 = vcmp.gt.f32.partialorder %v7014, 0.0
    %vm7020 = vcmp.gt.f32.partialorder %v7017, 0.0
    %v7021 = vmin.f32 %v7014, 0.0
    %v7022 = vmin.f32 %v7017, 0.0
    %v7023 = vmul.f32 %v7021, 1.442695
    %v7024 = vpow.pop %v7023
    %v7025 = vmul.f32 %v7022, 1.442695
    %v7026 = vpow.pop %v7025
    %v7027 = vsub.f32 %v7024, 1.0
    %v7028 = vsub.f32 %v7026, 1.0
    %v7029 = vsel %vm7019, %v7014, %v7027
    %v7030 = vsel %vm7020, %v7017, %v7028
    %v7031 = vld [vmem:[%s13] sm:$0x3]
    %v7033 = vsel %vm414, %v7031, 0
    %7035 = vmatpush.msra.mxu0 0.0
    %7036 = vmatpush.msra.mxu0 0.0
    %7037 = vmatpush.msra.mxu0 0.0
    %7038 = vmatpush.msra.mxu0 0.0
    %7039 = vmatpush.msra.mxu0 0.0
    %7040 = vmatpush.msra.mxu0 0.0
    %7041 = vmatpush.msra.mxu0 0.0
    %7042 = vmatpush.msra.mxu0 0.0
    %7043 = vmatpush.msra.mxu0 0.0
    %7044 = vmatpush.msra.mxu0 0.0
    %7045 = vmatpush.msra.mxu0 0.0
    %7046 = vmatpush.msra.mxu0 0.0
    %7047 = vmatpush.msra.mxu0 0.0
    %7048 = vmatpush.msra.mxu0 0.0
    %7049 = vmatpush.msra.mxu0 %v7030
    %7050 = vmatpush.msra.mxu0 %v7029
    %7051 = vmatmul.f32.gmra.mxu0 %v7033
    %v7052 = vpop.f32.mrf.mxu0
    %v7053 = vadd.f32 0.0, %v7052
    %7054 = vdwg.mxu0
    %v7055 = vld [vmem:[%s14] sm:$0xff]
    %v7056 = vld [vmem:[%s14 + $0x8] sm:$0xff]
    %v7057 = vld [vmem:[%s14 + $0x10] sm:$0xff]
    %v7058 = vld [vmem:[%s14 + $0x18] sm:$0xff]
    %v7059 = vld [vmem:[%s15] sm:$0x1]
    %v7061 = vperm.slane %v7059, 0
    %v7064 = vsel %vm156, %v7053, 0
    %7066 = vmatpush.msra.mxu0 0.0
    %7067 = vmatpush.msra.mxu0 0.0
    %7068 = vmatpush.msra.mxu0 0.0
    %7069 = vmatpush.msra.mxu0 0.0
    %7070 = vmatpush.msra.mxu0 0.0
    %7071 = vmatpush.msra.mxu0 0.0
    %7072 = vmatpush.msra.mxu0 0.0
    %7073 = vmatpush.msra.mxu0 0.0
    %7074 = vmatpush.msra.mxu0 0.0
    %7075 = vmatpush.msra.mxu0 0.0
    %7076 = vmatpush.msra.mxu0 0.0
    %7077 = vmatpush.msra.mxu0 0.0
    %7078 = vmatpush.msra.mxu0 %v7058
    %7079 = vmatpush.msra.mxu0 %v7057
    %7080 = vmatpush.msra.mxu0 %v7056
    %7081 = vmatpush.msra.mxu0 %v7055
    %7082 = vmatmul.f32.gmra.mxu0 %v7064
    %v7083 = vpop.f32.mrf.mxu0
    %v7084 = vadd.f32 %v7061, %v7083
    %7085 = vdwg.mxu0
    %vm7086 = vcmask 123904
    %7087 = vst.msk [vmem:[#allocation10] sm:$0x3] %vm7086, %v7084
    // Predicated region
    $region82: #{gcn_forward_fused.1} parent=1 // pred_check
      _
    $region83: #{gcn_forward_fused.1} parent=1 // pred_check_branch
      %7089 = sbr.rel (0) target = $region85
    $region84: #{gcn_forward_fused.1} parent=1 // pred_region
      %7091 = vsyncadd [#allocation4], 0
      %s7093 = sshll.u32 [#allocation10], 4
      %s7094 = int_to_ptr.vmem [resolvable:$true] %s7093
      %s7095 = sshll.u32 %s16, 4
      %s7096 = int_to_ptr.hbm [resolvable:$true] %s7095
      %7098 = dma.vmem_to_hbm [thread:$0]  %s7094, 32, %s7096, [#allocation4]
    $region85: #{gcn_forward_fused.1} parent=1 // pred_fallthru
      _
    // Predicated region
    $region86: #{gcn_forward_fused.1} parent=1 // pred_check
      _
    $region87: #{gcn_forward_fused.1} parent=1 // pred_check_branch
      %7100 = sbr.rel (0) target = $region89
    $region88: #{gcn_forward_fused.1} parent=1 // pred_region
      %7102 = dma.done [#allocation4], 32
    $region89: #{gcn_forward_fused.1} parent=1 // pred_fallthru
      _
    %7103 = vsyncpa [#allocation3], 1
    %7104 = vsyncpa [#allocation6], 1
    %7105 = vsyncpa [#allocation9], 1
    %7106 = vsyncpa [#allocation4], 1

</llo_original>
